<compile_context>
chip_gen: v7x
topology: tpu7x:2x2x1
jax: 0.10.0
libtpu: 0.0.40
codegen_flags: <defaults>
</compile_context>

<pallas_src>
import jax
import jax.numpy as jnp
from jax import lax
from jax.experimental import pallas as pl
from jax.experimental.pallas import tpu as pltpu

_MXU_DTYPE = jnp.bfloat16


# ----------------------------------------------------------------------------
# In-kernel building blocks (traced inside the fused kernel body).
# ----------------------------------------------------------------------------

def _im2col3x3(x):
    """(H, W, C) f32 -> (H*W, 9*C) patch matrix for a 3x3 / pad=1 conv.

    Zero padding is done in-kernel; the 9 shifted windows are packed on the
    lane axis so the conv becomes ONE matmul with contraction depth 9*C
    instead of 9 small K=C matmuls (fewer MXU K-passes, no accumulate adds).
    """
    H, W, C = x.shape
    zr = jnp.zeros((1, W, C), x.dtype)
    xp = jnp.concatenate([zr, x, zr], axis=0)               # (H+2, W, C)
    zc = jnp.zeros((H + 2, 1, C), x.dtype)
    xp = jnp.concatenate([zc, xp, zc], axis=1)               # (H+2, W+2, C)
    cols = [xp[ky:ky + H, kx:kx + W, :].reshape(H * W, C)
            for ky in range(3) for kx in range(3)]
    return jnp.concatenate(cols, axis=-1)                    # (H*W, 9*C)


def _conv3x3(x, w, b, act):
    """x: (H, W, Cin) f32; w: (9*Cin, Cout) bf16; b: (1, Cout) f32."""
    H, W, _ = x.shape
    cout = w.shape[-1]
    patches = _im2col3x3(x).astype(w.dtype)
    y = jnp.dot(patches, w, preferred_element_type=jnp.float32) + b
    if act == "relu":
        y = jnp.maximum(y, 0.0)
    return y.reshape(H, W, cout)


def _conv3x3_tanh_t(x, w_t, b_col):
    """Final conv (Cout=3) computed transposed so the store is lane-dense.
    x: (H, W, Cin); w_t: (3, 9*Cin); b_col: (3, 1).  Returns (3, H*W)."""
    patches = _im2col3x3(x).astype(w_t.dtype)
    y = lax.dot_general(w_t, patches, (((1,), (1,)), ((), ())),
                        preferred_element_type=jnp.float32)  # (3, H*W)
    return jnp.tanh(y + b_col)


def _maxpool2x2(x):
    """2x2 / stride-2 max pool via reshape + elementwise max (no slice loops)."""
    H, W, C = x.shape
    a = x.reshape(H // 2, 2, W, C)
    a = jnp.maximum(a[:, 0], a[:, 1])                        # (H/2, W, C)
    a = a.reshape(H // 2, W // 2, 2, C)
    return jnp.maximum(a[:, :, 0], a[:, :, 1])               # (H/2, W/2, C)


def _attention(feat, w_qkv, b_qkv):
    """TemporalAttention.  feat: (HW, C); w_qkv: (C, C/8 + C/8 + C) fused Q|K|V.

    Matches the PyTorch module exactly: scores[i, j] = <q_i, k_j>, softmax over
    keys j, out[i, :] = sum_j p[i, j] * v[j, :]  (no 1/sqrt(d_k) scaling, no
    residual add).
    """
    HW, C = feat.shape
    c8 = (w_qkv.shape[-1] - C) // 2
    qkv = jnp.dot(feat.astype(w_qkv.dtype), w_qkv,
                  preferred_element_type=jnp.float32) + b_qkv  # (HW, 2*c8 + C)
    q = qkv[:, :c8].astype(w_qkv.dtype)
    k = qkv[:, c8:2 * c8].astype(w_qkv.dtype)
    v = qkv[:, 2 * c8:].astype(w_qkv.dtype)
    s = lax.dot_general(q, k, (((1,), (1,)), ((), ())),
                        preferred_element_type=jnp.float32)    # (HW, HW)
    s = s - jnp.max(s, axis=-1, keepdims=True)                 # XLU reduce
    p = jnp.exp(s)                                             # EUP
    p = p * pl.reciprocal(jnp.sum(p, axis=-1, keepdims=True), approx=True)
    return jnp.dot(p.astype(w_qkv.dtype), v,
                   preferred_element_type=jnp.float32)          # (HW, C)


def _deconv2x2(x, w_flat, b_flat):
    """ConvTranspose2d(k=2, s=2) as one matmul + in-kernel depth-to-space.
    x: (H, W, Cin); w_flat: (Cin, 4*Cout) columns ordered [ky, kx, cout];
    b_flat: (1, 4*Cout).  Returns (2H, 2W, Cout)."""
    H, W, Cin = x.shape
    cout = w_flat.shape[-1] // 4
    y = jnp.dot(x.reshape(H * W, Cin).astype(w_flat.dtype), w_flat,
                preferred_element_type=jnp.float32) + b_flat    # (HW, 4*Cout)
    taps = [y[:, t * cout:(t + 1) * cout].reshape(H, W, 1, cout) for t in range(4)]
    # interleave kx along width: (H, W, 2, C) -> (H, 2W, C)
    r0 = jnp.concatenate([taps[0], taps[1]], axis=2).reshape(H, 2 * W, cout)
    r1 = jnp.concatenate([taps[2], taps[3]], axis=2).reshape(H, 2 * W, cout)
    # interleave ky along height: (H, 2, 2W, C) -> (2H, 2W, C)
    out = jnp.concatenate([r0.reshape(H, 1, 2 * W, cout),
                           r1.reshape(H, 1, 2 * W, cout)], axis=1)
    return out.reshape(2 * H, 2 * W, cout)


# ----------------------------------------------------------------------------
# Fused kernel: whole STGenerator forward for one batch element per grid step.
# ----------------------------------------------------------------------------

def _stgen_kernel(x_ref,
                  w_e1a, b_e1a, w_e1b, b_e1b,
                  w_e2a, b_e2a, w_e2b, b_e2b,
                  w_qkv, b_qkv, w_dt, b_dt,
                  w_d1, b_d1, w_d2t, b_d2,
                  o_ref):
    x = x_ref[0]                                                   # (H, W, 6) f32
    # enc1: conv3x3+relu, conv3x3+relu
    e = _conv3x3(x, w_e1a[...], b_e1a[...], act="relu")
    e1 = _conv3x3(e, w_e1b[...], b_e1b[...], act="relu")           # (H, W, 32)
    # enc2: maxpool2, conv3x3+relu, conv3x3+relu
    p = _maxpool2x2(e1)                                            # (H/2, W/2, 32)
    e = _conv3x3(p, w_e2a[...], b_e2a[...], act="relu")
    e2 = _conv3x3(e, w_e2b[...], b_e2b[...], act="relu")           # (H/2, W/2, 64)
    # temporal attention over spatial positions
    hh, ww, cc = e2.shape
    att = _attention(e2.reshape(hh * ww, cc), w_qkv[...], b_qkv[...])
    # dec1: deconv2x2 stride 2, conv3x3+relu, conv3x3+tanh
    d = _deconv2x2(att.reshape(hh, ww, cc), w_dt[...], b_dt[...])  # (H, W, 32)
    d = _conv3x3(d, w_d1[...], b_d1[...], act="relu")
    # final conv stored channel-major -> lane-dense (last dim = H*W)
    o_ref[0] = _conv3x3_tanh_t(d, w_d2t[...], b_d2[...])           # (3, H*W)


# ----------------------------------------------------------------------------
# Parameters and wrapper
# ----------------------------------------------------------------------------

def init_params(key):
    ks = jax.random.split(key, 20)

    def w(k, shape, scale=0.1):
        return jax.random.normal(k, shape, jnp.float32) * scale

    return {
        # enc1
        "enc1_w1": w(ks[0], (3, 3, 6, 32)),  "enc1_b1": w(ks[1], (32,), 0.01),
        "enc1_w2": w(ks[2], (3, 3, 32, 32)), "enc1_b2": w(ks[3], (32,), 0.01),
        # enc2 (after maxpool)
        "enc2_w1": w(ks[4], (3, 3, 32, 64)), "enc2_b1": w(ks[5], (64,), 0.01),
        "enc2_w2": w(ks[6], (3, 3, 64, 64)), "enc2_b2": w(ks[7], (64,), 0.01),
        # temporal attention (1x1 convs -> channel matmuls)
        "att_wq": w(ks[8], (64, 8)),   "att_bq": w(ks[9], (8,), 0.01),
        "att_wk": w(ks[10], (64, 8)),  "att_bk": w(ks[11], (8,), 0.01),
        "att_wv": w(ks[12], (64, 64)), "att_bv": w(ks[13], (64,), 0.01),
        # dec1
        "dec_tw": w(ks[14], (2, 2, 64, 32)), "dec_tb": w(ks[15], (32,), 0.01),
        "dec_w1": w(ks[16], (3, 3, 32, 32)), "dec_b1": w(ks[17], (32,), 0.01),
        "dec_w2": w(ks[18], (3, 3, 32, 3)),  "dec_b2": w(ks[19], (3,), 0.01),
    }


def _prep_weights(params, mxu_dtype=_MXU_DTYPE):
    """Reshape/cast parameters into fused-kernel layouts (tiny, runs under jit)."""
    f32 = jnp.float32

    def conv_w(w):                       # (3,3,Cin,Cout) -> (9*Cin, Cout)
        return w.reshape(-1, w.shape[-1]).astype(mxu_dtype)

    def row(b):
        return b.reshape(1, -1).astype(f32)

    # fused Q|K|V projection: (64, 8+8+64)
    w_qkv = jnp.concatenate(
        [params["att_wq"], params["att_wk"], params["att_wv"]], axis=1
    ).astype(mxu_dtype)
    b_qkv = jnp.concatenate(
        [params["att_bq"], params["att_bk"], params["att_bv"]]
    ).reshape(1, -1).astype(f32)

    # deconv weight (ky,kx,cin,cout) -> (cin, [ky,kx,cout])
    dec_tw = params["dec_tw"]
    cin = dec_tw.shape[2]
    w_dt = jnp.transpose(dec_tw, (2, 0, 1, 3)).reshape(cin, -1).astype(mxu_dtype)
    b_dt = jnp.tile(params["dec_tb"], 4).reshape(1, -1).astype(f32)

    # final conv transposed for lane-dense channel-major output
    w_d2t = params["dec_w2"].reshape(-1, params["dec_w2"].shape[-1]).T.astype(mxu_dtype)
    b_d2 = params["dec_b2"].reshape(-1, 1).astype(f32)

    return (
        conv_w(params["enc1_w1"]), row(params["enc1_b1"]),
        conv_w(params["enc1_w2"]), row(params["enc1_b2"]),
        conv_w(params["enc2_w1"]), row(params["enc2_b1"]),
        conv_w(params["enc2_w2"]), row(params["enc2_b2"]),
        w_qkv, b_qkv, w_dt, b_dt,
        conv_w(params["dec_w1"]), row(params["dec_b1"]),
        w_d2t, b_d2,
    )


def st_generator_forward(params, x_nchw):
    x = jnp.transpose(x_nchw, (0, 2, 3, 1)).astype(jnp.float32)    # NCHW -> NHWC
    B, H, W, Cin = x.shape
    assert H % 2 == 0 and W % 2 == 0
    weights = _prep_weights(params)

    in_specs = [pl.BlockSpec((1, H, W, Cin), lambda i: (i, 0, 0, 0))]
    # all weights are 2-D and grid-invariant: fetched once, resident in VMEM
    in_specs += [pl.BlockSpec(w.shape, lambda i: (0, 0)) for w in weights]

    out = pl.pallas_call(
        _stgen_kernel,
        out_shape=jax.ShapeDtypeStruct((B, 3, H * W), jnp.float32),
        grid=(B,),
        in_specs=in_specs,
        out_specs=pl.BlockSpec((1, 3, H * W), lambda i: (i, 0, 0)),
        compiler_params=pltpu.CompilerParams(
            dimension_semantics=("parallel",),        # both TCs busy on v7x
            vmem_limit_bytes=32 * 1024 * 1024,        # headroom on v5e too
        ),
    )(x, *weights)
    # (B, 3, H*W) was stored lane-dense; this reshape to NCHW is free.
    return out.reshape(B, 3, H, W)


if __name__ == "__main__":
    key = jax.random.PRNGKey(0)
    pkey, xkey = jax.random.split(key)
    params = init_params(pkey)
    x = jax.random.normal(xkey, (2, 6, 16, 16), jnp.float32)       # NCHW input
    fwd = jax.jit(st_generator_forward)
    y = fwd(params, x)
    jax.block_until_ready(y)
    assert y.shape == (2, 3, 16, 16), y.shape
    assert bool(jnp.all(jnp.isfinite(y)))
    # tanh output must be in (-1, 1)
    assert bool(jnp.all(jnp.abs(y) <= 1.0))
    print("KERNEL_OK")
</pallas_src>

<mosaic_0001>
module attributes {stable_mosaic.version = 11 : i64} {
  func.func @_stgen_kernel(%arg0: i32, %arg1: memref<1x16x16x6xf32, #tpu.memory_space<vmem>>, %arg2: memref<54x32xbf16, #tpu.memory_space<vmem>>, %arg3: memref<1x32xf32, #tpu.memory_space<vmem>>, %arg4: memref<288x32xbf16, #tpu.memory_space<vmem>>, %arg5: memref<1x32xf32, #tpu.memory_space<vmem>>, %arg6: memref<288x64xbf16, #tpu.memory_space<vmem>>, %arg7: memref<1x64xf32, #tpu.memory_space<vmem>>, %arg8: memref<576x64xbf16, #tpu.memory_space<vmem>>, %arg9: memref<1x64xf32, #tpu.memory_space<vmem>>, %arg10: memref<64x80xbf16, #tpu.memory_space<vmem>>, %arg11: memref<1x80xf32, #tpu.memory_space<vmem>>, %arg12: memref<64x128xbf16, #tpu.memory_space<vmem>>, %arg13: memref<1x128xf32, #tpu.memory_space<vmem>>, %arg14: memref<288x32xbf16, #tpu.memory_space<vmem>>, %arg15: memref<1x32xf32, #tpu.memory_space<vmem>>, %arg16: memref<3x288xbf16, #tpu.memory_space<vmem>>, %arg17: memref<3x1xf32, #tpu.memory_space<vmem>>, %arg18: memref<1x3x256xf32, #tpu.memory_space<vmem>>) attributes {dimension_semantics = [#tpu.dimension_semantics<parallel>], iteration_bounds = array<i64: 2>, scalar_prefetch = 0 : i64, scratch_operands = 0 : i64, tpu.core_type = #tpu.core_type<tc>, window_params = [{transform_indices = @transform_0, window_bounds = array<i64: 1, 16, 16, 6>}, {pipeline_mode = #tpu.pipeline_mode<synchronous>, transform_indices = @transform_1, window_bounds = array<i64: 54, 32>}, {pipeline_mode = #tpu.pipeline_mode<synchronous>, transform_indices = @transform_2, window_bounds = array<i64: 1, 32>}, {pipeline_mode = #tpu.pipeline_mode<synchronous>, transform_indices = @transform_3, window_bounds = array<i64: 288, 32>}, {pipeline_mode = #tpu.pipeline_mode<synchronous>, transform_indices = @transform_4, window_bounds = array<i64: 1, 32>}, {pipeline_mode = #tpu.pipeline_mode<synchronous>, transform_indices = @transform_5, window_bounds = array<i64: 288, 64>}, {pipeline_mode = #tpu.pipeline_mode<synchronous>, transform_indices = @transform_6, window_bounds = array<i64: 1, 64>}, {pipeline_mode = #tpu.pipeline_mode<synchronous>, transform_indices = @transform_7, window_bounds = array<i64: 576, 64>}, {pipeline_mode = #tpu.pipeline_mode<synchronous>, transform_indices = @transform_8, window_bounds = array<i64: 1, 64>}, {pipeline_mode = #tpu.pipeline_mode<synchronous>, transform_indices = @transform_9, window_bounds = array<i64: 64, 80>}, {pipeline_mode = #tpu.pipeline_mode<synchronous>, transform_indices = @transform_10, window_bounds = array<i64: 1, 80>}, {pipeline_mode = #tpu.pipeline_mode<synchronous>, transform_indices = @transform_11, window_bounds = array<i64: 64, 128>}, {pipeline_mode = #tpu.pipeline_mode<synchronous>, transform_indices = @transform_12, window_bounds = array<i64: 1, 128>}, {pipeline_mode = #tpu.pipeline_mode<synchronous>, transform_indices = @transform_13, window_bounds = array<i64: 288, 32>}, {pipeline_mode = #tpu.pipeline_mode<synchronous>, transform_indices = @transform_14, window_bounds = array<i64: 1, 32>}, {pipeline_mode = #tpu.pipeline_mode<synchronous>, transform_indices = @transform_15, window_bounds = array<i64: 3, 288>}, {pipeline_mode = #tpu.pipeline_mode<synchronous>, transform_indices = @transform_16, window_bounds = array<i64: 3, 1>}, {transform_indices = @transform_17, window_bounds = array<i64: 1, 3, 256>}]} {
    %c0 = arith.constant 0 : index
    %c0_0 = arith.constant 0 : index
    %c0_1 = arith.constant 0 : index
    %c0_2 = arith.constant 0 : index
    %0 = vector.load %arg1[%c0, %c0_0, %c0_1, %c0_2] : memref<1x16x16x6xf32, #tpu.memory_space<vmem>>, vector<1x16x16x6xf32>
    %1 = vector.shape_cast %0 : vector<1x16x16x6xf32> to vector<16x16x6xf32>
    %c0_3 = arith.constant 0 : index
    %c0_4 = arith.constant 0 : index
    %2 = vector.load %arg2[%c0_3, %c0_4] : memref<54x32xbf16, #tpu.memory_space<vmem>>, vector<54x32xbf16>
    %c0_5 = arith.constant 0 : index
    %c0_6 = arith.constant 0 : index
    %3 = vector.load %arg3[%c0_5, %c0_6] : memref<1x32xf32, #tpu.memory_space<vmem>>, vector<1x32xf32>
    %cst = arith.constant 0.000000e+00 : f32
    %4 = vector.broadcast %cst : f32 to vector<1x16x6xf32>
    %5 = tpu.concatenate %4, %1, %4 in 0 : vector<1x16x6xf32>, vector<16x16x6xf32>, vector<1x16x6xf32> -> vector<18x16x6xf32>
    %cst_7 = arith.constant 0.000000e+00 : f32
    %6 = vector.broadcast %cst_7 : f32 to vector<18x1x6xf32>
    %7 = tpu.concatenate %6, %5, %6 in 1 : vector<18x1x6xf32>, vector<18x16x6xf32>, vector<18x1x6xf32> -> vector<18x18x6xf32>
    %8 = vector.extract_strided_slice %7 {offsets = [0, 0, 0], sizes = [16, 16, 6], strides = [1, 1, 1]} : vector<18x18x6xf32> to vector<16x16x6xf32>
    %9 = vector.shape_cast %8 : vector<16x16x6xf32> to vector<256x6xf32>
    %10 = vector.extract_strided_slice %7 {offsets = [0, 1, 0], sizes = [16, 16, 6], strides = [1, 1, 1]} : vector<18x18x6xf32> to vector<16x16x6xf32>
    %11 = vector.shape_cast %10 : vector<16x16x6xf32> to vector<256x6xf32>
    %12 = vector.extract_strided_slice %7 {offsets = [0, 2, 0], sizes = [16, 16, 6], strides = [1, 1, 1]} : vector<18x18x6xf32> to vector<16x16x6xf32>
    %13 = vector.shape_cast %12 : vector<16x16x6xf32> to vector<256x6xf32>
    %14 = vector.extract_strided_slice %7 {offsets = [1, 0, 0], sizes = [16, 16, 6], strides = [1, 1, 1]} : vector<18x18x6xf32> to vector<16x16x6xf32>
    %15 = vector.shape_cast %14 : vector<16x16x6xf32> to vector<256x6xf32>
    %16 = vector.extract_strided_slice %7 {offsets = [1, 1, 0], sizes = [16, 16, 6], strides = [1, 1, 1]} : vector<18x18x6xf32> to vector<16x16x6xf32>
    %17 = vector.shape_cast %16 : vector<16x16x6xf32> to vector<256x6xf32>
    %18 = vector.extract_strided_slice %7 {offsets = [1, 2, 0], sizes = [16, 16, 6], strides = [1, 1, 1]} : vector<18x18x6xf32> to vector<16x16x6xf32>
    %19 = vector.shape_cast %18 : vector<16x16x6xf32> to vector<256x6xf32>
    %20 = vector.extract_strided_slice %7 {offsets = [2, 0, 0], sizes = [16, 16, 6], strides = [1, 1, 1]} : vector<18x18x6xf32> to vector<16x16x6xf32>
    %21 = vector.shape_cast %20 : vector<16x16x6xf32> to vector<256x6xf32>
    %22 = vector.extract_strided_slice %7 {offsets = [2, 1, 0], sizes = [16, 16, 6], strides = [1, 1, 1]} : vector<18x18x6xf32> to vector<16x16x6xf32>
    %23 = vector.shape_cast %22 : vector<16x16x6xf32> to vector<256x6xf32>
    %24 = vector.extract_strided_slice %7 {offsets = [2, 2, 0], sizes = [16, 16, 6], strides = [1, 1, 1]} : vector<18x18x6xf32> to vector<16x16x6xf32>
    %25 = vector.shape_cast %24 : vector<16x16x6xf32> to vector<256x6xf32>
    %26 = tpu.concatenate %9, %11, %13, %15, %17, %19, %21, %23, %25 in 1 : vector<256x6xf32>, vector<256x6xf32>, vector<256x6xf32>, vector<256x6xf32>, vector<256x6xf32>, vector<256x6xf32>, vector<256x6xf32>, vector<256x6xf32>, vector<256x6xf32> -> vector<256x54xf32>
    %27 = arith.truncf %26 : vector<256x54xf32> to vector<256x54xbf16>
    %cst_8 = arith.constant dense<0.000000e+00> : vector<256x32xf32>
    %28 = tpu.matmul %27, %2, %cst_8 {dimension_numbers = #tpu.dot_dimension_numbers<[1], [0], [0], [1], [0, 0, 1, 1], [], []>} : vector<256x54xbf16>, vector<54x32xbf16>, vector<256x32xf32> -> vector<256x32xf32>
    %29 = vector.broadcast %3 : vector<1x32xf32> to vector<256x32xf32>
    %30 = arith.addf %28, %29 : vector<256x32xf32>
    %cst_9 = arith.constant 0.000000e+00 : f32
    %31 = vector.broadcast %cst_9 : f32 to vector<256x32xf32>
    %32 = arith.maximumf %30, %31 : vector<256x32xf32>
    %33 = vector.shape_cast %32 : vector<256x32xf32> to vector<16x16x32xf32>
    %c0_10 = arith.constant 0 : index
    %c0_11 = arith.constant 0 : index
    %34 = vector.load %arg4[%c0_10, %c0_11] : memref<288x32xbf16, #tpu.memory_space<vmem>>, vector<288x32xbf16>
    %c0_12 = arith.constant 0 : index
    %c0_13 = arith.constant 0 : index
    %35 = vector.load %arg5[%c0_12, %c0_13] : memref<1x32xf32, #tpu.memory_space<vmem>>, vector<1x32xf32>
    %cst_14 = arith.constant 0.000000e+00 : f32
    %36 = vector.broadcast %cst_14 : f32 to vector<1x16x32xf32>
    %37 = tpu.concatenate %36, %33, %36 in 0 : vector<1x16x32xf32>, vector<16x16x32xf32>, vector<1x16x32xf32> -> vector<18x16x32xf32>
    %cst_15 = arith.constant 0.000000e+00 : f32
    %38 = vector.broadcast %cst_15 : f32 to vector<18x1x32xf32>
    %39 = tpu.concatenate %38, %37, %38 in 1 : vector<18x1x32xf32>, vector<18x16x32xf32>, vector<18x1x32xf32> -> vector<18x18x32xf32>
    %40 = vector.extract_strided_slice %39 {offsets = [0, 0, 0], sizes = [16, 16, 32], strides = [1, 1, 1]} : vector<18x18x32xf32> to vector<16x16x32xf32>
    %41 = vector.shape_cast %40 : vector<16x16x32xf32> to vector<256x32xf32>
    %42 = vector.extract_strided_slice %39 {offsets = [0, 1, 0], sizes = [16, 16, 32], strides = [1, 1, 1]} : vector<18x18x32xf32> to vector<16x16x32xf32>
    %43 = vector.shape_cast %42 : vector<16x16x32xf32> to vector<256x32xf32>
    %44 = vector.extract_strided_slice %39 {offsets = [0, 2, 0], sizes = [16, 16, 32], strides = [1, 1, 1]} : vector<18x18x32xf32> to vector<16x16x32xf32>
    %45 = vector.shape_cast %44 : vector<16x16x32xf32> to vector<256x32xf32>
    %46 = vector.extract_strided_slice %39 {offsets = [1, 0, 0], sizes = [16, 16, 32], strides = [1, 1, 1]} : vector<18x18x32xf32> to vector<16x16x32xf32>
    %47 = vector.shape_cast %46 : vector<16x16x32xf32> to vector<256x32xf32>
    %48 = vector.extract_strided_slice %39 {offsets = [1, 1, 0], sizes = [16, 16, 32], strides = [1, 1, 1]} : vector<18x18x32xf32> to vector<16x16x32xf32>
    %49 = vector.shape_cast %48 : vector<16x16x32xf32> to vector<256x32xf32>
    %50 = vector.extract_strided_slice %39 {offsets = [1, 2, 0], sizes = [16, 16, 32], strides = [1, 1, 1]} : vector<18x18x32xf32> to vector<16x16x32xf32>
    %51 = vector.shape_cast %50 : vector<16x16x32xf32> to vector<256x32xf32>
    %52 = vector.extract_strided_slice %39 {offsets = [2, 0, 0], sizes = [16, 16, 32], strides = [1, 1, 1]} : vector<18x18x32xf32> to vector<16x16x32xf32>
    %53 = vector.shape_cast %52 : vector<16x16x32xf32> to vector<256x32xf32>
    %54 = vector.extract_strided_slice %39 {offsets = [2, 1, 0], sizes = [16, 16, 32], strides = [1, 1, 1]} : vector<18x18x32xf32> to vector<16x16x32xf32>
    %55 = vector.shape_cast %54 : vector<16x16x32xf32> to vector<256x32xf32>
    %56 = vector.extract_strided_slice %39 {offsets = [2, 2, 0], sizes = [16, 16, 32], strides = [1, 1, 1]} : vector<18x18x32xf32> to vector<16x16x32xf32>
    %57 = vector.shape_cast %56 : vector<16x16x32xf32> to vector<256x32xf32>
    %58 = tpu.concatenate %41, %43, %45, %47, %49, %51, %53, %55, %57 in 1 : vector<256x32xf32>, vector<256x32xf32>, vector<256x32xf32>, vector<256x32xf32>, vector<256x32xf32>, vector<256x32xf32>, vector<256x32xf32>, vector<256x32xf32>, vector<256x32xf32> -> vector<256x288xf32>
    %59 = arith.truncf %58 : vector<256x288xf32> to vector<256x288xbf16>
    %cst_16 = arith.constant dense<0.000000e+00> : vector<256x32xf32>
    %60 = tpu.matmul %59, %34, %cst_16 {dimension_numbers = #tpu.dot_dimension_numbers<[1], [0], [0], [1], [0, 0, 1, 1], [], []>} : vector<256x288xbf16>, vector<288x32xbf16>, vector<256x32xf32> -> vector<256x32xf32>
    %61 = vector.broadcast %35 : vector<1x32xf32> to vector<256x32xf32>
    %62 = arith.addf %60, %61 : vector<256x32xf32>
    %cst_17 = arith.constant 0.000000e+00 : f32
    %63 = vector.broadcast %cst_17 : f32 to vector<256x32xf32>
    %64 = arith.maximumf %62, %63 : vector<256x32xf32>
    %65 = vector.shape_cast %64 : vector<256x32xf32> to vector<16x16x32xf32>
    %66 = vector.shape_cast %65 : vector<16x16x32xf32> to vector<8x2x16x32xf32>
    %67 = vector.extract_strided_slice %66 {offsets = [0, 0, 0, 0], sizes = [8, 1, 16, 32], strides = [1, 1, 1, 1]} : vector<8x2x16x32xf32> to vector<8x1x16x32xf32>
    %68 = vector.shape_cast %67 : vector<8x1x16x32xf32> to vector<8x16x32xf32>
    %69 = vector.extract_strided_slice %66 {offsets = [0, 1, 0, 0], sizes = [8, 1, 16, 32], strides = [1, 1, 1, 1]} : vector<8x2x16x32xf32> to vector<8x1x16x32xf32>
    %70 = vector.shape_cast %69 : vector<8x1x16x32xf32> to vector<8x16x32xf32>
    %71 = arith.maximumf %68, %70 : vector<8x16x32xf32>
    %72 = vector.shape_cast %71 : vector<8x16x32xf32> to vector<8x8x2x32xf32>
    %73 = vector.extract_strided_slice %72 {offsets = [0, 0, 0, 0], sizes = [8, 8, 1, 32], strides = [1, 1, 1, 1]} : vector<8x8x2x32xf32> to vector<8x8x1x32xf32>
    %74 = vector.shape_cast %73 : vector<8x8x1x32xf32> to vector<8x8x32xf32>
    %75 = vector.extract_strided_slice %72 {offsets = [0, 0, 1, 0], sizes = [8, 8, 1, 32], strides = [1, 1, 1, 1]} : vector<8x8x2x32xf32> to vector<8x8x1x32xf32>
    %76 = vector.shape_cast %75 : vector<8x8x1x32xf32> to vector<8x8x32xf32>
    %77 = arith.maximumf %74, %76 : vector<8x8x32xf32>
    %c0_18 = arith.constant 0 : index
    %c0_19 = arith.constant 0 : index
    %78 = vector.load %arg6[%c0_18, %c0_19] : memref<288x64xbf16, #tpu.memory_space<vmem>>, vector<288x64xbf16>
    %c0_20 = arith.constant 0 : index
    %c0_21 = arith.constant 0 : index
    %79 = vector.load %arg7[%c0_20, %c0_21] : memref<1x64xf32, #tpu.memory_space<vmem>>, vector<1x64xf32>
    %cst_22 = arith.constant 0.000000e+00 : f32
    %80 = vector.broadcast %cst_22 : f32 to vector<1x8x32xf32>
    %81 = tpu.concatenate %80, %77, %80 in 0 : vector<1x8x32xf32>, vector<8x8x32xf32>, vector<1x8x32xf32> -> vector<10x8x32xf32>
    %cst_23 = arith.constant 0.000000e+00 : f32
    %82 = vector.broadcast %cst_23 : f32 to vector<10x1x32xf32>
    %83 = tpu.concatenate %82, %81, %82 in 1 : vector<10x1x32xf32>, vector<10x8x32xf32>, vector<10x1x32xf32> -> vector<10x10x32xf32>
    %84 = vector.extract_strided_slice %83 {offsets = [0, 0, 0], sizes = [8, 8, 32], strides = [1, 1, 1]} : vector<10x10x32xf32> to vector<8x8x32xf32>
    %85 = vector.shape_cast %84 : vector<8x8x32xf32> to vector<64x32xf32>
    %86 = vector.extract_strided_slice %83 {offsets = [0, 1, 0], sizes = [8, 8, 32], strides = [1, 1, 1]} : vector<10x10x32xf32> to vector<8x8x32xf32>
    %87 = vector.shape_cast %86 : vector<8x8x32xf32> to vector<64x32xf32>
    %88 = vector.extract_strided_slice %83 {offsets = [0, 2, 0], sizes = [8, 8, 32], strides = [1, 1, 1]} : vector<10x10x32xf32> to vector<8x8x32xf32>
    %89 = vector.shape_cast %88 : vector<8x8x32xf32> to vector<64x32xf32>
    %90 = vector.extract_strided_slice %83 {offsets = [1, 0, 0], sizes = [8, 8, 32], strides = [1, 1, 1]} : vector<10x10x32xf32> to vector<8x8x32xf32>
    %91 = vector.shape_cast %90 : vector<8x8x32xf32> to vector<64x32xf32>
    %92 = vector.extract_strided_slice %83 {offsets = [1, 1, 0], sizes = [8, 8, 32], strides = [1, 1, 1]} : vector<10x10x32xf32> to vector<8x8x32xf32>
    %93 = vector.shape_cast %92 : vector<8x8x32xf32> to vector<64x32xf32>
    %94 = vector.extract_strided_slice %83 {offsets = [1, 2, 0], sizes = [8, 8, 32], strides = [1, 1, 1]} : vector<10x10x32xf32> to vector<8x8x32xf32>
    %95 = vector.shape_cast %94 : vector<8x8x32xf32> to vector<64x32xf32>
    %96 = vector.extract_strided_slice %83 {offsets = [2, 0, 0], sizes = [8, 8, 32], strides = [1, 1, 1]} : vector<10x10x32xf32> to vector<8x8x32xf32>
    %97 = vector.shape_cast %96 : vector<8x8x32xf32> to vector<64x32xf32>
    %98 = vector.extract_strided_slice %83 {offsets = [2, 1, 0], sizes = [8, 8, 32], strides = [1, 1, 1]} : vector<10x10x32xf32> to vector<8x8x32xf32>
    %99 = vector.shape_cast %98 : vector<8x8x32xf32> to vector<64x32xf32>
    %100 = vector.extract_strided_slice %83 {offsets = [2, 2, 0], sizes = [8, 8, 32], strides = [1, 1, 1]} : vector<10x10x32xf32> to vector<8x8x32xf32>
    %101 = vector.shape_cast %100 : vector<8x8x32xf32> to vector<64x32xf32>
    %102 = tpu.concatenate %85, %87, %89, %91, %93, %95, %97, %99, %101 in 1 : vector<64x32xf32>, vector<64x32xf32>, vector<64x32xf32>, vector<64x32xf32>, vector<64x32xf32>, vector<64x32xf32>, vector<64x32xf32>, vector<64x32xf32>, vector<64x32xf32> -> vector<64x288xf32>
    %103 = arith.truncf %102 : vector<64x288xf32> to vector<64x288xbf16>
    %cst_24 = arith.constant dense<0.000000e+00> : vector<64x64xf32>
    %104 = tpu.matmul %103, %78, %cst_24 {dimension_numbers = #tpu.dot_dimension_numbers<[1], [0], [0], [1], [0, 0, 1, 1], [], []>} : vector<64x288xbf16>, vector<288x64xbf16>, vector<64x64xf32> -> vector<64x64xf32>
    %105 = vector.broadcast %79 : vector<1x64xf32> to vector<64x64xf32>
    %106 = arith.addf %104, %105 : vector<64x64xf32>
    %cst_25 = arith.constant 0.000000e+00 : f32
    %107 = vector.broadcast %cst_25 : f32 to vector<64x64xf32>
    %108 = arith.maximumf %106, %107 : vector<64x64xf32>
    %109 = vector.shape_cast %108 : vector<64x64xf32> to vector<8x8x64xf32>
    %c0_26 = arith.constant 0 : index
    %c0_27 = arith.constant 0 : index
    %110 = vector.load %arg8[%c0_26, %c0_27] : memref<576x64xbf16, #tpu.memory_space<vmem>>, vector<576x64xbf16>
    %c0_28 = arith.constant 0 : index
    %c0_29 = arith.constant 0 : index
    %111 = vector.load %arg9[%c0_28, %c0_29] : memref<1x64xf32, #tpu.memory_space<vmem>>, vector<1x64xf32>
    %cst_30 = arith.constant 0.000000e+00 : f32
    %112 = vector.broadcast %cst_30 : f32 to vector<1x8x64xf32>
    %113 = tpu.concatenate %112, %109, %112 in 0 : vector<1x8x64xf32>, vector<8x8x64xf32>, vector<1x8x64xf32> -> vector<10x8x64xf32>
    %cst_31 = arith.constant 0.000000e+00 : f32
    %114 = vector.broadcast %cst_31 : f32 to vector<10x1x64xf32>
    %115 = tpu.concatenate %114, %113, %114 in 1 : vector<10x1x64xf32>, vector<10x8x64xf32>, vector<10x1x64xf32> -> vector<10x10x64xf32>
    %116 = vector.extract_strided_slice %115 {offsets = [0, 0, 0], sizes = [8, 8, 64], strides = [1, 1, 1]} : vector<10x10x64xf32> to vector<8x8x64xf32>
    %117 = vector.shape_cast %116 : vector<8x8x64xf32> to vector<64x64xf32>
    %118 = vector.extract_strided_slice %115 {offsets = [0, 1, 0], sizes = [8, 8, 64], strides = [1, 1, 1]} : vector<10x10x64xf32> to vector<8x8x64xf32>
    %119 = vector.shape_cast %118 : vector<8x8x64xf32> to vector<64x64xf32>
    %120 = vector.extract_strided_slice %115 {offsets = [0, 2, 0], sizes = [8, 8, 64], strides = [1, 1, 1]} : vector<10x10x64xf32> to vector<8x8x64xf32>
    %121 = vector.shape_cast %120 : vector<8x8x64xf32> to vector<64x64xf32>
    %122 = vector.extract_strided_slice %115 {offsets = [1, 0, 0], sizes = [8, 8, 64], strides = [1, 1, 1]} : vector<10x10x64xf32> to vector<8x8x64xf32>
    %123 = vector.shape_cast %122 : vector<8x8x64xf32> to vector<64x64xf32>
    %124 = vector.extract_strided_slice %115 {offsets = [1, 1, 0], sizes = [8, 8, 64], strides = [1, 1, 1]} : vector<10x10x64xf32> to vector<8x8x64xf32>
    %125 = vector.shape_cast %124 : vector<8x8x64xf32> to vector<64x64xf32>
    %126 = vector.extract_strided_slice %115 {offsets = [1, 2, 0], sizes = [8, 8, 64], strides = [1, 1, 1]} : vector<10x10x64xf32> to vector<8x8x64xf32>
    %127 = vector.shape_cast %126 : vector<8x8x64xf32> to vector<64x64xf32>
    %128 = vector.extract_strided_slice %115 {offsets = [2, 0, 0], sizes = [8, 8, 64], strides = [1, 1, 1]} : vector<10x10x64xf32> to vector<8x8x64xf32>
    %129 = vector.shape_cast %128 : vector<8x8x64xf32> to vector<64x64xf32>
    %130 = vector.extract_strided_slice %115 {offsets = [2, 1, 0], sizes = [8, 8, 64], strides = [1, 1, 1]} : vector<10x10x64xf32> to vector<8x8x64xf32>
    %131 = vector.shape_cast %130 : vector<8x8x64xf32> to vector<64x64xf32>
    %132 = vector.extract_strided_slice %115 {offsets = [2, 2, 0], sizes = [8, 8, 64], strides = [1, 1, 1]} : vector<10x10x64xf32> to vector<8x8x64xf32>
    %133 = vector.shape_cast %132 : vector<8x8x64xf32> to vector<64x64xf32>
    %134 = tpu.concatenate %117, %119, %121, %123, %125, %127, %129, %131, %133 in 1 : vector<64x64xf32>, vector<64x64xf32>, vector<64x64xf32>, vector<64x64xf32>, vector<64x64xf32>, vector<64x64xf32>, vector<64x64xf32>, vector<64x64xf32>, vector<64x64xf32> -> vector<64x576xf32>
    %135 = arith.truncf %134 : vector<64x576xf32> to vector<64x576xbf16>
    %cst_32 = arith.constant dense<0.000000e+00> : vector<64x64xf32>
    %136 = tpu.matmul %135, %110, %cst_32 {dimension_numbers = #tpu.dot_dimension_numbers<[1], [0], [0], [1], [0, 0, 1, 1], [], []>} : vector<64x576xbf16>, vector<576x64xbf16>, vector<64x64xf32> -> vector<64x64xf32>
    %137 = vector.broadcast %111 : vector<1x64xf32> to vector<64x64xf32>
    %138 = arith.addf %136, %137 : vector<64x64xf32>
    %cst_33 = arith.constant 0.000000e+00 : f32
    %139 = vector.broadcast %cst_33 : f32 to vector<64x64xf32>
    %140 = arith.maximumf %138, %139 : vector<64x64xf32>
    %141 = vector.shape_cast %140 : vector<64x64xf32> to vector<8x8x64xf32>
    %142 = vector.shape_cast %141 : vector<8x8x64xf32> to vector<64x64xf32>
    %c0_34 = arith.constant 0 : index
    %c0_35 = arith.constant 0 : index
    %143 = vector.load %arg10[%c0_34, %c0_35] : memref<64x80xbf16, #tpu.memory_space<vmem>>, vector<64x80xbf16>
    %c0_36 = arith.constant 0 : index
    %c0_37 = arith.constant 0 : index
    %144 = vector.load %arg11[%c0_36, %c0_37] : memref<1x80xf32, #tpu.memory_space<vmem>>, vector<1x80xf32>
    %145 = arith.truncf %142 : vector<64x64xf32> to vector<64x64xbf16>
    %cst_38 = arith.constant dense<0.000000e+00> : vector<64x80xf32>
    %146 = tpu.matmul %145, %143, %cst_38 {dimension_numbers = #tpu.dot_dimension_numbers<[1], [0], [0], [1], [0, 0, 1, 1], [], []>} : vector<64x64xbf16>, vector<64x80xbf16>, vector<64x80xf32> -> vector<64x80xf32>
    %147 = vector.broadcast %144 : vector<1x80xf32> to vector<64x80xf32>
    %148 = arith.addf %146, %147 : vector<64x80xf32>
    %149 = vector.extract_strided_slice %148 {offsets = [0, 0], sizes = [64, 8], strides = [1, 1]} : vector<64x80xf32> to vector<64x8xf32>
    %150 = arith.truncf %149 : vector<64x8xf32> to vector<64x8xbf16>
    %151 = vector.extract_strided_slice %148 {offsets = [0, 8], sizes = [64, 8], strides = [1, 1]} : vector<64x80xf32> to vector<64x8xf32>
    %152 = arith.truncf %151 : vector<64x8xf32> to vector<64x8xbf16>
    %153 = vector.extract_strided_slice %148 {offsets = [0, 16], sizes = [64, 64], strides = [1, 1]} : vector<64x80xf32> to vector<64x64xf32>
    %154 = arith.truncf %153 : vector<64x64xf32> to vector<64x64xbf16>
    %cst_39 = arith.constant dense<0.000000e+00> : vector<64x64xf32>
    %155 = tpu.matmul %150, %152, %cst_39 {dimension_numbers = #tpu.dot_dimension_numbers<[1], [1], [0], [0], [0, 0, 1, 0], [], []>} : vector<64x8xbf16>, vector<64x8xbf16>, vector<64x64xf32> -> vector<64x64xf32>
    %cst_40 = arith.constant dense<0xFF800000> : vector<64xf32>
    %156 = vector.multi_reduction <maximumf>, %155, %cst_40 [1] : vector<64x64xf32> to vector<64xf32>
    %157 = vector.shape_cast %156 : vector<64xf32> to vector<64x1xf32>
    %158 = vector.broadcast %157 : vector<64x1xf32> to vector<64x64xf32>
    %159 = arith.subf %155, %158 : vector<64x64xf32>
    %160 = math.exp %159 : vector<64x64xf32>
    %cst_41 = arith.constant dense<0.000000e+00> : vector<64xf32>
    %161 = vector.multi_reduction <add>, %160, %cst_41 [1] : vector<64x64xf32> to vector<64xf32>
    %162 = vector.shape_cast %161 : vector<64xf32> to vector<64x1xf32>
    %163 = tpu.reciprocal %162 {approx = true} : vector<64x1xf32> -> vector<64x1xf32>
    %164 = vector.broadcast %163 : vector<64x1xf32> to vector<64x64xf32>
    %165 = arith.mulf %160, %164 : vector<64x64xf32>
    %166 = arith.truncf %165 : vector<64x64xf32> to vector<64x64xbf16>
    %cst_42 = arith.constant dense<0.000000e+00> : vector<64x64xf32>
    %167 = tpu.matmul %166, %154, %cst_42 {dimension_numbers = #tpu.dot_dimension_numbers<[1], [0], [0], [1], [0, 0, 1, 1], [], []>} : vector<64x64xbf16>, vector<64x64xbf16>, vector<64x64xf32> -> vector<64x64xf32>
    %168 = vector.shape_cast %167 : vector<64x64xf32> to vector<8x8x64xf32>
    %c0_43 = arith.constant 0 : index
    %c0_44 = arith.constant 0 : index
    %169 = vector.load %arg12[%c0_43, %c0_44] : memref<64x128xbf16, #tpu.memory_space<vmem>>, vector<64x128xbf16>
    %c0_45 = arith.constant 0 : index
    %c0_46 = arith.constant 0 : index
    %170 = vector.load %arg13[%c0_45, %c0_46] : memref<1x128xf32, #tpu.memory_space<vmem>>, vector<1x128xf32>
    %171 = vector.shape_cast %168 : vector<8x8x64xf32> to vector<64x64xf32>
    %172 = arith.truncf %171 : vector<64x64xf32> to vector<64x64xbf16>
    %cst_47 = arith.constant dense<0.000000e+00> : vector<64x128xf32>
    %173 = tpu.matmul %172, %169, %cst_47 {dimension_numbers = #tpu.dot_dimension_numbers<[1], [0], [0], [1], [0, 0, 1, 1], [], []>} : vector<64x64xbf16>, vector<64x128xbf16>, vector<64x128xf32> -> vector<64x128xf32>
    %174 = vector.broadcast %170 : vector<1x128xf32> to vector<64x128xf32>
    %175 = arith.addf %173, %174 : vector<64x128xf32>
    %176 = vector.extract_strided_slice %175 {offsets = [0, 0], sizes = [64, 32], strides = [1, 1]} : vector<64x128xf32> to vector<64x32xf32>
    %177 = vector.shape_cast %176 : vector<64x32xf32> to vector<8x8x1x32xf32>
    %178 = vector.extract_strided_slice %175 {offsets = [0, 32], sizes = [64, 32], strides = [1, 1]} : vector<64x128xf32> to vector<64x32xf32>
    %179 = vector.shape_cast %178 : vector<64x32xf32> to vector<8x8x1x32xf32>
    %180 = vector.extract_strided_slice %175 {offsets = [0, 64], sizes = [64, 32], strides = [1, 1]} : vector<64x128xf32> to vector<64x32xf32>
    %181 = vector.shape_cast %180 : vector<64x32xf32> to vector<8x8x1x32xf32>
    %182 = vector.extract_strided_slice %175 {offsets = [0, 96], sizes = [64, 32], strides = [1, 1]} : vector<64x128xf32> to vector<64x32xf32>
    %183 = vector.shape_cast %182 : vector<64x32xf32> to vector<8x8x1x32xf32>
    %184 = tpu.concatenate %177, %179 in 2 : vector<8x8x1x32xf32>, vector<8x8x1x32xf32> -> vector<8x8x2x32xf32>
    %185 = vector.shape_cast %184 : vector<8x8x2x32xf32> to vector<8x16x32xf32>
    %186 = tpu.concatenate %181, %183 in 2 : vector<8x8x1x32xf32>, vector<8x8x1x32xf32> -> vector<8x8x2x32xf32>
    %187 = vector.shape_cast %186 : vector<8x8x2x32xf32> to vector<8x16x32xf32>
    %188 = vector.shape_cast %185 : vector<8x16x32xf32> to vector<8x1x16x32xf32>
    %189 = vector.shape_cast %187 : vector<8x16x32xf32> to vector<8x1x16x32xf32>
    %190 = tpu.concatenate %188, %189 in 1 : vector<8x1x16x32xf32>, vector<8x1x16x32xf32> -> vector<8x2x16x32xf32>
    %191 = vector.shape_cast %190 : vector<8x2x16x32xf32> to vector<16x16x32xf32>
    %c0_48 = arith.constant 0 : index
    %c0_49 = arith.constant 0 : index
    %192 = vector.load %arg14[%c0_48, %c0_49] : memref<288x32xbf16, #tpu.memory_space<vmem>>, vector<288x32xbf16>
    %c0_50 = arith.constant 0 : index
    %c0_51 = arith.constant 0 : index
    %193 = vector.load %arg15[%c0_50, %c0_51] : memref<1x32xf32, #tpu.memory_space<vmem>>, vector<1x32xf32>
    %cst_52 = arith.constant 0.000000e+00 : f32
    %194 = vector.broadcast %cst_52 : f32 to vector<1x16x32xf32>
    %195 = tpu.concatenate %194, %191, %194 in 0 : vector<1x16x32xf32>, vector<16x16x32xf32>, vector<1x16x32xf32> -> vector<18x16x32xf32>
    %cst_53 = arith.constant 0.000000e+00 : f32
    %196 = vector.broadcast %cst_53 : f32 to vector<18x1x32xf32>
    %197 = tpu.concatenate %196, %195, %196 in 1 : vector<18x1x32xf32>, vector<18x16x32xf32>, vector<18x1x32xf32> -> vector<18x18x32xf32>
    %198 = vector.extract_strided_slice %197 {offsets = [0, 0, 0], sizes = [16, 16, 32], strides = [1, 1, 1]} : vector<18x18x32xf32> to vector<16x16x32xf32>
    %199 = vector.shape_cast %198 : vector<16x16x32xf32> to vector<256x32xf32>
    %200 = vector.extract_strided_slice %197 {offsets = [0, 1, 0], sizes = [16, 16, 32], strides = [1, 1, 1]} : vector<18x18x32xf32> to vector<16x16x32xf32>
    %201 = vector.shape_cast %200 : vector<16x16x32xf32> to vector<256x32xf32>
    %202 = vector.extract_strided_slice %197 {offsets = [0, 2, 0], sizes = [16, 16, 32], strides = [1, 1, 1]} : vector<18x18x32xf32> to vector<16x16x32xf32>
    %203 = vector.shape_cast %202 : vector<16x16x32xf32> to vector<256x32xf32>
    %204 = vector.extract_strided_slice %197 {offsets = [1, 0, 0], sizes = [16, 16, 32], strides = [1, 1, 1]} : vector<18x18x32xf32> to vector<16x16x32xf32>
    %205 = vector.shape_cast %204 : vector<16x16x32xf32> to vector<256x32xf32>
    %206 = vector.extract_strided_slice %197 {offsets = [1, 1, 0], sizes = [16, 16, 32], strides = [1, 1, 1]} : vector<18x18x32xf32> to vector<16x16x32xf32>
    %207 = vector.shape_cast %206 : vector<16x16x32xf32> to vector<256x32xf32>
    %208 = vector.extract_strided_slice %197 {offsets = [1, 2, 0], sizes = [16, 16, 32], strides = [1, 1, 1]} : vector<18x18x32xf32> to vector<16x16x32xf32>
    %209 = vector.shape_cast %208 : vector<16x16x32xf32> to vector<256x32xf32>
    %210 = vector.extract_strided_slice %197 {offsets = [2, 0, 0], sizes = [16, 16, 32], strides = [1, 1, 1]} : vector<18x18x32xf32> to vector<16x16x32xf32>
    %211 = vector.shape_cast %210 : vector<16x16x32xf32> to vector<256x32xf32>
    %212 = vector.extract_strided_slice %197 {offsets = [2, 1, 0], sizes = [16, 16, 32], strides = [1, 1, 1]} : vector<18x18x32xf32> to vector<16x16x32xf32>
    %213 = vector.shape_cast %212 : vector<16x16x32xf32> to vector<256x32xf32>
    %214 = vector.extract_strided_slice %197 {offsets = [2, 2, 0], sizes = [16, 16, 32], strides = [1, 1, 1]} : vector<18x18x32xf32> to vector<16x16x32xf32>
    %215 = vector.shape_cast %214 : vector<16x16x32xf32> to vector<256x32xf32>
    %216 = tpu.concatenate %199, %201, %203, %205, %207, %209, %211, %213, %215 in 1 : vector<256x32xf32>, vector<256x32xf32>, vector<256x32xf32>, vector<256x32xf32>, vector<256x32xf32>, vector<256x32xf32>, vector<256x32xf32>, vector<256x32xf32>, vector<256x32xf32> -> vector<256x288xf32>
    %217 = arith.truncf %216 : vector<256x288xf32> to vector<256x288xbf16>
    %cst_54 = arith.constant dense<0.000000e+00> : vector<256x32xf32>
    %218 = tpu.matmul %217, %192, %cst_54 {dimension_numbers = #tpu.dot_dimension_numbers<[1], [0], [0], [1], [0, 0, 1, 1], [], []>} : vector<256x288xbf16>, vector<288x32xbf16>, vector<256x32xf32> -> vector<256x32xf32>
    %219 = vector.broadcast %193 : vector<1x32xf32> to vector<256x32xf32>
    %220 = arith.addf %218, %219 : vector<256x32xf32>
    %cst_55 = arith.constant 0.000000e+00 : f32
    %221 = vector.broadcast %cst_55 : f32 to vector<256x32xf32>
    %222 = arith.maximumf %220, %221 : vector<256x32xf32>
    %223 = vector.shape_cast %222 : vector<256x32xf32> to vector<16x16x32xf32>
    %c0_56 = arith.constant 0 : index
    %c0_57 = arith.constant 0 : index
    %224 = vector.load %arg16[%c0_56, %c0_57] : memref<3x288xbf16, #tpu.memory_space<vmem>>, vector<3x288xbf16>
    %c0_58 = arith.constant 0 : index
    %c0_59 = arith.constant 0 : index
    %225 = vector.load %arg17[%c0_58, %c0_59] : memref<3x1xf32, #tpu.memory_space<vmem>>, vector<3x1xf32>
    %cst_60 = arith.constant 0.000000e+00 : f32
    %226 = vector.broadcast %cst_60 : f32 to vector<1x16x32xf32>
    %227 = tpu.concatenate %226, %223, %226 in 0 : vector<1x16x32xf32>, vector<16x16x32xf32>, vector<1x16x32xf32> -> vector<18x16x32xf32>
    %cst_61 = arith.constant 0.000000e+00 : f32
    %228 = vector.broadcast %cst_61 : f32 to vector<18x1x32xf32>
    %229 = tpu.concatenate %228, %227, %228 in 1 : vector<18x1x32xf32>, vector<18x16x32xf32>, vector<18x1x32xf32> -> vector<18x18x32xf32>
    %230 = vector.extract_strided_slice %229 {offsets = [0, 0, 0], sizes = [16, 16, 32], strides = [1, 1, 1]} : vector<18x18x32xf32> to vector<16x16x32xf32>
    %231 = vector.shape_cast %230 : vector<16x16x32xf32> to vector<256x32xf32>
    %232 = vector.extract_strided_slice %229 {offsets = [0, 1, 0], sizes = [16, 16, 32], strides = [1, 1, 1]} : vector<18x18x32xf32> to vector<16x16x32xf32>
    %233 = vector.shape_cast %232 : vector<16x16x32xf32> to vector<256x32xf32>
    %234 = vector.extract_strided_slice %229 {offsets = [0, 2, 0], sizes = [16, 16, 32], strides = [1, 1, 1]} : vector<18x18x32xf32> to vector<16x16x32xf32>
    %235 = vector.shape_cast %234 : vector<16x16x32xf32> to vector<256x32xf32>
    %236 = vector.extract_strided_slice %229 {offsets = [1, 0, 0], sizes = [16, 16, 32], strides = [1, 1, 1]} : vector<18x18x32xf32> to vector<16x16x32xf32>
    %237 = vector.shape_cast %236 : vector<16x16x32xf32> to vector<256x32xf32>
    %238 = vector.extract_strided_slice %229 {offsets = [1, 1, 0], sizes = [16, 16, 32], strides = [1, 1, 1]} : vector<18x18x32xf32> to vector<16x16x32xf32>
    %239 = vector.shape_cast %238 : vector<16x16x32xf32> to vector<256x32xf32>
    %240 = vector.extract_strided_slice %229 {offsets = [1, 2, 0], sizes = [16, 16, 32], strides = [1, 1, 1]} : vector<18x18x32xf32> to vector<16x16x32xf32>
    %241 = vector.shape_cast %240 : vector<16x16x32xf32> to vector<256x32xf32>
    %242 = vector.extract_strided_slice %229 {offsets = [2, 0, 0], sizes = [16, 16, 32], strides = [1, 1, 1]} : vector<18x18x32xf32> to vector<16x16x32xf32>
    %243 = vector.shape_cast %242 : vector<16x16x32xf32> to vector<256x32xf32>
    %244 = vector.extract_strided_slice %229 {offsets = [2, 1, 0], sizes = [16, 16, 32], strides = [1, 1, 1]} : vector<18x18x32xf32> to vector<16x16x32xf32>
    %245 = vector.shape_cast %244 : vector<16x16x32xf32> to vector<256x32xf32>
    %246 = vector.extract_strided_slice %229 {offsets = [2, 2, 0], sizes = [16, 16, 32], strides = [1, 1, 1]} : vector<18x18x32xf32> to vector<16x16x32xf32>
    %247 = vector.shape_cast %246 : vector<16x16x32xf32> to vector<256x32xf32>
    %248 = tpu.concatenate %231, %233, %235, %237, %239, %241, %243, %245, %247 in 1 : vector<256x32xf32>, vector<256x32xf32>, vector<256x32xf32>, vector<256x32xf32>, vector<256x32xf32>, vector<256x32xf32>, vector<256x32xf32>, vector<256x32xf32>, vector<256x32xf32> -> vector<256x288xf32>
    %249 = arith.truncf %248 : vector<256x288xf32> to vector<256x288xbf16>
    %cst_62 = arith.constant dense<0.000000e+00> : vector<3x256xf32>
    %250 = tpu.matmul %224, %249, %cst_62 {dimension_numbers = #tpu.dot_dimension_numbers<[1], [1], [0], [0], [0, 0, 1, 0], [], []>} : vector<3x288xbf16>, vector<256x288xbf16>, vector<3x256xf32> -> vector<3x256xf32>
    %251 = vector.broadcast %225 : vector<3x1xf32> to vector<3x256xf32>
    %252 = arith.addf %250, %251 : vector<3x256xf32>
    %253 = math.tanh %252 : vector<3x256xf32>
    %c0_63 = arith.constant 0 : index
    %c0_64 = arith.constant 0 : index
    %c0_65 = arith.constant 0 : index
    %254 = vector.load %arg18[%c0_63, %c0_64, %c0_65] : memref<1x3x256xf32, #tpu.memory_space<vmem>>, vector<1x3x256xf32>
    %255 = vector.shape_cast %254 : vector<1x3x256xf32> to vector<3x256xf32>
    %256 = vector.shape_cast %253 : vector<3x256xf32> to vector<1x3x256xf32>
    tpu.vector_store %arg18[%c0_63, %c0_64, %c0_65], %256 {strides = array<i32>} : memref<1x3x256xf32, #tpu.memory_space<vmem>>, vector<1x3x256xf32>,
    return
  }
  func.func @transform_0(%arg0: i32) -> (i32, i32, i32, i32) {
    %c0_i32 = arith.constant 0 : i32
    %c0_i32_0 = arith.constant 0 : i32
    %c0_i32_1 = arith.constant 0 : i32
    %c0_i32_2 = arith.constant 0 : i32
    return %arg0, %c0_i32, %c0_i32_0, %c0_i32_1 : i32, i32, i32, i32
  }
  func.func @transform_1(%arg0: i32) -> (i32, i32) {
    %c0_i32 = arith.constant 0 : i32
    %c0_i32_0 = arith.constant 0 : i32
    %c0_i32_1 = arith.constant 0 : i32
    return %c0_i32, %c0_i32_0 : i32, i32
  }
  func.func @transform_2(%arg0: i32) -> (i32, i32) {
    %c0_i32 = arith.constant 0 : i32
    %c0_i32_0 = arith.constant 0 : i32
    %c0_i32_1 = arith.constant 0 : i32
    return %c0_i32, %c0_i32_0 : i32, i32
  }
  func.func @transform_3(%arg0: i32) -> (i32, i32) {
    %c0_i32 = arith.constant 0 : i32
    %c0_i32_0 = arith.constant 0 : i32
    %c0_i32_1 = arith.constant 0 : i32
    return %c0_i32, %c0_i32_0 : i32, i32
  }
  func.func @transform_4(%arg0: i32) -> (i32, i32) {
    %c0_i32 = arith.constant 0 : i32
    %c0_i32_0 = arith.constant 0 : i32
    %c0_i32_1 = arith.constant 0 : i32
    return %c0_i32, %c0_i32_0 : i32, i32
  }
  func.func @transform_5(%arg0: i32) -> (i32, i32) {
    %c0_i32 = arith.constant 0 : i32
    %c0_i32_0 = arith.constant 0 : i32
    %c0_i32_1 = arith.constant 0 : i32
    return %c0_i32, %c0_i32_0 : i32, i32
  }
  func.func @transform_6(%arg0: i32) -> (i32, i32) {
    %c0_i32 = arith.constant 0 : i32
    %c0_i32_0 = arith.constant 0 : i32
    %c0_i32_1 = arith.constant 0 : i32
    return %c0_i32, %c0_i32_0 : i32, i32
  }
  func.func @transform_7(%arg0: i32) -> (i32, i32) {
    %c0_i32 = arith.constant 0 : i32
    %c0_i32_0 = arith.constant 0 : i32
    %c0_i32_1 = arith.constant 0 : i32
    return %c0_i32, %c0_i32_0 : i32, i32
  }
  func.func @transform_8(%arg0: i32) -> (i32, i32) {
    %c0_i32 = arith.constant 0 : i32
    %c0_i32_0 = arith.constant 0 : i32
    %c0_i32_1 = arith.constant 0 : i32
    return %c0_i32, %c0_i32_0 : i32, i32
  }
  func.func @transform_9(%arg0: i32) -> (i32, i32) {
    %c0_i32 = arith.constant 0 : i32
    %c0_i32_0 = arith.constant 0 : i32
    %c0_i32_1 = arith.constant 0 : i32
    return %c0_i32, %c0_i32_0 : i32, i32
  }
  func.func @transform_10(%arg0: i32) -> (i32, i32) {
    %c0_i32 = arith.constant 0 : i32
    %c0_i32_0 = arith.constant 0 : i32
    %c0_i32_1 = arith.constant 0 : i32
    return %c0_i32, %c0_i32_0 : i32, i32
  }
  func.func @transform_11(%arg0: i32) -> (i32, i32) {
    %c0_i32 = arith.constant 0 : i32
    %c0_i32_0 = arith.constant 0 : i32
    %c0_i32_1 = arith.constant 0 : i32
    return %c0_i32, %c0_i32_0 : i32, i32
  }
  func.func @transform_12(%arg0: i32) -> (i32, i32) {
    %c0_i32 = arith.constant 0 : i32
    %c0_i32_0 = arith.constant 0 : i32
    %c0_i32_1 = arith.constant 0 : i32
    return %c0_i32, %c0_i32_0 : i32, i32
  }
  func.func @transform_13(%arg0: i32) -> (i32, i32) {
    %c0_i32 = arith.constant 0 : i32
    %c0_i32_0 = arith.constant 0 : i32
    %c0_i32_1 = arith.constant 0 : i32
    return %c0_i32, %c0_i32_0 : i32, i32
  }
  func.func @transform_14(%arg0: i32) -> (i32, i32) {
    %c0_i32 = arith.constant 0 : i32
    %c0_i32_0 = arith.constant 0 : i32
    %c0_i32_1 = arith.constant 0 : i32
    return %c0_i32, %c0_i32_0 : i32, i32
  }
  func.func @transform_15(%arg0: i32) -> (i32, i32) {
    %c0_i32 = arith.constant 0 : i32
    %c0_i32_0 = arith.constant 0 : i32
    %c0_i32_1 = arith.constant 0 : i32
    return %c0_i32, %c0_i32_0 : i32, i32
  }
  func.func @transform_16(%arg0: i32) -> (i32, i32) {
    %c0_i32 = arith.constant 0 : i32
    %c0_i32_0 = arith.constant 0 : i32
    %c0_i32_1 = arith.constant 0 : i32
    return %c0_i32, %c0_i32_0 : i32, i32
  }
  func.func @transform_17(%arg0: i32) -> (i32, i32, i32) {
    %c0_i32 = arith.constant 0 : i32
    %c0_i32_0 = arith.constant 0 : i32
    %c0_i32_1 = arith.constant 0 : i32
    return %arg0, %c0_i32, %c0_i32_0 : i32, i32, i32
  }
}

</mosaic_0001>

<llo_original>
// kernel: tile.8
$region0: #{tile.8}
  #allocation0 [shape = 's32[1]{0}', space=sflag, size = 0x4, scoped, tag = 'scoped memory for tile.8']
  %s0 = inlined_call_operand.vmem [shape: f32[32], index: 0, kind: input, shape index: {}]
  %s1 = inlined_call_operand.vmem [shape: f32[4,32], index: 1, kind: output, shape index: {}]
  // Predicated region
  $region2: #{tile.8} parent=0 // pred_check
    _
  $region3: #{tile.8} parent=0 // pred_check_branch
    %3 = sbr.rel (0) target = $region5
  $region4: #{tile.8} parent=0 // pred_region
    _
  $region5: #{tile.8} parent=0 // pred_fallthru
    _
  %v4 = vld [vmem:[%s0] ss:$0 sm:$0xff]
  %5 = vst [vmem:[%s1] sm:$0xf] %v4

// kernel: tile.9
$region0: #{tile.9}
  %s0 = inlined_call_operand.vmem [shape: f32[4,32], index: 0, kind: input, shape index: {}]
  %s1 = inlined_call_operand.vmem [shape: f32[1,128], index: 1, kind: output, shape index: {}]
  $region1: #{tile.9} parent=0
    #allocation0 [shape = 'u8[4096]{0}', space=vmem, size = 0x1000, scoped, tag = 'scoped mem for output reshape']
    #allocation1 [shape = 'u8[4096]{0}', space=vmem, size = 0x1000, scoped, tag = 'scoped mem for input reshape']
    %s3 = sshllo.u32 0, 4
    %v4 = vld [vmem:[%s0] sm:%s3]
    %5 = vst [vmem:[#allocation1] sm:%s3] %v4
    %v6 = vld [vmem:[#allocation1] sm:$0x1]
    %vm7 = vcmask 261120
    %8 = vst.msk [vmem:[#allocation0] sm:$0x1] %vm7, %v6
    %s9 = scalar_lea.vmem [#allocation1], 3
    %v10 = vld [vmem:[%s9] sm:$0x1]
    %11 = vrot.lane.b32.xlu0 %v10, 96
    %v12 = vpop.permute.xlu0 %11
    %vm13 = vcmask 1048320
    %14 = vst.msk [vmem:[#allocation0] sm:$0x1] %vm13, %v12
    %s15 = scalar_lea.vmem [#allocation1], 2
    %v16 = vld [vmem:[%s15] sm:$0x1]
    %17 = vrot.lane.b32.xlu0 %v16, 64
    %v18 = vpop.permute.xlu0 %17
    %vm19 = vcmask 785920
    %20 = vst.msk [vmem:[#allocation0] sm:$0x1] %vm19, %v18
    %s21 = scalar_lea.vmem [#allocation1], 1
    %v22 = vld [vmem:[%s21] sm:$0x1]
    %23 = vrot.lane.b32.xlu0 %v22, 32
    %v24 = vpop.permute.xlu0 %23
    %vm25 = vcmask 523520
    %26 = vst.msk [vmem:[#allocation0] sm:$0x1] %vm25, %v24
    %s28 = sshllo.u32 0, 1
    %v30 = vld [vmem:[#allocation0] sm:%s28]
    %s31 = sshllo.u32 0, 1
    %32 = vst [vmem:[%s1] sm:%s31] %v30

// kernel: st_generator_forward.1
$region0: #{st_generator_forward.1}
  #allocation0 [shape = 'u32[]', space=smem, size = 0x4, offset = 0x4, fixed_abs, tag = 'smem constant byte address 0x4 - core index']
  #allocation1 [shape = 'u32[144,128]{1,0:T(1,128)}', space=vmem, size = 0x12000, scoped, tag = 'internal scratch']
  %s0 = inlined_call_operand.vmem [shape: f32[2,16,16,6], index: 0, kind: input, shape index: {}]
  %s1 = inlined_call_operand.vmem [shape: bf16[54,32], index: 1, kind: input, shape index: {}]
  %s2 = inlined_call_operand.vmem [shape: f32[1,32], index: 2, kind: input, shape index: {}]
  %s3 = inlined_call_operand.vmem [shape: bf16[288,32], index: 3, kind: input, shape index: {}]
  %s4 = inlined_call_operand.vmem [shape: f32[1,32], index: 4, kind: input, shape index: {}]
  %s5 = inlined_call_operand.vmem [shape: bf16[288,64], index: 5, kind: input, shape index: {}]
  %s6 = inlined_call_operand.vmem [shape: f32[1,64], index: 6, kind: input, shape index: {}]
  %s7 = inlined_call_operand.vmem [shape: bf16[576,64], index: 7, kind: input, shape index: {}]
  %s8 = inlined_call_operand.vmem [shape: f32[1,64], index: 8, kind: input, shape index: {}]
  %s9 = inlined_call_operand.vmem [shape: bf16[64,80], index: 9, kind: input, shape index: {}]
  %s10 = inlined_call_operand.vmem [shape: f32[1,80], index: 10, kind: input, shape index: {}]
  %s11 = inlined_call_operand.vmem [shape: bf16[64,128], index: 11, kind: input, shape index: {}]
  %s12 = inlined_call_operand.vmem [shape: f32[1,128], index: 12, kind: input, shape index: {}]
  %s13 = inlined_call_operand.vmem [shape: bf16[288,32], index: 13, kind: input, shape index: {}]
  %s14 = inlined_call_operand.vmem [shape: f32[1,32], index: 14, kind: input, shape index: {}]
  %s15 = inlined_call_operand.vmem [shape: bf16[3,288], index: 15, kind: input, shape index: {}]
  %s16 = inlined_call_operand.vmem [shape: f32[3,1], index: 16, kind: input, shape index: {}]
  %s17 = inlined_call_operand.vmem [shape: f32[2,3,256], index: 17, kind: output, shape index: {}]
  %s18 = sld [smem:[#allocation0]]
  $region101: #{st_generator_forward.1} parent=0
    _
  %s20 = ssub.s32 1, %s18
  %s21 = scalar_select 0, %s20, %s18
  loop: start=0, step=1, limit=4
  $region2: #{st_generator_forward.1} parent=0 // loop_pre_header
    _
  $region3: #{st_generator_forward.1} parent=0 // loop_header
    %s23 = sphi 0, %s27
    %p24 = scmp.ge.s32.totalorder %s23, 4
    %s33 = sphi 0, %s35
    %s36 = sphi 0, %s33
    %s37 = sphi 0, %s36
    %s53 = sphi 0, %s37
    %s57 = sphi 0, %s57
    %s59 = sphi 0, %s57
    %s60 = sphi 0, %s59
    %s74 = sphi 0, %s60
    %s78 = sphi 0, %s78
    %s80 = sphi 0, %s78
    %s81 = sphi 0, %s80
    %s95 = sphi 0, %s81
    %s99 = sphi 0, %s99
    %s101 = sphi 0, %s99
    %s102 = sphi 0, %s101
    %s116 = sphi 0, %s102
    %s120 = sphi 0, %s120
    %s122 = sphi 0, %s120
    %s123 = sphi 0, %s122
    %s137 = sphi 0, %s123
    %s141 = sphi 0, %s141
    %s143 = sphi 0, %s141
    %s144 = sphi 0, %s143
    %s158 = sphi 0, %s144
    %s162 = sphi 0, %s162
    %s164 = sphi 0, %s162
    %s165 = sphi 0, %s164
    %s179 = sphi 0, %s165
    %s183 = sphi 0, %s183
    %s185 = sphi 0, %s183
    %s186 = sphi 0, %s185
    %s200 = sphi 0, %s186
    %s204 = sphi 0, %s204
    %s206 = sphi 0, %s204
    %s207 = sphi 0, %s206
    %s221 = sphi 0, %s207
    %s225 = sphi 0, %s225
    %s227 = sphi 0, %s225
    %s228 = sphi 0, %s227
    %s242 = sphi 0, %s228
    %s246 = sphi 0, %s246
    %s248 = sphi 0, %s246
    %s249 = sphi 0, %s248
    %s263 = sphi 0, %s249
    %s267 = sphi 0, %s267
    %s269 = sphi 0, %s267
    %s270 = sphi 0, %s269
    %s284 = sphi 0, %s270
    %s288 = sphi 0, %s288
    %s290 = sphi 0, %s288
    %s291 = sphi 0, %s290
    %s305 = sphi 0, %s291
    %s309 = sphi 0, %s309
    %s311 = sphi 0, %s309
    %s312 = sphi 0, %s311
    %s326 = sphi 0, %s312
    %s330 = sphi 0, %s330
    %s332 = sphi 0, %s330
    %s333 = sphi 0, %s332
    %s347 = sphi 0, %s333
    %s351 = sphi 0, %s351
    %s353 = sphi 0, %s351
    %s354 = sphi 0, %s353
    %s368 = sphi 0, %s354
    %s372 = sphi 0, %s372
    %s374 = sphi 0, %s372
    %s375 = sphi 0, %s374
    %s389 = sphi 0, %s375
    %s395 = sphi 0, %s397
    %s398 = sphi 0, %s395
    %s399 = sphi 0, %s398
    %s415 = sphi 0, %s399
  $region4: #{st_generator_forward.1} parent=0 // loop_header_branch
    %26 = sbr.rel (%p24) target = $region8
  $region5: #{st_generator_forward.1} parent=0 // loop_body
    %s28 = ssub.s32 %s23, 1
    %s29 = ssub.s32 %s23, 2
    %s30 = sadd.s32 %s23, 1
    %s31 = ssub.s32 %s23, %s30
    %p32 = scmp.eq.s32.totalorder %s31, 0
    %s34 = sadd.s32 %s33, 1
    %s35 = scalar_select %p32, %s33, %s34
    %p38 = pneg %p32
    %p39 = scmp.eq.s32.totalorder %s23, 1
    %p40 = por %p38, %p39
    %p41 = scmp.ne.s32.totalorder %s33, %s36
    %p42 = scmp.eq.s32.totalorder %s23, 0
    %p43 = por %p41, %p42
    %p44 = scmp.ne.s32.totalorder %s33, %s36
    %p45 = scmp.eq.s32.totalorder %s28, 1
    %p46 = por %p44, %p45
    %p47 = scmp.ne.s32.totalorder %s36, %s37
    %p48 = scmp.eq.s32.totalorder %s28, 0
    %p49 = por %p47, %p48
    %p50 = scmp.ne.s32.totalorder %s36, %s37
    %p51 = scmp.eq.s32.totalorder %s29, 1
    %p52 = por %p50, %p51
    %p54 = scmp.ne.s32.totalorder %s37, %s53
    %p55 = scmp.eq.s32.totalorder %s29, 0
    %p56 = por %p54, %p55
    %s58 = sadd.s32 %s57, 1
    %p61 = scmp.eq.s32.totalorder %s23, 1
    %p62 = scmp.ne.s32.totalorder %s57, %s59
    %p63 = scmp.eq.s32.totalorder %s23, 0
    %p64 = por %p62, %p63
    %p65 = scmp.ne.s32.totalorder %s57, %s59
    %p66 = scmp.eq.s32.totalorder %s28, 1
    %p67 = por %p65, %p66
    %p68 = scmp.ne.s32.totalorder %s59, %s60
    %p69 = scmp.eq.s32.totalorder %s28, 0
    %p70 = por %p68, %p69
    %p71 = scmp.ne.s32.totalorder %s59, %s60
    %p72 = scmp.eq.s32.totalorder %s29, 1
    %p73 = por %p71, %p72
    %p75 = scmp.ne.s32.totalorder %s60, %s74
    %p76 = scmp.eq.s32.totalorder %s29, 0
    %p77 = por %p75, %p76
    %s79 = sadd.s32 %s78, 1
    %p82 = scmp.eq.s32.totalorder %s23, 1
    %p83 = scmp.ne.s32.totalorder %s78, %s80
    %p84 = scmp.eq.s32.totalorder %s23, 0
    %p85 = por %p83, %p84
    %p86 = scmp.ne.s32.totalorder %s78, %s80
    %p87 = scmp.eq.s32.totalorder %s28, 1
    %p88 = por %p86, %p87
    %p89 = scmp.ne.s32.totalorder %s80, %s81
    %p90 = scmp.eq.s32.totalorder %s28, 0
    %p91 = por %p89, %p90
    %p92 = scmp.ne.s32.totalorder %s80, %s81
    %p93 = scmp.eq.s32.totalorder %s29, 1
    %p94 = por %p92, %p93
    %p96 = scmp.ne.s32.totalorder %s81, %s95
    %p97 = scmp.eq.s32.totalorder %s29, 0
    %p98 = por %p96, %p97
    %s100 = sadd.s32 %s99, 1
    %p103 = scmp.eq.s32.totalorder %s23, 1
    %p104 = scmp.ne.s32.totalorder %s99, %s101
    %p105 = scmp.eq.s32.totalorder %s23, 0
    %p106 = por %p104, %p105
    %p107 = scmp.ne.s32.totalorder %s99, %s101
    %p108 = scmp.eq.s32.totalorder %s28, 1
    %p109 = por %p107, %p108
    %p110 = scmp.ne.s32.totalorder %s101, %s102
    %p111 = scmp.eq.s32.totalorder %s28, 0
    %p112 = por %p110, %p111
    %p113 = scmp.ne.s32.totalorder %s101, %s102
    %p114 = scmp.eq.s32.totalorder %s29, 1
    %p115 = por %p113, %p114
    %p117 = scmp.ne.s32.totalorder %s102, %s116
    %p118 = scmp.eq.s32.totalorder %s29, 0
    %p119 = por %p117, %p118
    %s121 = sadd.s32 %s120, 1
    %p124 = scmp.eq.s32.totalorder %s23, 1
    %p125 = scmp.ne.s32.totalorder %s120, %s122
    %p126 = scmp.eq.s32.totalorder %s23, 0
    %p127 = por %p125, %p126
    %p128 = scmp.ne.s32.totalorder %s120, %s122
    %p129 = scmp.eq.s32.totalorder %s28, 1
    %p130 = por %p128, %p129
    %p131 = scmp.ne.s32.totalorder %s122, %s123
    %p132 = scmp.eq.s32.totalorder %s28, 0
    %p133 = por %p131, %p132
    %p134 = scmp.ne.s32.totalorder %s122, %s123
    %p135 = scmp.eq.s32.totalorder %s29, 1
    %p136 = por %p134, %p135
    %p138 = scmp.ne.s32.totalorder %s123, %s137
    %p139 = scmp.eq.s32.totalorder %s29, 0
    %p140 = por %p138, %p139
    %s142 = sadd.s32 %s141, 1
    %p145 = scmp.eq.s32.totalorder %s23, 1
    %p146 = scmp.ne.s32.totalorder %s141, %s143
    %p147 = scmp.eq.s32.totalorder %s23, 0
    %p148 = por %p146, %p147
    %p149 = scmp.ne.s32.totalorder %s141, %s143
    %p150 = scmp.eq.s32.totalorder %s28, 1
    %p151 = por %p149, %p150
    %p152 = scmp.ne.s32.totalorder %s143, %s144
    %p153 = scmp.eq.s32.totalorder %s28, 0
    %p154 = por %p152, %p153
    %p155 = scmp.ne.s32.totalorder %s143, %s144
    %p156 = scmp.eq.s32.totalorder %s29, 1
    %p157 = por %p155, %p156
    %p159 = scmp.ne.s32.totalorder %s144, %s158
    %p160 = scmp.eq.s32.totalorder %s29, 0
    %p161 = por %p159, %p160
    %s163 = sadd.s32 %s162, 1
    %p166 = scmp.eq.s32.totalorder %s23, 1
    %p167 = scmp.ne.s32.totalorder %s162, %s164
    %p168 = scmp.eq.s32.totalorder %s23, 0
    %p169 = por %p167, %p168
    %p170 = scmp.ne.s32.totalorder %s162, %s164
    %p171 = scmp.eq.s32.totalorder %s28, 1
    %p172 = por %p170, %p171
    %p173 = scmp.ne.s32.totalorder %s164, %s165
    %p174 = scmp.eq.s32.totalorder %s28, 0
    %p175 = por %p173, %p174
    %p176 = scmp.ne.s32.totalorder %s164, %s165
    %p177 = scmp.eq.s32.totalorder %s29, 1
    %p178 = por %p176, %p177
    %p180 = scmp.ne.s32.totalorder %s165, %s179
    %p181 = scmp.eq.s32.totalorder %s29, 0
    %p182 = por %p180, %p181
    %s184 = sadd.s32 %s183, 1
    %p187 = scmp.eq.s32.totalorder %s23, 1
    %p188 = scmp.ne.s32.totalorder %s183, %s185
    %p189 = scmp.eq.s32.totalorder %s23, 0
    %p190 = por %p188, %p189
    %p191 = scmp.ne.s32.totalorder %s183, %s185
    %p192 = scmp.eq.s32.totalorder %s28, 1
    %p193 = por %p191, %p192
    %p194 = scmp.ne.s32.totalorder %s185, %s186
    %p195 = scmp.eq.s32.totalorder %s28, 0
    %p196 = por %p194, %p195
    %p197 = scmp.ne.s32.totalorder %s185, %s186
    %p198 = scmp.eq.s32.totalorder %s29, 1
    %p199 = por %p197, %p198
    %p201 = scmp.ne.s32.totalorder %s186, %s200
    %p202 = scmp.eq.s32.totalorder %s29, 0
    %p203 = por %p201, %p202
    %s205 = sadd.s32 %s204, 1
    %p208 = scmp.eq.s32.totalorder %s23, 1
    %p209 = scmp.ne.s32.totalorder %s204, %s206
    %p210 = scmp.eq.s32.totalorder %s23, 0
    %p211 = por %p209, %p210
    %p212 = scmp.ne.s32.totalorder %s204, %s206
    %p213 = scmp.eq.s32.totalorder %s28, 1
    %p214 = por %p212, %p213
    %p215 = scmp.ne.s32.totalorder %s206, %s207
    %p216 = scmp.eq.s32.totalorder %s28, 0
    %p217 = por %p215, %p216
    %p218 = scmp.ne.s32.totalorder %s206, %s207
    %p219 = scmp.eq.s32.totalorder %s29, 1
    %p220 = por %p218, %p219
    %p222 = scmp.ne.s32.totalorder %s207, %s221
    %p223 = scmp.eq.s32.totalorder %s29, 0
    %p224 = por %p222, %p223
    %s226 = sadd.s32 %s225, 1
    %p229 = scmp.eq.s32.totalorder %s23, 1
    %p230 = scmp.ne.s32.totalorder %s225, %s227
    %p231 = scmp.eq.s32.totalorder %s23, 0
    %p232 = por %p230, %p231
    %p233 = scmp.ne.s32.totalorder %s225, %s227
    %p234 = scmp.eq.s32.totalorder %s28, 1
    %p235 = por %p233, %p234
    %p236 = scmp.ne.s32.totalorder %s227, %s228
    %p237 = scmp.eq.s32.totalorder %s28, 0
    %p238 = por %p236, %p237
    %p239 = scmp.ne.s32.totalorder %s227, %s228
    %p240 = scmp.eq.s32.totalorder %s29, 1
    %p241 = por %p239, %p240
    %p243 = scmp.ne.s32.totalorder %s228, %s242
    %p244 = scmp.eq.s32.totalorder %s29, 0
    %p245 = por %p243, %p244
    %s247 = sadd.s32 %s246, 1
    %p250 = scmp.eq.s32.totalorder %s23, 1
    %p251 = scmp.ne.s32.totalorder %s246, %s248
    %p252 = scmp.eq.s32.totalorder %s23, 0
    %p253 = por %p251, %p252
    %p254 = scmp.ne.s32.totalorder %s246, %s248
    %p255 = scmp.eq.s32.totalorder %s28, 1
    %p256 = por %p254, %p255
    %p257 = scmp.ne.s32.totalorder %s248, %s249
    %p258 = scmp.eq.s32.totalorder %s28, 0
    %p259 = por %p257, %p258
    %p260 = scmp.ne.s32.totalorder %s248, %s249
    %p261 = scmp.eq.s32.totalorder %s29, 1
    %p262 = por %p260, %p261
    %p264 = scmp.ne.s32.totalorder %s249, %s263
    %p265 = scmp.eq.s32.totalorder %s29, 0
    %p266 = por %p264, %p265
    %s268 = sadd.s32 %s267, 1
    %p271 = scmp.eq.s32.totalorder %s23, 1
    %p272 = scmp.ne.s32.totalorder %s267, %s269
    %p273 = scmp.eq.s32.totalorder %s23, 0
    %p274 = por %p272, %p273
    %p275 = scmp.ne.s32.totalorder %s267, %s269
    %p276 = scmp.eq.s32.totalorder %s28, 1
    %p277 = por %p275, %p276
    %p278 = scmp.ne.s32.totalorder %s269, %s270
    %p279 = scmp.eq.s32.totalorder %s28, 0
    %p280 = por %p278, %p279
    %p281 = scmp.ne.s32.totalorder %s269, %s270
    %p282 = scmp.eq.s32.totalorder %s29, 1
    %p283 = por %p281, %p282
    %p285 = scmp.ne.s32.totalorder %s270, %s284
    %p286 = scmp.eq.s32.totalorder %s29, 0
    %p287 = por %p285, %p286
    %s289 = sadd.s32 %s288, 1
    %p292 = scmp.eq.s32.totalorder %s23, 1
    %p293 = scmp.ne.s32.totalorder %s288, %s290
    %p294 = scmp.eq.s32.totalorder %s23, 0
    %p295 = por %p293, %p294
    %p296 = scmp.ne.s32.totalorder %s288, %s290
    %p297 = scmp.eq.s32.totalorder %s28, 1
    %p298 = por %p296, %p297
    %p299 = scmp.ne.s32.totalorder %s290, %s291
    %p300 = scmp.eq.s32.totalorder %s28, 0
    %p301 = por %p299, %p300
    %p302 = scmp.ne.s32.totalorder %s290, %s291
    %p303 = scmp.eq.s32.totalorder %s29, 1
    %p304 = por %p302, %p303
    %p306 = scmp.ne.s32.totalorder %s291, %s305
    %p307 = scmp.eq.s32.totalorder %s29, 0
    %p308 = por %p306, %p307
    %s310 = sadd.s32 %s309, 1
    %p313 = scmp.eq.s32.totalorder %s23, 1
    %p314 = scmp.ne.s32.totalorder %s309, %s311
    %p315 = scmp.eq.s32.totalorder %s23, 0
    %p316 = por %p314, %p315
    %p317 = scmp.ne.s32.totalorder %s309, %s311
    %p318 = scmp.eq.s32.totalorder %s28, 1
    %p319 = por %p317, %p318
    %p320 = scmp.ne.s32.totalorder %s311, %s312
    %p321 = scmp.eq.s32.totalorder %s28, 0
    %p322 = por %p320, %p321
    %p323 = scmp.ne.s32.totalorder %s311, %s312
    %p324 = scmp.eq.s32.totalorder %s29, 1
    %p325 = por %p323, %p324
    %p327 = scmp.ne.s32.totalorder %s312, %s326
    %p328 = scmp.eq.s32.totalorder %s29, 0
    %p329 = por %p327, %p328
    %s331 = sadd.s32 %s330, 1
    %p334 = scmp.eq.s32.totalorder %s23, 1
    %p335 = scmp.ne.s32.totalorder %s330, %s332
    %p336 = scmp.eq.s32.totalorder %s23, 0
    %p337 = por %p335, %p336
    %p338 = scmp.ne.s32.totalorder %s330, %s332
    %p339 = scmp.eq.s32.totalorder %s28, 1
    %p340 = por %p338, %p339
    %p341 = scmp.ne.s32.totalorder %s332, %s333
    %p342 = scmp.eq.s32.totalorder %s28, 0
    %p343 = por %p341, %p342
    %p344 = scmp.ne.s32.totalorder %s332, %s333
    %p345 = scmp.eq.s32.totalorder %s29, 1
    %p346 = por %p344, %p345
    %p348 = scmp.ne.s32.totalorder %s333, %s347
    %p349 = scmp.eq.s32.totalorder %s29, 0
    %p350 = por %p348, %p349
    %s352 = sadd.s32 %s351, 1
    %p355 = scmp.eq.s32.totalorder %s23, 1
    %p356 = scmp.ne.s32.totalorder %s351, %s353
    %p357 = scmp.eq.s32.totalorder %s23, 0
    %p358 = por %p356, %p357
    %p359 = scmp.ne.s32.totalorder %s351, %s353
    %p360 = scmp.eq.s32.totalorder %s28, 1
    %p361 = por %p359, %p360
    %p362 = scmp.ne.s32.totalorder %s353, %s354
    %p363 = scmp.eq.s32.totalorder %s28, 0
    %p364 = por %p362, %p363
    %p365 = scmp.ne.s32.totalorder %s353, %s354
    %p366 = scmp.eq.s32.totalorder %s29, 1
    %p367 = por %p365, %p366
    %p369 = scmp.ne.s32.totalorder %s354, %s368
    %p370 = scmp.eq.s32.totalorder %s29, 0
    %p371 = por %p369, %p370
    %s373 = sadd.s32 %s372, 1
    %p376 = scmp.eq.s32.totalorder %s23, 1
    %p377 = scmp.ne.s32.totalorder %s372, %s374
    %p378 = scmp.eq.s32.totalorder %s23, 0
    %p379 = por %p377, %p378
    %p380 = scmp.ne.s32.totalorder %s372, %s374
    %p381 = scmp.eq.s32.totalorder %s28, 1
    %p382 = por %p380, %p381
    %p383 = scmp.ne.s32.totalorder %s374, %s375
    %p384 = scmp.eq.s32.totalorder %s28, 0
    %p385 = por %p383, %p384
    %p386 = scmp.ne.s32.totalorder %s374, %s375
    %p387 = scmp.eq.s32.totalorder %s29, 1
    %p388 = por %p386, %p387
    %p390 = scmp.ne.s32.totalorder %s375, %s389
    %p391 = scmp.eq.s32.totalorder %s29, 0
    %p392 = por %p390, %p391
    %s393 = ssub.s32 %s23, %s30
    %p394 = scmp.eq.s32.totalorder %s393, 0
    %s396 = sadd.s32 %s395, 1
    %s397 = scalar_select %p394, %s395, %s396
    %p400 = pneg %p394
    %p401 = scmp.eq.s32.totalorder %s23, 1
    %p402 = por %p400, %p401
    %p403 = scmp.ne.s32.totalorder %s395, %s398
    %p404 = scmp.eq.s32.totalorder %s23, 0
    %p405 = por %p403, %p404
    %p406 = scmp.ne.s32.totalorder %s395, %s398
    %p407 = scmp.eq.s32.totalorder %s28, 1
    %p408 = por %p406, %p407
    %p409 = scmp.ne.s32.totalorder %s398, %s399
    %p410 = scmp.eq.s32.totalorder %s28, 0
    %p411 = por %p409, %p410
    %p412 = scmp.ne.s32.totalorder %s398, %s399
    %p413 = scmp.eq.s32.totalorder %s29, 1
    %p414 = por %p412, %p413
    %p416 = scmp.ne.s32.totalorder %s399, %s415
    %p417 = scmp.eq.s32.totalorder %s29, 0
    %p418 = por %p416, %p417
    %p419 = scmp.le.s32.totalorder 1, %s23
    %p420 = scmp.lt.s32.totalorder %s23, 3
    %p421 = pnand %p419, %p420
    %p422 = pneg %p421
    // Predicated region
    $region9: #{st_generator_forward.1} parent=5 // pred_check
      _
    $region10: #{st_generator_forward.1} parent=5 // pred_check_branch
      %424 = sbr.rel (%p421) target = $region12
    $region11: #{st_generator_forward.1} parent=5 // pred_region
      %s425 = ssub.s32 %s23, 1
      // Predicated region
      $region13: #{st_generator_forward.1} parent=11 // pred_check
        %p426 = pneg %p70
      $region14: #{st_generator_forward.1} parent=11 // pred_check_branch
        %428 = sbr.rel (%p426) target = $region16
      $region15: #{st_generator_forward.1} parent=11 // pred_region
        _
      $region16: #{st_generator_forward.1} parent=11 // pred_fallthru
        _
      // Predicated region
      $region17: #{st_generator_forward.1} parent=11 // pred_check
        %p429 = pneg %p91
      $region18: #{st_generator_forward.1} parent=11 // pred_check_branch
        %431 = sbr.rel (%p429) target = $region20
      $region19: #{st_generator_forward.1} parent=11 // pred_region
        _
      $region20: #{st_generator_forward.1} parent=11 // pred_fallthru
        _
      // Predicated region
      $region21: #{st_generator_forward.1} parent=11 // pred_check
        %p432 = pneg %p112
      $region22: #{st_generator_forward.1} parent=11 // pred_check_branch
        %434 = sbr.rel (%p432) target = $region24
      $region23: #{st_generator_forward.1} parent=11 // pred_region
        _
      $region24: #{st_generator_forward.1} parent=11 // pred_fallthru
        _
      // Predicated region
      $region25: #{st_generator_forward.1} parent=11 // pred_check
        %p435 = pneg %p133
      $region26: #{st_generator_forward.1} parent=11 // pred_check_branch
        %437 = sbr.rel (%p435) target = $region28
      $region27: #{st_generator_forward.1} parent=11 // pred_region
        _
      $region28: #{st_generator_forward.1} parent=11 // pred_fallthru
        _
      // Predicated region
      $region29: #{st_generator_forward.1} parent=11 // pred_check
        %p438 = pneg %p154
      $region30: #{st_generator_forward.1} parent=11 // pred_check_branch
        %440 = sbr.rel (%p438) target = $region32
      $region31: #{st_generator_forward.1} parent=11 // pred_region
        _
      $region32: #{st_generator_forward.1} parent=11 // pred_fallthru
        _
      // Predicated region
      $region33: #{st_generator_forward.1} parent=11 // pred_check
        %p441 = pneg %p175
      $region34: #{st_generator_forward.1} parent=11 // pred_check_branch
        %443 = sbr.rel (%p441) target = $region36
      $region35: #{st_generator_forward.1} parent=11 // pred_region
        _
      $region36: #{st_generator_forward.1} parent=11 // pred_fallthru
        _
      // Predicated region
      $region37: #{st_generator_forward.1} parent=11 // pred_check
        %p444 = pneg %p196
      $region38: #{st_generator_forward.1} parent=11 // pred_check_branch
        %446 = sbr.rel (%p444) target = $region40
      $region39: #{st_generator_forward.1} parent=11 // pred_region
        _
      $region40: #{st_generator_forward.1} parent=11 // pred_fallthru
        _
      // Predicated region
      $region41: #{st_generator_forward.1} parent=11 // pred_check
        %p447 = pneg %p217
      $region42: #{st_generator_forward.1} parent=11 // pred_check_branch
        %449 = sbr.rel (%p447) target = $region44
      $region43: #{st_generator_forward.1} parent=11 // pred_region
        _
      $region44: #{st_generator_forward.1} parent=11 // pred_fallthru
        _
      // Predicated region
      $region45: #{st_generator_forward.1} parent=11 // pred_check
        %p450 = pneg %p238
      $region46: #{st_generator_forward.1} parent=11 // pred_check_branch
        %452 = sbr.rel (%p450) target = $region48
      $region47: #{st_generator_forward.1} parent=11 // pred_region
        _
      $region48: #{st_generator_forward.1} parent=11 // pred_fallthru
        _
      // Predicated region
      $region49: #{st_generator_forward.1} parent=11 // pred_check
        %p453 = pneg %p259
      $region50: #{st_generator_forward.1} parent=11 // pred_check_branch
        %455 = sbr.rel (%p453) target = $region52
      $region51: #{st_generator_forward.1} parent=11 // pred_region
        _
      $region52: #{st_generator_forward.1} parent=11 // pred_fallthru
        _
      // Predicated region
      $region53: #{st_generator_forward.1} parent=11 // pred_check
        %p456 = pneg %p280
      $region54: #{st_generator_forward.1} parent=11 // pred_check_branch
        %458 = sbr.rel (%p456) target = $region56
      $region55: #{st_generator_forward.1} parent=11 // pred_region
        _
      $region56: #{st_generator_forward.1} parent=11 // pred_fallthru
        _
      // Predicated region
      $region57: #{st_generator_forward.1} parent=11 // pred_check
        %p459 = pneg %p301
      $region58: #{st_generator_forward.1} parent=11 // pred_check_branch
        %461 = sbr.rel (%p459) target = $region60
      $region59: #{st_generator_forward.1} parent=11 // pred_region
        _
      $region60: #{st_generator_forward.1} parent=11 // pred_fallthru
        _
      // Predicated region
      $region61: #{st_generator_forward.1} parent=11 // pred_check
        %p462 = pneg %p322
      $region62: #{st_generator_forward.1} parent=11 // pred_check_branch
        %464 = sbr.rel (%p462) target = $region64
      $region63: #{st_generator_forward.1} parent=11 // pred_region
        _
      $region64: #{st_generator_forward.1} parent=11 // pred_fallthru
        _
      // Predicated region
      $region65: #{st_generator_forward.1} parent=11 // pred_check
        %p465 = pneg %p343
      $region66: #{st_generator_forward.1} parent=11 // pred_check_branch
        %467 = sbr.rel (%p465) target = $region68
      $region67: #{st_generator_forward.1} parent=11 // pred_region
        _
      $region68: #{st_generator_forward.1} parent=11 // pred_fallthru
        _
      // Predicated region
      $region69: #{st_generator_forward.1} parent=11 // pred_check
        %p468 = pneg %p364
      $region70: #{st_generator_forward.1} parent=11 // pred_check_branch
        %470 = sbr.rel (%p468) target = $region72
      $region71: #{st_generator_forward.1} parent=11 // pred_region
        _
      $region72: #{st_generator_forward.1} parent=11 // pred_fallthru
        _
      // Predicated region
      $region73: #{st_generator_forward.1} parent=11 // pred_check
        %p471 = pneg %p385
      $region74: #{st_generator_forward.1} parent=11 // pred_check_branch
        %473 = sbr.rel (%p471) target = $region76
      $region75: #{st_generator_forward.1} parent=11 // pred_region
        _
      $region76: #{st_generator_forward.1} parent=11 // pred_fallthru
        _
    $region12: #{st_generator_forward.1} parent=5 // pred_fallthru
      _
    %p474 = scmp.lt.s32.totalorder %s23, 2
    // Predicated region
    $region77: #{st_generator_forward.1} parent=5 // pred_check
      %p475 = pneg %p474
    $region78: #{st_generator_forward.1} parent=5 // pred_check_branch
      %477 = sbr.rel (%p475) target = $region80
    $region79: #{st_generator_forward.1} parent=5 // pred_region
      // Predicated region
      $region81: #{st_generator_forward.1} parent=79 // pred_check
        %p478 = pneg %p43
      $region82: #{st_generator_forward.1} parent=79 // pred_check_branch
        %480 = sbr.rel (%p478) target = $region84
      $region83: #{st_generator_forward.1} parent=79 // pred_region
        %p481 = scmp.lt.s32.totalorder %s23, 1
        %s482 = scalar_select %p481, %s23, 1
        %s483 = smul.addr %s482, 32
        %s484 = smul.addr %s483, 8
        %s485 = scalar_lea.vmem %s0, %s484
      $region84: #{st_generator_forward.1} parent=79 // pred_fallthru
        _
    $region80: #{st_generator_forward.1} parent=5 // pred_fallthru
      _
    %p486 = scmp.le.s32.totalorder 1, %s23
    %p487 = scmp.lt.s32.totalorder %s23, 3
    %p488 = pnand %p486, %p487
    %p489 = pneg %p488
    // Predicated region
    $region85: #{st_generator_forward.1} parent=5 // pred_check
      _
    $region86: #{st_generator_forward.1} parent=5 // pred_check_branch
      %491 = sbr.rel (%p488) target = $region88
    $region87: #{st_generator_forward.1} parent=5 // pred_region
      %s492 = ssub.s32 %s23, 1
      %p493 = scmp.lt.s32.totalorder %s28, 1
      %s494 = scalar_select %p493, %s28, 1
      %s495 = smul.addr %s494, 32
      %s496 = smul.addr %s495, 8
      %s497 = scalar_lea.vmem %s0, %s496
      %p498 = pneg %p49
      %p499 = pneg %p46
      %p500 = pneg %p70
      %p501 = pneg %p67
      %p502 = pneg %p91
      %p503 = pneg %p88
      %p504 = pneg %p112
      %p505 = pneg %p109
      %p506 = pneg %p133
      %p507 = pneg %p130
      %p508 = pneg %p154
      %p509 = pneg %p151
      %p510 = pneg %p175
      %p511 = pneg %p172
      %p512 = pneg %p196
      %p513 = pneg %p193
      %p514 = pneg %p217
      %p515 = pneg %p214
      %p516 = pneg %p238
      %p517 = pneg %p235
      %p518 = pneg %p259
      %p519 = pneg %p256
      %p520 = pneg %p280
      %p521 = pneg %p277
      %p522 = pneg %p301
      %p523 = pneg %p298
      %p524 = pneg %p322
      %p525 = pneg %p319
      %p526 = pneg %p343
      %p527 = pneg %p340
      %p528 = pneg %p364
      %p529 = pneg %p361
      %p530 = pneg %p385
      %p531 = pneg %p382
      %p532 = pneg %p411
      %p533 = pneg %p408
      %p534 = scmp.lt.s32.totalorder %s28, 1
      %s535 = scalar_select %p534, %s28, 1
      %s536 = smul.addr %s535, 2
      %s537 = smul.addr %s536, 4
      %s538 = scalar_lea.vmem %s17, %s537
      %p539 = scmp.lt.s32.totalorder %s28, 1
      %s540 = scalar_select %p539, %s28, 1
      %s541 = smul.addr %s540, 32
      %s542 = smul.addr %s541, 8
      %s543 = scalar_lea.vmem %s0, %s542
      %p544 = scmp.lt.s32.totalorder %s28, 1
      %s545 = scalar_select %p544, %s28, 1
      %s546 = smul.addr %s545, 2
      %s547 = smul.addr %s546, 4
      %s548 = scalar_lea.vmem %s17, %s547
      %v550 = vld [vmem:[%s543] sm:$0xff]
      %v551 = vld [vmem:[%s543 + $0x8] sm:$0xff]
      %v552 = vld [vmem:[%s543 + $0x10] sm:$0xff]
      %v553 = vld [vmem:[%s543 + $0x18] sm:$0xff]
      %v554 = vld [vmem:[%s543 + $0x20] sm:$0xff]
      %v555 = vld [vmem:[%s543 + $0x28] sm:$0xff]
      %v556 = vld [vmem:[%s543 + $0x30] sm:$0xff]
      %v557 = vld [vmem:[%s543 + $0x38] sm:$0xff]
      %v558 = vld [vmem:[%s543 + $0x40] sm:$0xff]
      %v559 = vld [vmem:[%s543 + $0x48] sm:$0xff]
      %v560 = vld [vmem:[%s543 + $0x50] sm:$0xff]
      %v561 = vld [vmem:[%s543 + $0x58] sm:$0xff]
      %v562 = vld [vmem:[%s543 + $0x60] sm:$0xff]
      %v563 = vld [vmem:[%s543 + $0x68] sm:$0xff]
      %v564 = vld [vmem:[%s543 + $0x70] sm:$0xff]
      %v565 = vld [vmem:[%s543 + $0x78] sm:$0xff]
      %v566 = vld [vmem:[%s543 + $0x80] sm:$0xff]
      %v567 = vld [vmem:[%s543 + $0x88] sm:$0xff]
      %v568 = vld [vmem:[%s543 + $0x90] sm:$0xff]
      %v569 = vld [vmem:[%s543 + $0x98] sm:$0xff]
      %v570 = vld [vmem:[%s543 + $0xa0] sm:$0xff]
      %v571 = vld [vmem:[%s543 + $0xa8] sm:$0xff]
      %v572 = vld [vmem:[%s543 + $0xb0] sm:$0xff]
      %v573 = vld [vmem:[%s543 + $0xb8] sm:$0xff]
      %v574 = vld [vmem:[%s543 + $0xc0] sm:$0xff]
      %v575 = vld [vmem:[%s543 + $0xc8] sm:$0xff]
      %v576 = vld [vmem:[%s543 + $0xd0] sm:$0xff]
      %v577 = vld [vmem:[%s543 + $0xd8] sm:$0xff]
      %v578 = vld [vmem:[%s543 + $0xe0] sm:$0xff]
      %v579 = vld [vmem:[%s543 + $0xe8] sm:$0xff]
      %v580 = vld [vmem:[%s543 + $0xf0] sm:$0xff]
      %v581 = vld [vmem:[%s543 + $0xf8] sm:$0xff]
      %v582 = vld [vmem:[%s1] sm:$0xf]
      %v583 = vld [vmem:[%s1 + $0x4] sm:$0xf]
      %v584 = vld [vmem:[%s1 + $0x8] sm:$0xf]
      %v585 = vld [vmem:[%s1 + $0xc] sm:$0xf]
      %v586 = vld [vmem:[%s1 + $0x10] sm:$0xf]
      %v587 = vld [vmem:[%s1 + $0x14] sm:$0xf]
      %v588 = vld [vmem:[%s1 + $0x18] sm:$0x7]
      %v589 = vld [vmem:[%s2] sm:$0x1]
      %vm623 = vcmask 1040384
      %v624 = vrot.slane 0.0, 7
      %v625 = vsel %vm623, %v624, %v624
      %v626 = vrot.slane %v550, 7
      %v627 = vrot.slane %v551, 7
      %v628 = vsel %vm623, %v626, %v627
      %v629 = vrot.slane %v552, 7
      %v630 = vrot.slane %v553, 7
      %v631 = vsel %vm623, %v629, %v630
      %v632 = vrot.slane %v554, 7
      %v633 = vrot.slane %v555, 7
      %v634 = vsel %vm623, %v632, %v633
      %v635 = vrot.slane %v556, 7
      %v636 = vrot.slane %v557, 7
      %v637 = vsel %vm623, %v635, %v636
      %v638 = vrot.slane %v558, 7
      %v639 = vrot.slane %v559, 7
      %v640 = vsel %vm623, %v638, %v639
      %v641 = vrot.slane %v560, 7
      %v642 = vrot.slane %v561, 7
      %v643 = vsel %vm623, %v641, %v642
      %v644 = vrot.slane %v562, 7
      %v645 = vrot.slane %v563, 7
      %v646 = vsel %vm623, %v644, %v645
      %v647 = vrot.slane %v564, 7
      %v648 = vrot.slane %v565, 7
      %v649 = vsel %vm623, %v647, %v648
      %v650 = vrot.slane %v566, 7
      %v651 = vrot.slane %v567, 7
      %v652 = vsel %vm623, %v650, %v651
      %v653 = vrot.slane %v568, 7
      %v654 = vrot.slane %v569, 7
      %v655 = vsel %vm623, %v653, %v654
      %v656 = vrot.slane %v570, 7
      %v657 = vrot.slane %v571, 7
      %v658 = vsel %vm623, %v656, %v657
      %v659 = vrot.slane %v572, 7
      %v660 = vrot.slane %v573, 7
      %v661 = vsel %vm623, %v659, %v660
      %v662 = vrot.slane %v574, 7
      %v663 = vrot.slane %v575, 7
      %v664 = vsel %vm623, %v662, %v663
      %v665 = vrot.slane %v576, 7
      %v666 = vrot.slane %v577, 7
      %v667 = vsel %vm623, %v665, %v666
      %v668 = vrot.slane %v578, 7
      %v669 = vrot.slane %v579, 7
      %v670 = vsel %vm623, %v668, %v669
      %v671 = vrot.slane %v580, 7
      %v672 = vrot.slane %v581, 7
      %v673 = vsel %vm623, %v671, %v672
      %v723 = vsel %vm623, 0.0, %v624
      %v724 = vsel %vm623, 0.0, %v626
      %v725 = vsel %vm623, 0.0, %v629
      %v726 = vsel %vm623, 0.0, %v632
      %v727 = vsel %vm623, 0.0, %v635
      %v728 = vsel %vm623, 0.0, %v638
      %v729 = vsel %vm623, 0.0, %v641
      %v730 = vsel %vm623, 0.0, %v644
      %v731 = vsel %vm623, 0.0, %v647
      %v732 = vsel %vm623, 0.0, %v650
      %v733 = vsel %vm623, 0.0, %v653
      %v734 = vsel %vm623, 0.0, %v656
      %v735 = vsel %vm623, 0.0, %v659
      %v736 = vsel %vm623, 0.0, %v662
      %v737 = vsel %vm623, 0.0, %v665
      %v738 = vsel %vm623, 0.0, %v668
      %v739 = vsel %vm623, 0.0, %v671
      %v740 = vsel %vm623, %v624, 0.0
      %v741 = vsel %vm623, %v627, 0.0
      %v742 = vsel %vm623, %v630, 0.0
      %v743 = vsel %vm623, %v633, 0.0
      %v744 = vsel %vm623, %v636, 0.0
      %v745 = vsel %vm623, %v639, 0.0
      %v746 = vsel %vm623, %v642, 0.0
      %v747 = vsel %vm623, %v645, 0.0
      %v748 = vsel %vm623, %v648, 0.0
      %v749 = vsel %vm623, %v651, 0.0
      %v750 = vsel %vm623, %v654, 0.0
      %v751 = vsel %vm623, %v657, 0.0
      %v752 = vsel %vm623, %v660, 0.0
      %v753 = vsel %vm623, %v663, 0.0
      %v754 = vsel %vm623, %v666, 0.0
      %v755 = vsel %vm623, %v669, 0.0
      %v756 = vsel %vm623, %v672, 0.0
      %vm789 = vcmask 1046528
      %v790 = vrot.slane %v723, 1
      %v791 = vrot.slane %v625, 1
      %v792 = vsel %vm789, %v790, %v791
      %v793 = vrot.slane %v740, 1
      %v794 = vsel %vm789, %v791, %v793
      %v795 = vrot.slane %v724, 1
      %v796 = vrot.slane %v628, 1
      %v797 = vsel %vm789, %v795, %v796
      %v798 = vrot.slane %v741, 1
      %v799 = vsel %vm789, %v796, %v798
      %v800 = vrot.slane %v725, 1
      %v801 = vrot.slane %v631, 1
      %v802 = vsel %vm789, %v800, %v801
      %v803 = vrot.slane %v742, 1
      %v804 = vsel %vm789, %v801, %v803
      %v805 = vrot.slane %v726, 1
      %v806 = vrot.slane %v634, 1
      %v807 = vsel %vm789, %v805, %v806
      %v808 = vrot.slane %v743, 1
      %v809 = vsel %vm789, %v806, %v808
      %v810 = vrot.slane %v727, 1
      %v811 = vrot.slane %v637, 1
      %v812 = vsel %vm789, %v810, %v811
      %v813 = vrot.slane %v744, 1
      %v814 = vsel %vm789, %v811, %v813
      %v815 = vrot.slane %v728, 1
      %v816 = vrot.slane %v640, 1
      %v817 = vsel %vm789, %v815, %v816
      %v818 = vrot.slane %v745, 1
      %v819 = vsel %vm789, %v816, %v818
      %v820 = vrot.slane %v729, 1
      %v821 = vrot.slane %v643, 1
      %v822 = vsel %vm789, %v820, %v821
      %v823 = vrot.slane %v746, 1
      %v824 = vsel %vm789, %v821, %v823
      %v825 = vrot.slane %v730, 1
      %v826 = vrot.slane %v646, 1
      %v827 = vsel %vm789, %v825, %v826
      %v828 = vrot.slane %v747, 1
      %v829 = vsel %vm789, %v826, %v828
      %v830 = vrot.slane %v731, 1
      %v831 = vrot.slane %v649, 1
      %v832 = vsel %vm789, %v830, %v831
      %v833 = vrot.slane %v748, 1
      %v834 = vsel %vm789, %v831, %v833
      %v835 = vrot.slane %v732, 1
      %v836 = vrot.slane %v652, 1
      %v837 = vsel %vm789, %v835, %v836
      %v838 = vrot.slane %v749, 1
      %v839 = vsel %vm789, %v836, %v838
      %v840 = vrot.slane %v733, 1
      %v841 = vrot.slane %v655, 1
      %v842 = vsel %vm789, %v840, %v841
      %v843 = vrot.slane %v750, 1
      %v844 = vsel %vm789, %v841, %v843
      %v845 = vrot.slane %v734, 1
      %v846 = vrot.slane %v658, 1
      %v847 = vsel %vm789, %v845, %v846
      %v848 = vrot.slane %v751, 1
      %v849 = vsel %vm789, %v846, %v848
      %v850 = vrot.slane %v735, 1
      %v851 = vrot.slane %v661, 1
      %v852 = vsel %vm789, %v850, %v851
      %v853 = vrot.slane %v752, 1
      %v854 = vsel %vm789, %v851, %v853
      %v855 = vrot.slane %v736, 1
      %v856 = vrot.slane %v664, 1
      %v857 = vsel %vm789, %v855, %v856
      %v858 = vrot.slane %v753, 1
      %v859 = vsel %vm789, %v856, %v858
      %v860 = vrot.slane %v737, 1
      %v861 = vrot.slane %v667, 1
      %v862 = vsel %vm789, %v860, %v861
      %v863 = vrot.slane %v754, 1
      %v864 = vsel %vm789, %v861, %v863
      %v865 = vrot.slane %v738, 1
      %v866 = vrot.slane %v670, 1
      %v867 = vsel %vm789, %v865, %v866
      %v868 = vrot.slane %v755, 1
      %v869 = vsel %vm789, %v866, %v868
      %vm870 = vcmask 1045504
      %v871 = vrot.slane %v723, 2
      %v872 = vrot.slane %v625, 2
      %v873 = vsel %vm870, %v871, %v872
      %v874 = vrot.slane %v740, 2
      %v875 = vsel %vm870, %v872, %v874
      %v876 = vrot.slane %v724, 2
      %v877 = vrot.slane %v628, 2
      %v878 = vsel %vm870, %v876, %v877
      %v879 = vrot.slane %v741, 2
      %v880 = vsel %vm870, %v877, %v879
      %v881 = vrot.slane %v725, 2
      %v882 = vrot.slane %v631, 2
      %v883 = vsel %vm870, %v881, %v882
      %v884 = vrot.slane %v742, 2
      %v885 = vsel %vm870, %v882, %v884
      %v886 = vrot.slane %v726, 2
      %v887 = vrot.slane %v634, 2
      %v888 = vsel %vm870, %v886, %v887
      %v889 = vrot.slane %v743, 2
      %v890 = vsel %vm870, %v887, %v889
      %v891 = vrot.slane %v727, 2
      %v892 = vrot.slane %v637, 2
      %v893 = vsel %vm870, %v891, %v892
      %v894 = vrot.slane %v744, 2
      %v895 = vsel %vm870, %v892, %v894
      %v896 = vrot.slane %v728, 2
      %v897 = vrot.slane %v640, 2
      %v898 = vsel %vm870, %v896, %v897
      %v899 = vrot.slane %v745, 2
      %v900 = vsel %vm870, %v897, %v899
      %v901 = vrot.slane %v729, 2
      %v902 = vrot.slane %v643, 2
      %v903 = vsel %vm870, %v901, %v902
      %v904 = vrot.slane %v746, 2
      %v905 = vsel %vm870, %v902, %v904
      %v906 = vrot.slane %v730, 2
      %v907 = vrot.slane %v646, 2
      %v908 = vsel %vm870, %v906, %v907
      %v909 = vrot.slane %v747, 2
      %v910 = vsel %vm870, %v907, %v909
      %v911 = vrot.slane %v731, 2
      %v912 = vrot.slane %v649, 2
      %v913 = vsel %vm870, %v911, %v912
      %v914 = vrot.slane %v748, 2
      %v915 = vsel %vm870, %v912, %v914
      %v916 = vrot.slane %v732, 2
      %v917 = vrot.slane %v652, 2
      %v918 = vsel %vm870, %v916, %v917
      %v919 = vrot.slane %v749, 2
      %v920 = vsel %vm870, %v917, %v919
      %v921 = vrot.slane %v733, 2
      %v922 = vrot.slane %v655, 2
      %v923 = vsel %vm870, %v921, %v922
      %v924 = vrot.slane %v750, 2
      %v925 = vsel %vm870, %v922, %v924
      %v926 = vrot.slane %v734, 2
      %v927 = vrot.slane %v658, 2
      %v928 = vsel %vm870, %v926, %v927
      %v929 = vrot.slane %v751, 2
      %v930 = vsel %vm870, %v927, %v929
      %v931 = vrot.slane %v735, 2
      %v932 = vrot.slane %v661, 2
      %v933 = vsel %vm870, %v931, %v932
      %v934 = vrot.slane %v752, 2
      %v935 = vsel %vm870, %v932, %v934
      %v936 = vrot.slane %v736, 2
      %v937 = vrot.slane %v664, 2
      %v938 = vsel %vm870, %v936, %v937
      %v939 = vrot.slane %v753, 2
      %v940 = vsel %vm870, %v937, %v939
      %v941 = vrot.slane %v737, 2
      %v942 = vrot.slane %v667, 2
      %v943 = vsel %vm870, %v941, %v942
      %v944 = vrot.slane %v754, 2
      %v945 = vsel %vm870, %v942, %v944
      %v946 = vrot.slane %v738, 2
      %v947 = vrot.slane %v670, 2
      %v948 = vsel %vm870, %v946, %v947
      %v949 = vrot.slane %v755, 2
      %v950 = vsel %vm870, %v947, %v949
      %v953 = vrot.slane %v739, 1
      %v954 = vrot.slane %v673, 1
      %v955 = vsel %vm789, %v953, %v954
      %v956 = vrot.slane %v756, 1
      %v957 = vsel %vm789, %v954, %v956
      %v958 = vrot.slane %v739, 2
      %v959 = vrot.slane %v673, 2
      %v960 = vsel %vm870, %v958, %v959
      %v961 = vrot.slane %v756, 2
      %v962 = vsel %vm870, %v959, %v961
      %963 = vrot.lane.b32.xlu0 %v792, 6
      %v964 = vpop.permute.xlu0 %963
      %965 = vrot.lane.b32.xlu0 %v794, 6
      %v966 = vpop.permute.xlu0 %965
      %967 = vrot.lane.b32.xlu0 %v797, 6
      %v968 = vpop.permute.xlu0 %967
      %969 = vrot.lane.b32.xlu0 %v799, 6
      %v970 = vpop.permute.xlu0 %969
      %971 = vrot.lane.b32.xlu0 %v802, 6
      %v972 = vpop.permute.xlu0 %971
      %973 = vrot.lane.b32.xlu0 %v804, 6
      %v974 = vpop.permute.xlu0 %973
      %975 = vrot.lane.b32.xlu0 %v807, 6
      %v976 = vpop.permute.xlu0 %975
      %977 = vrot.lane.b32.xlu0 %v809, 6
      %v978 = vpop.permute.xlu0 %977
      %979 = vrot.lane.b32.xlu0 %v812, 6
      %v980 = vpop.permute.xlu0 %979
      %981 = vrot.lane.b32.xlu0 %v814, 6
      %v982 = vpop.permute.xlu0 %981
      %983 = vrot.lane.b32.xlu0 %v817, 6
      %v984 = vpop.permute.xlu0 %983
      %985 = vrot.lane.b32.xlu0 %v819, 6
      %v986 = vpop.permute.xlu0 %985
      %987 = vrot.lane.b32.xlu0 %v822, 6
      %v988 = vpop.permute.xlu0 %987
      %989 = vrot.lane.b32.xlu0 %v824, 6
      %v990 = vpop.permute.xlu0 %989
      %991 = vrot.lane.b32.xlu0 %v827, 6
      %v992 = vpop.permute.xlu0 %991
      %993 = vrot.lane.b32.xlu0 %v829, 6
      %v994 = vpop.permute.xlu0 %993
      %995 = vrot.lane.b32.xlu0 %v832, 6
      %v996 = vpop.permute.xlu0 %995
      %997 = vrot.lane.b32.xlu0 %v834, 6
      %v998 = vpop.permute.xlu0 %997
      %999 = vrot.lane.b32.xlu0 %v837, 6
      %v1000 = vpop.permute.xlu0 %999
      %1001 = vrot.lane.b32.xlu0 %v839, 6
      %v1002 = vpop.permute.xlu0 %1001
      %1003 = vrot.lane.b32.xlu0 %v842, 6
      %v1004 = vpop.permute.xlu0 %1003
      %1005 = vrot.lane.b32.xlu0 %v844, 6
      %v1006 = vpop.permute.xlu0 %1005
      %1007 = vrot.lane.b32.xlu0 %v847, 6
      %v1008 = vpop.permute.xlu0 %1007
      %1009 = vrot.lane.b32.xlu0 %v849, 6
      %v1010 = vpop.permute.xlu0 %1009
      %1011 = vrot.lane.b32.xlu0 %v852, 6
      %v1012 = vpop.permute.xlu0 %1011
      %1013 = vrot.lane.b32.xlu0 %v854, 6
      %v1014 = vpop.permute.xlu0 %1013
      %1015 = vrot.lane.b32.xlu0 %v857, 6
      %v1016 = vpop.permute.xlu0 %1015
      %1017 = vrot.lane.b32.xlu0 %v859, 6
      %v1018 = vpop.permute.xlu0 %1017
      %1019 = vrot.lane.b32.xlu0 %v862, 6
      %v1020 = vpop.permute.xlu0 %1019
      %1021 = vrot.lane.b32.xlu0 %v864, 6
      %v1022 = vpop.permute.xlu0 %1021
      %1023 = vrot.lane.b32.xlu0 %v867, 6
      %v1024 = vpop.permute.xlu0 %1023
      %1025 = vrot.lane.b32.xlu0 %v869, 6
      %v1026 = vpop.permute.xlu0 %1025
      %1059 = vrot.lane.b32.xlu0 %v873, 12
      %v1060 = vpop.permute.xlu0 %1059
      %1061 = vrot.lane.b32.xlu0 %v875, 12
      %v1062 = vpop.permute.xlu0 %1061
      %1063 = vrot.lane.b32.xlu0 %v878, 12
      %v1064 = vpop.permute.xlu0 %1063
      %1065 = vrot.lane.b32.xlu0 %v880, 12
      %v1066 = vpop.permute.xlu0 %1065
      %1067 = vrot.lane.b32.xlu0 %v883, 12
      %v1068 = vpop.permute.xlu0 %1067
      %1069 = vrot.lane.b32.xlu0 %v885, 12
      %v1070 = vpop.permute.xlu0 %1069
      %1071 = vrot.lane.b32.xlu0 %v888, 12
      %v1072 = vpop.permute.xlu0 %1071
      %1073 = vrot.lane.b32.xlu0 %v890, 12
      %v1074 = vpop.permute.xlu0 %1073
      %1075 = vrot.lane.b32.xlu0 %v893, 12
      %v1076 = vpop.permute.xlu0 %1075
      %1077 = vrot.lane.b32.xlu0 %v895, 12
      %v1078 = vpop.permute.xlu0 %1077
      %1079 = vrot.lane.b32.xlu0 %v898, 12
      %v1080 = vpop.permute.xlu0 %1079
      %1081 = vrot.lane.b32.xlu0 %v900, 12
      %v1082 = vpop.permute.xlu0 %1081
      %1083 = vrot.lane.b32.xlu0 %v903, 12
      %v1084 = vpop.permute.xlu0 %1083
      %1085 = vrot.lane.b32.xlu0 %v905, 12
      %v1086 = vpop.permute.xlu0 %1085
      %1087 = vrot.lane.b32.xlu0 %v908, 12
      %v1088 = vpop.permute.xlu0 %1087
      %1089 = vrot.lane.b32.xlu0 %v910, 12
      %v1090 = vpop.permute.xlu0 %1089
      %1091 = vrot.lane.b32.xlu0 %v913, 12
      %v1092 = vpop.permute.xlu0 %1091
      %1093 = vrot.lane.b32.xlu0 %v915, 12
      %v1094 = vpop.permute.xlu0 %1093
      %1095 = vrot.lane.b32.xlu0 %v918, 12
      %v1096 = vpop.permute.xlu0 %1095
      %1097 = vrot.lane.b32.xlu0 %v920, 12
      %v1098 = vpop.permute.xlu0 %1097
      %1099 = vrot.lane.b32.xlu0 %v923, 12
      %v1100 = vpop.permute.xlu0 %1099
      %1101 = vrot.lane.b32.xlu0 %v925, 12
      %v1102 = vpop.permute.xlu0 %1101
      %1103 = vrot.lane.b32.xlu0 %v928, 12
      %v1104 = vpop.permute.xlu0 %1103
      %1105 = vrot.lane.b32.xlu0 %v930, 12
      %v1106 = vpop.permute.xlu0 %1105
      %1107 = vrot.lane.b32.xlu0 %v933, 12
      %v1108 = vpop.permute.xlu0 %1107
      %1109 = vrot.lane.b32.xlu0 %v935, 12
      %v1110 = vpop.permute.xlu0 %1109
      %1111 = vrot.lane.b32.xlu0 %v938, 12
      %v1112 = vpop.permute.xlu0 %1111
      %1113 = vrot.lane.b32.xlu0 %v940, 12
      %v1114 = vpop.permute.xlu0 %1113
      %1115 = vrot.lane.b32.xlu0 %v943, 12
      %v1116 = vpop.permute.xlu0 %1115
      %1117 = vrot.lane.b32.xlu0 %v945, 12
      %v1118 = vpop.permute.xlu0 %1117
      %1119 = vrot.lane.b32.xlu0 %v948, 12
      %v1120 = vpop.permute.xlu0 %1119
      %1121 = vrot.lane.b32.xlu0 %v950, 12
      %v1122 = vpop.permute.xlu0 %1121
      %1155 = vrot.lane.b32.xlu0 %v724, 18
      %v1156 = vpop.permute.xlu0 %1155
      %1157 = vrot.lane.b32.xlu0 %v628, 18
      %v1158 = vpop.permute.xlu0 %1157
      %1159 = vrot.lane.b32.xlu0 %v725, 18
      %v1160 = vpop.permute.xlu0 %1159
      %1161 = vrot.lane.b32.xlu0 %v631, 18
      %v1162 = vpop.permute.xlu0 %1161
      %1163 = vrot.lane.b32.xlu0 %v726, 18
      %v1164 = vpop.permute.xlu0 %1163
      %1165 = vrot.lane.b32.xlu0 %v634, 18
      %v1166 = vpop.permute.xlu0 %1165
      %1167 = vrot.lane.b32.xlu0 %v727, 18
      %v1168 = vpop.permute.xlu0 %1167
      %1169 = vrot.lane.b32.xlu0 %v637, 18
      %v1170 = vpop.permute.xlu0 %1169
      %1171 = vrot.lane.b32.xlu0 %v728, 18
      %v1172 = vpop.permute.xlu0 %1171
      %1173 = vrot.lane.b32.xlu0 %v640, 18
      %v1174 = vpop.permute.xlu0 %1173
      %1175 = vrot.lane.b32.xlu0 %v729, 18
      %v1176 = vpop.permute.xlu0 %1175
      %1177 = vrot.lane.b32.xlu0 %v643, 18
      %v1178 = vpop.permute.xlu0 %1177
      %1179 = vrot.lane.b32.xlu0 %v730, 18
      %v1180 = vpop.permute.xlu0 %1179
      %1181 = vrot.lane.b32.xlu0 %v646, 18
      %v1182 = vpop.permute.xlu0 %1181
      %1183 = vrot.lane.b32.xlu0 %v731, 18
      %v1184 = vpop.permute.xlu0 %1183
      %1185 = vrot.lane.b32.xlu0 %v649, 18
      %v1186 = vpop.permute.xlu0 %1185
      %1187 = vrot.lane.b32.xlu0 %v732, 18
      %v1188 = vpop.permute.xlu0 %1187
      %1189 = vrot.lane.b32.xlu0 %v652, 18
      %v1190 = vpop.permute.xlu0 %1189
      %1191 = vrot.lane.b32.xlu0 %v733, 18
      %v1192 = vpop.permute.xlu0 %1191
      %1193 = vrot.lane.b32.xlu0 %v655, 18
      %v1194 = vpop.permute.xlu0 %1193
      %1195 = vrot.lane.b32.xlu0 %v734, 18
      %v1196 = vpop.permute.xlu0 %1195
      %1197 = vrot.lane.b32.xlu0 %v658, 18
      %v1198 = vpop.permute.xlu0 %1197
      %1199 = vrot.lane.b32.xlu0 %v735, 18
      %v1200 = vpop.permute.xlu0 %1199
      %1201 = vrot.lane.b32.xlu0 %v661, 18
      %v1202 = vpop.permute.xlu0 %1201
      %1203 = vrot.lane.b32.xlu0 %v736, 18
      %v1204 = vpop.permute.xlu0 %1203
      %1205 = vrot.lane.b32.xlu0 %v664, 18
      %v1206 = vpop.permute.xlu0 %1205
      %1207 = vrot.lane.b32.xlu0 %v737, 18
      %v1208 = vpop.permute.xlu0 %1207
      %1209 = vrot.lane.b32.xlu0 %v667, 18
      %v1210 = vpop.permute.xlu0 %1209
      %1211 = vrot.lane.b32.xlu0 %v738, 18
      %v1212 = vpop.permute.xlu0 %1211
      %1213 = vrot.lane.b32.xlu0 %v670, 18
      %v1214 = vpop.permute.xlu0 %1213
      %1215 = vrot.lane.b32.xlu0 %v739, 18
      %v1216 = vpop.permute.xlu0 %1215
      %1217 = vrot.lane.b32.xlu0 %v673, 18
      %v1218 = vpop.permute.xlu0 %1217
      %1251 = vrot.lane.b32.xlu0 %v797, 24
      %v1252 = vpop.permute.xlu0 %1251
      %1253 = vrot.lane.b32.xlu0 %v799, 24
      %v1254 = vpop.permute.xlu0 %1253
      %1255 = vrot.lane.b32.xlu0 %v802, 24
      %v1256 = vpop.permute.xlu0 %1255
      %1257 = vrot.lane.b32.xlu0 %v804, 24
      %v1258 = vpop.permute.xlu0 %1257
      %1259 = vrot.lane.b32.xlu0 %v807, 24
      %v1260 = vpop.permute.xlu0 %1259
      %1261 = vrot.lane.b32.xlu0 %v809, 24
      %v1262 = vpop.permute.xlu0 %1261
      %1263 = vrot.lane.b32.xlu0 %v812, 24
      %v1264 = vpop.permute.xlu0 %1263
      %1265 = vrot.lane.b32.xlu0 %v814, 24
      %v1266 = vpop.permute.xlu0 %1265
      %1267 = vrot.lane.b32.xlu0 %v817, 24
      %v1268 = vpop.permute.xlu0 %1267
      %1269 = vrot.lane.b32.xlu0 %v819, 24
      %v1270 = vpop.permute.xlu0 %1269
      %1271 = vrot.lane.b32.xlu0 %v822, 24
      %v1272 = vpop.permute.xlu0 %1271
      %1273 = vrot.lane.b32.xlu0 %v824, 24
      %v1274 = vpop.permute.xlu0 %1273
      %1275 = vrot.lane.b32.xlu0 %v827, 24
      %v1276 = vpop.permute.xlu0 %1275
      %1277 = vrot.lane.b32.xlu0 %v829, 24
      %v1278 = vpop.permute.xlu0 %1277
      %1279 = vrot.lane.b32.xlu0 %v832, 24
      %v1280 = vpop.permute.xlu0 %1279
      %1281 = vrot.lane.b32.xlu0 %v834, 24
      %v1282 = vpop.permute.xlu0 %1281
      %1283 = vrot.lane.b32.xlu0 %v837, 24
      %v1284 = vpop.permute.xlu0 %1283
      %1285 = vrot.lane.b32.xlu0 %v839, 24
      %v1286 = vpop.permute.xlu0 %1285
      %1287 = vrot.lane.b32.xlu0 %v842, 24
      %v1288 = vpop.permute.xlu0 %1287
      %1289 = vrot.lane.b32.xlu0 %v844, 24
      %v1290 = vpop.permute.xlu0 %1289
      %1291 = vrot.lane.b32.xlu0 %v847, 24
      %v1292 = vpop.permute.xlu0 %1291
      %1293 = vrot.lane.b32.xlu0 %v849, 24
      %v1294 = vpop.permute.xlu0 %1293
      %1295 = vrot.lane.b32.xlu0 %v852, 24
      %v1296 = vpop.permute.xlu0 %1295
      %1297 = vrot.lane.b32.xlu0 %v854, 24
      %v1298 = vpop.permute.xlu0 %1297
      %1299 = vrot.lane.b32.xlu0 %v857, 24
      %v1300 = vpop.permute.xlu0 %1299
      %1301 = vrot.lane.b32.xlu0 %v859, 24
      %v1302 = vpop.permute.xlu0 %1301
      %1303 = vrot.lane.b32.xlu0 %v862, 24
      %v1304 = vpop.permute.xlu0 %1303
      %1305 = vrot.lane.b32.xlu0 %v864, 24
      %v1306 = vpop.permute.xlu0 %1305
      %1307 = vrot.lane.b32.xlu0 %v867, 24
      %v1308 = vpop.permute.xlu0 %1307
      %1309 = vrot.lane.b32.xlu0 %v869, 24
      %v1310 = vpop.permute.xlu0 %1309
      %1311 = vrot.lane.b32.xlu0 %v955, 24
      %v1312 = vpop.permute.xlu0 %1311
      %1313 = vrot.lane.b32.xlu0 %v957, 24
      %v1314 = vpop.permute.xlu0 %1313
      %1347 = vrot.lane.b32.xlu0 %v878, 30
      %v1348 = vpop.permute.xlu0 %1347
      %1349 = vrot.lane.b32.xlu0 %v880, 30
      %v1350 = vpop.permute.xlu0 %1349
      %1351 = vrot.lane.b32.xlu0 %v883, 30
      %v1352 = vpop.permute.xlu0 %1351
      %1353 = vrot.lane.b32.xlu0 %v885, 30
      %v1354 = vpop.permute.xlu0 %1353
      %1355 = vrot.lane.b32.xlu0 %v888, 30
      %v1356 = vpop.permute.xlu0 %1355
      %1357 = vrot.lane.b32.xlu0 %v890, 30
      %v1358 = vpop.permute.xlu0 %1357
      %1359 = vrot.lane.b32.xlu0 %v893, 30
      %v1360 = vpop.permute.xlu0 %1359
      %1361 = vrot.lane.b32.xlu0 %v895, 30
      %v1362 = vpop.permute.xlu0 %1361
      %1363 = vrot.lane.b32.xlu0 %v898, 30
      %v1364 = vpop.permute.xlu0 %1363
      %1365 = vrot.lane.b32.xlu0 %v900, 30
      %v1366 = vpop.permute.xlu0 %1365
      %1367 = vrot.lane.b32.xlu0 %v903, 30
      %v1368 = vpop.permute.xlu0 %1367
      %1369 = vrot.lane.b32.xlu0 %v905, 30
      %v1370 = vpop.permute.xlu0 %1369
      %1371 = vrot.lane.b32.xlu0 %v908, 30
      %v1372 = vpop.permute.xlu0 %1371
      %1373 = vrot.lane.b32.xlu0 %v910, 30
      %v1374 = vpop.permute.xlu0 %1373
      %1375 = vrot.lane.b32.xlu0 %v913, 30
      %v1376 = vpop.permute.xlu0 %1375
      %1377 = vrot.lane.b32.xlu0 %v915, 30
      %v1378 = vpop.permute.xlu0 %1377
      %1379 = vrot.lane.b32.xlu0 %v918, 30
      %v1380 = vpop.permute.xlu0 %1379
      %1381 = vrot.lane.b32.xlu0 %v920, 30
      %v1382 = vpop.permute.xlu0 %1381
      %1383 = vrot.lane.b32.xlu0 %v923, 30
      %v1384 = vpop.permute.xlu0 %1383
      %1385 = vrot.lane.b32.xlu0 %v925, 30
      %v1386 = vpop.permute.xlu0 %1385
      %1387 = vrot.lane.b32.xlu0 %v928, 30
      %v1388 = vpop.permute.xlu0 %1387
      %1389 = vrot.lane.b32.xlu0 %v930, 30
      %v1390 = vpop.permute.xlu0 %1389
      %1391 = vrot.lane.b32.xlu0 %v933, 30
      %v1392 = vpop.permute.xlu0 %1391
      %1393 = vrot.lane.b32.xlu0 %v935, 30
      %v1394 = vpop.permute.xlu0 %1393
      %1395 = vrot.lane.b32.xlu0 %v938, 30
      %v1396 = vpop.permute.xlu0 %1395
      %1397 = vrot.lane.b32.xlu0 %v940, 30
      %v1398 = vpop.permute.xlu0 %1397
      %1399 = vrot.lane.b32.xlu0 %v943, 30
      %v1400 = vpop.permute.xlu0 %1399
      %1401 = vrot.lane.b32.xlu0 %v945, 30
      %v1402 = vpop.permute.xlu0 %1401
      %1403 = vrot.lane.b32.xlu0 %v948, 30
      %v1404 = vpop.permute.xlu0 %1403
      %1405 = vrot.lane.b32.xlu0 %v950, 30
      %v1406 = vpop.permute.xlu0 %1405
      %1407 = vrot.lane.b32.xlu0 %v960, 30
      %v1408 = vpop.permute.xlu0 %1407
      %1409 = vrot.lane.b32.xlu0 %v962, 30
      %v1410 = vpop.permute.xlu0 %1409
      %1443 = vrot.lane.b32.xlu0 %v725, 36
      %v1444 = vpop.permute.xlu0 %1443
      %1445 = vrot.lane.b32.xlu0 %v631, 36
      %v1446 = vpop.permute.xlu0 %1445
      %1447 = vrot.lane.b32.xlu0 %v726, 36
      %v1448 = vpop.permute.xlu0 %1447
      %1449 = vrot.lane.b32.xlu0 %v634, 36
      %v1450 = vpop.permute.xlu0 %1449
      %1451 = vrot.lane.b32.xlu0 %v727, 36
      %v1452 = vpop.permute.xlu0 %1451
      %1453 = vrot.lane.b32.xlu0 %v637, 36
      %v1454 = vpop.permute.xlu0 %1453
      %1455 = vrot.lane.b32.xlu0 %v728, 36
      %v1456 = vpop.permute.xlu0 %1455
      %1457 = vrot.lane.b32.xlu0 %v640, 36
      %v1458 = vpop.permute.xlu0 %1457
      %1459 = vrot.lane.b32.xlu0 %v729, 36
      %v1460 = vpop.permute.xlu0 %1459
      %1461 = vrot.lane.b32.xlu0 %v643, 36
      %v1462 = vpop.permute.xlu0 %1461
      %1463 = vrot.lane.b32.xlu0 %v730, 36
      %v1464 = vpop.permute.xlu0 %1463
      %1465 = vrot.lane.b32.xlu0 %v646, 36
      %v1466 = vpop.permute.xlu0 %1465
      %1467 = vrot.lane.b32.xlu0 %v731, 36
      %v1468 = vpop.permute.xlu0 %1467
      %1469 = vrot.lane.b32.xlu0 %v649, 36
      %v1470 = vpop.permute.xlu0 %1469
      %1471 = vrot.lane.b32.xlu0 %v732, 36
      %v1472 = vpop.permute.xlu0 %1471
      %1473 = vrot.lane.b32.xlu0 %v652, 36
      %v1474 = vpop.permute.xlu0 %1473
      %1475 = vrot.lane.b32.xlu0 %v733, 36
      %v1476 = vpop.permute.xlu0 %1475
      %1477 = vrot.lane.b32.xlu0 %v655, 36
      %v1478 = vpop.permute.xlu0 %1477
      %1479 = vrot.lane.b32.xlu0 %v734, 36
      %v1480 = vpop.permute.xlu0 %1479
      %1481 = vrot.lane.b32.xlu0 %v658, 36
      %v1482 = vpop.permute.xlu0 %1481
      %1483 = vrot.lane.b32.xlu0 %v735, 36
      %v1484 = vpop.permute.xlu0 %1483
      %1485 = vrot.lane.b32.xlu0 %v661, 36
      %v1486 = vpop.permute.xlu0 %1485
      %1487 = vrot.lane.b32.xlu0 %v736, 36
      %v1488 = vpop.permute.xlu0 %1487
      %1489 = vrot.lane.b32.xlu0 %v664, 36
      %v1490 = vpop.permute.xlu0 %1489
      %1491 = vrot.lane.b32.xlu0 %v737, 36
      %v1492 = vpop.permute.xlu0 %1491
      %1493 = vrot.lane.b32.xlu0 %v667, 36
      %v1494 = vpop.permute.xlu0 %1493
      %1495 = vrot.lane.b32.xlu0 %v738, 36
      %v1496 = vpop.permute.xlu0 %1495
      %1497 = vrot.lane.b32.xlu0 %v670, 36
      %v1498 = vpop.permute.xlu0 %1497
      %1499 = vrot.lane.b32.xlu0 %v739, 36
      %v1500 = vpop.permute.xlu0 %1499
      %1501 = vrot.lane.b32.xlu0 %v673, 36
      %v1502 = vpop.permute.xlu0 %1501
      %1503 = vrot.lane.b32.xlu0 %v723, 36
      %v1504 = vpop.permute.xlu0 %1503
      %1505 = vrot.lane.b32.xlu0 %v625, 36
      %v1506 = vpop.permute.xlu0 %1505
      %1539 = vrot.lane.b32.xlu0 %v802, 42
      %v1540 = vpop.permute.xlu0 %1539
      %1541 = vrot.lane.b32.xlu0 %v804, 42
      %v1542 = vpop.permute.xlu0 %1541
      %1543 = vrot.lane.b32.xlu0 %v807, 42
      %v1544 = vpop.permute.xlu0 %1543
      %1545 = vrot.lane.b32.xlu0 %v809, 42
      %v1546 = vpop.permute.xlu0 %1545
      %1547 = vrot.lane.b32.xlu0 %v812, 42
      %v1548 = vpop.permute.xlu0 %1547
      %1549 = vrot.lane.b32.xlu0 %v814, 42
      %v1550 = vpop.permute.xlu0 %1549
      %1551 = vrot.lane.b32.xlu0 %v817, 42
      %v1552 = vpop.permute.xlu0 %1551
      %1553 = vrot.lane.b32.xlu0 %v819, 42
      %v1554 = vpop.permute.xlu0 %1553
      %1555 = vrot.lane.b32.xlu0 %v822, 42
      %v1556 = vpop.permute.xlu0 %1555
      %1557 = vrot.lane.b32.xlu0 %v824, 42
      %v1558 = vpop.permute.xlu0 %1557
      %1559 = vrot.lane.b32.xlu0 %v827, 42
      %v1560 = vpop.permute.xlu0 %1559
      %1561 = vrot.lane.b32.xlu0 %v829, 42
      %v1562 = vpop.permute.xlu0 %1561
      %1563 = vrot.lane.b32.xlu0 %v832, 42
      %v1564 = vpop.permute.xlu0 %1563
      %1565 = vrot.lane.b32.xlu0 %v834, 42
      %v1566 = vpop.permute.xlu0 %1565
      %1567 = vrot.lane.b32.xlu0 %v837, 42
      %v1568 = vpop.permute.xlu0 %1567
      %1569 = vrot.lane.b32.xlu0 %v839, 42
      %v1570 = vpop.permute.xlu0 %1569
      %1571 = vrot.lane.b32.xlu0 %v842, 42
      %v1572 = vpop.permute.xlu0 %1571
      %1573 = vrot.lane.b32.xlu0 %v844, 42
      %v1574 = vpop.permute.xlu0 %1573
      %1575 = vrot.lane.b32.xlu0 %v847, 42
      %v1576 = vpop.permute.xlu0 %1575
      %1577 = vrot.lane.b32.xlu0 %v849, 42
      %v1578 = vpop.permute.xlu0 %1577
      %1579 = vrot.lane.b32.xlu0 %v852, 42
      %v1580 = vpop.permute.xlu0 %1579
      %1581 = vrot.lane.b32.xlu0 %v854, 42
      %v1582 = vpop.permute.xlu0 %1581
      %1583 = vrot.lane.b32.xlu0 %v857, 42
      %v1584 = vpop.permute.xlu0 %1583
      %1585 = vrot.lane.b32.xlu0 %v859, 42
      %v1586 = vpop.permute.xlu0 %1585
      %1587 = vrot.lane.b32.xlu0 %v862, 42
      %v1588 = vpop.permute.xlu0 %1587
      %1589 = vrot.lane.b32.xlu0 %v864, 42
      %v1590 = vpop.permute.xlu0 %1589
      %1591 = vrot.lane.b32.xlu0 %v867, 42
      %v1592 = vpop.permute.xlu0 %1591
      %1593 = vrot.lane.b32.xlu0 %v869, 42
      %v1594 = vpop.permute.xlu0 %1593
      %1595 = vrot.lane.b32.xlu0 %v955, 42
      %v1596 = vpop.permute.xlu0 %1595
      %1597 = vrot.lane.b32.xlu0 %v957, 42
      %v1598 = vpop.permute.xlu0 %1597
      %1599 = vrot.lane.b32.xlu0 %v792, 42
      %v1600 = vpop.permute.xlu0 %1599
      %1601 = vrot.lane.b32.xlu0 %v794, 42
      %v1602 = vpop.permute.xlu0 %1601
      %1635 = vrot.lane.b32.xlu0 %v883, 48
      %v1636 = vpop.permute.xlu0 %1635
      %1637 = vrot.lane.b32.xlu0 %v885, 48
      %v1638 = vpop.permute.xlu0 %1637
      %1639 = vrot.lane.b32.xlu0 %v888, 48
      %v1640 = vpop.permute.xlu0 %1639
      %1641 = vrot.lane.b32.xlu0 %v890, 48
      %v1642 = vpop.permute.xlu0 %1641
      %1643 = vrot.lane.b32.xlu0 %v893, 48
      %v1644 = vpop.permute.xlu0 %1643
      %1645 = vrot.lane.b32.xlu0 %v895, 48
      %v1646 = vpop.permute.xlu0 %1645
      %1647 = vrot.lane.b32.xlu0 %v898, 48
      %v1648 = vpop.permute.xlu0 %1647
      %1649 = vrot.lane.b32.xlu0 %v900, 48
      %v1650 = vpop.permute.xlu0 %1649
      %1651 = vrot.lane.b32.xlu0 %v903, 48
      %v1652 = vpop.permute.xlu0 %1651
      %1653 = vrot.lane.b32.xlu0 %v905, 48
      %v1654 = vpop.permute.xlu0 %1653
      %1655 = vrot.lane.b32.xlu0 %v908, 48
      %v1656 = vpop.permute.xlu0 %1655
      %1657 = vrot.lane.b32.xlu0 %v910, 48
      %v1658 = vpop.permute.xlu0 %1657
      %1659 = vrot.lane.b32.xlu0 %v913, 48
      %v1660 = vpop.permute.xlu0 %1659
      %1661 = vrot.lane.b32.xlu0 %v915, 48
      %v1662 = vpop.permute.xlu0 %1661
      %1663 = vrot.lane.b32.xlu0 %v918, 48
      %v1664 = vpop.permute.xlu0 %1663
      %1665 = vrot.lane.b32.xlu0 %v920, 48
      %v1666 = vpop.permute.xlu0 %1665
      %1667 = vrot.lane.b32.xlu0 %v923, 48
      %v1668 = vpop.permute.xlu0 %1667
      %1669 = vrot.lane.b32.xlu0 %v925, 48
      %v1670 = vpop.permute.xlu0 %1669
      %1671 = vrot.lane.b32.xlu0 %v928, 48
      %v1672 = vpop.permute.xlu0 %1671
      %1673 = vrot.lane.b32.xlu0 %v930, 48
      %v1674 = vpop.permute.xlu0 %1673
      %1675 = vrot.lane.b32.xlu0 %v933, 48
      %v1676 = vpop.permute.xlu0 %1675
      %1677 = vrot.lane.b32.xlu0 %v935, 48
      %v1678 = vpop.permute.xlu0 %1677
      %1679 = vrot.lane.b32.xlu0 %v938, 48
      %v1680 = vpop.permute.xlu0 %1679
      %1681 = vrot.lane.b32.xlu0 %v940, 48
      %v1682 = vpop.permute.xlu0 %1681
      %1683 = vrot.lane.b32.xlu0 %v943, 48
      %v1684 = vpop.permute.xlu0 %1683
      %1685 = vrot.lane.b32.xlu0 %v945, 48
      %v1686 = vpop.permute.xlu0 %1685
      %1687 = vrot.lane.b32.xlu0 %v948, 48
      %v1688 = vpop.permute.xlu0 %1687
      %1689 = vrot.lane.b32.xlu0 %v950, 48
      %v1690 = vpop.permute.xlu0 %1689
      %1691 = vrot.lane.b32.xlu0 %v960, 48
      %v1692 = vpop.permute.xlu0 %1691
      %1693 = vrot.lane.b32.xlu0 %v962, 48
      %v1694 = vpop.permute.xlu0 %1693
      %1695 = vrot.lane.b32.xlu0 %v873, 48
      %v1696 = vpop.permute.xlu0 %1695
      %1697 = vrot.lane.b32.xlu0 %v875, 48
      %v1698 = vpop.permute.xlu0 %1697
      %vm1731 = vcmask 48128
      %v1732 = vsel %vm1731, %v723, %v964
      %v1733 = vsel %vm1731, %v625, %v966
      %v1734 = vsel %vm1731, %v724, %v968
      %v1735 = vsel %vm1731, %v628, %v970
      %v1736 = vsel %vm1731, %v725, %v972
      %v1737 = vsel %vm1731, %v631, %v974
      %v1738 = vsel %vm1731, %v726, %v976
      %v1739 = vsel %vm1731, %v634, %v978
      %v1740 = vsel %vm1731, %v727, %v980
      %v1741 = vsel %vm1731, %v637, %v982
      %v1742 = vsel %vm1731, %v728, %v984
      %v1743 = vsel %vm1731, %v640, %v986
      %v1744 = vsel %vm1731, %v729, %v988
      %v1745 = vsel %vm1731, %v643, %v990
      %v1746 = vsel %vm1731, %v730, %v992
      %v1747 = vsel %vm1731, %v646, %v994
      %v1748 = vsel %vm1731, %v731, %v996
      %v1749 = vsel %vm1731, %v649, %v998
      %v1750 = vsel %vm1731, %v732, %v1000
      %v1751 = vsel %vm1731, %v652, %v1002
      %v1752 = vsel %vm1731, %v733, %v1004
      %v1753 = vsel %vm1731, %v655, %v1006
      %v1754 = vsel %vm1731, %v734, %v1008
      %v1755 = vsel %vm1731, %v658, %v1010
      %v1756 = vsel %vm1731, %v735, %v1012
      %v1757 = vsel %vm1731, %v661, %v1014
      %v1758 = vsel %vm1731, %v736, %v1016
      %v1759 = vsel %vm1731, %v664, %v1018
      %v1760 = vsel %vm1731, %v737, %v1020
      %v1761 = vsel %vm1731, %v667, %v1022
      %v1762 = vsel %vm1731, %v738, %v1024
      %v1763 = vsel %vm1731, %v670, %v1026
      %vm1764 = vcmask 97280
      %v1765 = vsel %vm1764, %v1732, %v1060
      %v1766 = vsel %vm1764, %v1733, %v1062
      %v1767 = vsel %vm1764, %v1734, %v1064
      %v1768 = vsel %vm1764, %v1735, %v1066
      %v1769 = vsel %vm1764, %v1736, %v1068
      %v1770 = vsel %vm1764, %v1737, %v1070
      %v1771 = vsel %vm1764, %v1738, %v1072
      %v1772 = vsel %vm1764, %v1739, %v1074
      %v1773 = vsel %vm1764, %v1740, %v1076
      %v1774 = vsel %vm1764, %v1741, %v1078
      %v1775 = vsel %vm1764, %v1742, %v1080
      %v1776 = vsel %vm1764, %v1743, %v1082
      %v1777 = vsel %vm1764, %v1744, %v1084
      %v1778 = vsel %vm1764, %v1745, %v1086
      %v1779 = vsel %vm1764, %v1746, %v1088
      %v1780 = vsel %vm1764, %v1747, %v1090
      %v1781 = vsel %vm1764, %v1748, %v1092
      %v1782 = vsel %vm1764, %v1749, %v1094
      %v1783 = vsel %vm1764, %v1750, %v1096
      %v1784 = vsel %vm1764, %v1751, %v1098
      %v1785 = vsel %vm1764, %v1752, %v1100
      %v1786 = vsel %vm1764, %v1753, %v1102
      %v1787 = vsel %vm1764, %v1754, %v1104
      %v1788 = vsel %vm1764, %v1755, %v1106
      %v1789 = vsel %vm1764, %v1756, %v1108
      %v1790 = vsel %vm1764, %v1757, %v1110
      %v1791 = vsel %vm1764, %v1758, %v1112
      %v1792 = vsel %vm1764, %v1759, %v1114
      %v1793 = vsel %vm1764, %v1760, %v1116
      %v1794 = vsel %vm1764, %v1761, %v1118
      %v1795 = vsel %vm1764, %v1762, %v1120
      %v1796 = vsel %vm1764, %v1763, %v1122
      %vm1797 = vcmask 146432
      %v1798 = vsel %vm1797, %v1765, %v1156
      %v1799 = vsel %vm1797, %v1766, %v1158
      %v1800 = vsel %vm1797, %v1767, %v1160
      %v1801 = vsel %vm1797, %v1768, %v1162
      %v1802 = vsel %vm1797, %v1769, %v1164
      %v1803 = vsel %vm1797, %v1770, %v1166
      %v1804 = vsel %vm1797, %v1771, %v1168
      %v1805 = vsel %vm1797, %v1772, %v1170
      %v1806 = vsel %vm1797, %v1773, %v1172
      %v1807 = vsel %vm1797, %v1774, %v1174
      %v1808 = vsel %vm1797, %v1775, %v1176
      %v1809 = vsel %vm1797, %v1776, %v1178
      %v1810 = vsel %vm1797, %v1777, %v1180
      %v1811 = vsel %vm1797, %v1778, %v1182
      %v1812 = vsel %vm1797, %v1779, %v1184
      %v1813 = vsel %vm1797, %v1780, %v1186
      %v1814 = vsel %vm1797, %v1781, %v1188
      %v1815 = vsel %vm1797, %v1782, %v1190
      %v1816 = vsel %vm1797, %v1783, %v1192
      %v1817 = vsel %vm1797, %v1784, %v1194
      %v1818 = vsel %vm1797, %v1785, %v1196
      %v1819 = vsel %vm1797, %v1786, %v1198
      %v1820 = vsel %vm1797, %v1787, %v1200
      %v1821 = vsel %vm1797, %v1788, %v1202
      %v1822 = vsel %vm1797, %v1789, %v1204
      %v1823 = vsel %vm1797, %v1790, %v1206
      %v1824 = vsel %vm1797, %v1791, %v1208
      %v1825 = vsel %vm1797, %v1792, %v1210
      %v1826 = vsel %vm1797, %v1793, %v1212
      %v1827 = vsel %vm1797, %v1794, %v1214
      %v1828 = vsel %vm1797, %v1795, %v1216
      %v1829 = vsel %vm1797, %v1796, %v1218
      %vm1830 = vcmask 195584
      %v1831 = vsel %vm1830, %v1798, %v1252
      %v1832 = vsel %vm1830, %v1799, %v1254
      %v1833 = vsel %vm1830, %v1800, %v1256
      %v1834 = vsel %vm1830, %v1801, %v1258
      %v1835 = vsel %vm1830, %v1802, %v1260
      %v1836 = vsel %vm1830, %v1803, %v1262
      %v1837 = vsel %vm1830, %v1804, %v1264
      %v1838 = vsel %vm1830, %v1805, %v1266
      %v1839 = vsel %vm1830, %v1806, %v1268
      %v1840 = vsel %vm1830, %v1807, %v1270
      %v1841 = vsel %vm1830, %v1808, %v1272
      %v1842 = vsel %vm1830, %v1809, %v1274
      %v1843 = vsel %vm1830, %v1810, %v1276
      %v1844 = vsel %vm1830, %v1811, %v1278
      %v1845 = vsel %vm1830, %v1812, %v1280
      %v1846 = vsel %vm1830, %v1813, %v1282
      %v1847 = vsel %vm1830, %v1814, %v1284
      %v1848 = vsel %vm1830, %v1815, %v1286
      %v1849 = vsel %vm1830, %v1816, %v1288
      %v1850 = vsel %vm1830, %v1817, %v1290
      %v1851 = vsel %vm1830, %v1818, %v1292
      %v1852 = vsel %vm1830, %v1819, %v1294
      %v1853 = vsel %vm1830, %v1820, %v1296
      %v1854 = vsel %vm1830, %v1821, %v1298
      %v1855 = vsel %vm1830, %v1822, %v1300
      %v1856 = vsel %vm1830, %v1823, %v1302
      %v1857 = vsel %vm1830, %v1824, %v1304
      %v1858 = vsel %vm1830, %v1825, %v1306
      %v1859 = vsel %vm1830, %v1826, %v1308
      %v1860 = vsel %vm1830, %v1827, %v1310
      %v1861 = vsel %vm1830, %v1828, %v1312
      %v1862 = vsel %vm1830, %v1829, %v1314
      %vm1863 = vcmask 244736
      %v1864 = vsel %vm1863, %v1831, %v1348
      %v1865 = vsel %vm1863, %v1832, %v1350
      %v1866 = vsel %vm1863, %v1833, %v1352
      %v1867 = vsel %vm1863, %v1834, %v1354
      %v1868 = vsel %vm1863, %v1835, %v1356
      %v1869 = vsel %vm1863, %v1836, %v1358
      %v1870 = vsel %vm1863, %v1837, %v1360
      %v1871 = vsel %vm1863, %v1838, %v1362
      %v1872 = vsel %vm1863, %v1839, %v1364
      %v1873 = vsel %vm1863, %v1840, %v1366
      %v1874 = vsel %vm1863, %v1841, %v1368
      %v1875 = vsel %vm1863, %v1842, %v1370
      %v1876 = vsel %vm1863, %v1843, %v1372
      %v1877 = vsel %vm1863, %v1844, %v1374
      %v1878 = vsel %vm1863, %v1845, %v1376
      %v1879 = vsel %vm1863, %v1846, %v1378
      %v1880 = vsel %vm1863, %v1847, %v1380
      %v1881 = vsel %vm1863, %v1848, %v1382
      %v1882 = vsel %vm1863, %v1849, %v1384
      %v1883 = vsel %vm1863, %v1850, %v1386
      %v1884 = vsel %vm1863, %v1851, %v1388
      %v1885 = vsel %vm1863, %v1852, %v1390
      %v1886 = vsel %vm1863, %v1853, %v1392
      %v1887 = vsel %vm1863, %v1854, %v1394
      %v1888 = vsel %vm1863, %v1855, %v1396
      %v1889 = vsel %vm1863, %v1856, %v1398
      %v1890 = vsel %vm1863, %v1857, %v1400
      %v1891 = vsel %vm1863, %v1858, %v1402
      %v1892 = vsel %vm1863, %v1859, %v1404
      %v1893 = vsel %vm1863, %v1860, %v1406
      %v1894 = vsel %vm1863, %v1861, %v1408
      %v1895 = vsel %vm1863, %v1862, %v1410
      %vm1896 = vcmask 293888
      %v1897 = vsel %vm1896, %v1864, %v1444
      %v1898 = vsel %vm1896, %v1865, %v1446
      %v1899 = vsel %vm1896, %v1866, %v1448
      %v1900 = vsel %vm1896, %v1867, %v1450
      %v1901 = vsel %vm1896, %v1868, %v1452
      %v1902 = vsel %vm1896, %v1869, %v1454
      %v1903 = vsel %vm1896, %v1870, %v1456
      %v1904 = vsel %vm1896, %v1871, %v1458
      %v1905 = vsel %vm1896, %v1872, %v1460
      %v1906 = vsel %vm1896, %v1873, %v1462
      %v1907 = vsel %vm1896, %v1874, %v1464
      %v1908 = vsel %vm1896, %v1875, %v1466
      %v1909 = vsel %vm1896, %v1876, %v1468
      %v1910 = vsel %vm1896, %v1877, %v1470
      %v1911 = vsel %vm1896, %v1878, %v1472
      %v1912 = vsel %vm1896, %v1879, %v1474
      %v1913 = vsel %vm1896, %v1880, %v1476
      %v1914 = vsel %vm1896, %v1881, %v1478
      %v1915 = vsel %vm1896, %v1882, %v1480
      %v1916 = vsel %vm1896, %v1883, %v1482
      %v1917 = vsel %vm1896, %v1884, %v1484
      %v1918 = vsel %vm1896, %v1885, %v1486
      %v1919 = vsel %vm1896, %v1886, %v1488
      %v1920 = vsel %vm1896, %v1887, %v1490
      %v1921 = vsel %vm1896, %v1888, %v1492
      %v1922 = vsel %vm1896, %v1889, %v1494
      %v1923 = vsel %vm1896, %v1890, %v1496
      %v1924 = vsel %vm1896, %v1891, %v1498
      %v1925 = vsel %vm1896, %v1892, %v1500
      %v1926 = vsel %vm1896, %v1893, %v1502
      %v1927 = vsel %vm1896, %v1894, %v1504
      %v1928 = vsel %vm1896, %v1895, %v1506
      %vm1929 = vcmask 343040
      %v1930 = vsel %vm1929, %v1897, %v1540
      %v1931 = vsel %vm1929, %v1898, %v1542
      %v1932 = vsel %vm1929, %v1899, %v1544
      %v1933 = vsel %vm1929, %v1900, %v1546
      %v1934 = vsel %vm1929, %v1901, %v1548
      %v1935 = vsel %vm1929, %v1902, %v1550
      %v1936 = vsel %vm1929, %v1903, %v1552
      %v1937 = vsel %vm1929, %v1904, %v1554
      %v1938 = vsel %vm1929, %v1905, %v1556
      %v1939 = vsel %vm1929, %v1906, %v1558
      %v1940 = vsel %vm1929, %v1907, %v1560
      %v1941 = vsel %vm1929, %v1908, %v1562
      %v1942 = vsel %vm1929, %v1909, %v1564
      %v1943 = vsel %vm1929, %v1910, %v1566
      %v1944 = vsel %vm1929, %v1911, %v1568
      %v1945 = vsel %vm1929, %v1912, %v1570
      %v1946 = vsel %vm1929, %v1913, %v1572
      %v1947 = vsel %vm1929, %v1914, %v1574
      %v1948 = vsel %vm1929, %v1915, %v1576
      %v1949 = vsel %vm1929, %v1916, %v1578
      %v1950 = vsel %vm1929, %v1917, %v1580
      %v1951 = vsel %vm1929, %v1918, %v1582
      %v1952 = vsel %vm1929, %v1919, %v1584
      %v1953 = vsel %vm1929, %v1920, %v1586
      %v1954 = vsel %vm1929, %v1921, %v1588
      %v1955 = vsel %vm1929, %v1922, %v1590
      %v1956 = vsel %vm1929, %v1923, %v1592
      %v1957 = vsel %vm1929, %v1924, %v1594
      %v1958 = vsel %vm1929, %v1925, %v1596
      %v1959 = vsel %vm1929, %v1926, %v1598
      %v1960 = vsel %vm1929, %v1927, %v1600
      %v1961 = vsel %vm1929, %v1928, %v1602
      %vm1962 = vcmask 392192
      %v1963 = vsel %vm1962, %v1930, %v1636
      %v1964 = vsel %vm1962, %v1931, %v1638
      %v1965 = vsel %vm1962, %v1932, %v1640
      %v1966 = vsel %vm1962, %v1933, %v1642
      %v1967 = vsel %vm1962, %v1934, %v1644
      %v1968 = vsel %vm1962, %v1935, %v1646
      %v1969 = vsel %vm1962, %v1936, %v1648
      %v1970 = vsel %vm1962, %v1937, %v1650
      %v1971 = vsel %vm1962, %v1938, %v1652
      %v1972 = vsel %vm1962, %v1939, %v1654
      %v1973 = vsel %vm1962, %v1940, %v1656
      %v1974 = vsel %vm1962, %v1941, %v1658
      %v1975 = vsel %vm1962, %v1942, %v1660
      %v1976 = vsel %vm1962, %v1943, %v1662
      %v1977 = vsel %vm1962, %v1944, %v1664
      %v1978 = vsel %vm1962, %v1945, %v1666
      %v1979 = vsel %vm1962, %v1946, %v1668
      %v1980 = vsel %vm1962, %v1947, %v1670
      %v1981 = vsel %vm1962, %v1948, %v1672
      %v1982 = vsel %vm1962, %v1949, %v1674
      %v1983 = vsel %vm1962, %v1950, %v1676
      %v1984 = vsel %vm1962, %v1951, %v1678
      %v1985 = vsel %vm1962, %v1952, %v1680
      %v1986 = vsel %vm1962, %v1953, %v1682
      %v1987 = vsel %vm1962, %v1954, %v1684
      %v1988 = vsel %vm1962, %v1955, %v1686
      %v1989 = vsel %vm1962, %v1956, %v1688
      %v1990 = vsel %vm1962, %v1957, %v1690
      %v1991 = vsel %vm1962, %v1958, %v1692
      %v1992 = vsel %vm1962, %v1959, %v1694
      %v1993 = vsel %vm1962, %v1960, %v1696
      %v1994 = vsel %vm1962, %v1961, %v1698
      %v1995 = vpack.c.bf16 %v1964, %v1963
      %v1996 = vpack.c.bf16 %v1966, %v1965
      %v1997 = vpack.c.bf16 %v1968, %v1967
      %v1998 = vpack.c.bf16 %v1970, %v1969
      %v1999 = vpack.c.bf16 %v1972, %v1971
      %v2000 = vpack.c.bf16 %v1974, %v1973
      %v2001 = vpack.c.bf16 %v1976, %v1975
      %v2002 = vpack.c.bf16 %v1978, %v1977
      %v2003 = vpack.c.bf16 %v1980, %v1979
      %v2004 = vpack.c.bf16 %v1982, %v1981
      %v2005 = vpack.c.bf16 %v1984, %v1983
      %v2006 = vpack.c.bf16 %v1986, %v1985
      %v2007 = vpack.c.bf16 %v1988, %v1987
      %v2008 = vpack.c.bf16 %v1990, %v1989
      %v2009 = vpack.c.bf16 %v1992, %v1991
      %v2010 = vpack.c.bf16 %v1994, %v1993
      %v2012 = vlaneseq
      %v2013 = vshrl.u32 %v2012, 7
      %v2014 = vsub.s32 0, %v2013
      %v2015 = vrot.slane %v589, %v2014
      %v2024 = vunpack.c.l.b16 %v582
      %v2025 = vunpack.c.l.b16 %v583
      %v2026 = vunpack.c.l.b16 %v584
      %v2027 = vunpack.c.l.b16 %v585
      %v2028 = vunpack.c.l.b16 %v586
      %v2029 = vunpack.c.l.b16 %v587
      %v2030 = vunpack.c.l.b16 %v588
      %v2031 = vpack.c.b16 %v2025, %v2024
      %v2032 = vpack.c.b16 %v2027, %v2026
      %v2033 = vpack.c.b16 %v2029, %v2028
      %v2034 = vpack.c.b16 %v2030, %v2030
      %vm2038 = vcmask 441344
      %v2040 = vsel %vm2038, %v1995, 0
      %v2043 = vsel %vm2038, %v1996, 0
      %v2046 = vsel %vm2038, %v1997, 0
      %v2049 = vsel %vm2038, %v1998, 0
      %v2052 = vsel %vm2038, %v1999, 0
      %v2055 = vsel %vm2038, %v2000, 0
      %v2058 = vsel %vm2038, %v2001, 0
      %v2061 = vsel %vm2038, %v2002, 0
      %v2064 = vsel %vm2038, %v2003, 0
      %v2067 = vsel %vm2038, %v2004, 0
      %v2070 = vsel %vm2038, %v2005, 0
      %v2073 = vsel %vm2038, %v2006, 0
      %v2076 = vsel %vm2038, %v2007, 0
      %v2079 = vsel %vm2038, %v2008, 0
      %v2082 = vsel %vm2038, %v2009, 0
      %v2085 = vsel %vm2038, %v2010, 0
      %vm2087 = vcmask 1042432
      %v2089 = vsel %vm2087, %v2034, 0
      %2091 = vmatprep.subr.bf16.mxu0 0
      %2092 = vmatpush1.bf16.msra.mxu0 %v2031
      %2093 = vmatprep.subr.bf16.mxu0 0
      %2094 = vmatpush1.bf16.msra.mxu0 %v2032
      %2095 = vmatprep.subr.bf16.mxu0 0
      %2096 = vmatpush1.bf16.msra.mxu0 %v2033
      %2097 = vmatprep.subr.bf16.mxu0 0
      %2098 = vmatpush1.bf16.msra.mxu0 %v2089
      %2099 = vmatprep.subr.bf16.mxu0 0
      %2100 = vmatpush1.bf16.msra.mxu0 0
      %2101 = vmatprep.subr.bf16.mxu0 0
      %2102 = vmatpush1.bf16.msra.mxu0 0
      %2103 = vmatprep.subr.bf16.mxu0 0
      %2104 = vmatpush1.bf16.msra.mxu0 0
      %2105 = vmatprep.subr.bf16.mxu0 0
      %2106 = vmatpush1.bf16.msra.mxu0 0
      %2107 = vmatprep.subr.bf16.mxu0 0
      %2108 = vmatpush1.bf16.msra.mxu0 0
      %2109 = vmatprep.subr.bf16.mxu0 0
      %2110 = vmatpush1.bf16.msra.mxu0 0
      %2111 = vmatprep.subr.bf16.mxu0 0
      %2112 = vmatpush1.bf16.msra.mxu0 0
      %2113 = vmatprep.subr.bf16.mxu0 0
      %2114 = vmatpush1.bf16.msra.mxu0 0
      %2115 = vmatprep.subr.bf16.mxu0 0
      %2116 = vmatpush1.bf16.msra.mxu0 0
      %2117 = vmatprep.subr.bf16.mxu0 0
      %2118 = vmatpush1.bf16.msra.mxu0 0
      %2119 = vmatprep.subr.bf16.mxu0 0
      %2120 = vmatpush1.bf16.msra.mxu0 0
      %2121 = vmatprep.subr.bf16.mxu0 0
      %2122 = vmatpush1.bf16.msra.mxu0 0
      %2123 = vmatprep.mubr.bf16.mxu0 0
      %2124 = vmatmul.mubr.bf16.gmra.mrb[0].mxu0 %v2040
      %v2125 = vpop.f32.mrb[0].mxu0
      %v2126 = vadd.f32 %v2015, %v2125
      %v2127 = vpop.f32.mrb[0].mxu0
      %v2128 = vpop.f32.mrb[0].mxu0
      %v2129 = vadd.f32 %v2015, %v2128
      %v2130 = vpop.f32.mrb[0].mxu0
      %2131 = vmatprep.mubr.bf16.mxu0 0
      %2132 = vmatmul.mubr.bf16.gmra.mrb[0].mxu0 %v2043
      %v2133 = vpop.f32.mrb[0].mxu0
      %v2134 = vadd.f32 %v2015, %v2133
      %v2135 = vpop.f32.mrb[0].mxu0
      %v2136 = vpop.f32.mrb[0].mxu0
      %v2137 = vadd.f32 %v2015, %v2136
      %v2138 = vpop.f32.mrb[0].mxu0
      %2139 = vmatprep.mubr.bf16.mxu0 0
      %2140 = vmatmul.mubr.bf16.gmra.mrb[0].mxu0 %v2046
      %v2141 = vpop.f32.mrb[0].mxu0
      %v2142 = vadd.f32 %v2015, %v2141
      %v2143 = vpop.f32.mrb[0].mxu0
      %v2144 = vpop.f32.mrb[0].mxu0
      %v2145 = vadd.f32 %v2015, %v2144
      %v2146 = vpop.f32.mrb[0].mxu0
      %2147 = vmatprep.mubr.bf16.mxu0 0
      %2148 = vmatmul.mubr.bf16.gmra.mrb[0].mxu0 %v2049
      %v2149 = vpop.f32.mrb[0].mxu0
      %v2150 = vadd.f32 %v2015, %v2149
      %v2151 = vpop.f32.mrb[0].mxu0
      %v2152 = vpop.f32.mrb[0].mxu0
      %v2153 = vadd.f32 %v2015, %v2152
      %v2154 = vpop.f32.mrb[0].mxu0
      %2155 = vmatprep.mubr.bf16.mxu0 0
      %2156 = vmatmul.mubr.bf16.gmra.mrb[0].mxu0 %v2052
      %v2157 = vpop.f32.mrb[0].mxu0
      %v2158 = vadd.f32 %v2015, %v2157
      %v2159 = vpop.f32.mrb[0].mxu0
      %v2160 = vpop.f32.mrb[0].mxu0
      %v2161 = vadd.f32 %v2015, %v2160
      %v2162 = vpop.f32.mrb[0].mxu0
      %2163 = vmatprep.mubr.bf16.mxu0 0
      %2164 = vmatmul.mubr.bf16.gmra.mrb[0].mxu0 %v2055
      %v2165 = vpop.f32.mrb[0].mxu0
      %v2166 = vadd.f32 %v2015, %v2165
      %v2167 = vpop.f32.mrb[0].mxu0
      %v2168 = vpop.f32.mrb[0].mxu0
      %v2169 = vadd.f32 %v2015, %v2168
      %v2170 = vpop.f32.mrb[0].mxu0
      %2171 = vmatprep.mubr.bf16.mxu0 0
      %2172 = vmatmul.mubr.bf16.gmra.mrb[0].mxu0 %v2058
      %v2173 = vpop.f32.mrb[0].mxu0
      %v2174 = vadd.f32 %v2015, %v2173
      %v2175 = vpop.f32.mrb[0].mxu0
      %v2176 = vpop.f32.mrb[0].mxu0
      %v2177 = vadd.f32 %v2015, %v2176
      %v2178 = vpop.f32.mrb[0].mxu0
      %2179 = vmatprep.mubr.bf16.mxu0 0
      %2180 = vmatmul.mubr.bf16.gmra.mrb[0].mxu0 %v2061
      %v2181 = vpop.f32.mrb[0].mxu0
      %v2182 = vadd.f32 %v2015, %v2181
      %v2183 = vpop.f32.mrb[0].mxu0
      %v2184 = vpop.f32.mrb[0].mxu0
      %v2185 = vadd.f32 %v2015, %v2184
      %v2186 = vpop.f32.mrb[0].mxu0
      %2187 = vmatprep.mubr.bf16.mxu0 0
      %2188 = vmatmul.mubr.bf16.gmra.mrb[0].mxu0 %v2064
      %v2189 = vpop.f32.mrb[0].mxu0
      %v2190 = vadd.f32 %v2015, %v2189
      %v2191 = vpop.f32.mrb[0].mxu0
      %v2192 = vpop.f32.mrb[0].mxu0
      %v2193 = vadd.f32 %v2015, %v2192
      %v2194 = vpop.f32.mrb[0].mxu0
      %2195 = vmatprep.mubr.bf16.mxu0 0
      %2196 = vmatmul.mubr.bf16.gmra.mrb[0].mxu0 %v2067
      %v2197 = vpop.f32.mrb[0].mxu0
      %v2198 = vadd.f32 %v2015, %v2197
      %v2199 = vpop.f32.mrb[0].mxu0
      %v2200 = vpop.f32.mrb[0].mxu0
      %v2201 = vadd.f32 %v2015, %v2200
      %v2202 = vpop.f32.mrb[0].mxu0
      %2203 = vmatprep.mubr.bf16.mxu0 0
      %2204 = vmatmul.mubr.bf16.gmra.mrb[0].mxu0 %v2070
      %v2205 = vpop.f32.mrb[0].mxu0
      %v2206 = vadd.f32 %v2015, %v2205
      %v2207 = vpop.f32.mrb[0].mxu0
      %v2208 = vpop.f32.mrb[0].mxu0
      %v2209 = vadd.f32 %v2015, %v2208
      %v2210 = vpop.f32.mrb[0].mxu0
      %2211 = vmatprep.mubr.bf16.mxu0 0
      %2212 = vmatmul.mubr.bf16.gmra.mrb[0].mxu0 %v2073
      %v2213 = vpop.f32.mrb[0].mxu0
      %v2214 = vadd.f32 %v2015, %v2213
      %v2215 = vpop.f32.mrb[0].mxu0
      %v2216 = vpop.f32.mrb[0].mxu0
      %v2217 = vadd.f32 %v2015, %v2216
      %v2218 = vpop.f32.mrb[0].mxu0
      %2219 = vmatprep.mubr.bf16.mxu0 0
      %2220 = vmatmul.mubr.bf16.gmra.mrb[0].mxu0 %v2076
      %v2221 = vpop.f32.mrb[0].mxu0
      %v2222 = vadd.f32 %v2015, %v2221
      %v2223 = vpop.f32.mrb[0].mxu0
      %v2224 = vpop.f32.mrb[0].mxu0
      %v2225 = vadd.f32 %v2015, %v2224
      %v2226 = vpop.f32.mrb[0].mxu0
      %2227 = vmatprep.mubr.bf16.mxu0 0
      %2228 = vmatmul.mubr.bf16.gmra.mrb[0].mxu0 %v2079
      %v2229 = vpop.f32.mrb[0].mxu0
      %v2230 = vadd.f32 %v2015, %v2229
      %v2231 = vpop.f32.mrb[0].mxu0
      %v2232 = vpop.f32.mrb[0].mxu0
      %v2233 = vadd.f32 %v2015, %v2232
      %v2234 = vpop.f32.mrb[0].mxu0
      %2235 = vmatprep.mubr.bf16.mxu0 0
      %2236 = vmatmul.mubr.bf16.gmra.mrb[0].mxu0 %v2082
      %v2237 = vpop.f32.mrb[0].mxu0
      %v2238 = vadd.f32 %v2015, %v2237
      %v2239 = vpop.f32.mrb[0].mxu0
      %v2240 = vpop.f32.mrb[0].mxu0
      %v2241 = vadd.f32 %v2015, %v2240
      %v2242 = vpop.f32.mrb[0].mxu0
      %2243 = vmatprep.mubr.bf16.mxu0 0
      %2244 = vmatmul.mubr.bf16.gmra.mrb[0].mxu0 %v2085
      %v2245 = vpop.f32.mrb[0].mxu0
      %v2246 = vadd.f32 %v2015, %v2245
      %v2247 = vpop.f32.mrb[0].mxu0
      %v2248 = vpop.f32.mrb[0].mxu0
      %v2249 = vadd.f32 %v2015, %v2248
      %v2250 = vpop.f32.mrb[0].mxu0
      %2251 = vdwg.mxu0
      %v2252 = vmax.f32 %v2126, 0.0
      %v2253 = vmax.f32 %v2129, 0.0
      %v2254 = vmax.f32 %v2134, 0.0
      %v2255 = vmax.f32 %v2137, 0.0
      %v2256 = vmax.f32 %v2142, 0.0
      %v2257 = vmax.f32 %v2145, 0.0
      %v2258 = vmax.f32 %v2150, 0.0
      %v2259 = vmax.f32 %v2153, 0.0
      %v2260 = vmax.f32 %v2158, 0.0
      %v2261 = vmax.f32 %v2161, 0.0
      %v2262 = vmax.f32 %v2166, 0.0
      %v2263 = vmax.f32 %v2169, 0.0
      %v2264 = vmax.f32 %v2174, 0.0
      %v2265 = vmax.f32 %v2177, 0.0
      %v2266 = vmax.f32 %v2182, 0.0
      %v2267 = vmax.f32 %v2185, 0.0
      %v2268 = vmax.f32 %v2190, 0.0
      %v2269 = vmax.f32 %v2193, 0.0
      %v2270 = vmax.f32 %v2198, 0.0
      %v2271 = vmax.f32 %v2201, 0.0
      %v2272 = vmax.f32 %v2206, 0.0
      %v2273 = vmax.f32 %v2209, 0.0
      %v2274 = vmax.f32 %v2214, 0.0
      %v2275 = vmax.f32 %v2217, 0.0
      %v2276 = vmax.f32 %v2222, 0.0
      %v2277 = vmax.f32 %v2225, 0.0
      %v2278 = vmax.f32 %v2230, 0.0
      %v2279 = vmax.f32 %v2233, 0.0
      %v2280 = vmax.f32 %v2238, 0.0
      %v2281 = vmax.f32 %v2241, 0.0
      %v2282 = vmax.f32 %v2246, 0.0
      %v2283 = vmax.f32 %v2249, 0.0
      %v2284 = vld [vmem:[%s3] sm:$0xf]
      %v2285 = vld [vmem:[%s3 + $0x4] sm:$0xf]
      %v2286 = vld [vmem:[%s3 + $0x8] sm:$0xf]
      %v2287 = vld [vmem:[%s3 + $0xc] sm:$0xf]
      %v2288 = vld [vmem:[%s3 + $0x10] sm:$0xf]
      %v2289 = vld [vmem:[%s3 + $0x14] sm:$0xf]
      %v2290 = vld [vmem:[%s3 + $0x18] sm:$0xf]
      %v2291 = vld [vmem:[%s3 + $0x1c] sm:$0xf]
      %v2292 = vld [vmem:[%s3 + $0x20] sm:$0xf]
      %v2293 = vld [vmem:[%s3 + $0x24] sm:$0xf]
      %v2294 = vld [vmem:[%s3 + $0x28] sm:$0xf]
      %v2295 = vld [vmem:[%s3 + $0x2c] sm:$0xf]
      %v2296 = vld [vmem:[%s3 + $0x30] sm:$0xf]
      %v2297 = vld [vmem:[%s3 + $0x34] sm:$0xf]
      %v2298 = vld [vmem:[%s3 + $0x38] sm:$0xf]
      %v2299 = vld [vmem:[%s3 + $0x3c] sm:$0xf]
      %v2300 = vld [vmem:[%s3 + $0x40] sm:$0xf]
      %v2301 = vld [vmem:[%s3 + $0x44] sm:$0xf]
      %v2302 = vld [vmem:[%s3 + $0x48] sm:$0xf]
      %v2303 = vld [vmem:[%s3 + $0x4c] sm:$0xf]
      %v2304 = vld [vmem:[%s3 + $0x50] sm:$0xf]
      %v2305 = vld [vmem:[%s3 + $0x54] sm:$0xf]
      %v2306 = vld [vmem:[%s3 + $0x58] sm:$0xf]
      %v2307 = vld [vmem:[%s3 + $0x5c] sm:$0xf]
      %v2308 = vld [vmem:[%s3 + $0x60] sm:$0xf]
      %v2309 = vld [vmem:[%s3 + $0x64] sm:$0xf]
      %v2310 = vld [vmem:[%s3 + $0x68] sm:$0xf]
      %v2311 = vld [vmem:[%s3 + $0x6c] sm:$0xf]
      %v2312 = vld [vmem:[%s3 + $0x70] sm:$0xf]
      %v2313 = vld [vmem:[%s3 + $0x74] sm:$0xf]
      %v2314 = vld [vmem:[%s3 + $0x78] sm:$0xf]
      %v2315 = vld [vmem:[%s3 + $0x7c] sm:$0xf]
      %v2316 = vld [vmem:[%s3 + $0x80] sm:$0xf]
      %v2317 = vld [vmem:[%s3 + $0x84] sm:$0xf]
      %v2318 = vld [vmem:[%s3 + $0x88] sm:$0xf]
      %v2319 = vld [vmem:[%s3 + $0x8c] sm:$0xf]
      %v2320 = vld [vmem:[%s4] sm:$0x1]
      %v2353 = vrot.slane %v2252, 7
      %v2354 = vrot.slane %v2253, 7
      %v2355 = vsel %vm623, %v2353, %v2354
      %v2356 = vrot.slane %v2254, 7
      %v2357 = vrot.slane %v2255, 7
      %v2358 = vsel %vm623, %v2356, %v2357
      %v2359 = vrot.slane %v2256, 7
      %v2360 = vrot.slane %v2257, 7
      %v2361 = vsel %vm623, %v2359, %v2360
      %v2362 = vrot.slane %v2258, 7
      %v2363 = vrot.slane %v2259, 7
      %v2364 = vsel %vm623, %v2362, %v2363
      %v2365 = vrot.slane %v2260, 7
      %v2366 = vrot.slane %v2261, 7
      %v2367 = vsel %vm623, %v2365, %v2366
      %v2368 = vrot.slane %v2262, 7
      %v2369 = vrot.slane %v2263, 7
      %v2370 = vsel %vm623, %v2368, %v2369
      %v2371 = vrot.slane %v2264, 7
      %v2372 = vrot.slane %v2265, 7
      %v2373 = vsel %vm623, %v2371, %v2372
      %v2374 = vrot.slane %v2266, 7
      %v2375 = vrot.slane %v2267, 7
      %v2376 = vsel %vm623, %v2374, %v2375
      %v2377 = vrot.slane %v2268, 7
      %v2378 = vrot.slane %v2269, 7
      %v2379 = vsel %vm623, %v2377, %v2378
      %v2380 = vrot.slane %v2270, 7
      %v2381 = vrot.slane %v2271, 7
      %v2382 = vsel %vm623, %v2380, %v2381
      %v2383 = vrot.slane %v2272, 7
      %v2384 = vrot.slane %v2273, 7
      %v2385 = vsel %vm623, %v2383, %v2384
      %v2386 = vrot.slane %v2274, 7
      %v2387 = vrot.slane %v2275, 7
      %v2388 = vsel %vm623, %v2386, %v2387
      %v2389 = vrot.slane %v2276, 7
      %v2390 = vrot.slane %v2277, 7
      %v2391 = vsel %vm623, %v2389, %v2390
      %v2392 = vrot.slane %v2278, 7
      %v2393 = vrot.slane %v2279, 7
      %v2394 = vsel %vm623, %v2392, %v2393
      %v2395 = vrot.slane %v2280, 7
      %v2396 = vrot.slane %v2281, 7
      %v2397 = vsel %vm623, %v2395, %v2396
      %v2398 = vrot.slane %v2282, 7
      %v2399 = vrot.slane %v2283, 7
      %v2400 = vsel %vm623, %v2398, %v2399
      %v2448 = vsel %vm623, 0.0, %v2353
      %v2449 = vsel %vm623, 0.0, %v2356
      %v2450 = vsel %vm623, 0.0, %v2359
      %v2451 = vsel %vm623, 0.0, %v2362
      %v2452 = vsel %vm623, 0.0, %v2365
      %v2453 = vsel %vm623, 0.0, %v2368
      %v2454 = vsel %vm623, 0.0, %v2371
      %v2455 = vsel %vm623, 0.0, %v2374
      %v2456 = vsel %vm623, 0.0, %v2377
      %v2457 = vsel %vm623, 0.0, %v2380
      %v2458 = vsel %vm623, 0.0, %v2383
      %v2459 = vsel %vm623, 0.0, %v2386
      %v2460 = vsel %vm623, 0.0, %v2389
      %v2461 = vsel %vm623, 0.0, %v2392
      %v2462 = vsel %vm623, 0.0, %v2395
      %v2463 = vsel %vm623, 0.0, %v2398
      %v2464 = vsel %vm623, %v2354, 0.0
      %v2465 = vsel %vm623, %v2357, 0.0
      %v2466 = vsel %vm623, %v2360, 0.0
      %v2467 = vsel %vm623, %v2363, 0.0
      %v2468 = vsel %vm623, %v2366, 0.0
      %v2469 = vsel %vm623, %v2369, 0.0
      %v2470 = vsel %vm623, %v2372, 0.0
      %v2471 = vsel %vm623, %v2375, 0.0
      %v2472 = vsel %vm623, %v2378, 0.0
      %v2473 = vsel %vm623, %v2381, 0.0
      %v2474 = vsel %vm623, %v2384, 0.0
      %v2475 = vsel %vm623, %v2387, 0.0
      %v2476 = vsel %vm623, %v2390, 0.0
      %v2477 = vsel %vm623, %v2393, 0.0
      %v2478 = vsel %vm623, %v2396, 0.0
      %v2479 = vsel %vm623, %v2399, 0.0
      %v2510 = vrot.slane %v2448, 1
      %v2511 = vrot.slane %v2355, 1
      %v2512 = vsel %vm789, %v2510, %v2511
      %v2513 = vrot.slane %v2464, 1
      %v2514 = vsel %vm789, %v2511, %v2513
      %v2515 = vrot.slane %v2449, 1
      %v2516 = vrot.slane %v2358, 1
      %v2517 = vsel %vm789, %v2515, %v2516
      %v2518 = vrot.slane %v2465, 1
      %v2519 = vsel %vm789, %v2516, %v2518
      %v2520 = vrot.slane %v2450, 1
      %v2521 = vrot.slane %v2361, 1
      %v2522 = vsel %vm789, %v2520, %v2521
      %v2523 = vrot.slane %v2466, 1
      %v2524 = vsel %vm789, %v2521, %v2523
      %v2525 = vrot.slane %v2451, 1
      %v2526 = vrot.slane %v2364, 1
      %v2527 = vsel %vm789, %v2525, %v2526
      %v2528 = vrot.slane %v2467, 1
      %v2529 = vsel %vm789, %v2526, %v2528
      %v2530 = vrot.slane %v2452, 1
      %v2531 = vrot.slane %v2367, 1
      %v2532 = vsel %vm789, %v2530, %v2531
      %v2533 = vrot.slane %v2468, 1
      %v2534 = vsel %vm789, %v2531, %v2533
      %v2535 = vrot.slane %v2453, 1
      %v2536 = vrot.slane %v2370, 1
      %v2537 = vsel %vm789, %v2535, %v2536
      %v2538 = vrot.slane %v2469, 1
      %v2539 = vsel %vm789, %v2536, %v2538
      %v2540 = vrot.slane %v2454, 1
      %v2541 = vrot.slane %v2373, 1
      %v2542 = vsel %vm789, %v2540, %v2541
      %v2543 = vrot.slane %v2470, 1
      %v2544 = vsel %vm789, %v2541, %v2543
      %v2545 = vrot.slane %v2455, 1
      %v2546 = vrot.slane %v2376, 1
      %v2547 = vsel %vm789, %v2545, %v2546
      %v2548 = vrot.slane %v2471, 1
      %v2549 = vsel %vm789, %v2546, %v2548
      %v2550 = vrot.slane %v2456, 1
      %v2551 = vrot.slane %v2379, 1
      %v2552 = vsel %vm789, %v2550, %v2551
      %v2553 = vrot.slane %v2472, 1
      %v2554 = vsel %vm789, %v2551, %v2553
      %v2555 = vrot.slane %v2457, 1
      %v2556 = vrot.slane %v2382, 1
      %v2557 = vsel %vm789, %v2555, %v2556
      %v2558 = vrot.slane %v2473, 1
      %v2559 = vsel %vm789, %v2556, %v2558
      %v2560 = vrot.slane %v2458, 1
      %v2561 = vrot.slane %v2385, 1
      %v2562 = vsel %vm789, %v2560, %v2561
      %v2563 = vrot.slane %v2474, 1
      %v2564 = vsel %vm789, %v2561, %v2563
      %v2565 = vrot.slane %v2459, 1
      %v2566 = vrot.slane %v2388, 1
      %v2567 = vsel %vm789, %v2565, %v2566
      %v2568 = vrot.slane %v2475, 1
      %v2569 = vsel %vm789, %v2566, %v2568
      %v2570 = vrot.slane %v2460, 1
      %v2571 = vrot.slane %v2391, 1
      %v2572 = vsel %vm789, %v2570, %v2571
      %v2573 = vrot.slane %v2476, 1
      %v2574 = vsel %vm789, %v2571, %v2573
      %v2575 = vrot.slane %v2461, 1
      %v2576 = vrot.slane %v2394, 1
      %v2577 = vsel %vm789, %v2575, %v2576
      %v2578 = vrot.slane %v2477, 1
      %v2579 = vsel %vm789, %v2576, %v2578
      %v2580 = vrot.slane %v2462, 1
      %v2581 = vrot.slane %v2397, 1
      %v2582 = vsel %vm789, %v2580, %v2581
      %v2583 = vrot.slane %v2478, 1
      %v2584 = vsel %vm789, %v2581, %v2583
      %v2585 = vrot.slane %v2448, 2
      %v2586 = vrot.slane %v2355, 2
      %v2587 = vsel %vm870, %v2585, %v2586
      %v2588 = vrot.slane %v2464, 2
      %v2589 = vsel %vm870, %v2586, %v2588
      %v2590 = vrot.slane %v2449, 2
      %v2591 = vrot.slane %v2358, 2
      %v2592 = vsel %vm870, %v2590, %v2591
      %v2593 = vrot.slane %v2465, 2
      %v2594 = vsel %vm870, %v2591, %v2593
      %v2595 = vrot.slane %v2450, 2
      %v2596 = vrot.slane %v2361, 2
      %v2597 = vsel %vm870, %v2595, %v2596
      %v2598 = vrot.slane %v2466, 2
      %v2599 = vsel %vm870, %v2596, %v2598
      %v2600 = vrot.slane %v2451, 2
      %v2601 = vrot.slane %v2364, 2
      %v2602 = vsel %vm870, %v2600, %v2601
      %v2603 = vrot.slane %v2467, 2
      %v2604 = vsel %vm870, %v2601, %v2603
      %v2605 = vrot.slane %v2452, 2
      %v2606 = vrot.slane %v2367, 2
      %v2607 = vsel %vm870, %v2605, %v2606
      %v2608 = vrot.slane %v2468, 2
      %v2609 = vsel %vm870, %v2606, %v2608
      %v2610 = vrot.slane %v2453, 2
      %v2611 = vrot.slane %v2370, 2
      %v2612 = vsel %vm870, %v2610, %v2611
      %v2613 = vrot.slane %v2469, 2
      %v2614 = vsel %vm870, %v2611, %v2613
      %v2615 = vrot.slane %v2454, 2
      %v2616 = vrot.slane %v2373, 2
      %v2617 = vsel %vm870, %v2615, %v2616
      %v2618 = vrot.slane %v2470, 2
      %v2619 = vsel %vm870, %v2616, %v2618
      %v2620 = vrot.slane %v2455, 2
      %v2621 = vrot.slane %v2376, 2
      %v2622 = vsel %vm870, %v2620, %v2621
      %v2623 = vrot.slane %v2471, 2
      %v2624 = vsel %vm870, %v2621, %v2623
      %v2625 = vrot.slane %v2456, 2
      %v2626 = vrot.slane %v2379, 2
      %v2627 = vsel %vm870, %v2625, %v2626
      %v2628 = vrot.slane %v2472, 2
      %v2629 = vsel %vm870, %v2626, %v2628
      %v2630 = vrot.slane %v2457, 2
      %v2631 = vrot.slane %v2382, 2
      %v2632 = vsel %vm870, %v2630, %v2631
      %v2633 = vrot.slane %v2473, 2
      %v2634 = vsel %vm870, %v2631, %v2633
      %v2635 = vrot.slane %v2458, 2
      %v2636 = vrot.slane %v2385, 2
      %v2637 = vsel %vm870, %v2635, %v2636
      %v2638 = vrot.slane %v2474, 2
      %v2639 = vsel %vm870, %v2636, %v2638
      %v2640 = vrot.slane %v2459, 2
      %v2641 = vrot.slane %v2388, 2
      %v2642 = vsel %vm870, %v2640, %v2641
      %v2643 = vrot.slane %v2475, 2
      %v2644 = vsel %vm870, %v2641, %v2643
      %v2645 = vrot.slane %v2460, 2
      %v2646 = vrot.slane %v2391, 2
      %v2647 = vsel %vm870, %v2645, %v2646
      %v2648 = vrot.slane %v2476, 2
      %v2649 = vsel %vm870, %v2646, %v2648
      %v2650 = vrot.slane %v2461, 2
      %v2651 = vrot.slane %v2394, 2
      %v2652 = vsel %vm870, %v2650, %v2651
      %v2653 = vrot.slane %v2477, 2
      %v2654 = vsel %vm870, %v2651, %v2653
      %v2655 = vrot.slane %v2462, 2
      %v2656 = vrot.slane %v2397, 2
      %v2657 = vsel %vm870, %v2655, %v2656
      %v2658 = vrot.slane %v2478, 2
      %v2659 = vsel %vm870, %v2656, %v2658
      %v2662 = vrot.slane %v2463, 1
      %v2663 = vrot.slane %v2400, 1
      %v2664 = vsel %vm789, %v2662, %v2663
      %v2665 = vrot.slane %v2479, 1
      %v2666 = vsel %vm789, %v2663, %v2665
      %v2699 = vrot.slane %v2463, 2
      %v2700 = vrot.slane %v2400, 2
      %v2701 = vsel %vm870, %v2699, %v2700
      %v2702 = vrot.slane %v2479, 2
      %v2703 = vsel %vm870, %v2700, %v2702
      %2736 = vrot.lane.b32.xlu0 %v792, 32
      %v2737 = vpop.permute.xlu0 %2736
      %2738 = vrot.lane.b32.xlu0 %v794, 32
      %v2739 = vpop.permute.xlu0 %2738
      %2740 = vrot.lane.b32.xlu0 %v2512, 32
      %v2741 = vpop.permute.xlu0 %2740
      %2742 = vrot.lane.b32.xlu0 %v2514, 32
      %v2743 = vpop.permute.xlu0 %2742
      %2744 = vrot.lane.b32.xlu0 %v2517, 32
      %v2745 = vpop.permute.xlu0 %2744
      %2746 = vrot.lane.b32.xlu0 %v2519, 32
      %v2747 = vpop.permute.xlu0 %2746
      %2748 = vrot.lane.b32.xlu0 %v2522, 32
      %v2749 = vpop.permute.xlu0 %2748
      %2750 = vrot.lane.b32.xlu0 %v2524, 32
      %v2751 = vpop.permute.xlu0 %2750
      %2752 = vrot.lane.b32.xlu0 %v2527, 32
      %v2753 = vpop.permute.xlu0 %2752
      %2754 = vrot.lane.b32.xlu0 %v2529, 32
      %v2755 = vpop.permute.xlu0 %2754
      %2756 = vrot.lane.b32.xlu0 %v2532, 32
      %v2757 = vpop.permute.xlu0 %2756
      %2758 = vrot.lane.b32.xlu0 %v2534, 32
      %v2759 = vpop.permute.xlu0 %2758
      %2760 = vrot.lane.b32.xlu0 %v2537, 32
      %v2761 = vpop.permute.xlu0 %2760
      %2762 = vrot.lane.b32.xlu0 %v2539, 32
      %v2763 = vpop.permute.xlu0 %2762
      %2764 = vrot.lane.b32.xlu0 %v2542, 32
      %v2765 = vpop.permute.xlu0 %2764
      %2766 = vrot.lane.b32.xlu0 %v2544, 32
      %v2767 = vpop.permute.xlu0 %2766
      %2768 = vrot.lane.b32.xlu0 %v2547, 32
      %v2769 = vpop.permute.xlu0 %2768
      %2770 = vrot.lane.b32.xlu0 %v2549, 32
      %v2771 = vpop.permute.xlu0 %2770
      %2772 = vrot.lane.b32.xlu0 %v2552, 32
      %v2773 = vpop.permute.xlu0 %2772
      %2774 = vrot.lane.b32.xlu0 %v2554, 32
      %v2775 = vpop.permute.xlu0 %2774
      %2776 = vrot.lane.b32.xlu0 %v2557, 32
      %v2777 = vpop.permute.xlu0 %2776
      %2778 = vrot.lane.b32.xlu0 %v2559, 32
      %v2779 = vpop.permute.xlu0 %2778
      %2780 = vrot.lane.b32.xlu0 %v2562, 32
      %v2781 = vpop.permute.xlu0 %2780
      %2782 = vrot.lane.b32.xlu0 %v2564, 32
      %v2783 = vpop.permute.xlu0 %2782
      %2784 = vrot.lane.b32.xlu0 %v2567, 32
      %v2785 = vpop.permute.xlu0 %2784
      %2786 = vrot.lane.b32.xlu0 %v2569, 32
      %v2787 = vpop.permute.xlu0 %2786
      %2788 = vrot.lane.b32.xlu0 %v2572, 32
      %v2789 = vpop.permute.xlu0 %2788
      %2790 = vrot.lane.b32.xlu0 %v2574, 32
      %v2791 = vpop.permute.xlu0 %2790
      %2792 = vrot.lane.b32.xlu0 %v2577, 32
      %v2793 = vpop.permute.xlu0 %2792
      %2794 = vrot.lane.b32.xlu0 %v2579, 32
      %v2795 = vpop.permute.xlu0 %2794
      %2796 = vrot.lane.b32.xlu0 %v2582, 32
      %v2797 = vpop.permute.xlu0 %2796
      %2798 = vrot.lane.b32.xlu0 %v2584, 32
      %v2799 = vpop.permute.xlu0 %2798
      %2832 = vrot.lane.b32.xlu0 %v873, 64
      %v2833 = vpop.permute.xlu0 %2832
      %2834 = vrot.lane.b32.xlu0 %v875, 64
      %v2835 = vpop.permute.xlu0 %2834
      %2836 = vrot.lane.b32.xlu0 %v2587, 64
      %v2837 = vpop.permute.xlu0 %2836
      %2838 = vrot.lane.b32.xlu0 %v2589, 64
      %v2839 = vpop.permute.xlu0 %2838
      %2840 = vrot.lane.b32.xlu0 %v2592, 64
      %v2841 = vpop.permute.xlu0 %2840
      %2842 = vrot.lane.b32.xlu0 %v2594, 64
      %v2843 = vpop.permute.xlu0 %2842
      %2844 = vrot.lane.b32.xlu0 %v2597, 64
      %v2845 = vpop.permute.xlu0 %2844
      %2846 = vrot.lane.b32.xlu0 %v2599, 64
      %v2847 = vpop.permute.xlu0 %2846
      %2848 = vrot.lane.b32.xlu0 %v2602, 64
      %v2849 = vpop.permute.xlu0 %2848
      %2850 = vrot.lane.b32.xlu0 %v2604, 64
      %v2851 = vpop.permute.xlu0 %2850
      %2852 = vrot.lane.b32.xlu0 %v2607, 64
      %v2853 = vpop.permute.xlu0 %2852
      %2854 = vrot.lane.b32.xlu0 %v2609, 64
      %v2855 = vpop.permute.xlu0 %2854
      %2856 = vrot.lane.b32.xlu0 %v2612, 64
      %v2857 = vpop.permute.xlu0 %2856
      %2858 = vrot.lane.b32.xlu0 %v2614, 64
      %v2859 = vpop.permute.xlu0 %2858
      %2860 = vrot.lane.b32.xlu0 %v2617, 64
      %v2861 = vpop.permute.xlu0 %2860
      %2862 = vrot.lane.b32.xlu0 %v2619, 64
      %v2863 = vpop.permute.xlu0 %2862
      %2864 = vrot.lane.b32.xlu0 %v2622, 64
      %v2865 = vpop.permute.xlu0 %2864
      %2866 = vrot.lane.b32.xlu0 %v2624, 64
      %v2867 = vpop.permute.xlu0 %2866
      %2868 = vrot.lane.b32.xlu0 %v2627, 64
      %v2869 = vpop.permute.xlu0 %2868
      %2870 = vrot.lane.b32.xlu0 %v2629, 64
      %v2871 = vpop.permute.xlu0 %2870
      %2872 = vrot.lane.b32.xlu0 %v2632, 64
      %v2873 = vpop.permute.xlu0 %2872
      %2874 = vrot.lane.b32.xlu0 %v2634, 64
      %v2875 = vpop.permute.xlu0 %2874
      %2876 = vrot.lane.b32.xlu0 %v2637, 64
      %v2877 = vpop.permute.xlu0 %2876
      %2878 = vrot.lane.b32.xlu0 %v2639, 64
      %v2879 = vpop.permute.xlu0 %2878
      %2880 = vrot.lane.b32.xlu0 %v2642, 64
      %v2881 = vpop.permute.xlu0 %2880
      %2882 = vrot.lane.b32.xlu0 %v2644, 64
      %v2883 = vpop.permute.xlu0 %2882
      %2884 = vrot.lane.b32.xlu0 %v2647, 64
      %v2885 = vpop.permute.xlu0 %2884
      %2886 = vrot.lane.b32.xlu0 %v2649, 64
      %v2887 = vpop.permute.xlu0 %2886
      %2888 = vrot.lane.b32.xlu0 %v2652, 64
      %v2889 = vpop.permute.xlu0 %2888
      %2890 = vrot.lane.b32.xlu0 %v2654, 64
      %v2891 = vpop.permute.xlu0 %2890
      %2892 = vrot.lane.b32.xlu0 %v2657, 64
      %v2893 = vpop.permute.xlu0 %2892
      %2894 = vrot.lane.b32.xlu0 %v2659, 64
      %v2895 = vpop.permute.xlu0 %2894
      %2928 = vrot.lane.b32.xlu0 %v2448, 96
      %v2929 = vpop.permute.xlu0 %2928
      %2930 = vrot.lane.b32.xlu0 %v2355, 96
      %v2931 = vpop.permute.xlu0 %2930
      %2932 = vrot.lane.b32.xlu0 %v2449, 96
      %v2933 = vpop.permute.xlu0 %2932
      %2934 = vrot.lane.b32.xlu0 %v2358, 96
      %v2935 = vpop.permute.xlu0 %2934
      %2936 = vrot.lane.b32.xlu0 %v2450, 96
      %v2937 = vpop.permute.xlu0 %2936
      %2938 = vrot.lane.b32.xlu0 %v2361, 96
      %v2939 = vpop.permute.xlu0 %2938
      %2940 = vrot.lane.b32.xlu0 %v2451, 96
      %v2941 = vpop.permute.xlu0 %2940
      %2942 = vrot.lane.b32.xlu0 %v2364, 96
      %v2943 = vpop.permute.xlu0 %2942
      %2944 = vrot.lane.b32.xlu0 %v2452, 96
      %v2945 = vpop.permute.xlu0 %2944
      %2946 = vrot.lane.b32.xlu0 %v2367, 96
      %v2947 = vpop.permute.xlu0 %2946
      %2948 = vrot.lane.b32.xlu0 %v2453, 96
      %v2949 = vpop.permute.xlu0 %2948
      %2950 = vrot.lane.b32.xlu0 %v2370, 96
      %v2951 = vpop.permute.xlu0 %2950
      %2952 = vrot.lane.b32.xlu0 %v2454, 96
      %v2953 = vpop.permute.xlu0 %2952
      %2954 = vrot.lane.b32.xlu0 %v2373, 96
      %v2955 = vpop.permute.xlu0 %2954
      %2956 = vrot.lane.b32.xlu0 %v2455, 96
      %v2957 = vpop.permute.xlu0 %2956
      %2958 = vrot.lane.b32.xlu0 %v2376, 96
      %v2959 = vpop.permute.xlu0 %2958
      %2960 = vrot.lane.b32.xlu0 %v2456, 96
      %v2961 = vpop.permute.xlu0 %2960
      %2962 = vrot.lane.b32.xlu0 %v2379, 96
      %v2963 = vpop.permute.xlu0 %2962
      %2964 = vrot.lane.b32.xlu0 %v2457, 96
      %v2965 = vpop.permute.xlu0 %2964
      %2966 = vrot.lane.b32.xlu0 %v2382, 96
      %v2967 = vpop.permute.xlu0 %2966
      %2968 = vrot.lane.b32.xlu0 %v2458, 96
      %v2969 = vpop.permute.xlu0 %2968
      %2970 = vrot.lane.b32.xlu0 %v2385, 96
      %v2971 = vpop.permute.xlu0 %2970
      %2972 = vrot.lane.b32.xlu0 %v2459, 96
      %v2973 = vpop.permute.xlu0 %2972
      %2974 = vrot.lane.b32.xlu0 %v2388, 96
      %v2975 = vpop.permute.xlu0 %2974
      %2976 = vrot.lane.b32.xlu0 %v2460, 96
      %v2977 = vpop.permute.xlu0 %2976
      %2978 = vrot.lane.b32.xlu0 %v2391, 96
      %v2979 = vpop.permute.xlu0 %2978
      %2980 = vrot.lane.b32.xlu0 %v2461, 96
      %v2981 = vpop.permute.xlu0 %2980
      %2982 = vrot.lane.b32.xlu0 %v2394, 96
      %v2983 = vpop.permute.xlu0 %2982
      %2984 = vrot.lane.b32.xlu0 %v2462, 96
      %v2985 = vpop.permute.xlu0 %2984
      %2986 = vrot.lane.b32.xlu0 %v2397, 96
      %v2987 = vpop.permute.xlu0 %2986
      %2988 = vrot.lane.b32.xlu0 %v2463, 96
      %v2989 = vpop.permute.xlu0 %2988
      %2990 = vrot.lane.b32.xlu0 %v2400, 96
      %v2991 = vpop.permute.xlu0 %2990
      %3024 = vrot.lane.b32.xlu0 %v2587, 32
      %v3025 = vpop.permute.xlu0 %3024
      %3026 = vrot.lane.b32.xlu0 %v2589, 32
      %v3027 = vpop.permute.xlu0 %3026
      %3028 = vrot.lane.b32.xlu0 %v2592, 32
      %v3029 = vpop.permute.xlu0 %3028
      %3030 = vrot.lane.b32.xlu0 %v2594, 32
      %v3031 = vpop.permute.xlu0 %3030
      %3032 = vrot.lane.b32.xlu0 %v2597, 32
      %v3033 = vpop.permute.xlu0 %3032
      %3034 = vrot.lane.b32.xlu0 %v2599, 32
      %v3035 = vpop.permute.xlu0 %3034
      %3036 = vrot.lane.b32.xlu0 %v2602, 32
      %v3037 = vpop.permute.xlu0 %3036
      %3038 = vrot.lane.b32.xlu0 %v2604, 32
      %v3039 = vpop.permute.xlu0 %3038
      %3040 = vrot.lane.b32.xlu0 %v2607, 32
      %v3041 = vpop.permute.xlu0 %3040
      %3042 = vrot.lane.b32.xlu0 %v2609, 32
      %v3043 = vpop.permute.xlu0 %3042
      %3044 = vrot.lane.b32.xlu0 %v2612, 32
      %v3045 = vpop.permute.xlu0 %3044
      %3046 = vrot.lane.b32.xlu0 %v2614, 32
      %v3047 = vpop.permute.xlu0 %3046
      %3048 = vrot.lane.b32.xlu0 %v2617, 32
      %v3049 = vpop.permute.xlu0 %3048
      %3050 = vrot.lane.b32.xlu0 %v2619, 32
      %v3051 = vpop.permute.xlu0 %3050
      %3052 = vrot.lane.b32.xlu0 %v2622, 32
      %v3053 = vpop.permute.xlu0 %3052
      %3054 = vrot.lane.b32.xlu0 %v2624, 32
      %v3055 = vpop.permute.xlu0 %3054
      %3056 = vrot.lane.b32.xlu0 %v2627, 32
      %v3057 = vpop.permute.xlu0 %3056
      %3058 = vrot.lane.b32.xlu0 %v2629, 32
      %v3059 = vpop.permute.xlu0 %3058
      %3060 = vrot.lane.b32.xlu0 %v2632, 32
      %v3061 = vpop.permute.xlu0 %3060
      %3062 = vrot.lane.b32.xlu0 %v2634, 32
      %v3063 = vpop.permute.xlu0 %3062
      %3064 = vrot.lane.b32.xlu0 %v2637, 32
      %v3065 = vpop.permute.xlu0 %3064
      %3066 = vrot.lane.b32.xlu0 %v2639, 32
      %v3067 = vpop.permute.xlu0 %3066
      %3068 = vrot.lane.b32.xlu0 %v2642, 32
      %v3069 = vpop.permute.xlu0 %3068
      %3070 = vrot.lane.b32.xlu0 %v2644, 32
      %v3071 = vpop.permute.xlu0 %3070
      %3072 = vrot.lane.b32.xlu0 %v2647, 32
      %v3073 = vpop.permute.xlu0 %3072
      %3074 = vrot.lane.b32.xlu0 %v2649, 32
      %v3075 = vpop.permute.xlu0 %3074
      %3076 = vrot.lane.b32.xlu0 %v2652, 32
      %v3077 = vpop.permute.xlu0 %3076
      %3078 = vrot.lane.b32.xlu0 %v2654, 32
      %v3079 = vpop.permute.xlu0 %3078
      %3080 = vrot.lane.b32.xlu0 %v2657, 32
      %v3081 = vpop.permute.xlu0 %3080
      %3082 = vrot.lane.b32.xlu0 %v2659, 32
      %v3083 = vpop.permute.xlu0 %3082
      %3084 = vrot.lane.b32.xlu0 %v2701, 32
      %v3085 = vpop.permute.xlu0 %3084
      %3086 = vrot.lane.b32.xlu0 %v2703, 32
      %v3087 = vpop.permute.xlu0 %3086
      %3120 = vrot.lane.b32.xlu0 %v2449, 64
      %v3121 = vpop.permute.xlu0 %3120
      %3122 = vrot.lane.b32.xlu0 %v2358, 64
      %v3123 = vpop.permute.xlu0 %3122
      %3124 = vrot.lane.b32.xlu0 %v2450, 64
      %v3125 = vpop.permute.xlu0 %3124
      %3126 = vrot.lane.b32.xlu0 %v2361, 64
      %v3127 = vpop.permute.xlu0 %3126
      %3128 = vrot.lane.b32.xlu0 %v2451, 64
      %v3129 = vpop.permute.xlu0 %3128
      %3130 = vrot.lane.b32.xlu0 %v2364, 64
      %v3131 = vpop.permute.xlu0 %3130
      %3132 = vrot.lane.b32.xlu0 %v2452, 64
      %v3133 = vpop.permute.xlu0 %3132
      %3134 = vrot.lane.b32.xlu0 %v2367, 64
      %v3135 = vpop.permute.xlu0 %3134
      %3136 = vrot.lane.b32.xlu0 %v2453, 64
      %v3137 = vpop.permute.xlu0 %3136
      %3138 = vrot.lane.b32.xlu0 %v2370, 64
      %v3139 = vpop.permute.xlu0 %3138
      %3140 = vrot.lane.b32.xlu0 %v2454, 64
      %v3141 = vpop.permute.xlu0 %3140
      %3142 = vrot.lane.b32.xlu0 %v2373, 64
      %v3143 = vpop.permute.xlu0 %3142
      %3144 = vrot.lane.b32.xlu0 %v2455, 64
      %v3145 = vpop.permute.xlu0 %3144
      %3146 = vrot.lane.b32.xlu0 %v2376, 64
      %v3147 = vpop.permute.xlu0 %3146
      %3148 = vrot.lane.b32.xlu0 %v2456, 64
      %v3149 = vpop.permute.xlu0 %3148
      %3150 = vrot.lane.b32.xlu0 %v2379, 64
      %v3151 = vpop.permute.xlu0 %3150
      %3152 = vrot.lane.b32.xlu0 %v2457, 64
      %v3153 = vpop.permute.xlu0 %3152
      %3154 = vrot.lane.b32.xlu0 %v2382, 64
      %v3155 = vpop.permute.xlu0 %3154
      %3156 = vrot.lane.b32.xlu0 %v2458, 64
      %v3157 = vpop.permute.xlu0 %3156
      %3158 = vrot.lane.b32.xlu0 %v2385, 64
      %v3159 = vpop.permute.xlu0 %3158
      %3160 = vrot.lane.b32.xlu0 %v2459, 64
      %v3161 = vpop.permute.xlu0 %3160
      %3162 = vrot.lane.b32.xlu0 %v2388, 64
      %v3163 = vpop.permute.xlu0 %3162
      %3164 = vrot.lane.b32.xlu0 %v2460, 64
      %v3165 = vpop.permute.xlu0 %3164
      %3166 = vrot.lane.b32.xlu0 %v2391, 64
      %v3167 = vpop.permute.xlu0 %3166
      %3168 = vrot.lane.b32.xlu0 %v2461, 64
      %v3169 = vpop.permute.xlu0 %3168
      %3170 = vrot.lane.b32.xlu0 %v2394, 64
      %v3171 = vpop.permute.xlu0 %3170
      %3172 = vrot.lane.b32.xlu0 %v2462, 64
      %v3173 = vpop.permute.xlu0 %3172
      %3174 = vrot.lane.b32.xlu0 %v2397, 64
      %v3175 = vpop.permute.xlu0 %3174
      %3176 = vrot.lane.b32.xlu0 %v2463, 64
      %v3177 = vpop.permute.xlu0 %3176
      %3178 = vrot.lane.b32.xlu0 %v2400, 64
      %v3179 = vpop.permute.xlu0 %3178
      %3180 = vrot.lane.b32.xlu0 %v723, 64
      %v3181 = vpop.permute.xlu0 %3180
      %3182 = vrot.lane.b32.xlu0 %v625, 64
      %v3183 = vpop.permute.xlu0 %3182
      %3216 = vrot.lane.b32.xlu0 %v2517, 96
      %v3217 = vpop.permute.xlu0 %3216
      %3218 = vrot.lane.b32.xlu0 %v2519, 96
      %v3219 = vpop.permute.xlu0 %3218
      %3220 = vrot.lane.b32.xlu0 %v2522, 96
      %v3221 = vpop.permute.xlu0 %3220
      %3222 = vrot.lane.b32.xlu0 %v2524, 96
      %v3223 = vpop.permute.xlu0 %3222
      %3224 = vrot.lane.b32.xlu0 %v2527, 96
      %v3225 = vpop.permute.xlu0 %3224
      %3226 = vrot.lane.b32.xlu0 %v2529, 96
      %v3227 = vpop.permute.xlu0 %3226
      %3228 = vrot.lane.b32.xlu0 %v2532, 96
      %v3229 = vpop.permute.xlu0 %3228
      %3230 = vrot.lane.b32.xlu0 %v2534, 96
      %v3231 = vpop.permute.xlu0 %3230
      %3232 = vrot.lane.b32.xlu0 %v2537, 96
      %v3233 = vpop.permute.xlu0 %3232
      %3234 = vrot.lane.b32.xlu0 %v2539, 96
      %v3235 = vpop.permute.xlu0 %3234
      %3236 = vrot.lane.b32.xlu0 %v2542, 96
      %v3237 = vpop.permute.xlu0 %3236
      %3238 = vrot.lane.b32.xlu0 %v2544, 96
      %v3239 = vpop.permute.xlu0 %3238
      %3240 = vrot.lane.b32.xlu0 %v2547, 96
      %v3241 = vpop.permute.xlu0 %3240
      %3242 = vrot.lane.b32.xlu0 %v2549, 96
      %v3243 = vpop.permute.xlu0 %3242
      %3244 = vrot.lane.b32.xlu0 %v2552, 96
      %v3245 = vpop.permute.xlu0 %3244
      %3246 = vrot.lane.b32.xlu0 %v2554, 96
      %v3247 = vpop.permute.xlu0 %3246
      %3248 = vrot.lane.b32.xlu0 %v2557, 96
      %v3249 = vpop.permute.xlu0 %3248
      %3250 = vrot.lane.b32.xlu0 %v2559, 96
      %v3251 = vpop.permute.xlu0 %3250
      %3252 = vrot.lane.b32.xlu0 %v2562, 96
      %v3253 = vpop.permute.xlu0 %3252
      %3254 = vrot.lane.b32.xlu0 %v2564, 96
      %v3255 = vpop.permute.xlu0 %3254
      %3256 = vrot.lane.b32.xlu0 %v2567, 96
      %v3257 = vpop.permute.xlu0 %3256
      %3258 = vrot.lane.b32.xlu0 %v2569, 96
      %v3259 = vpop.permute.xlu0 %3258
      %3260 = vrot.lane.b32.xlu0 %v2572, 96
      %v3261 = vpop.permute.xlu0 %3260
      %3262 = vrot.lane.b32.xlu0 %v2574, 96
      %v3263 = vpop.permute.xlu0 %3262
      %3264 = vrot.lane.b32.xlu0 %v2577, 96
      %v3265 = vpop.permute.xlu0 %3264
      %3266 = vrot.lane.b32.xlu0 %v2579, 96
      %v3267 = vpop.permute.xlu0 %3266
      %3268 = vrot.lane.b32.xlu0 %v2582, 96
      %v3269 = vpop.permute.xlu0 %3268
      %3270 = vrot.lane.b32.xlu0 %v2584, 96
      %v3271 = vpop.permute.xlu0 %3270
      %3272 = vrot.lane.b32.xlu0 %v2664, 96
      %v3273 = vpop.permute.xlu0 %3272
      %3274 = vrot.lane.b32.xlu0 %v2666, 96
      %v3275 = vpop.permute.xlu0 %3274
      %3276 = vrot.lane.b32.xlu0 %v792, 96
      %v3277 = vpop.permute.xlu0 %3276
      %3278 = vrot.lane.b32.xlu0 %v794, 96
      %v3279 = vpop.permute.xlu0 %3278
      %vm3312 = vcmask 261120
      %v3313 = vsel %vm3312, %v723, %v2737
      %v3314 = vsel %vm3312, %v625, %v2739
      %v3315 = vsel %vm3312, %v2448, %v2741
      %v3316 = vsel %vm3312, %v2355, %v2743
      %v3317 = vsel %vm3312, %v2449, %v2745
      %v3318 = vsel %vm3312, %v2358, %v2747
      %v3319 = vsel %vm3312, %v2450, %v2749
      %v3320 = vsel %vm3312, %v2361, %v2751
      %v3321 = vsel %vm3312, %v2451, %v2753
      %v3322 = vsel %vm3312, %v2364, %v2755
      %v3323 = vsel %vm3312, %v2452, %v2757
      %v3324 = vsel %vm3312, %v2367, %v2759
      %v3325 = vsel %vm3312, %v2453, %v2761
      %v3326 = vsel %vm3312, %v2370, %v2763
      %v3327 = vsel %vm3312, %v2454, %v2765
      %v3328 = vsel %vm3312, %v2373, %v2767
      %v3329 = vsel %vm3312, %v2455, %v2769
      %v3330 = vsel %vm3312, %v2376, %v2771
      %v3331 = vsel %vm3312, %v2456, %v2773
      %v3332 = vsel %vm3312, %v2379, %v2775
      %v3333 = vsel %vm3312, %v2457, %v2777
      %v3334 = vsel %vm3312, %v2382, %v2779
      %v3335 = vsel %vm3312, %v2458, %v2781
      %v3336 = vsel %vm3312, %v2385, %v2783
      %v3337 = vsel %vm3312, %v2459, %v2785
      %v3338 = vsel %vm3312, %v2388, %v2787
      %v3339 = vsel %vm3312, %v2460, %v2789
      %v3340 = vsel %vm3312, %v2391, %v2791
      %v3341 = vsel %vm3312, %v2461, %v2793
      %v3342 = vsel %vm3312, %v2394, %v2795
      %v3343 = vsel %vm3312, %v2462, %v2797
      %v3344 = vsel %vm3312, %v2397, %v2799
      %vm3345 = vcmask 523264
      %v3346 = vsel %vm3345, %v3313, %v2833
      %v3347 = vsel %vm3345, %v3314, %v2835
      %v3348 = vsel %vm3345, %v3315, %v2837
      %v3349 = vsel %vm3345, %v3316, %v2839
      %v3350 = vsel %vm3345, %v3317, %v2841
      %v3351 = vsel %vm3345, %v3318, %v2843
      %v3352 = vsel %vm3345, %v3319, %v2845
      %v3353 = vsel %vm3345, %v3320, %v2847
      %v3354 = vsel %vm3345, %v3321, %v2849
      %v3355 = vsel %vm3345, %v3322, %v2851
      %v3356 = vsel %vm3345, %v3323, %v2853
      %v3357 = vsel %vm3345, %v3324, %v2855
      %v3358 = vsel %vm3345, %v3325, %v2857
      %v3359 = vsel %vm3345, %v3326, %v2859
      %v3360 = vsel %vm3345, %v3327, %v2861
      %v3361 = vsel %vm3345, %v3328, %v2863
      %v3362 = vsel %vm3345, %v3329, %v2865
      %v3363 = vsel %vm3345, %v3330, %v2867
      %v3364 = vsel %vm3345, %v3331, %v2869
      %v3365 = vsel %vm3345, %v3332, %v2871
      %v3366 = vsel %vm3345, %v3333, %v2873
      %v3367 = vsel %vm3345, %v3334, %v2875
      %v3368 = vsel %vm3345, %v3335, %v2877
      %v3369 = vsel %vm3345, %v3336, %v2879
      %v3370 = vsel %vm3345, %v3337, %v2881
      %v3371 = vsel %vm3345, %v3338, %v2883
      %v3372 = vsel %vm3345, %v3339, %v2885
      %v3373 = vsel %vm3345, %v3340, %v2887
      %v3374 = vsel %vm3345, %v3341, %v2889
      %v3375 = vsel %vm3345, %v3342, %v2891
      %v3376 = vsel %vm3345, %v3343, %v2893
      %v3377 = vsel %vm3345, %v3344, %v2895
      %vm3378 = vcmask 785408
      %v3379 = vsel %vm3378, %v3346, %v2929
      %v3380 = vsel %vm3378, %v3347, %v2931
      %v3381 = vsel %vm3378, %v3348, %v2933
      %v3382 = vsel %vm3378, %v3349, %v2935
      %v3383 = vsel %vm3378, %v3350, %v2937
      %v3384 = vsel %vm3378, %v3351, %v2939
      %v3385 = vsel %vm3378, %v3352, %v2941
      %v3386 = vsel %vm3378, %v3353, %v2943
      %v3387 = vsel %vm3378, %v3354, %v2945
      %v3388 = vsel %vm3378, %v3355, %v2947
      %v3389 = vsel %vm3378, %v3356, %v2949
      %v3390 = vsel %vm3378, %v3357, %v2951
      %v3391 = vsel %vm3378, %v3358, %v2953
      %v3392 = vsel %vm3378, %v3359, %v2955
      %v3393 = vsel %vm3378, %v3360, %v2957
      %v3394 = vsel %vm3378, %v3361, %v2959
      %v3395 = vsel %vm3378, %v3362, %v2961
      %v3396 = vsel %vm3378, %v3363, %v2963
      %v3397 = vsel %vm3378, %v3364, %v2965
      %v3398 = vsel %vm3378, %v3365, %v2967
      %v3399 = vsel %vm3378, %v3366, %v2969
      %v3400 = vsel %vm3378, %v3367, %v2971
      %v3401 = vsel %vm3378, %v3368, %v2973
      %v3402 = vsel %vm3378, %v3369, %v2975
      %v3403 = vsel %vm3378, %v3370, %v2977
      %v3404 = vsel %vm3378, %v3371, %v2979
      %v3405 = vsel %vm3378, %v3372, %v2981
      %v3406 = vsel %vm3378, %v3373, %v2983
      %v3407 = vsel %vm3378, %v3374, %v2985
      %v3408 = vsel %vm3378, %v3375, %v2987
      %v3409 = vsel %vm3378, %v3376, %v2989
      %v3410 = vsel %vm3378, %v3377, %v2991
      %v3411 = vsel %vm3312, %v2512, %v3025
      %v3412 = vsel %vm3312, %v2514, %v3027
      %v3413 = vsel %vm3312, %v2517, %v3029
      %v3414 = vsel %vm3312, %v2519, %v3031
      %v3415 = vsel %vm3312, %v2522, %v3033
      %v3416 = vsel %vm3312, %v2524, %v3035
      %v3417 = vsel %vm3312, %v2527, %v3037
      %v3418 = vsel %vm3312, %v2529, %v3039
      %v3419 = vsel %vm3312, %v2532, %v3041
      %v3420 = vsel %vm3312, %v2534, %v3043
      %v3421 = vsel %vm3312, %v2537, %v3045
      %v3422 = vsel %vm3312, %v2539, %v3047
      %v3423 = vsel %vm3312, %v2542, %v3049
      %v3424 = vsel %vm3312, %v2544, %v3051
      %v3425 = vsel %vm3312, %v2547, %v3053
      %v3426 = vsel %vm3312, %v2549, %v3055
      %v3427 = vsel %vm3312, %v2552, %v3057
      %v3428 = vsel %vm3312, %v2554, %v3059
      %v3429 = vsel %vm3312, %v2557, %v3061
      %v3430 = vsel %vm3312, %v2559, %v3063
      %v3431 = vsel %vm3312, %v2562, %v3065
      %v3432 = vsel %vm3312, %v2564, %v3067
      %v3433 = vsel %vm3312, %v2567, %v3069
      %v3434 = vsel %vm3312, %v2569, %v3071
      %v3435 = vsel %vm3312, %v2572, %v3073
      %v3436 = vsel %vm3312, %v2574, %v3075
      %v3437 = vsel %vm3312, %v2577, %v3077
      %v3438 = vsel %vm3312, %v2579, %v3079
      %v3439 = vsel %vm3312, %v2582, %v3081
      %v3440 = vsel %vm3312, %v2584, %v3083
      %v3441 = vsel %vm3312, %v2664, %v3085
      %v3442 = vsel %vm3312, %v2666, %v3087
      %v3443 = vsel %vm3345, %v3411, %v3121
      %v3444 = vsel %vm3345, %v3412, %v3123
      %v3445 = vsel %vm3345, %v3413, %v3125
      %v3446 = vsel %vm3345, %v3414, %v3127
      %v3447 = vsel %vm3345, %v3415, %v3129
      %v3448 = vsel %vm3345, %v3416, %v3131
      %v3449 = vsel %vm3345, %v3417, %v3133
      %v3450 = vsel %vm3345, %v3418, %v3135
      %v3451 = vsel %vm3345, %v3419, %v3137
      %v3452 = vsel %vm3345, %v3420, %v3139
      %v3453 = vsel %vm3345, %v3421, %v3141
      %v3454 = vsel %vm3345, %v3422, %v3143
      %v3455 = vsel %vm3345, %v3423, %v3145
      %v3456 = vsel %vm3345, %v3424, %v3147
      %v3457 = vsel %vm3345, %v3425, %v3149
      %v3458 = vsel %vm3345, %v3426, %v3151
      %v3459 = vsel %vm3345, %v3427, %v3153
      %v3460 = vsel %vm3345, %v3428, %v3155
      %v3461 = vsel %vm3345, %v3429, %v3157
      %v3462 = vsel %vm3345, %v3430, %v3159
      %v3463 = vsel %vm3345, %v3431, %v3161
      %v3464 = vsel %vm3345, %v3432, %v3163
      %v3465 = vsel %vm3345, %v3433, %v3165
      %v3466 = vsel %vm3345, %v3434, %v3167
      %v3467 = vsel %vm3345, %v3435, %v3169
      %v3468 = vsel %vm3345, %v3436, %v3171
      %v3469 = vsel %vm3345, %v3437, %v3173
      %v3470 = vsel %vm3345, %v3438, %v3175
      %v3471 = vsel %vm3345, %v3439, %v3177
      %v3472 = vsel %vm3345, %v3440, %v3179
      %v3473 = vsel %vm3345, %v3441, %v3181
      %v3474 = vsel %vm3345, %v3442, %v3183
      %v3475 = vsel %vm3378, %v3443, %v3217
      %v3476 = vsel %vm3378, %v3444, %v3219
      %v3477 = vsel %vm3378, %v3445, %v3221
      %v3478 = vsel %vm3378, %v3446, %v3223
      %v3479 = vsel %vm3378, %v3447, %v3225
      %v3480 = vsel %vm3378, %v3448, %v3227
      %v3481 = vsel %vm3378, %v3449, %v3229
      %v3482 = vsel %vm3378, %v3450, %v3231
      %v3483 = vsel %vm3378, %v3451, %v3233
      %v3484 = vsel %vm3378, %v3452, %v3235
      %v3485 = vsel %vm3378, %v3453, %v3237
      %v3486 = vsel %vm3378, %v3454, %v3239
      %v3487 = vsel %vm3378, %v3455, %v3241
      %v3488 = vsel %vm3378, %v3456, %v3243
      %v3489 = vsel %vm3378, %v3457, %v3245
      %v3490 = vsel %vm3378, %v3458, %v3247
      %v3491 = vsel %vm3378, %v3459, %v3249
      %v3492 = vsel %vm3378, %v3460, %v3251
      %v3493 = vsel %vm3378, %v3461, %v3253
      %v3494 = vsel %vm3378, %v3462, %v3255
      %v3495 = vsel %vm3378, %v3463, %v3257
      %v3496 = vsel %vm3378, %v3464, %v3259
      %v3497 = vsel %vm3378, %v3465, %v3261
      %v3498 = vsel %vm3378, %v3466, %v3263
      %v3499 = vsel %vm3378, %v3467, %v3265
      %v3500 = vsel %vm3378, %v3468, %v3267
      %v3501 = vsel %vm3378, %v3469, %v3269
      %v3502 = vsel %vm3378, %v3470, %v3271
      %v3503 = vsel %vm3378, %v3471, %v3273
      %v3504 = vsel %vm3378, %v3472, %v3275
      %v3505 = vsel %vm3378, %v3473, %v3277
      %v3506 = vsel %vm3378, %v3474, %v3279
      %v3507 = vpack.c.bf16 %v3380, %v3379
      %v3508 = vpack.c.bf16 %v3476, %v3475
      %v3509 = vpack.c.bf16 %v2594, %v2592
      %v3510 = vpack.c.bf16 %v3382, %v3381
      %v3511 = vpack.c.bf16 %v3478, %v3477
      %v3512 = vpack.c.bf16 %v2599, %v2597
      %v3513 = vpack.c.bf16 %v3384, %v3383
      %v3514 = vpack.c.bf16 %v3480, %v3479
      %v3515 = vpack.c.bf16 %v2604, %v2602
      %v3516 = vpack.c.bf16 %v3386, %v3385
      %v3517 = vpack.c.bf16 %v3482, %v3481
      %v3518 = vpack.c.bf16 %v2609, %v2607
      %v3519 = vpack.c.bf16 %v3388, %v3387
      %v3520 = vpack.c.bf16 %v3484, %v3483
      %v3521 = vpack.c.bf16 %v2614, %v2612
      %v3522 = vpack.c.bf16 %v3390, %v3389
      %v3523 = vpack.c.bf16 %v3486, %v3485
      %v3524 = vpack.c.bf16 %v2619, %v2617
      %v3525 = vpack.c.bf16 %v3392, %v3391
      %v3526 = vpack.c.bf16 %v3488, %v3487
      %v3527 = vpack.c.bf16 %v2624, %v2622
      %v3528 = vpack.c.bf16 %v3394, %v3393
      %v3529 = vpack.c.bf16 %v3490, %v3489
      %v3530 = vpack.c.bf16 %v2629, %v2627
      %v3531 = vpack.c.bf16 %v3396, %v3395
      %v3532 = vpack.c.bf16 %v3492, %v3491
      %v3533 = vpack.c.bf16 %v2634, %v2632
      %v3534 = vpack.c.bf16 %v3398, %v3397
      %v3535 = vpack.c.bf16 %v3494, %v3493
      %v3536 = vpack.c.bf16 %v2639, %v2637
      %v3537 = vpack.c.bf16 %v3400, %v3399
      %v3538 = vpack.c.bf16 %v3496, %v3495
      %v3539 = vpack.c.bf16 %v2644, %v2642
      %v3540 = vpack.c.bf16 %v3402, %v3401
      %v3541 = vpack.c.bf16 %v3498, %v3497
      %v3542 = vpack.c.bf16 %v2649, %v2647
      %v3543 = vpack.c.bf16 %v3404, %v3403
      %v3544 = vpack.c.bf16 %v3500, %v3499
      %v3545 = vpack.c.bf16 %v2654, %v2652
      %v3546 = vpack.c.bf16 %v3406, %v3405
      %v3547 = vpack.c.bf16 %v3502, %v3501
      %v3548 = vpack.c.bf16 %v2659, %v2657
      %v3549 = vpack.c.bf16 %v3408, %v3407
      %v3550 = vpack.c.bf16 %v3504, %v3503
      %v3551 = vpack.c.bf16 %v2703, %v2701
      %v3552 = vpack.c.bf16 %v3410, %v3409
      %v3553 = vpack.c.bf16 %v3506, %v3505
      %v3554 = vpack.c.bf16 %v875, %v873
      %v3556 = vlaneseq
      %v3557 = vshrl.u32 %v3556, 7
      %v3558 = vsub.s32 0, %v3557
      %v3559 = vrot.slane %v2320, %v3558
      %v3597 = vunpack.c.l.b16 %v2284
      %v3598 = vunpack.c.l.b16 %v2285
      %v3599 = vunpack.c.l.b16 %v2286
      %v3600 = vunpack.c.l.b16 %v2287
      %v3601 = vunpack.c.l.b16 %v2288
      %v3602 = vunpack.c.l.b16 %v2289
      %v3603 = vunpack.c.l.b16 %v2290
      %v3604 = vunpack.c.l.b16 %v2291
      %v3605 = vunpack.c.l.b16 %v2292
      %v3606 = vunpack.c.l.b16 %v2293
      %v3607 = vunpack.c.l.b16 %v2294
      %v3608 = vunpack.c.l.b16 %v2295
      %v3609 = vunpack.c.l.b16 %v2296
      %v3610 = vunpack.c.l.b16 %v2297
      %v3611 = vunpack.c.l.b16 %v2298
      %v3612 = vunpack.c.l.b16 %v2299
      %v3613 = vunpack.c.l.b16 %v2300
      %v3614 = vunpack.c.l.b16 %v2301
      %v3615 = vunpack.c.l.b16 %v2302
      %v3616 = vunpack.c.l.b16 %v2303
      %v3617 = vunpack.c.l.b16 %v2304
      %v3618 = vunpack.c.l.b16 %v2305
      %v3619 = vunpack.c.l.b16 %v2306
      %v3620 = vunpack.c.l.b16 %v2307
      %v3621 = vunpack.c.l.b16 %v2308
      %v3622 = vunpack.c.l.b16 %v2309
      %v3623 = vunpack.c.l.b16 %v2310
      %v3624 = vunpack.c.l.b16 %v2311
      %v3625 = vunpack.c.l.b16 %v2312
      %v3626 = vunpack.c.l.b16 %v2313
      %v3627 = vunpack.c.l.b16 %v2314
      %v3628 = vunpack.c.l.b16 %v2315
      %v3629 = vunpack.c.l.b16 %v2316
      %v3630 = vunpack.c.l.b16 %v2317
      %v3631 = vunpack.c.l.b16 %v2318
      %v3632 = vunpack.c.l.b16 %v2319
      %v3633 = vpack.c.b16 %v3598, %v3597
      %v3634 = vpack.c.b16 %v3600, %v3599
      %v3635 = vpack.c.b16 %v3602, %v3601
      %v3636 = vpack.c.b16 %v3604, %v3603
      %v3637 = vpack.c.b16 %v3606, %v3605
      %v3638 = vpack.c.b16 %v3608, %v3607
      %v3639 = vpack.c.b16 %v3610, %v3609
      %v3640 = vpack.c.b16 %v3612, %v3611
      %v3641 = vpack.c.b16 %v3614, %v3613
      %v3642 = vpack.c.b16 %v3616, %v3615
      %v3643 = vpack.c.b16 %v3618, %v3617
      %v3644 = vpack.c.b16 %v3620, %v3619
      %v3645 = vpack.c.b16 %v3622, %v3621
      %v3646 = vpack.c.b16 %v3624, %v3623
      %v3647 = vpack.c.b16 %v3626, %v3625
      %v3648 = vpack.c.b16 %v3628, %v3627
      %v3649 = vpack.c.b16 %v3630, %v3629
      %v3650 = vpack.c.b16 %v3632, %v3631
      %v3670 = vsel %vm3312, %v3509, 0
      %v3673 = vsel %vm3312, %v3512, 0
      %v3676 = vsel %vm3312, %v3515, 0
      %v3679 = vsel %vm3312, %v3518, 0
      %v3682 = vsel %vm3312, %v3521, 0
      %v3685 = vsel %vm3312, %v3524, 0
      %v3688 = vsel %vm3312, %v3527, 0
      %v3691 = vsel %vm3312, %v3530, 0
      %v3694 = vsel %vm3312, %v3533, 0
      %v3697 = vsel %vm3312, %v3536, 0
      %v3700 = vsel %vm3312, %v3539, 0
      %v3703 = vsel %vm3312, %v3542, 0
      %v3706 = vsel %vm3312, %v3545, 0
      %v3709 = vsel %vm3312, %v3548, 0
      %v3712 = vsel %vm3312, %v3551, 0
      %v3715 = vsel %vm3312, %v3554, 0
      %3717 = vmatprep.subr.bf16.mxu0 0
      %3718 = vmatpush1.bf16.msra.mxu0 %v3633
      %3719 = vmatprep.subr.bf16.mxu0 0
      %3720 = vmatpush1.bf16.msra.mxu0 %v3634
      %3721 = vmatprep.subr.bf16.mxu0 0
      %3722 = vmatpush1.bf16.msra.mxu0 %v3635
      %3723 = vmatprep.subr.bf16.mxu0 0
      %3724 = vmatpush1.bf16.msra.mxu0 %v3636
      %3725 = vmatprep.subr.bf16.mxu0 0
      %3726 = vmatpush1.bf16.msra.mxu0 %v3637
      %3727 = vmatprep.subr.bf16.mxu0 0
      %3728 = vmatpush1.bf16.msra.mxu0 %v3638
      %3729 = vmatprep.subr.bf16.mxu0 0
      %3730 = vmatpush1.bf16.msra.mxu0 %v3639
      %3731 = vmatprep.subr.bf16.mxu0 0
      %3732 = vmatpush1.bf16.msra.mxu0 %v3640
      %3733 = vmatprep.subr.bf16.mxu0 0
      %3734 = vmatpush1.bf16.msra.mxu0 %v3641
      %3735 = vmatprep.subr.bf16.mxu0 0
      %3736 = vmatpush1.bf16.msra.mxu0 %v3642
      %3737 = vmatprep.subr.bf16.mxu0 0
      %3738 = vmatpush1.bf16.msra.mxu0 %v3643
      %3739 = vmatprep.subr.bf16.mxu0 0
      %3740 = vmatpush1.bf16.msra.mxu0 %v3644
      %3741 = vmatprep.subr.bf16.mxu0 0
      %3742 = vmatpush1.bf16.msra.mxu0 %v3645
      %3743 = vmatprep.subr.bf16.mxu0 0
      %3744 = vmatpush1.bf16.msra.mxu0 %v3646
      %3745 = vmatprep.subr.bf16.mxu0 0
      %3746 = vmatpush1.bf16.msra.mxu0 %v3647
      %3747 = vmatprep.subr.bf16.mxu0 0
      %3748 = vmatpush1.bf16.msra.mxu0 %v3648
      %3749 = vmatprep.mubr.bf16.mxu0 %v3508
      %3750 = vmatmul.mubr.bf16.gmra.mrb[0].mxu0 %v3507
      %v3751 = vpop.f32.mrb[0].mxu0
      %v3752 = vadd.f32 %v3559, %v3751
      %v3753 = vpop.f32.mrb[0].mxu0
      %v3754 = vpop.f32.mrb[0].mxu0
      %v3755 = vadd.f32 %v3559, %v3754
      %v3756 = vpop.f32.mrb[0].mxu0
      %3757 = vmatprep.mubr.bf16.mxu0 %v3511
      %3758 = vmatmul.mubr.bf16.gmra.mrb[0].mxu0 %v3510
      %v3759 = vpop.f32.mrb[0].mxu0
      %v3760 = vadd.f32 %v3559, %v3759
      %v3761 = vpop.f32.mrb[0].mxu0
      %v3762 = vpop.f32.mrb[0].mxu0
      %v3763 = vadd.f32 %v3559, %v3762
      %v3764 = vpop.f32.mrb[0].mxu0
      %3765 = vmatprep.mubr.bf16.mxu0 %v3514
      %3766 = vmatmul.mubr.bf16.gmra.mrb[0].mxu0 %v3513
      %v3767 = vpop.f32.mrb[0].mxu0
      %v3768 = vadd.f32 %v3559, %v3767
      %v3769 = vpop.f32.mrb[0].mxu0
      %v3770 = vpop.f32.mrb[0].mxu0
      %v3771 = vadd.f32 %v3559, %v3770
      %v3772 = vpop.f32.mrb[0].mxu0
      %3773 = vmatprep.mubr.bf16.mxu0 %v3517
      %3774 = vmatmul.mubr.bf16.gmra.mrb[0].mxu0 %v3516
      %v3775 = vpop.f32.mrb[0].mxu0
      %v3776 = vadd.f32 %v3559, %v3775
      %v3777 = vpop.f32.mrb[0].mxu0
      %v3778 = vpop.f32.mrb[0].mxu0
      %v3779 = vadd.f32 %v3559, %v3778
      %v3780 = vpop.f32.mrb[0].mxu0
      %3781 = vmatprep.mubr.bf16.mxu0 %v3520
      %3782 = vmatmul.mubr.bf16.gmra.mrb[0].mxu0 %v3519
      %v3783 = vpop.f32.mrb[0].mxu0
      %v3784 = vadd.f32 %v3559, %v3783
      %v3785 = vpop.f32.mrb[0].mxu0
      %v3786 = vpop.f32.mrb[0].mxu0
      %v3787 = vadd.f32 %v3559, %v3786
      %v3788 = vpop.f32.mrb[0].mxu0
      %3789 = vmatprep.mubr.bf16.mxu0 %v3523
      %3790 = vmatmul.mubr.bf16.gmra.mrb[0].mxu0 %v3522
      %v3791 = vpop.f32.mrb[0].mxu0
      %v3792 = vadd.f32 %v3559, %v3791
      %v3793 = vpop.f32.mrb[0].mxu0
      %v3794 = vpop.f32.mrb[0].mxu0
      %v3795 = vadd.f32 %v3559, %v3794
      %v3796 = vpop.f32.mrb[0].mxu0
      %3797 = vmatprep.mubr.bf16.mxu0 %v3526
      %3798 = vmatmul.mubr.bf16.gmra.mrb[0].mxu0 %v3525
      %v3799 = vpop.f32.mrb[0].mxu0
      %v3800 = vadd.f32 %v3559, %v3799
      %v3801 = vpop.f32.mrb[0].mxu0
      %v3802 = vpop.f32.mrb[0].mxu0
      %v3803 = vadd.f32 %v3559, %v3802
      %v3804 = vpop.f32.mrb[0].mxu0
      %3805 = vmatprep.mubr.bf16.mxu0 %v3529
      %3806 = vmatmul.mubr.bf16.gmra.mrb[0].mxu0 %v3528
      %v3807 = vpop.f32.mrb[0].mxu0
      %v3808 = vadd.f32 %v3559, %v3807
      %v3809 = vpop.f32.mrb[0].mxu0
      %v3810 = vpop.f32.mrb[0].mxu0
      %v3811 = vadd.f32 %v3559, %v3810
      %v3812 = vpop.f32.mrb[0].mxu0
      %3813 = vmatprep.mubr.bf16.mxu0 %v3532
      %3814 = vmatmul.mubr.bf16.gmra.mrb[0].mxu0 %v3531
      %v3815 = vpop.f32.mrb[0].mxu0
      %v3816 = vadd.f32 %v3559, %v3815
      %v3817 = vpop.f32.mrb[0].mxu0
      %v3818 = vpop.f32.mrb[0].mxu0
      %v3819 = vadd.f32 %v3559, %v3818
      %v3820 = vpop.f32.mrb[0].mxu0
      %3821 = vmatprep.mubr.bf16.mxu0 %v3535
      %3822 = vmatmul.mubr.bf16.gmra.mrb[0].mxu0 %v3534
      %v3823 = vpop.f32.mrb[0].mxu0
      %v3824 = vadd.f32 %v3559, %v3823
      %v3825 = vpop.f32.mrb[0].mxu0
      %v3826 = vpop.f32.mrb[0].mxu0
      %v3827 = vadd.f32 %v3559, %v3826
      %v3828 = vpop.f32.mrb[0].mxu0
      %3829 = vmatprep.mubr.bf16.mxu0 %v3538
      %3830 = vmatmul.mubr.bf16.gmra.mrb[0].mxu0 %v3537
      %v3831 = vpop.f32.mrb[0].mxu0
      %v3832 = vadd.f32 %v3559, %v3831
      %v3833 = vpop.f32.mrb[0].mxu0
      %v3834 = vpop.f32.mrb[0].mxu0
      %v3835 = vadd.f32 %v3559, %v3834
      %v3836 = vpop.f32.mrb[0].mxu0
      %3837 = vmatprep.mubr.bf16.mxu0 %v3541
      %3838 = vmatmul.mubr.bf16.gmra.mrb[0].mxu0 %v3540
      %v3839 = vpop.f32.mrb[0].mxu0
      %v3840 = vadd.f32 %v3559, %v3839
      %v3841 = vpop.f32.mrb[0].mxu0
      %v3842 = vpop.f32.mrb[0].mxu0
      %v3843 = vadd.f32 %v3559, %v3842
      %v3844 = vpop.f32.mrb[0].mxu0
      %3845 = vmatprep.mubr.bf16.mxu0 %v3544
      %3846 = vmatmul.mubr.bf16.gmra.mrb[0].mxu0 %v3543
      %v3847 = vpop.f32.mrb[0].mxu0
      %v3848 = vadd.f32 %v3559, %v3847
      %v3849 = vpop.f32.mrb[0].mxu0
      %v3850 = vpop.f32.mrb[0].mxu0
      %v3851 = vadd.f32 %v3559, %v3850
      %v3852 = vpop.f32.mrb[0].mxu0
      %3853 = vmatprep.mubr.bf16.mxu0 %v3547
      %3854 = vmatmul.mubr.bf16.gmra.mrb[0].mxu0 %v3546
      %v3855 = vpop.f32.mrb[0].mxu0
      %v3856 = vadd.f32 %v3559, %v3855
      %v3857 = vpop.f32.mrb[0].mxu0
      %v3858 = vpop.f32.mrb[0].mxu0
      %v3859 = vadd.f32 %v3559, %v3858
      %v3860 = vpop.f32.mrb[0].mxu0
      %3861 = vmatprep.mubr.bf16.mxu0 %v3550
      %3862 = vmatmul.mubr.bf16.gmra.mrb[0].mxu0 %v3549
      %v3863 = vpop.f32.mrb[0].mxu0
      %v3864 = vadd.f32 %v3559, %v3863
      %v3865 = vpop.f32.mrb[0].mxu0
      %v3866 = vpop.f32.mrb[0].mxu0
      %v3867 = vadd.f32 %v3559, %v3866
      %v3868 = vpop.f32.mrb[0].mxu0
      %3869 = vmatprep.mubr.bf16.mxu0 %v3553
      %3870 = vmatmul.mubr.bf16.gmra.mrb[0].mxu0 %v3552
      %v3871 = vpop.f32.mrb[0].mxu0
      %v3872 = vadd.f32 %v3559, %v3871
      %v3873 = vpop.f32.mrb[0].mxu0
      %v3874 = vpop.f32.mrb[0].mxu0
      %v3875 = vadd.f32 %v3559, %v3874
      %v3876 = vpop.f32.mrb[0].mxu0
      %3877 = vdwg.mxu0
      %3878 = vmatprep.subr.bf16.mxu0 0
      %3879 = vmatpush1.bf16.msra.mxu0 %v3649
      %3880 = vmatprep.subr.bf16.mxu0 0
      %3881 = vmatpush1.bf16.msra.mxu0 %v3650
      %3882 = vmatprep.subr.bf16.mxu0 0
      %3883 = vmatpush1.bf16.msra.mxu0 0
      %3884 = vmatprep.subr.bf16.mxu0 0
      %3885 = vmatpush1.bf16.msra.mxu0 0
      %3886 = vmatprep.subr.bf16.mxu0 0
      %3887 = vmatpush1.bf16.msra.mxu0 0
      %3888 = vmatprep.subr.bf16.mxu0 0
      %3889 = vmatpush1.bf16.msra.mxu0 0
      %3890 = vmatprep.subr.bf16.mxu0 0
      %3891 = vmatpush1.bf16.msra.mxu0 0
      %3892 = vmatprep.subr.bf16.mxu0 0
      %3893 = vmatpush1.bf16.msra.mxu0 0
      %3894 = vmatprep.subr.bf16.mxu0 0
      %3895 = vmatpush1.bf16.msra.mxu0 0
      %3896 = vmatprep.subr.bf16.mxu0 0
      %3897 = vmatpush1.bf16.msra.mxu0 0
      %3898 = vmatprep.subr.bf16.mxu0 0
      %3899 = vmatpush1.bf16.msra.mxu0 0
      %3900 = vmatprep.subr.bf16.mxu0 0
      %3901 = vmatpush1.bf16.msra.mxu0 0
      %3902 = vmatprep.subr.bf16.mxu0 0
      %3903 = vmatpush1.bf16.msra.mxu0 0
      %3904 = vmatprep.subr.bf16.mxu0 0
      %3905 = vmatpush1.bf16.msra.mxu0 0
      %3906 = vmatprep.subr.bf16.mxu0 0
      %3907 = vmatpush1.bf16.msra.mxu0 0
      %3908 = vmatprep.subr.bf16.mxu0 0
      %3909 = vmatpush1.bf16.msra.mxu0 0
      %3910 = vmatprep.mubr.bf16.mxu0 0
      %3911 = vmatmul.mubr.bf16.gmra.mrb[0].mxu0 %v3670
      %v3912 = vpop.f32.mrb[0].mxu0
      %v3913 = vadd.f32 %v3752, %v3912
      %v3914 = vpop.f32.mrb[0].mxu0
      %v3915 = vpop.f32.mrb[0].mxu0
      %v3916 = vadd.f32 %v3755, %v3915
      %v3917 = vpop.f32.mrb[0].mxu0
      %3918 = vmatprep.mubr.bf16.mxu0 0
      %3919 = vmatmul.mubr.bf16.gmra.mrb[0].mxu0 %v3673
      %v3920 = vpop.f32.mrb[0].mxu0
      %v3921 = vadd.f32 %v3760, %v3920
      %v3922 = vpop.f32.mrb[0].mxu0
      %v3923 = vpop.f32.mrb[0].mxu0
      %v3924 = vadd.f32 %v3763, %v3923
      %v3925 = vpop.f32.mrb[0].mxu0
      %3926 = vmatprep.mubr.bf16.mxu0 0
      %3927 = vmatmul.mubr.bf16.gmra.mrb[0].mxu0 %v3676
      %v3928 = vpop.f32.mrb[0].mxu0
      %v3929 = vadd.f32 %v3768, %v3928
      %v3930 = vpop.f32.mrb[0].mxu0
      %v3931 = vpop.f32.mrb[0].mxu0
      %v3932 = vadd.f32 %v3771, %v3931
      %v3933 = vpop.f32.mrb[0].mxu0
      %3934 = vmatprep.mubr.bf16.mxu0 0
      %3935 = vmatmul.mubr.bf16.gmra.mrb[0].mxu0 %v3679
      %v3936 = vpop.f32.mrb[0].mxu0
      %v3937 = vadd.f32 %v3776, %v3936
      %v3938 = vpop.f32.mrb[0].mxu0
      %v3939 = vpop.f32.mrb[0].mxu0
      %v3940 = vadd.f32 %v3779, %v3939
      %v3941 = vpop.f32.mrb[0].mxu0
      %3942 = vmatprep.mubr.bf16.mxu0 0
      %3943 = vmatmul.mubr.bf16.gmra.mrb[0].mxu0 %v3682
      %v3944 = vpop.f32.mrb[0].mxu0
      %v3945 = vadd.f32 %v3784, %v3944
      %v3946 = vpop.f32.mrb[0].mxu0
      %v3947 = vpop.f32.mrb[0].mxu0
      %v3948 = vadd.f32 %v3787, %v3947
      %v3949 = vpop.f32.mrb[0].mxu0
      %3950 = vmatprep.mubr.bf16.mxu0 0
      %3951 = vmatmul.mubr.bf16.gmra.mrb[0].mxu0 %v3685
      %v3952 = vpop.f32.mrb[0].mxu0
      %v3953 = vadd.f32 %v3792, %v3952
      %v3954 = vpop.f32.mrb[0].mxu0
      %v3955 = vpop.f32.mrb[0].mxu0
      %v3956 = vadd.f32 %v3795, %v3955
      %v3957 = vpop.f32.mrb[0].mxu0
      %3958 = vmatprep.mubr.bf16.mxu0 0
      %3959 = vmatmul.mubr.bf16.gmra.mrb[0].mxu0 %v3688
      %v3960 = vpop.f32.mrb[0].mxu0
      %v3961 = vadd.f32 %v3800, %v3960
      %v3962 = vpop.f32.mrb[0].mxu0
      %v3963 = vpop.f32.mrb[0].mxu0
      %v3964 = vadd.f32 %v3803, %v3963
      %v3965 = vpop.f32.mrb[0].mxu0
      %3966 = vmatprep.mubr.bf16.mxu0 0
      %3967 = vmatmul.mubr.bf16.gmra.mrb[0].mxu0 %v3691
      %v3968 = vpop.f32.mrb[0].mxu0
      %v3969 = vadd.f32 %v3808, %v3968
      %v3970 = vpop.f32.mrb[0].mxu0
      %v3971 = vpop.f32.mrb[0].mxu0
      %v3972 = vadd.f32 %v3811, %v3971
      %v3973 = vpop.f32.mrb[0].mxu0
      %3974 = vmatprep.mubr.bf16.mxu0 0
      %3975 = vmatmul.mubr.bf16.gmra.mrb[0].mxu0 %v3694
      %v3976 = vpop.f32.mrb[0].mxu0
      %v3977 = vadd.f32 %v3816, %v3976
      %v3978 = vpop.f32.mrb[0].mxu0
      %v3979 = vpop.f32.mrb[0].mxu0
      %v3980 = vadd.f32 %v3819, %v3979
      %v3981 = vpop.f32.mrb[0].mxu0
      %3982 = vmatprep.mubr.bf16.mxu0 0
      %3983 = vmatmul.mubr.bf16.gmra.mrb[0].mxu0 %v3697
      %v3984 = vpop.f32.mrb[0].mxu0
      %v3985 = vadd.f32 %v3824, %v3984
      %v3986 = vpop.f32.mrb[0].mxu0
      %v3987 = vpop.f32.mrb[0].mxu0
      %v3988 = vadd.f32 %v3827, %v3987
      %v3989 = vpop.f32.mrb[0].mxu0
      %3990 = vmatprep.mubr.bf16.mxu0 0
      %3991 = vmatmul.mubr.bf16.gmra.mrb[0].mxu0 %v3700
      %v3992 = vpop.f32.mrb[0].mxu0
      %v3993 = vadd.f32 %v3832, %v3992
      %v3994 = vpop.f32.mrb[0].mxu0
      %v3995 = vpop.f32.mrb[0].mxu0
      %v3996 = vadd.f32 %v3835, %v3995
      %v3997 = vpop.f32.mrb[0].mxu0
      %3998 = vmatprep.mubr.bf16.mxu0 0
      %3999 = vmatmul.mubr.bf16.gmra.mrb[0].mxu0 %v3703
      %v4000 = vpop.f32.mrb[0].mxu0
      %v4001 = vadd.f32 %v3840, %v4000
      %v4002 = vpop.f32.mrb[0].mxu0
      %v4003 = vpop.f32.mrb[0].mxu0
      %v4004 = vadd.f32 %v3843, %v4003
      %v4005 = vpop.f32.mrb[0].mxu0
      %4006 = vmatprep.mubr.bf16.mxu0 0
      %4007 = vmatmul.mubr.bf16.gmra.mrb[0].mxu0 %v3706
      %v4008 = vpop.f32.mrb[0].mxu0
      %v4009 = vadd.f32 %v3848, %v4008
      %v4010 = vpop.f32.mrb[0].mxu0
      %v4011 = vpop.f32.mrb[0].mxu0
      %v4012 = vadd.f32 %v3851, %v4011
      %v4013 = vpop.f32.mrb[0].mxu0
      %4014 = vmatprep.mubr.bf16.mxu0 0
      %4015 = vmatmul.mubr.bf16.gmra.mrb[0].mxu0 %v3709
      %v4016 = vpop.f32.mrb[0].mxu0
      %v4017 = vadd.f32 %v3856, %v4016
      %v4018 = vpop.f32.mrb[0].mxu0
      %v4019 = vpop.f32.mrb[0].mxu0
      %v4020 = vadd.f32 %v3859, %v4019
      %v4021 = vpop.f32.mrb[0].mxu0
      %4022 = vmatprep.mubr.bf16.mxu0 0
      %4023 = vmatmul.mubr.bf16.gmra.mrb[0].mxu0 %v3712
      %v4024 = vpop.f32.mrb[0].mxu0
      %v4025 = vadd.f32 %v3864, %v4024
      %v4026 = vpop.f32.mrb[0].mxu0
      %v4027 = vpop.f32.mrb[0].mxu0
      %v4028 = vadd.f32 %v3867, %v4027
      %v4029 = vpop.f32.mrb[0].mxu0
      %4030 = vmatprep.mubr.bf16.mxu0 0
      %4031 = vmatmul.mubr.bf16.gmra.mrb[0].mxu0 %v3715
      %v4032 = vpop.f32.mrb[0].mxu0
      %v4033 = vadd.f32 %v3872, %v4032
      %v4034 = vpop.f32.mrb[0].mxu0
      %v4035 = vpop.f32.mrb[0].mxu0
      %v4036 = vadd.f32 %v3875, %v4035
      %v4037 = vpop.f32.mrb[0].mxu0
      %4038 = vdwg.mxu0
      %v4039 = vmax.f32 %v3913, 0.0
      %v4040 = vmax.f32 %v3916, 0.0
      %v4041 = vmax.f32 %v3921, 0.0
      %v4042 = vmax.f32 %v3924, 0.0
      %v4043 = vmax.f32 %v3929, 0.0
      %v4044 = vmax.f32 %v3932, 0.0
      %v4045 = vmax.f32 %v3937, 0.0
      %v4046 = vmax.f32 %v3940, 0.0
      %v4047 = vmax.f32 %v3945, 0.0
      %v4048 = vmax.f32 %v3948, 0.0
      %v4049 = vmax.f32 %v3953, 0.0
      %v4050 = vmax.f32 %v3956, 0.0
      %v4051 = vmax.f32 %v3961, 0.0
      %v4052 = vmax.f32 %v3964, 0.0
      %v4053 = vmax.f32 %v3969, 0.0
      %v4054 = vmax.f32 %v3972, 0.0
      %v4055 = vmax.f32 %v3977, 0.0
      %v4056 = vmax.f32 %v3980, 0.0
      %v4057 = vmax.f32 %v3985, 0.0
      %v4058 = vmax.f32 %v3988, 0.0
      %v4059 = vmax.f32 %v3993, 0.0
      %v4060 = vmax.f32 %v3996, 0.0
      %v4061 = vmax.f32 %v4001, 0.0
      %v4062 = vmax.f32 %v4004, 0.0
      %v4063 = vmax.f32 %v4009, 0.0
      %v4064 = vmax.f32 %v4012, 0.0
      %v4065 = vmax.f32 %v4017, 0.0
      %v4066 = vmax.f32 %v4020, 0.0
      %v4067 = vmax.f32 %v4025, 0.0
      %v4068 = vmax.f32 %v4028, 0.0
      %v4069 = vmax.f32 %v4033, 0.0
      %v4070 = vmax.f32 %v4036, 0.0
      %v4071 = vmax.f32 %v4039, %v4041
      %v4072 = vmax.f32 %v4040, %v4042
      %v4073 = vmax.f32 %v4043, %v4045
      %v4074 = vmax.f32 %v4044, %v4046
      %v4075 = vmax.f32 %v4047, %v4049
      %v4076 = vmax.f32 %v4048, %v4050
      %v4077 = vmax.f32 %v4051, %v4053
      %v4078 = vmax.f32 %v4052, %v4054
      %v4079 = vmax.f32 %v4055, %v4057
      %v4080 = vmax.f32 %v4056, %v4058
      %v4081 = vmax.f32 %v4059, %v4061
      %v4082 = vmax.f32 %v4060, %v4062
      %v4083 = vmax.f32 %v4063, %v4065
      %v4084 = vmax.f32 %v4064, %v4066
      %v4085 = vmax.f32 %v4067, %v4069
      %v4086 = vmax.f32 %v4068, %v4070
      %v4103 = vcombine.high %v4071, %v4071
      %v4105 = vunpack.c.l.s4 1983009808
      %v4106 = vunpack.c.0.s8 %v4105
      %v4107 = vlaneseq
      %v4108 = vshrl.u32 %v4107, 7
      %v4109 = vsub.s32 %v4106, %v4108
      %v4110 = vrot.slane %v4071, %v4109
      %v4112 = vunpack.c.l.s4 1983009808
      %v4113 = vunpack.c.0.s8 %v4112
      %v4114 = vlaneseq
      %v4115 = vshrl.u32 %v4114, 7
      %v4116 = vsub.s32 %v4113, %v4115
      %v4117 = vrot.slane %v4103, %v4116
      %v4118 = vcombine.high %v4110, %v4110
      %v4119 = vcombine.high %v4117, %v4117
      %v4120 = vcombine.high %v4072, %v4072
      %v4122 = vunpack.c.l.s4 1983009808
      %v4123 = vunpack.c.0.s8 %v4122
      %v4124 = vlaneseq
      %v4125 = vshrl.u32 %v4124, 7
      %v4126 = vsub.s32 %v4123, %v4125
      %v4127 = vrot.slane %v4072, %v4126
      %v4129 = vunpack.c.l.s4 1983009808
      %v4130 = vunpack.c.0.s8 %v4129
      %v4131 = vlaneseq
      %v4132 = vshrl.u32 %v4131, 7
      %v4133 = vsub.s32 %v4130, %v4132
      %v4134 = vrot.slane %v4120, %v4133
      %v4135 = vcombine.high %v4127, %v4127
      %v4136 = vcombine.high %v4134, %v4134
      %v4137 = vcombine.high %v4073, %v4073
      %v4139 = vunpack.c.l.s4 1983009808
      %v4140 = vunpack.c.0.s8 %v4139
      %v4141 = vlaneseq
      %v4142 = vshrl.u32 %v4141, 7
      %v4143 = vsub.s32 %v4140, %v4142
      %v4144 = vrot.slane %v4073, %v4143
      %v4146 = vunpack.c.l.s4 1983009808
      %v4147 = vunpack.c.0.s8 %v4146
      %v4148 = vlaneseq
      %v4149 = vshrl.u32 %v4148, 7
      %v4150 = vsub.s32 %v4147, %v4149
      %v4151 = vrot.slane %v4137, %v4150
      %v4152 = vcombine.high %v4144, %v4144
      %v4153 = vcombine.high %v4151, %v4151
      %v4154 = vcombine.high %v4074, %v4074
      %v4156 = vunpack.c.l.s4 1983009808
      %v4157 = vunpack.c.0.s8 %v4156
      %v4158 = vlaneseq
      %v4159 = vshrl.u32 %v4158, 7
      %v4160 = vsub.s32 %v4157, %v4159
      %v4161 = vrot.slane %v4074, %v4160
      %v4163 = vunpack.c.l.s4 1983009808
      %v4164 = vunpack.c.0.s8 %v4163
      %v4165 = vlaneseq
      %v4166 = vshrl.u32 %v4165, 7
      %v4167 = vsub.s32 %v4164, %v4166
      %v4168 = vrot.slane %v4154, %v4167
      %v4169 = vcombine.high %v4161, %v4161
      %v4170 = vcombine.high %v4168, %v4168
      %v4171 = vcombine.high %v4075, %v4075
      %v4173 = vunpack.c.l.s4 1983009808
      %v4174 = vunpack.c.0.s8 %v4173
      %v4175 = vlaneseq
      %v4176 = vshrl.u32 %v4175, 7
      %v4177 = vsub.s32 %v4174, %v4176
      %v4178 = vrot.slane %v4075, %v4177
      %v4180 = vunpack.c.l.s4 1983009808
      %v4181 = vunpack.c.0.s8 %v4180
      %v4182 = vlaneseq
      %v4183 = vshrl.u32 %v4182, 7
      %v4184 = vsub.s32 %v4181, %v4183
      %v4185 = vrot.slane %v4171, %v4184
      %v4186 = vcombine.high %v4178, %v4178
      %v4187 = vcombine.high %v4185, %v4185
      %v4188 = vcombine.high %v4076, %v4076
      %v4190 = vunpack.c.l.s4 1983009808
      %v4191 = vunpack.c.0.s8 %v4190
      %v4192 = vlaneseq
      %v4193 = vshrl.u32 %v4192, 7
      %v4194 = vsub.s32 %v4191, %v4193
      %v4195 = vrot.slane %v4076, %v4194
      %v4197 = vunpack.c.l.s4 1983009808
      %v4198 = vunpack.c.0.s8 %v4197
      %v4199 = vlaneseq
      %v4200 = vshrl.u32 %v4199, 7
      %v4201 = vsub.s32 %v4198, %v4200
      %v4202 = vrot.slane %v4188, %v4201
      %v4203 = vcombine.high %v4195, %v4195
      %v4204 = vcombine.high %v4202, %v4202
      %v4205 = vcombine.high %v4077, %v4077
      %v4207 = vunpack.c.l.s4 1983009808
      %v4208 = vunpack.c.0.s8 %v4207
      %v4209 = vlaneseq
      %v4210 = vshrl.u32 %v4209, 7
      %v4211 = vsub.s32 %v4208, %v4210
      %v4212 = vrot.slane %v4077, %v4211
      %v4214 = vunpack.c.l.s4 1983009808
      %v4215 = vunpack.c.0.s8 %v4214
      %v4216 = vlaneseq
      %v4217 = vshrl.u32 %v4216, 7
      %v4218 = vsub.s32 %v4215, %v4217
      %v4219 = vrot.slane %v4205, %v4218
      %v4220 = vcombine.high %v4212, %v4212
      %v4221 = vcombine.high %v4219, %v4219
      %v4222 = vcombine.high %v4078, %v4078
      %v4224 = vunpack.c.l.s4 1983009808
      %v4225 = vunpack.c.0.s8 %v4224
      %v4226 = vlaneseq
      %v4227 = vshrl.u32 %v4226, 7
      %v4228 = vsub.s32 %v4225, %v4227
      %v4229 = vrot.slane %v4078, %v4228
      %v4231 = vunpack.c.l.s4 1983009808
      %v4232 = vunpack.c.0.s8 %v4231
      %v4233 = vlaneseq
      %v4234 = vshrl.u32 %v4233, 7
      %v4235 = vsub.s32 %v4232, %v4234
      %v4236 = vrot.slane %v4222, %v4235
      %v4237 = vcombine.high %v4229, %v4229
      %v4238 = vcombine.high %v4236, %v4236
      %v4239 = vcombine.high %v4079, %v4079
      %v4241 = vunpack.c.l.s4 1983009808
      %v4242 = vunpack.c.0.s8 %v4241
      %v4243 = vlaneseq
      %v4244 = vshrl.u32 %v4243, 7
      %v4245 = vsub.s32 %v4242, %v4244
      %v4246 = vrot.slane %v4079, %v4245
      %v4248 = vunpack.c.l.s4 1983009808
      %v4249 = vunpack.c.0.s8 %v4248
      %v4250 = vlaneseq
      %v4251 = vshrl.u32 %v4250, 7
      %v4252 = vsub.s32 %v4249, %v4251
      %v4253 = vrot.slane %v4239, %v4252
      %v4254 = vcombine.high %v4246, %v4246
      %v4255 = vcombine.high %v4253, %v4253
      %v4256 = vcombine.high %v4080, %v4080
      %v4258 = vunpack.c.l.s4 1983009808
      %v4259 = vunpack.c.0.s8 %v4258
      %v4260 = vlaneseq
      %v4261 = vshrl.u32 %v4260, 7
      %v4262 = vsub.s32 %v4259, %v4261
      %v4263 = vrot.slane %v4080, %v4262
      %v4265 = vunpack.c.l.s4 1983009808
      %v4266 = vunpack.c.0.s8 %v4265
      %v4267 = vlaneseq
      %v4268 = vshrl.u32 %v4267, 7
      %v4269 = vsub.s32 %v4266, %v4268
      %v4270 = vrot.slane %v4256, %v4269
      %v4271 = vcombine.high %v4263, %v4263
      %v4272 = vcombine.high %v4270, %v4270
      %v4273 = vcombine.high %v4081, %v4081
      %v4275 = vunpack.c.l.s4 1983009808
      %v4276 = vunpack.c.0.s8 %v4275
      %v4277 = vlaneseq
      %v4278 = vshrl.u32 %v4277, 7
      %v4279 = vsub.s32 %v4276, %v4278
      %v4280 = vrot.slane %v4081, %v4279
      %v4282 = vunpack.c.l.s4 1983009808
      %v4283 = vunpack.c.0.s8 %v4282
      %v4284 = vlaneseq
      %v4285 = vshrl.u32 %v4284, 7
      %v4286 = vsub.s32 %v4283, %v4285
      %v4287 = vrot.slane %v4273, %v4286
      %v4288 = vcombine.high %v4280, %v4280
      %v4289 = vcombine.high %v4287, %v4287
      %v4290 = vcombine.high %v4082, %v4082
      %v4292 = vunpack.c.l.s4 1983009808
      %v4293 = vunpack.c.0.s8 %v4292
      %v4294 = vlaneseq
      %v4295 = vshrl.u32 %v4294, 7
      %v4296 = vsub.s32 %v4293, %v4295
      %v4297 = vrot.slane %v4082, %v4296
      %v4299 = vunpack.c.l.s4 1983009808
      %v4300 = vunpack.c.0.s8 %v4299
      %v4301 = vlaneseq
      %v4302 = vshrl.u32 %v4301, 7
      %v4303 = vsub.s32 %v4300, %v4302
      %v4304 = vrot.slane %v4290, %v4303
      %v4305 = vcombine.high %v4297, %v4297
      %v4306 = vcombine.high %v4304, %v4304
      %v4307 = vcombine.high %v4083, %v4083
      %v4309 = vunpack.c.l.s4 1983009808
      %v4310 = vunpack.c.0.s8 %v4309
      %v4311 = vlaneseq
      %v4312 = vshrl.u32 %v4311, 7
      %v4313 = vsub.s32 %v4310, %v4312
      %v4314 = vrot.slane %v4083, %v4313
      %v4316 = vunpack.c.l.s4 1983009808
      %v4317 = vunpack.c.0.s8 %v4316
      %v4318 = vlaneseq
      %v4319 = vshrl.u32 %v4318, 7
      %v4320 = vsub.s32 %v4317, %v4319
      %v4321 = vrot.slane %v4307, %v4320
      %v4322 = vcombine.high %v4314, %v4314
      %v4323 = vcombine.high %v4321, %v4321
      %v4324 = vcombine.high %v4084, %v4084
      %v4326 = vunpack.c.l.s4 1983009808
      %v4327 = vunpack.c.0.s8 %v4326
      %v4328 = vlaneseq
      %v4329 = vshrl.u32 %v4328, 7
      %v4330 = vsub.s32 %v4327, %v4329
      %v4331 = vrot.slane %v4084, %v4330
      %v4333 = vunpack.c.l.s4 1983009808
      %v4334 = vunpack.c.0.s8 %v4333
      %v4335 = vlaneseq
      %v4336 = vshrl.u32 %v4335, 7
      %v4337 = vsub.s32 %v4334, %v4336
      %v4338 = vrot.slane %v4324, %v4337
      %v4339 = vcombine.high %v4331, %v4331
      %v4340 = vcombine.high %v4338, %v4338
      %v4341 = vcombine.high %v4085, %v4085
      %v4343 = vunpack.c.l.s4 1983009808
      %v4344 = vunpack.c.0.s8 %v4343
      %v4345 = vlaneseq
      %v4346 = vshrl.u32 %v4345, 7
      %v4347 = vsub.s32 %v4344, %v4346
      %v4348 = vrot.slane %v4085, %v4347
      %v4350 = vunpack.c.l.s4 1983009808
      %v4351 = vunpack.c.0.s8 %v4350
      %v4352 = vlaneseq
      %v4353 = vshrl.u32 %v4352, 7
      %v4354 = vsub.s32 %v4351, %v4353
      %v4355 = vrot.slane %v4341, %v4354
      %v4356 = vcombine.high %v4348, %v4348
      %v4357 = vcombine.high %v4355, %v4355
      %v4358 = vcombine.high %v4086, %v4086
      %v4360 = vunpack.c.l.s4 1983009808
      %v4361 = vunpack.c.0.s8 %v4360
      %v4362 = vlaneseq
      %v4363 = vshrl.u32 %v4362, 7
      %v4364 = vsub.s32 %v4361, %v4363
      %v4365 = vrot.slane %v4086, %v4364
      %v4367 = vunpack.c.l.s4 1983009808
      %v4368 = vunpack.c.0.s8 %v4367
      %v4369 = vlaneseq
      %v4370 = vshrl.u32 %v4369, 7
      %v4371 = vsub.s32 %v4368, %v4370
      %v4372 = vrot.slane %v4358, %v4371
      %v4373 = vcombine.high %v4365, %v4365
      %v4374 = vcombine.high %v4372, %v4372
      %v4439 = vrot.slane %v4110, 7
      %v4440 = vrot.slane %v4439, 2
      %v4441 = vrot.slane %v4118, 7
      %v4442 = vrot.slane %v4441, 2
      %v4443 = vrot.slane %v4117, 7
      %v4444 = vrot.slane %v4443, 2
      %v4445 = vrot.slane %v4119, 7
      %v4446 = vrot.slane %v4445, 2
      %v4447 = vrot.slane %v4127, 7
      %v4448 = vrot.slane %v4447, 2
      %v4449 = vrot.slane %v4135, 7
      %v4450 = vrot.slane %v4449, 2
      %v4451 = vrot.slane %v4134, 7
      %v4452 = vrot.slane %v4451, 2
      %v4453 = vrot.slane %v4136, 7
      %v4454 = vrot.slane %v4453, 2
      %v4455 = vrot.slane %v4144, 7
      %v4456 = vrot.slane %v4455, 2
      %v4457 = vrot.slane %v4152, 7
      %v4458 = vrot.slane %v4457, 2
      %v4459 = vrot.slane %v4151, 7
      %v4460 = vrot.slane %v4459, 2
      %v4461 = vrot.slane %v4153, 7
      %v4462 = vrot.slane %v4461, 2
      %v4463 = vrot.slane %v4161, 7
      %v4464 = vrot.slane %v4463, 2
      %v4465 = vrot.slane %v4169, 7
      %v4466 = vrot.slane %v4465, 2
      %v4467 = vrot.slane %v4168, 7
      %v4468 = vrot.slane %v4467, 2
      %v4469 = vrot.slane %v4170, 7
      %v4470 = vrot.slane %v4469, 2
      %v4471 = vrot.slane %v4178, 7
      %v4472 = vrot.slane %v4471, 2
      %v4473 = vrot.slane %v4186, 7
      %v4474 = vrot.slane %v4473, 2
      %v4475 = vrot.slane %v4185, 7
      %v4476 = vrot.slane %v4475, 2
      %v4477 = vrot.slane %v4187, 7
      %v4478 = vrot.slane %v4477, 2
      %v4479 = vrot.slane %v4195, 7
      %v4480 = vrot.slane %v4479, 2
      %v4481 = vrot.slane %v4203, 7
      %v4482 = vrot.slane %v4481, 2
      %v4483 = vrot.slane %v4202, 7
      %v4484 = vrot.slane %v4483, 2
      %v4485 = vrot.slane %v4204, 7
      %v4486 = vrot.slane %v4485, 2
      %v4487 = vrot.slane %v4212, 7
      %v4488 = vrot.slane %v4487, 2
      %v4489 = vrot.slane %v4220, 7
      %v4490 = vrot.slane %v4489, 2
      %v4491 = vrot.slane %v4219, 7
      %v4492 = vrot.slane %v4491, 2
      %v4493 = vrot.slane %v4221, 7
      %v4494 = vrot.slane %v4493, 2
      %v4495 = vrot.slane %v4229, 7
      %v4496 = vrot.slane %v4495, 2
      %v4497 = vrot.slane %v4237, 7
      %v4498 = vrot.slane %v4497, 2
      %v4499 = vrot.slane %v4236, 7
      %v4500 = vrot.slane %v4499, 2
      %v4501 = vrot.slane %v4238, 7
      %v4502 = vrot.slane %v4501, 2
      %v4503 = vrot.slane %v4246, 7
      %v4504 = vrot.slane %v4503, 2
      %v4505 = vrot.slane %v4254, 7
      %v4506 = vrot.slane %v4505, 2
      %v4507 = vrot.slane %v4253, 7
      %v4508 = vrot.slane %v4507, 2
      %v4509 = vrot.slane %v4255, 7
      %v4510 = vrot.slane %v4509, 2
      %v4511 = vrot.slane %v4263, 7
      %v4512 = vrot.slane %v4511, 2
      %v4513 = vrot.slane %v4271, 7
      %v4514 = vrot.slane %v4513, 2
      %v4515 = vrot.slane %v4270, 7
      %v4516 = vrot.slane %v4515, 2
      %v4517 = vrot.slane %v4272, 7
      %v4518 = vrot.slane %v4517, 2
      %v4519 = vrot.slane %v4280, 7
      %v4520 = vrot.slane %v4519, 2
      %v4521 = vrot.slane %v4288, 7
      %v4522 = vrot.slane %v4521, 2
      %v4523 = vrot.slane %v4287, 7
      %v4524 = vrot.slane %v4523, 2
      %v4525 = vrot.slane %v4289, 7
      %v4526 = vrot.slane %v4525, 2
      %v4527 = vrot.slane %v4297, 7
      %v4528 = vrot.slane %v4527, 2
      %v4529 = vrot.slane %v4305, 7
      %v4530 = vrot.slane %v4529, 2
      %v4531 = vrot.slane %v4304, 7
      %v4532 = vrot.slane %v4531, 2
      %v4533 = vrot.slane %v4306, 7
      %v4534 = vrot.slane %v4533, 2
      %v4535 = vrot.slane %v4314, 7
      %v4536 = vrot.slane %v4535, 2
      %v4537 = vrot.slane %v4322, 7
      %v4538 = vrot.slane %v4537, 2
      %v4539 = vrot.slane %v4321, 7
      %v4540 = vrot.slane %v4539, 2
      %v4541 = vrot.slane %v4323, 7
      %v4542 = vrot.slane %v4541, 2
      %v4543 = vrot.slane %v4331, 7
      %v4544 = vrot.slane %v4543, 2
      %v4545 = vrot.slane %v4339, 7
      %v4546 = vrot.slane %v4545, 2
      %v4547 = vrot.slane %v4338, 7
      %v4548 = vrot.slane %v4547, 2
      %v4549 = vrot.slane %v4340, 7
      %v4550 = vrot.slane %v4549, 2
      %v4551 = vrot.slane %v4348, 7
      %v4552 = vrot.slane %v4551, 2
      %v4553 = vrot.slane %v4356, 7
      %v4554 = vrot.slane %v4553, 2
      %v4555 = vrot.slane %v4355, 7
      %v4556 = vrot.slane %v4555, 2
      %v4557 = vrot.slane %v4357, 7
      %v4558 = vrot.slane %v4557, 2
      %v4559 = vrot.slane %v4365, 7
      %v4560 = vrot.slane %v4559, 2
      %v4561 = vrot.slane %v4373, 7
      %v4562 = vrot.slane %v4561, 2
      %v4563 = vrot.slane %v4372, 7
      %v4564 = vrot.slane %v4563, 2
      %v4565 = vrot.slane %v4374, 7
      %v4566 = vrot.slane %v4565, 2
      %v4631 = vmax.f32 %v4110, %v4440
      %v4632 = vmax.f32 %v4118, %v4442
      %v4633 = vmax.f32 %v4117, %v4444
      %v4634 = vmax.f32 %v4119, %v4446
      %v4635 = vmax.f32 %v4127, %v4448
      %v4636 = vmax.f32 %v4135, %v4450
      %v4637 = vmax.f32 %v4134, %v4452
      %v4638 = vmax.f32 %v4136, %v4454
      %v4639 = vmax.f32 %v4144, %v4456
      %v4640 = vmax.f32 %v4152, %v4458
      %v4641 = vmax.f32 %v4151, %v4460
      %v4642 = vmax.f32 %v4153, %v4462
      %v4643 = vmax.f32 %v4161, %v4464
      %v4644 = vmax.f32 %v4169, %v4466
      %v4645 = vmax.f32 %v4168, %v4468
      %v4646 = vmax.f32 %v4170, %v4470
      %v4647 = vmax.f32 %v4178, %v4472
      %v4648 = vmax.f32 %v4186, %v4474
      %v4649 = vmax.f32 %v4185, %v4476
      %v4650 = vmax.f32 %v4187, %v4478
      %v4651 = vmax.f32 %v4195, %v4480
      %v4652 = vmax.f32 %v4203, %v4482
      %v4653 = vmax.f32 %v4202, %v4484
      %v4654 = vmax.f32 %v4204, %v4486
      %v4655 = vmax.f32 %v4212, %v4488
      %v4656 = vmax.f32 %v4220, %v4490
      %v4657 = vmax.f32 %v4219, %v4492
      %v4658 = vmax.f32 %v4221, %v4494
      %v4659 = vmax.f32 %v4229, %v4496
      %v4660 = vmax.f32 %v4237, %v4498
      %v4661 = vmax.f32 %v4236, %v4500
      %v4662 = vmax.f32 %v4238, %v4502
      %v4663 = vmax.f32 %v4246, %v4504
      %v4664 = vmax.f32 %v4254, %v4506
      %v4665 = vmax.f32 %v4253, %v4508
      %v4666 = vmax.f32 %v4255, %v4510
      %v4667 = vmax.f32 %v4263, %v4512
      %v4668 = vmax.f32 %v4271, %v4514
      %v4669 = vmax.f32 %v4270, %v4516
      %v4670 = vmax.f32 %v4272, %v4518
      %v4671 = vmax.f32 %v4280, %v4520
      %v4672 = vmax.f32 %v4288, %v4522
      %v4673 = vmax.f32 %v4287, %v4524
      %v4674 = vmax.f32 %v4289, %v4526
      %v4675 = vmax.f32 %v4297, %v4528
      %v4676 = vmax.f32 %v4305, %v4530
      %v4677 = vmax.f32 %v4304, %v4532
      %v4678 = vmax.f32 %v4306, %v4534
      %v4679 = vmax.f32 %v4314, %v4536
      %v4680 = vmax.f32 %v4322, %v4538
      %v4681 = vmax.f32 %v4321, %v4540
      %v4682 = vmax.f32 %v4323, %v4542
      %v4683 = vmax.f32 %v4331, %v4544
      %v4684 = vmax.f32 %v4339, %v4546
      %v4685 = vmax.f32 %v4338, %v4548
      %v4686 = vmax.f32 %v4340, %v4550
      %v4687 = vmax.f32 %v4348, %v4552
      %v4688 = vmax.f32 %v4356, %v4554
      %v4689 = vmax.f32 %v4355, %v4556
      %v4690 = vmax.f32 %v4357, %v4558
      %v4691 = vmax.f32 %v4365, %v4560
      %v4692 = vmax.f32 %v4373, %v4562
      %v4693 = vmax.f32 %v4372, %v4564
      %v4694 = vmax.f32 %v4374, %v4566
      %v4695 = vld [vmem:[%s5] sm:$0xf]
      %v4696 = vld [vmem:[%s5 + $0x4] sm:$0xf]
      %v4697 = vld [vmem:[%s5 + $0x8] sm:$0xf]
      %v4698 = vld [vmem:[%s5 + $0xc] sm:$0xf]
      %v4699 = vld [vmem:[%s5 + $0x10] sm:$0xf]
      %v4700 = vld [vmem:[%s5 + $0x14] sm:$0xf]
      %v4701 = vld [vmem:[%s5 + $0x18] sm:$0xf]
      %v4702 = vld [vmem:[%s5 + $0x1c] sm:$0xf]
      %v4703 = vld [vmem:[%s5 + $0x20] sm:$0xf]
      %v4704 = vld [vmem:[%s5 + $0x24] sm:$0xf]
      %v4705 = vld [vmem:[%s5 + $0x28] sm:$0xf]
      %v4706 = vld [vmem:[%s5 + $0x2c] sm:$0xf]
      %v4707 = vld [vmem:[%s5 + $0x30] sm:$0xf]
      %v4708 = vld [vmem:[%s5 + $0x34] sm:$0xf]
      %v4709 = vld [vmem:[%s5 + $0x38] sm:$0xf]
      %v4710 = vld [vmem:[%s5 + $0x3c] sm:$0xf]
      %v4711 = vld [vmem:[%s5 + $0x40] sm:$0xf]
      %v4712 = vld [vmem:[%s5 + $0x44] sm:$0xf]
      %v4713 = vld [vmem:[%s5 + $0x48] sm:$0xf]
      %v4714 = vld [vmem:[%s5 + $0x4c] sm:$0xf]
      %v4715 = vld [vmem:[%s5 + $0x50] sm:$0xf]
      %v4716 = vld [vmem:[%s5 + $0x54] sm:$0xf]
      %v4717 = vld [vmem:[%s5 + $0x58] sm:$0xf]
      %v4718 = vld [vmem:[%s5 + $0x5c] sm:$0xf]
      %v4719 = vld [vmem:[%s5 + $0x60] sm:$0xf]
      %v4720 = vld [vmem:[%s5 + $0x64] sm:$0xf]
      %v4721 = vld [vmem:[%s5 + $0x68] sm:$0xf]
      %v4722 = vld [vmem:[%s5 + $0x6c] sm:$0xf]
      %v4723 = vld [vmem:[%s5 + $0x70] sm:$0xf]
      %v4724 = vld [vmem:[%s5 + $0x74] sm:$0xf]
      %v4725 = vld [vmem:[%s5 + $0x78] sm:$0xf]
      %v4726 = vld [vmem:[%s5 + $0x7c] sm:$0xf]
      %v4727 = vld [vmem:[%s5 + $0x80] sm:$0xf]
      %v4728 = vld [vmem:[%s5 + $0x84] sm:$0xf]
      %v4729 = vld [vmem:[%s5 + $0x88] sm:$0xf]
      %v4730 = vld [vmem:[%s5 + $0x8c] sm:$0xf]
      %v4731 = vld [vmem:[%s6] sm:$0x1]
      %v4796 = vlaneseq
      %v4797 = vshrl.u32 %v4796, 7
      %v4798 = vsub.s32 0, %v4797
      %v4799 = vrot.slane %v4631, %v4798
      %v4800 = vlaneseq
      %v4801 = vshrl.u32 %v4800, 7
      %v4802 = vsub.s32 0, %v4801
      %v4803 = vrot.slane %v4632, %v4802
      %v4804 = vlaneseq
      %v4805 = vshrl.u32 %v4804, 7
      %v4806 = vsub.s32 0, %v4805
      %v4807 = vrot.slane %v4633, %v4806
      %v4808 = vlaneseq
      %v4809 = vshrl.u32 %v4808, 7
      %v4810 = vsub.s32 0, %v4809
      %v4811 = vrot.slane %v4634, %v4810
      %v4812 = vlaneseq
      %v4813 = vshrl.u32 %v4812, 7
      %v4814 = vsub.s32 0, %v4813
      %v4815 = vrot.slane %v4635, %v4814
      %v4816 = vlaneseq
      %v4817 = vshrl.u32 %v4816, 7
      %v4818 = vsub.s32 0, %v4817
      %v4819 = vrot.slane %v4636, %v4818
      %v4820 = vlaneseq
      %v4821 = vshrl.u32 %v4820, 7
      %v4822 = vsub.s32 0, %v4821
      %v4823 = vrot.slane %v4637, %v4822
      %v4824 = vlaneseq
      %v4825 = vshrl.u32 %v4824, 7
      %v4826 = vsub.s32 0, %v4825
      %v4827 = vrot.slane %v4638, %v4826
      %v4828 = vlaneseq
      %v4829 = vshrl.u32 %v4828, 7
      %v4830 = vsub.s32 0, %v4829
      %v4831 = vrot.slane %v4639, %v4830
      %v4832 = vlaneseq
      %v4833 = vshrl.u32 %v4832, 7
      %v4834 = vsub.s32 0, %v4833
      %v4835 = vrot.slane %v4640, %v4834
      %v4836 = vlaneseq
      %v4837 = vshrl.u32 %v4836, 7
      %v4838 = vsub.s32 0, %v4837
      %v4839 = vrot.slane %v4641, %v4838
      %v4840 = vlaneseq
      %v4841 = vshrl.u32 %v4840, 7
      %v4842 = vsub.s32 0, %v4841
      %v4843 = vrot.slane %v4642, %v4842
      %v4844 = vlaneseq
      %v4845 = vshrl.u32 %v4844, 7
      %v4846 = vsub.s32 0, %v4845
      %v4847 = vrot.slane %v4643, %v4846
      %v4848 = vlaneseq
      %v4849 = vshrl.u32 %v4848, 7
      %v4850 = vsub.s32 0, %v4849
      %v4851 = vrot.slane %v4644, %v4850
      %v4852 = vlaneseq
      %v4853 = vshrl.u32 %v4852, 7
      %v4854 = vsub.s32 0, %v4853
      %v4855 = vrot.slane %v4645, %v4854
      %v4856 = vlaneseq
      %v4857 = vshrl.u32 %v4856, 7
      %v4858 = vsub.s32 0, %v4857
      %v4859 = vrot.slane %v4646, %v4858
      %v4860 = vlaneseq
      %v4861 = vshrl.u32 %v4860, 7
      %v4862 = vsub.s32 0, %v4861
      %v4863 = vrot.slane %v4647, %v4862
      %v4864 = vlaneseq
      %v4865 = vshrl.u32 %v4864, 7
      %v4866 = vsub.s32 0, %v4865
      %v4867 = vrot.slane %v4648, %v4866
      %v4868 = vlaneseq
      %v4869 = vshrl.u32 %v4868, 7
      %v4870 = vsub.s32 0, %v4869
      %v4871 = vrot.slane %v4649, %v4870
      %v4872 = vlaneseq
      %v4873 = vshrl.u32 %v4872, 7
      %v4874 = vsub.s32 0, %v4873
      %v4875 = vrot.slane %v4650, %v4874
      %v4876 = vlaneseq
      %v4877 = vshrl.u32 %v4876, 7
      %v4878 = vsub.s32 0, %v4877
      %v4879 = vrot.slane %v4651, %v4878
      %v4880 = vlaneseq
      %v4881 = vshrl.u32 %v4880, 7
      %v4882 = vsub.s32 0, %v4881
      %v4883 = vrot.slane %v4652, %v4882
      %v4884 = vlaneseq
      %v4885 = vshrl.u32 %v4884, 7
      %v4886 = vsub.s32 0, %v4885
      %v4887 = vrot.slane %v4653, %v4886
      %v4888 = vlaneseq
      %v4889 = vshrl.u32 %v4888, 7
      %v4890 = vsub.s32 0, %v4889
      %v4891 = vrot.slane %v4654, %v4890
      %v4892 = vlaneseq
      %v4893 = vshrl.u32 %v4892, 7
      %v4894 = vsub.s32 0, %v4893
      %v4895 = vrot.slane %v4655, %v4894
      %v4896 = vlaneseq
      %v4897 = vshrl.u32 %v4896, 7
      %v4898 = vsub.s32 0, %v4897
      %v4899 = vrot.slane %v4656, %v4898
      %v4900 = vlaneseq
      %v4901 = vshrl.u32 %v4900, 7
      %v4902 = vsub.s32 0, %v4901
      %v4903 = vrot.slane %v4657, %v4902
      %v4904 = vlaneseq
      %v4905 = vshrl.u32 %v4904, 7
      %v4906 = vsub.s32 0, %v4905
      %v4907 = vrot.slane %v4658, %v4906
      %v4908 = vlaneseq
      %v4909 = vshrl.u32 %v4908, 7
      %v4910 = vsub.s32 0, %v4909
      %v4911 = vrot.slane %v4659, %v4910
      %v4912 = vlaneseq
      %v4913 = vshrl.u32 %v4912, 7
      %v4914 = vsub.s32 0, %v4913
      %v4915 = vrot.slane %v4660, %v4914
      %v4916 = vlaneseq
      %v4917 = vshrl.u32 %v4916, 7
      %v4918 = vsub.s32 0, %v4917
      %v4919 = vrot.slane %v4661, %v4918
      %v4920 = vlaneseq
      %v4921 = vshrl.u32 %v4920, 7
      %v4922 = vsub.s32 0, %v4921
      %v4923 = vrot.slane %v4662, %v4922
      %v4924 = vlaneseq
      %v4925 = vshrl.u32 %v4924, 7
      %v4926 = vsub.s32 0, %v4925
      %v4927 = vrot.slane %v4663, %v4926
      %v4928 = vlaneseq
      %v4929 = vshrl.u32 %v4928, 7
      %v4930 = vsub.s32 0, %v4929
      %v4931 = vrot.slane %v4664, %v4930
      %v4932 = vlaneseq
      %v4933 = vshrl.u32 %v4932, 7
      %v4934 = vsub.s32 0, %v4933
      %v4935 = vrot.slane %v4665, %v4934
      %v4936 = vlaneseq
      %v4937 = vshrl.u32 %v4936, 7
      %v4938 = vsub.s32 0, %v4937
      %v4939 = vrot.slane %v4666, %v4938
      %v4940 = vlaneseq
      %v4941 = vshrl.u32 %v4940, 7
      %v4942 = vsub.s32 0, %v4941
      %v4943 = vrot.slane %v4667, %v4942
      %v4944 = vlaneseq
      %v4945 = vshrl.u32 %v4944, 7
      %v4946 = vsub.s32 0, %v4945
      %v4947 = vrot.slane %v4668, %v4946
      %v4948 = vlaneseq
      %v4949 = vshrl.u32 %v4948, 7
      %v4950 = vsub.s32 0, %v4949
      %v4951 = vrot.slane %v4669, %v4950
      %v4952 = vlaneseq
      %v4953 = vshrl.u32 %v4952, 7
      %v4954 = vsub.s32 0, %v4953
      %v4955 = vrot.slane %v4670, %v4954
      %v4956 = vlaneseq
      %v4957 = vshrl.u32 %v4956, 7
      %v4958 = vsub.s32 0, %v4957
      %v4959 = vrot.slane %v4671, %v4958
      %v4960 = vlaneseq
      %v4961 = vshrl.u32 %v4960, 7
      %v4962 = vsub.s32 0, %v4961
      %v4963 = vrot.slane %v4672, %v4962
      %v4964 = vlaneseq
      %v4965 = vshrl.u32 %v4964, 7
      %v4966 = vsub.s32 0, %v4965
      %v4967 = vrot.slane %v4673, %v4966
      %v4968 = vlaneseq
      %v4969 = vshrl.u32 %v4968, 7
      %v4970 = vsub.s32 0, %v4969
      %v4971 = vrot.slane %v4674, %v4970
      %v4972 = vlaneseq
      %v4973 = vshrl.u32 %v4972, 7
      %v4974 = vsub.s32 0, %v4973
      %v4975 = vrot.slane %v4675, %v4974
      %v4976 = vlaneseq
      %v4977 = vshrl.u32 %v4976, 7
      %v4978 = vsub.s32 0, %v4977
      %v4979 = vrot.slane %v4676, %v4978
      %v4980 = vlaneseq
      %v4981 = vshrl.u32 %v4980, 7
      %v4982 = vsub.s32 0, %v4981
      %v4983 = vrot.slane %v4677, %v4982
      %v4984 = vlaneseq
      %v4985 = vshrl.u32 %v4984, 7
      %v4986 = vsub.s32 0, %v4985
      %v4987 = vrot.slane %v4678, %v4986
      %v4988 = vlaneseq
      %v4989 = vshrl.u32 %v4988, 7
      %v4990 = vsub.s32 0, %v4989
      %v4991 = vrot.slane %v4679, %v4990
      %v4992 = vlaneseq
      %v4993 = vshrl.u32 %v4992, 7
      %v4994 = vsub.s32 0, %v4993
      %v4995 = vrot.slane %v4680, %v4994
      %v4996 = vlaneseq
      %v4997 = vshrl.u32 %v4996, 7
      %v4998 = vsub.s32 0, %v4997
      %v4999 = vrot.slane %v4681, %v4998
      %v5000 = vlaneseq
      %v5001 = vshrl.u32 %v5000, 7
      %v5002 = vsub.s32 0, %v5001
      %v5003 = vrot.slane %v4682, %v5002
      %v5004 = vlaneseq
      %v5005 = vshrl.u32 %v5004, 7
      %v5006 = vsub.s32 0, %v5005
      %v5007 = vrot.slane %v4683, %v5006
      %v5008 = vlaneseq
      %v5009 = vshrl.u32 %v5008, 7
      %v5010 = vsub.s32 0, %v5009
      %v5011 = vrot.slane %v4684, %v5010
      %v5012 = vlaneseq
      %v5013 = vshrl.u32 %v5012, 7
      %v5014 = vsub.s32 0, %v5013
      %v5015 = vrot.slane %v4685, %v5014
      %v5016 = vlaneseq
      %v5017 = vshrl.u32 %v5016, 7
      %v5018 = vsub.s32 0, %v5017
      %v5019 = vrot.slane %v4686, %v5018
      %v5020 = vlaneseq
      %v5021 = vshrl.u32 %v5020, 7
      %v5022 = vsub.s32 0, %v5021
      %v5023 = vrot.slane %v4687, %v5022
      %v5024 = vlaneseq
      %v5025 = vshrl.u32 %v5024, 7
      %v5026 = vsub.s32 0, %v5025
      %v5027 = vrot.slane %v4688, %v5026
      %v5028 = vlaneseq
      %v5029 = vshrl.u32 %v5028, 7
      %v5030 = vsub.s32 0, %v5029
      %v5031 = vrot.slane %v4689, %v5030
      %v5032 = vlaneseq
      %v5033 = vshrl.u32 %v5032, 7
      %v5034 = vsub.s32 0, %v5033
      %v5035 = vrot.slane %v4690, %v5034
      %v5036 = vlaneseq
      %v5037 = vshrl.u32 %v5036, 7
      %v5038 = vsub.s32 0, %v5037
      %v5039 = vrot.slane %v4691, %v5038
      %v5040 = vlaneseq
      %v5041 = vshrl.u32 %v5040, 7
      %v5042 = vsub.s32 0, %v5041
      %v5043 = vrot.slane %v4692, %v5042
      %v5044 = vlaneseq
      %v5045 = vshrl.u32 %v5044, 7
      %v5046 = vsub.s32 0, %v5045
      %v5047 = vrot.slane %v4693, %v5046
      %v5048 = vlaneseq
      %v5049 = vshrl.u32 %v5048, 7
      %v5050 = vsub.s32 0, %v5049
      %v5051 = vrot.slane %v4694, %v5050
      %vm5052 = vcmask 1041409
      %v5053 = vsel %vm5052, %v4803, %v4799
      %vm5054 = vcmask 1042434
      %v5055 = vsel %vm5054, %v4807, %v5053
      %vm5056 = vcmask 1043459
      %v5057 = vsel %vm5056, %v4811, %v5055
      %vm5058 = vcmask 1044484
      %v5059 = vsel %vm5058, %v4815, %v5057
      %vm5060 = vcmask 1045509
      %v5061 = vsel %vm5060, %v4819, %v5059
      %vm5062 = vcmask 1046534
      %v5063 = vsel %vm5062, %v4823, %v5061
      %vm5064 = vcmask 1047559
      %v5065 = vsel %vm5064, %v4827, %v5063
      %v5066 = vsel %vm5052, %v4835, %v4831
      %v5067 = vsel %vm5054, %v4839, %v5066
      %v5068 = vsel %vm5056, %v4843, %v5067
      %v5069 = vsel %vm5058, %v4847, %v5068
      %v5070 = vsel %vm5060, %v4851, %v5069
      %v5071 = vsel %vm5062, %v4855, %v5070
      %v5072 = vsel %vm5064, %v4859, %v5071
      %v5073 = vsel %vm5052, %v4867, %v4863
      %v5074 = vsel %vm5054, %v4871, %v5073
      %v5075 = vsel %vm5056, %v4875, %v5074
      %v5076 = vsel %vm5058, %v4879, %v5075
      %v5077 = vsel %vm5060, %v4883, %v5076
      %v5078 = vsel %vm5062, %v4887, %v5077
      %v5079 = vsel %vm5064, %v4891, %v5078
      %v5080 = vsel %vm5052, %v4899, %v4895
      %v5081 = vsel %vm5054, %v4903, %v5080
      %v5082 = vsel %vm5056, %v4907, %v5081
      %v5083 = vsel %vm5058, %v4911, %v5082
      %v5084 = vsel %vm5060, %v4915, %v5083
      %v5085 = vsel %vm5062, %v4919, %v5084
      %v5086 = vsel %vm5064, %v4923, %v5085
      %v5087 = vsel %vm5052, %v4931, %v4927
      %v5088 = vsel %vm5054, %v4935, %v5087
      %v5089 = vsel %vm5056, %v4939, %v5088
      %v5090 = vsel %vm5058, %v4943, %v5089
      %v5091 = vsel %vm5060, %v4947, %v5090
      %v5092 = vsel %vm5062, %v4951, %v5091
      %v5093 = vsel %vm5064, %v4955, %v5092
      %v5094 = vsel %vm5052, %v4963, %v4959
      %v5095 = vsel %vm5054, %v4967, %v5094
      %v5096 = vsel %vm5056, %v4971, %v5095
      %v5097 = vsel %vm5058, %v4975, %v5096
      %v5098 = vsel %vm5060, %v4979, %v5097
      %v5099 = vsel %vm5062, %v4983, %v5098
      %v5100 = vsel %vm5064, %v4987, %v5099
      %v5101 = vsel %vm5052, %v4995, %v4991
      %v5102 = vsel %vm5054, %v4999, %v5101
      %v5103 = vsel %vm5056, %v5003, %v5102
      %v5104 = vsel %vm5058, %v5007, %v5103
      %v5105 = vsel %vm5060, %v5011, %v5104
      %v5106 = vsel %vm5062, %v5015, %v5105
      %v5107 = vsel %vm5064, %v5019, %v5106
      %v5108 = vsel %vm5052, %v5027, %v5023
      %v5109 = vsel %vm5054, %v5031, %v5108
      %v5110 = vsel %vm5056, %v5035, %v5109
      %v5111 = vsel %vm5058, %v5039, %v5110
      %v5112 = vsel %vm5060, %v5043, %v5111
      %v5113 = vsel %vm5062, %v5047, %v5112
      %v5114 = vsel %vm5064, %v5051, %v5113
      %v5115 = vrot.slane %v5065, 7
      %v5116 = vrot.slane %v5072, 7
      %v5117 = vrot.slane %v5079, 7
      %v5118 = vrot.slane %v5086, 7
      %v5119 = vrot.slane %v5093, 7
      %v5120 = vrot.slane %v5100, 7
      %v5121 = vrot.slane %v5107, 7
      %v5122 = vrot.slane %v5114, 7
      %v5131 = vsel %vm623, 0.0, %v5115
      %v5132 = vsel %vm623, 0.0, %v5116
      %v5133 = vsel %vm623, 0.0, %v5117
      %v5134 = vsel %vm623, 0.0, %v5118
      %v5135 = vsel %vm623, 0.0, %v5119
      %v5136 = vsel %vm623, 0.0, %v5120
      %v5137 = vsel %vm623, 0.0, %v5121
      %v5138 = vsel %vm623, 0.0, %v5122
      %v5139 = vsel %vm623, %v5115, 0.0
      %v5140 = vsel %vm623, %v5116, 0.0
      %v5141 = vsel %vm623, %v5117, 0.0
      %v5142 = vsel %vm623, %v5118, 0.0
      %v5143 = vsel %vm623, %v5119, 0.0
      %v5144 = vsel %vm623, %v5120, 0.0
      %v5145 = vsel %vm623, %v5121, 0.0
      %v5146 = vsel %vm623, %v5122, 0.0
      %v5161 = vsel %vm789, %v790, %v793
      %v5162 = vrot.slane %v5131, 1
      %v5163 = vrot.slane %v5139, 1
      %v5164 = vsel %vm789, %v5162, %v5163
      %v5165 = vrot.slane %v5132, 1
      %v5166 = vrot.slane %v5140, 1
      %v5167 = vsel %vm789, %v5165, %v5166
      %v5168 = vrot.slane %v5133, 1
      %v5169 = vrot.slane %v5141, 1
      %v5170 = vsel %vm789, %v5168, %v5169
      %v5171 = vrot.slane %v5134, 1
      %v5172 = vrot.slane %v5142, 1
      %v5173 = vsel %vm789, %v5171, %v5172
      %v5174 = vrot.slane %v5135, 1
      %v5175 = vrot.slane %v5143, 1
      %v5176 = vsel %vm789, %v5174, %v5175
      %v5177 = vrot.slane %v5136, 1
      %v5178 = vrot.slane %v5144, 1
      %v5179 = vsel %vm789, %v5177, %v5178
      %v5180 = vrot.slane %v5137, 1
      %v5181 = vrot.slane %v5145, 1
      %v5182 = vsel %vm789, %v5180, %v5181
      %v5183 = vsel %vm870, %v871, %v874
      %v5184 = vrot.slane %v5131, 2
      %v5185 = vrot.slane %v5139, 2
      %v5186 = vsel %vm870, %v5184, %v5185
      %v5187 = vrot.slane %v5132, 2
      %v5188 = vrot.slane %v5140, 2
      %v5189 = vsel %vm870, %v5187, %v5188
      %v5190 = vrot.slane %v5133, 2
      %v5191 = vrot.slane %v5141, 2
      %v5192 = vsel %vm870, %v5190, %v5191
      %v5193 = vrot.slane %v5134, 2
      %v5194 = vrot.slane %v5142, 2
      %v5195 = vsel %vm870, %v5193, %v5194
      %v5196 = vrot.slane %v5135, 2
      %v5197 = vrot.slane %v5143, 2
      %v5198 = vsel %vm870, %v5196, %v5197
      %v5199 = vrot.slane %v5136, 2
      %v5200 = vrot.slane %v5144, 2
      %v5201 = vsel %vm870, %v5199, %v5200
      %v5202 = vrot.slane %v5137, 2
      %v5203 = vrot.slane %v5145, 2
      %v5204 = vsel %vm870, %v5202, %v5203
      %v5207 = vrot.slane %v5138, 1
      %v5208 = vrot.slane %v5146, 1
      %v5209 = vsel %vm789, %v5207, %v5208
      %v5218 = vrot.slane %v5138, 2
      %v5219 = vrot.slane %v5146, 2
      %v5220 = vsel %vm870, %v5218, %v5219
      %5229 = vrot.lane.b32.xlu0 %v5161, 32
      %v5230 = vpop.permute.xlu0 %5229
      %5231 = vrot.lane.b32.xlu0 %v5164, 32
      %v5232 = vpop.permute.xlu0 %5231
      %5233 = vrot.lane.b32.xlu0 %v5167, 32
      %v5234 = vpop.permute.xlu0 %5233
      %5235 = vrot.lane.b32.xlu0 %v5170, 32
      %v5236 = vpop.permute.xlu0 %5235
      %5237 = vrot.lane.b32.xlu0 %v5173, 32
      %v5238 = vpop.permute.xlu0 %5237
      %5239 = vrot.lane.b32.xlu0 %v5176, 32
      %v5240 = vpop.permute.xlu0 %5239
      %5241 = vrot.lane.b32.xlu0 %v5179, 32
      %v5242 = vpop.permute.xlu0 %5241
      %5243 = vrot.lane.b32.xlu0 %v5182, 32
      %v5244 = vpop.permute.xlu0 %5243
      %5253 = vrot.lane.b32.xlu0 %v5183, 64
      %v5254 = vpop.permute.xlu0 %5253
      %5255 = vrot.lane.b32.xlu0 %v5186, 64
      %v5256 = vpop.permute.xlu0 %5255
      %5257 = vrot.lane.b32.xlu0 %v5189, 64
      %v5258 = vpop.permute.xlu0 %5257
      %5259 = vrot.lane.b32.xlu0 %v5192, 64
      %v5260 = vpop.permute.xlu0 %5259
      %5261 = vrot.lane.b32.xlu0 %v5195, 64
      %v5262 = vpop.permute.xlu0 %5261
      %5263 = vrot.lane.b32.xlu0 %v5198, 64
      %v5264 = vpop.permute.xlu0 %5263
      %5265 = vrot.lane.b32.xlu0 %v5201, 64
      %v5266 = vpop.permute.xlu0 %5265
      %5267 = vrot.lane.b32.xlu0 %v5204, 64
      %v5268 = vpop.permute.xlu0 %5267
      %5277 = vrot.lane.b32.xlu0 %v5131, 96
      %v5278 = vpop.permute.xlu0 %5277
      %5279 = vrot.lane.b32.xlu0 %v5132, 96
      %v5280 = vpop.permute.xlu0 %5279
      %5281 = vrot.lane.b32.xlu0 %v5133, 96
      %v5282 = vpop.permute.xlu0 %5281
      %5283 = vrot.lane.b32.xlu0 %v5134, 96
      %v5284 = vpop.permute.xlu0 %5283
      %5285 = vrot.lane.b32.xlu0 %v5135, 96
      %v5286 = vpop.permute.xlu0 %5285
      %5287 = vrot.lane.b32.xlu0 %v5136, 96
      %v5288 = vpop.permute.xlu0 %5287
      %5289 = vrot.lane.b32.xlu0 %v5137, 96
      %v5290 = vpop.permute.xlu0 %5289
      %5291 = vrot.lane.b32.xlu0 %v5138, 96
      %v5292 = vpop.permute.xlu0 %5291
      %5301 = vrot.lane.b32.xlu0 %v5186, 32
      %v5302 = vpop.permute.xlu0 %5301
      %5303 = vrot.lane.b32.xlu0 %v5189, 32
      %v5304 = vpop.permute.xlu0 %5303
      %5305 = vrot.lane.b32.xlu0 %v5192, 32
      %v5306 = vpop.permute.xlu0 %5305
      %5307 = vrot.lane.b32.xlu0 %v5195, 32
      %v5308 = vpop.permute.xlu0 %5307
      %5309 = vrot.lane.b32.xlu0 %v5198, 32
      %v5310 = vpop.permute.xlu0 %5309
      %5311 = vrot.lane.b32.xlu0 %v5201, 32
      %v5312 = vpop.permute.xlu0 %5311
      %5313 = vrot.lane.b32.xlu0 %v5204, 32
      %v5314 = vpop.permute.xlu0 %5313
      %5315 = vrot.lane.b32.xlu0 %v5220, 32
      %v5316 = vpop.permute.xlu0 %5315
      %5325 = vrot.lane.b32.xlu0 %v5132, 64
      %v5326 = vpop.permute.xlu0 %5325
      %5327 = vrot.lane.b32.xlu0 %v5133, 64
      %v5328 = vpop.permute.xlu0 %5327
      %5329 = vrot.lane.b32.xlu0 %v5134, 64
      %v5330 = vpop.permute.xlu0 %5329
      %5331 = vrot.lane.b32.xlu0 %v5135, 64
      %v5332 = vpop.permute.xlu0 %5331
      %5333 = vrot.lane.b32.xlu0 %v5136, 64
      %v5334 = vpop.permute.xlu0 %5333
      %5335 = vrot.lane.b32.xlu0 %v5137, 64
      %v5336 = vpop.permute.xlu0 %5335
      %5337 = vrot.lane.b32.xlu0 %v5138, 64
      %v5338 = vpop.permute.xlu0 %5337
      %5346 = vrot.lane.b32.xlu0 %v5167, 96
      %v5347 = vpop.permute.xlu0 %5346
      %5348 = vrot.lane.b32.xlu0 %v5170, 96
      %v5349 = vpop.permute.xlu0 %5348
      %5350 = vrot.lane.b32.xlu0 %v5173, 96
      %v5351 = vpop.permute.xlu0 %5350
      %5352 = vrot.lane.b32.xlu0 %v5176, 96
      %v5353 = vpop.permute.xlu0 %5352
      %5354 = vrot.lane.b32.xlu0 %v5179, 96
      %v5355 = vpop.permute.xlu0 %5354
      %5356 = vrot.lane.b32.xlu0 %v5182, 96
      %v5357 = vpop.permute.xlu0 %5356
      %5358 = vrot.lane.b32.xlu0 %v5209, 96
      %v5359 = vpop.permute.xlu0 %5358
      %5360 = vrot.lane.b32.xlu0 %v5161, 96
      %v5361 = vpop.permute.xlu0 %5360
      %v5370 = vsel %vm3312, %v723, %v5230
      %v5371 = vsel %vm3312, %v5131, %v5232
      %v5372 = vsel %vm3312, %v5132, %v5234
      %v5373 = vsel %vm3312, %v5133, %v5236
      %v5374 = vsel %vm3312, %v5134, %v5238
      %v5375 = vsel %vm3312, %v5135, %v5240
      %v5376 = vsel %vm3312, %v5136, %v5242
      %v5377 = vsel %vm3312, %v5137, %v5244
      %v5378 = vsel %vm3345, %v5370, %v5254
      %v5379 = vsel %vm3345, %v5371, %v5256
      %v5380 = vsel %vm3345, %v5372, %v5258
      %v5381 = vsel %vm3345, %v5373, %v5260
      %v5382 = vsel %vm3345, %v5374, %v5262
      %v5383 = vsel %vm3345, %v5375, %v5264
      %v5384 = vsel %vm3345, %v5376, %v5266
      %v5385 = vsel %vm3345, %v5377, %v5268
      %v5386 = vsel %vm3378, %v5378, %v5278
      %v5387 = vsel %vm3378, %v5379, %v5280
      %v5388 = vsel %vm3378, %v5380, %v5282
      %v5389 = vsel %vm3378, %v5381, %v5284
      %v5390 = vsel %vm3378, %v5382, %v5286
      %v5391 = vsel %vm3378, %v5383, %v5288
      %v5392 = vsel %vm3378, %v5384, %v5290
      %v5393 = vsel %vm3378, %v5385, %v5292
      %v5394 = vsel %vm3312, %v5164, %v5302
      %v5395 = vsel %vm3312, %v5167, %v5304
      %v5396 = vsel %vm3312, %v5170, %v5306
      %v5397 = vsel %vm3312, %v5173, %v5308
      %v5398 = vsel %vm3312, %v5176, %v5310
      %v5399 = vsel %vm3312, %v5179, %v5312
      %v5400 = vsel %vm3312, %v5182, %v5314
      %v5401 = vsel %vm3312, %v5209, %v5316
      %v5402 = vsel %vm3345, %v5394, %v5326
      %v5403 = vsel %vm3345, %v5395, %v5328
      %v5404 = vsel %vm3345, %v5396, %v5330
      %v5405 = vsel %vm3345, %v5397, %v5332
      %v5406 = vsel %vm3345, %v5398, %v5334
      %v5407 = vsel %vm3345, %v5399, %v5336
      %v5408 = vsel %vm3345, %v5400, %v5338
      %v5409 = vsel %vm3345, %v5401, %v3181
      %v5410 = vsel %vm3378, %v5402, %v5347
      %v5411 = vsel %vm3378, %v5403, %v5349
      %v5412 = vsel %vm3378, %v5404, %v5351
      %v5413 = vsel %vm3378, %v5405, %v5353
      %v5414 = vsel %vm3378, %v5406, %v5355
      %v5415 = vsel %vm3378, %v5407, %v5357
      %v5416 = vsel %vm3378, %v5408, %v5359
      %v5417 = vsel %vm3378, %v5409, %v5361
      %v5418 = vpack.c.bf16 %v5387, %v5386
      %v5419 = vpack.c.bf16 %v5411, %v5410
      %v5420 = vpack.c.bf16 %v5192, %v5189
      %v5421 = vpack.c.bf16 %v5389, %v5388
      %v5422 = vpack.c.bf16 %v5413, %v5412
      %v5423 = vpack.c.bf16 %v5198, %v5195
      %v5424 = vpack.c.bf16 %v5391, %v5390
      %v5425 = vpack.c.bf16 %v5415, %v5414
      %v5426 = vpack.c.bf16 %v5204, %v5201
      %v5427 = vpack.c.bf16 %v5393, %v5392
      %v5428 = vpack.c.bf16 %v5417, %v5416
      %v5429 = vpack.c.bf16 %v5183, %v5220
      %v5431 = vlaneseq
      %v5432 = vshrl.u32 %v5431, 7
      %v5433 = vsub.s32 0, %v5432
      %v5434 = vrot.slane %v4731, %v5433
      %v5472 = vunpack.c.l.b16 %v4695
      %v5473 = vunpack.c.l.b16 %v4696
      %v5474 = vunpack.c.l.b16 %v4697
      %v5475 = vunpack.c.l.b16 %v4698
      %v5476 = vunpack.c.l.b16 %v4699
      %v5477 = vunpack.c.l.b16 %v4700
      %v5478 = vunpack.c.l.b16 %v4701
      %v5479 = vunpack.c.l.b16 %v4702
      %v5480 = vunpack.c.l.b16 %v4703
      %v5481 = vunpack.c.l.b16 %v4704
      %v5482 = vunpack.c.l.b16 %v4705
      %v5483 = vunpack.c.l.b16 %v4706
      %v5484 = vunpack.c.l.b16 %v4707
      %v5485 = vunpack.c.l.b16 %v4708
      %v5486 = vunpack.c.l.b16 %v4709
      %v5487 = vunpack.c.l.b16 %v4710
      %v5488 = vunpack.c.l.b16 %v4711
      %v5489 = vunpack.c.l.b16 %v4712
      %v5490 = vunpack.c.l.b16 %v4713
      %v5491 = vunpack.c.l.b16 %v4714
      %v5492 = vunpack.c.l.b16 %v4715
      %v5493 = vunpack.c.l.b16 %v4716
      %v5494 = vunpack.c.l.b16 %v4717
      %v5495 = vunpack.c.l.b16 %v4718
      %v5496 = vunpack.c.l.b16 %v4719
      %v5497 = vunpack.c.l.b16 %v4720
      %v5498 = vunpack.c.l.b16 %v4721
      %v5499 = vunpack.c.l.b16 %v4722
      %v5500 = vunpack.c.l.b16 %v4723
      %v5501 = vunpack.c.l.b16 %v4724
      %v5502 = vunpack.c.l.b16 %v4725
      %v5503 = vunpack.c.l.b16 %v4726
      %v5504 = vunpack.c.l.b16 %v4727
      %v5505 = vunpack.c.l.b16 %v4728
      %v5506 = vunpack.c.l.b16 %v4729
      %v5507 = vunpack.c.l.b16 %v4730
      %v5508 = vpack.c.b16 %v5473, %v5472
      %v5509 = vpack.c.b16 %v5475, %v5474
      %v5510 = vpack.c.b16 %v5477, %v5476
      %v5511 = vpack.c.b16 %v5479, %v5478
      %v5512 = vpack.c.b16 %v5481, %v5480
      %v5513 = vpack.c.b16 %v5483, %v5482
      %v5514 = vpack.c.b16 %v5485, %v5484
      %v5515 = vpack.c.b16 %v5487, %v5486
      %v5516 = vpack.c.b16 %v5489, %v5488
      %v5517 = vpack.c.b16 %v5491, %v5490
      %v5518 = vpack.c.b16 %v5493, %v5492
      %v5519 = vpack.c.b16 %v5495, %v5494
      %v5520 = vpack.c.b16 %v5497, %v5496
      %v5521 = vpack.c.b16 %v5499, %v5498
      %v5522 = vpack.c.b16 %v5501, %v5500
      %v5523 = vpack.c.b16 %v5503, %v5502
      %v5524 = vpack.c.b16 %v5505, %v5504
      %v5525 = vpack.c.b16 %v5507, %v5506
      %v5545 = vsel %vm3312, %v5420, 0
      %v5548 = vsel %vm3312, %v5423, 0
      %v5551 = vsel %vm3312, %v5426, 0
      %v5554 = vsel %vm3312, %v5429, 0
      %5556 = vmatprep.subr.bf16.mxu0 0
      %5557 = vmatpush1.bf16.msra.mxu0 %v5508
      %5558 = vmatprep.subr.bf16.mxu0 0
      %5559 = vmatpush1.bf16.msra.mxu0 %v5509
      %5560 = vmatprep.subr.bf16.mxu0 0
      %5561 = vmatpush1.bf16.msra.mxu0 %v5510
      %5562 = vmatprep.subr.bf16.mxu0 0
      %5563 = vmatpush1.bf16.msra.mxu0 %v5511
      %5564 = vmatprep.subr.bf16.mxu0 0
      %5565 = vmatpush1.bf16.msra.mxu0 %v5512
      %5566 = vmatprep.subr.bf16.mxu0 0
      %5567 = vmatpush1.bf16.msra.mxu0 %v5513
      %5568 = vmatprep.subr.bf16.mxu0 0
      %5569 = vmatpush1.bf16.msra.mxu0 %v5514
      %5570 = vmatprep.subr.bf16.mxu0 0
      %5571 = vmatpush1.bf16.msra.mxu0 %v5515
      %5572 = vmatprep.subr.bf16.mxu0 0
      %5573 = vmatpush1.bf16.msra.mxu0 %v5516
      %5574 = vmatprep.subr.bf16.mxu0 0
      %5575 = vmatpush1.bf16.msra.mxu0 %v5517
      %5576 = vmatprep.subr.bf16.mxu0 0
      %5577 = vmatpush1.bf16.msra.mxu0 %v5518
      %5578 = vmatprep.subr.bf16.mxu0 0
      %5579 = vmatpush1.bf16.msra.mxu0 %v5519
      %5580 = vmatprep.subr.bf16.mxu0 0
      %5581 = vmatpush1.bf16.msra.mxu0 %v5520
      %5582 = vmatprep.subr.bf16.mxu0 0
      %5583 = vmatpush1.bf16.msra.mxu0 %v5521
      %5584 = vmatprep.subr.bf16.mxu0 0
      %5585 = vmatpush1.bf16.msra.mxu0 %v5522
      %5586 = vmatprep.subr.bf16.mxu0 0
      %5587 = vmatpush1.bf16.msra.mxu0 %v5523
      %5588 = vmatprep.mubr.bf16.mxu0 %v5419
      %5589 = vmatmul.mubr.bf16.gmra.mrb[0].mxu0 %v5418
      %v5590 = vpop.f32.mrb[0].mxu0
      %v5591 = vadd.f32 %v5434, %v5590
      %v5592 = vpop.f32.mrb[0].mxu0
      %v5593 = vpop.f32.mrb[0].mxu0
      %v5594 = vadd.f32 %v5434, %v5593
      %v5595 = vpop.f32.mrb[0].mxu0
      %5596 = vmatprep.mubr.bf16.mxu0 %v5422
      %5597 = vmatmul.mubr.bf16.gmra.mrb[0].mxu0 %v5421
      %v5598 = vpop.f32.mrb[0].mxu0
      %v5599 = vadd.f32 %v5434, %v5598
      %v5600 = vpop.f32.mrb[0].mxu0
      %v5601 = vpop.f32.mrb[0].mxu0
      %v5602 = vadd.f32 %v5434, %v5601
      %v5603 = vpop.f32.mrb[0].mxu0
      %5604 = vmatprep.mubr.bf16.mxu0 %v5425
      %5605 = vmatmul.mubr.bf16.gmra.mrb[0].mxu0 %v5424
      %v5606 = vpop.f32.mrb[0].mxu0
      %v5607 = vadd.f32 %v5434, %v5606
      %v5608 = vpop.f32.mrb[0].mxu0
      %v5609 = vpop.f32.mrb[0].mxu0
      %v5610 = vadd.f32 %v5434, %v5609
      %v5611 = vpop.f32.mrb[0].mxu0
      %5612 = vmatprep.mubr.bf16.mxu0 %v5428
      %5613 = vmatmul.mubr.bf16.gmra.mrb[0].mxu0 %v5427
      %v5614 = vpop.f32.mrb[0].mxu0
      %v5615 = vadd.f32 %v5434, %v5614
      %v5616 = vpop.f32.mrb[0].mxu0
      %v5617 = vpop.f32.mrb[0].mxu0
      %v5618 = vadd.f32 %v5434, %v5617
      %v5619 = vpop.f32.mrb[0].mxu0
      %5620 = vdwg.mxu0
      %5621 = vmatprep.subr.bf16.mxu0 0
      %5622 = vmatpush1.bf16.msra.mxu0 %v5524
      %5623 = vmatprep.subr.bf16.mxu0 0
      %5624 = vmatpush1.bf16.msra.mxu0 %v5525
      %5625 = vmatprep.subr.bf16.mxu0 0
      %5626 = vmatpush1.bf16.msra.mxu0 0
      %5627 = vmatprep.subr.bf16.mxu0 0
      %5628 = vmatpush1.bf16.msra.mxu0 0
      %5629 = vmatprep.subr.bf16.mxu0 0
      %5630 = vmatpush1.bf16.msra.mxu0 0
      %5631 = vmatprep.subr.bf16.mxu0 0
      %5632 = vmatpush1.bf16.msra.mxu0 0
      %5633 = vmatprep.subr.bf16.mxu0 0
      %5634 = vmatpush1.bf16.msra.mxu0 0
      %5635 = vmatprep.subr.bf16.mxu0 0
      %5636 = vmatpush1.bf16.msra.mxu0 0
      %5637 = vmatprep.subr.bf16.mxu0 0
      %5638 = vmatpush1.bf16.msra.mxu0 0
      %5639 = vmatprep.subr.bf16.mxu0 0
      %5640 = vmatpush1.bf16.msra.mxu0 0
      %5641 = vmatprep.subr.bf16.mxu0 0
      %5642 = vmatpush1.bf16.msra.mxu0 0
      %5643 = vmatprep.subr.bf16.mxu0 0
      %5644 = vmatpush1.bf16.msra.mxu0 0
      %5645 = vmatprep.subr.bf16.mxu0 0
      %5646 = vmatpush1.bf16.msra.mxu0 0
      %5647 = vmatprep.subr.bf16.mxu0 0
      %5648 = vmatpush1.bf16.msra.mxu0 0
      %5649 = vmatprep.subr.bf16.mxu0 0
      %5650 = vmatpush1.bf16.msra.mxu0 0
      %5651 = vmatprep.subr.bf16.mxu0 0
      %5652 = vmatpush1.bf16.msra.mxu0 0
      %5653 = vmatprep.mubr.bf16.mxu0 0
      %5654 = vmatmul.mubr.bf16.gmra.mrb[0].mxu0 %v5545
      %v5655 = vpop.f32.mrb[0].mxu0
      %v5656 = vadd.f32 %v5591, %v5655
      %v5657 = vpop.f32.mrb[0].mxu0
      %v5658 = vpop.f32.mrb[0].mxu0
      %v5659 = vadd.f32 %v5594, %v5658
      %v5660 = vpop.f32.mrb[0].mxu0
      %5661 = vmatprep.mubr.bf16.mxu0 0
      %5662 = vmatmul.mubr.bf16.gmra.mrb[0].mxu0 %v5548
      %v5663 = vpop.f32.mrb[0].mxu0
      %v5664 = vadd.f32 %v5599, %v5663
      %v5665 = vpop.f32.mrb[0].mxu0
      %v5666 = vpop.f32.mrb[0].mxu0
      %v5667 = vadd.f32 %v5602, %v5666
      %v5668 = vpop.f32.mrb[0].mxu0
      %5669 = vmatprep.mubr.bf16.mxu0 0
      %5670 = vmatmul.mubr.bf16.gmra.mrb[0].mxu0 %v5551
      %v5671 = vpop.f32.mrb[0].mxu0
      %v5672 = vadd.f32 %v5607, %v5671
      %v5673 = vpop.f32.mrb[0].mxu0
      %v5674 = vpop.f32.mrb[0].mxu0
      %v5675 = vadd.f32 %v5610, %v5674
      %v5676 = vpop.f32.mrb[0].mxu0
      %5677 = vmatprep.mubr.bf16.mxu0 0
      %5678 = vmatmul.mubr.bf16.gmra.mrb[0].mxu0 %v5554
      %v5679 = vpop.f32.mrb[0].mxu0
      %v5680 = vadd.f32 %v5615, %v5679
      %v5681 = vpop.f32.mrb[0].mxu0
      %v5682 = vpop.f32.mrb[0].mxu0
      %v5683 = vadd.f32 %v5618, %v5682
      %v5684 = vpop.f32.mrb[0].mxu0
      %5685 = vdwg.mxu0
      %v5686 = vmax.f32 %v5656, 0.0
      %v5687 = vmax.f32 %v5659, 0.0
      %v5688 = vmax.f32 %v5664, 0.0
      %v5689 = vmax.f32 %v5667, 0.0
      %v5690 = vmax.f32 %v5672, 0.0
      %v5691 = vmax.f32 %v5675, 0.0
      %v5692 = vmax.f32 %v5680, 0.0
      %v5693 = vmax.f32 %v5683, 0.0
      %v5694 = vld [vmem:[%s7] sm:$0xf]
      %v5695 = vld [vmem:[%s7 + $0x4] sm:$0xf]
      %v5696 = vld [vmem:[%s7 + $0x8] sm:$0xf]
      %v5697 = vld [vmem:[%s7 + $0xc] sm:$0xf]
      %v5698 = vld [vmem:[%s7 + $0x10] sm:$0xf]
      %v5699 = vld [vmem:[%s7 + $0x14] sm:$0xf]
      %v5700 = vld [vmem:[%s7 + $0x18] sm:$0xf]
      %v5701 = vld [vmem:[%s7 + $0x1c] sm:$0xf]
      %v5702 = vld [vmem:[%s7 + $0x20] sm:$0xf]
      %v5703 = vld [vmem:[%s7 + $0x24] sm:$0xf]
      %v5704 = vld [vmem:[%s7 + $0x28] sm:$0xf]
      %v5705 = vld [vmem:[%s7 + $0x2c] sm:$0xf]
      %v5706 = vld [vmem:[%s7 + $0x30] sm:$0xf]
      %v5707 = vld [vmem:[%s7 + $0x34] sm:$0xf]
      %v5708 = vld [vmem:[%s7 + $0x38] sm:$0xf]
      %v5709 = vld [vmem:[%s7 + $0x3c] sm:$0xf]
      %v5710 = vld [vmem:[%s7 + $0x40] sm:$0xf]
      %v5711 = vld [vmem:[%s7 + $0x44] sm:$0xf]
      %v5712 = vld [vmem:[%s7 + $0x48] sm:$0xf]
      %v5713 = vld [vmem:[%s7 + $0x4c] sm:$0xf]
      %v5714 = vld [vmem:[%s7 + $0x50] sm:$0xf]
      %v5715 = vld [vmem:[%s7 + $0x54] sm:$0xf]
      %v5716 = vld [vmem:[%s7 + $0x58] sm:$0xf]
      %v5717 = vld [vmem:[%s7 + $0x5c] sm:$0xf]
      %v5718 = vld [vmem:[%s7 + $0x60] sm:$0xf]
      %v5719 = vld [vmem:[%s7 + $0x64] sm:$0xf]
      %v5720 = vld [vmem:[%s7 + $0x68] sm:$0xf]
      %v5721 = vld [vmem:[%s7 + $0x6c] sm:$0xf]
      %v5722 = vld [vmem:[%s7 + $0x70] sm:$0xf]
      %v5723 = vld [vmem:[%s7 + $0x74] sm:$0xf]
      %v5724 = vld [vmem:[%s7 + $0x78] sm:$0xf]
      %v5725 = vld [vmem:[%s7 + $0x7c] sm:$0xf]
      %v5726 = vld [vmem:[%s7 + $0x80] sm:$0xf]
      %v5727 = vld [vmem:[%s7 + $0x84] sm:$0xf]
      %v5728 = vld [vmem:[%s7 + $0x88] sm:$0xf]
      %v5729 = vld [vmem:[%s7 + $0x8c] sm:$0xf]
      %v5730 = vld [vmem:[%s7 + $0x90] sm:$0xf]
      %v5731 = vld [vmem:[%s7 + $0x94] sm:$0xf]
      %v5732 = vld [vmem:[%s7 + $0x98] sm:$0xf]
      %v5733 = vld [vmem:[%s7 + $0x9c] sm:$0xf]
      %v5734 = vld [vmem:[%s7 + $0xa0] sm:$0xf]
      %v5735 = vld [vmem:[%s7 + $0xa4] sm:$0xf]
      %v5736 = vld [vmem:[%s7 + $0xa8] sm:$0xf]
      %v5737 = vld [vmem:[%s7 + $0xac] sm:$0xf]
      %v5738 = vld [vmem:[%s7 + $0xb0] sm:$0xf]
      %v5739 = vld [vmem:[%s7 + $0xb4] sm:$0xf]
      %v5740 = vld [vmem:[%s7 + $0xb8] sm:$0xf]
      %v5741 = vld [vmem:[%s7 + $0xbc] sm:$0xf]
      %v5742 = vld [vmem:[%s7 + $0xc0] sm:$0xf]
      %v5743 = vld [vmem:[%s7 + $0xc4] sm:$0xf]
      %v5744 = vld [vmem:[%s7 + $0xc8] sm:$0xf]
      %v5745 = vld [vmem:[%s7 + $0xcc] sm:$0xf]
      %v5746 = vld [vmem:[%s7 + $0xd0] sm:$0xf]
      %v5747 = vld [vmem:[%s7 + $0xd4] sm:$0xf]
      %v5748 = vld [vmem:[%s7 + $0xd8] sm:$0xf]
      %v5749 = vld [vmem:[%s7 + $0xdc] sm:$0xf]
      %v5750 = vld [vmem:[%s7 + $0xe0] sm:$0xf]
      %v5751 = vld [vmem:[%s7 + $0xe4] sm:$0xf]
      %v5752 = vld [vmem:[%s7 + $0xe8] sm:$0xf]
      %v5753 = vld [vmem:[%s7 + $0xec] sm:$0xf]
      %v5754 = vld [vmem:[%s7 + $0xf0] sm:$0xf]
      %v5755 = vld [vmem:[%s7 + $0xf4] sm:$0xf]
      %v5756 = vld [vmem:[%s7 + $0xf8] sm:$0xf]
      %v5757 = vld [vmem:[%s7 + $0xfc] sm:$0xf]
      %v5758 = vld [vmem:[%s7 + $0x100] sm:$0xf]
      %v5759 = vld [vmem:[%s7 + $0x104] sm:$0xf]
      %v5760 = vld [vmem:[%s7 + $0x108] sm:$0xf]
      %v5761 = vld [vmem:[%s7 + $0x10c] sm:$0xf]
      %v5762 = vld [vmem:[%s7 + $0x110] sm:$0xf]
      %v5763 = vld [vmem:[%s7 + $0x114] sm:$0xf]
      %v5764 = vld [vmem:[%s7 + $0x118] sm:$0xf]
      %v5765 = vld [vmem:[%s7 + $0x11c] sm:$0xf]
      %v5766 = vld [vmem:[%s8] sm:$0x1]
      %v5775 = vrot.slane %v5686, 7
      %v5776 = vrot.slane %v5687, 7
      %v5777 = vrot.slane %v5688, 7
      %v5778 = vrot.slane %v5689, 7
      %v5779 = vrot.slane %v5690, 7
      %v5780 = vrot.slane %v5691, 7
      %v5781 = vrot.slane %v5692, 7
      %v5782 = vrot.slane %v5693, 7
      %v5791 = vsel %vm623, 0.0, %v5775
      %v5792 = vsel %vm623, 0.0, %v5776
      %v5793 = vsel %vm623, 0.0, %v5777
      %v5794 = vsel %vm623, 0.0, %v5778
      %v5795 = vsel %vm623, 0.0, %v5779
      %v5796 = vsel %vm623, 0.0, %v5780
      %v5797 = vsel %vm623, 0.0, %v5781
      %v5798 = vsel %vm623, 0.0, %v5782
      %v5799 = vsel %vm623, %v5775, 0.0
      %v5800 = vsel %vm623, %v5776, 0.0
      %v5801 = vsel %vm623, %v5777, 0.0
      %v5802 = vsel %vm623, %v5778, 0.0
      %v5803 = vsel %vm623, %v5779, 0.0
      %v5804 = vsel %vm623, %v5780, 0.0
      %v5805 = vsel %vm623, %v5781, 0.0
      %v5806 = vsel %vm623, %v5782, 0.0
      %v5821 = vrot.slane %v5791, 1
      %v5822 = vrot.slane %v5799, 1
      %v5823 = vsel %vm789, %v5821, %v5822
      %v5824 = vrot.slane %v5792, 1
      %v5825 = vrot.slane %v5800, 1
      %v5826 = vsel %vm789, %v5824, %v5825
      %v5827 = vrot.slane %v5793, 1
      %v5828 = vrot.slane %v5801, 1
      %v5829 = vsel %vm789, %v5827, %v5828
      %v5830 = vrot.slane %v5794, 1
      %v5831 = vrot.slane %v5802, 1
      %v5832 = vsel %vm789, %v5830, %v5831
      %v5833 = vrot.slane %v5795, 1
      %v5834 = vrot.slane %v5803, 1
      %v5835 = vsel %vm789, %v5833, %v5834
      %v5836 = vrot.slane %v5796, 1
      %v5837 = vrot.slane %v5804, 1
      %v5838 = vsel %vm789, %v5836, %v5837
      %v5839 = vrot.slane %v5797, 1
      %v5840 = vrot.slane %v5805, 1
      %v5841 = vsel %vm789, %v5839, %v5840
      %v5842 = vrot.slane %v5791, 2
      %v5843 = vrot.slane %v5799, 2
      %v5844 = vsel %vm870, %v5842, %v5843
      %v5845 = vrot.slane %v5792, 2
      %v5846 = vrot.slane %v5800, 2
      %v5847 = vsel %vm870, %v5845, %v5846
      %v5848 = vrot.slane %v5793, 2
      %v5849 = vrot.slane %v5801, 2
      %v5850 = vsel %vm870, %v5848, %v5849
      %v5851 = vrot.slane %v5794, 2
      %v5852 = vrot.slane %v5802, 2
      %v5853 = vsel %vm870, %v5851, %v5852
      %v5854 = vrot.slane %v5795, 2
      %v5855 = vrot.slane %v5803, 2
      %v5856 = vsel %vm870, %v5854, %v5855
      %v5857 = vrot.slane %v5796, 2
      %v5858 = vrot.slane %v5804, 2
      %v5859 = vsel %vm870, %v5857, %v5858
      %v5860 = vrot.slane %v5797, 2
      %v5861 = vrot.slane %v5805, 2
      %v5862 = vsel %vm870, %v5860, %v5861
      %v5872 = vrot.slane %v5798, 1
      %v5873 = vrot.slane %v5806, 1
      %v5874 = vsel %vm789, %v5872, %v5873
      %v5883 = vrot.slane %v5798, 2
      %v5884 = vrot.slane %v5806, 2
      %v5885 = vsel %vm870, %v5883, %v5884
      %5887 = vrot.lane.b32.xlu0 %v5161, 64
      %v5888 = vpop.permute.xlu0 %5887
      %5889 = vrot.lane.b32.xlu0 %v5823, 64
      %v5890 = vpop.permute.xlu0 %5889
      %5891 = vrot.lane.b32.xlu0 %v5826, 64
      %v5892 = vpop.permute.xlu0 %5891
      %5893 = vrot.lane.b32.xlu0 %v5829, 64
      %v5894 = vpop.permute.xlu0 %5893
      %5895 = vrot.lane.b32.xlu0 %v5832, 64
      %v5896 = vpop.permute.xlu0 %5895
      %5897 = vrot.lane.b32.xlu0 %v5835, 64
      %v5898 = vpop.permute.xlu0 %5897
      %5899 = vrot.lane.b32.xlu0 %v5838, 64
      %v5900 = vpop.permute.xlu0 %5899
      %5901 = vrot.lane.b32.xlu0 %v5841, 64
      %v5902 = vpop.permute.xlu0 %5901
      %5911 = vrot.lane.b32.xlu0 %v5791, 64
      %v5912 = vpop.permute.xlu0 %5911
      %5913 = vrot.lane.b32.xlu0 %v5792, 64
      %v5914 = vpop.permute.xlu0 %5913
      %5915 = vrot.lane.b32.xlu0 %v5793, 64
      %v5916 = vpop.permute.xlu0 %5915
      %5917 = vrot.lane.b32.xlu0 %v5794, 64
      %v5918 = vpop.permute.xlu0 %5917
      %5919 = vrot.lane.b32.xlu0 %v5795, 64
      %v5920 = vpop.permute.xlu0 %5919
      %5921 = vrot.lane.b32.xlu0 %v5796, 64
      %v5922 = vpop.permute.xlu0 %5921
      %5923 = vrot.lane.b32.xlu0 %v5797, 64
      %v5924 = vpop.permute.xlu0 %5923
      %5925 = vrot.lane.b32.xlu0 %v5798, 64
      %v5926 = vpop.permute.xlu0 %5925
      %5935 = vrot.lane.b32.xlu0 %v5844, 64
      %v5936 = vpop.permute.xlu0 %5935
      %5937 = vrot.lane.b32.xlu0 %v5847, 64
      %v5938 = vpop.permute.xlu0 %5937
      %5939 = vrot.lane.b32.xlu0 %v5850, 64
      %v5940 = vpop.permute.xlu0 %5939
      %5941 = vrot.lane.b32.xlu0 %v5853, 64
      %v5942 = vpop.permute.xlu0 %5941
      %5943 = vrot.lane.b32.xlu0 %v5856, 64
      %v5944 = vpop.permute.xlu0 %5943
      %5945 = vrot.lane.b32.xlu0 %v5859, 64
      %v5946 = vpop.permute.xlu0 %5945
      %5947 = vrot.lane.b32.xlu0 %v5862, 64
      %v5948 = vpop.permute.xlu0 %5947
      %5949 = vrot.lane.b32.xlu0 %v5885, 64
      %v5950 = vpop.permute.xlu0 %5949
      %5959 = vrot.lane.b32.xlu0 %v5874, 64
      %v5960 = vpop.permute.xlu0 %5959
      %v5962 = vsel %vm3345, %v723, %v5888
      %v5963 = vsel %vm3345, %v5791, %v5890
      %v5964 = vsel %vm3345, %v5792, %v5892
      %v5965 = vsel %vm3345, %v5793, %v5894
      %v5966 = vsel %vm3345, %v5794, %v5896
      %v5967 = vsel %vm3345, %v5795, %v5898
      %v5968 = vsel %vm3345, %v5796, %v5900
      %v5969 = vsel %vm3345, %v5797, %v5902
      %v5970 = vsel %vm3345, %v5183, %v5912
      %v5971 = vsel %vm3345, %v5844, %v5914
      %v5972 = vsel %vm3345, %v5847, %v5916
      %v5973 = vsel %vm3345, %v5850, %v5918
      %v5974 = vsel %vm3345, %v5853, %v5920
      %v5975 = vsel %vm3345, %v5856, %v5922
      %v5976 = vsel %vm3345, %v5859, %v5924
      %v5977 = vsel %vm3345, %v5862, %v5926
      %v5978 = vsel %vm3345, %v5823, %v5936
      %v5979 = vsel %vm3345, %v5826, %v5938
      %v5980 = vsel %vm3345, %v5829, %v5940
      %v5981 = vsel %vm3345, %v5832, %v5942
      %v5982 = vsel %vm3345, %v5835, %v5944
      %v5983 = vsel %vm3345, %v5838, %v5946
      %v5984 = vsel %vm3345, %v5841, %v5948
      %v5985 = vsel %vm3345, %v5874, %v5950
      %v5986 = vsel %vm3345, %v5798, %v5960
      %v5987 = vpack.c.bf16 %v5963, %v5962
      %v5988 = vpack.c.bf16 %v5971, %v5970
      %v5989 = vpack.c.bf16 %v5979, %v5978
      %v5990 = vpack.c.bf16 %v5965, %v5964
      %v5991 = vpack.c.bf16 %v5850, %v5847
      %v5992 = vpack.c.bf16 %v5973, %v5972
      %v5993 = vpack.c.bf16 %v5981, %v5980
      %v5994 = vpack.c.bf16 %v5967, %v5966
      %v5995 = vpack.c.bf16 %v5856, %v5853
      %v5996 = vpack.c.bf16 %v5975, %v5974
      %v5997 = vpack.c.bf16 %v5983, %v5982
      %v5998 = vpack.c.bf16 %v5969, %v5968
      %v5999 = vpack.c.bf16 %v5862, %v5859
      %v6000 = vpack.c.bf16 %v5977, %v5976
      %v6001 = vpack.c.bf16 %v5985, %v5984
      %v6002 = vpack.c.bf16 %v5962, %v5986
      %v6003 = vpack.c.bf16 %v5183, %v5885
      %v6005 = vlaneseq
      %v6006 = vshrl.u32 %v6005, 7
      %v6007 = vsub.s32 0, %v6006
      %v6008 = vrot.slane %v5766, %v6007
      %v6082 = vunpack.c.l.b16 %v5694
      %v6083 = vunpack.c.l.b16 %v5695
      %v6084 = vunpack.c.l.b16 %v5696
      %v6085 = vunpack.c.l.b16 %v5697
      %v6086 = vunpack.c.l.b16 %v5698
      %v6087 = vunpack.c.l.b16 %v5699
      %v6088 = vunpack.c.l.b16 %v5700
      %v6089 = vunpack.c.l.b16 %v5701
      %v6090 = vunpack.c.l.b16 %v5702
      %v6091 = vunpack.c.l.b16 %v5703
      %v6092 = vunpack.c.l.b16 %v5704
      %v6093 = vunpack.c.l.b16 %v5705
      %v6094 = vunpack.c.l.b16 %v5706
      %v6095 = vunpack.c.l.b16 %v5707
      %v6096 = vunpack.c.l.b16 %v5708
      %v6097 = vunpack.c.l.b16 %v5709
      %v6098 = vunpack.c.l.b16 %v5710
      %v6099 = vunpack.c.l.b16 %v5711
      %v6100 = vunpack.c.l.b16 %v5712
      %v6101 = vunpack.c.l.b16 %v5713
      %v6102 = vunpack.c.l.b16 %v5714
      %v6103 = vunpack.c.l.b16 %v5715
      %v6104 = vunpack.c.l.b16 %v5716
      %v6105 = vunpack.c.l.b16 %v5717
      %v6106 = vunpack.c.l.b16 %v5718
      %v6107 = vunpack.c.l.b16 %v5719
      %v6108 = vunpack.c.l.b16 %v5720
      %v6109 = vunpack.c.l.b16 %v5721
      %v6110 = vunpack.c.l.b16 %v5722
      %v6111 = vunpack.c.l.b16 %v5723
      %v6112 = vunpack.c.l.b16 %v5724
      %v6113 = vunpack.c.l.b16 %v5725
      %v6114 = vunpack.c.l.b16 %v5726
      %v6115 = vunpack.c.l.b16 %v5727
      %v6116 = vunpack.c.l.b16 %v5728
      %v6117 = vunpack.c.l.b16 %v5729
      %v6118 = vunpack.c.l.b16 %v5730
      %v6119 = vunpack.c.l.b16 %v5731
      %v6120 = vunpack.c.l.b16 %v5732
      %v6121 = vunpack.c.l.b16 %v5733
      %v6122 = vunpack.c.l.b16 %v5734
      %v6123 = vunpack.c.l.b16 %v5735
      %v6124 = vunpack.c.l.b16 %v5736
      %v6125 = vunpack.c.l.b16 %v5737
      %v6126 = vunpack.c.l.b16 %v5738
      %v6127 = vunpack.c.l.b16 %v5739
      %v6128 = vunpack.c.l.b16 %v5740
      %v6129 = vunpack.c.l.b16 %v5741
      %v6130 = vunpack.c.l.b16 %v5742
      %v6131 = vunpack.c.l.b16 %v5743
      %v6132 = vunpack.c.l.b16 %v5744
      %v6133 = vunpack.c.l.b16 %v5745
      %v6134 = vunpack.c.l.b16 %v5746
      %v6135 = vunpack.c.l.b16 %v5747
      %v6136 = vunpack.c.l.b16 %v5748
      %v6137 = vunpack.c.l.b16 %v5749
      %v6138 = vunpack.c.l.b16 %v5750
      %v6139 = vunpack.c.l.b16 %v5751
      %v6140 = vunpack.c.l.b16 %v5752
      %v6141 = vunpack.c.l.b16 %v5753
      %v6142 = vunpack.c.l.b16 %v5754
      %v6143 = vunpack.c.l.b16 %v5755
      %v6144 = vunpack.c.l.b16 %v5756
      %v6145 = vunpack.c.l.b16 %v5757
      %v6146 = vunpack.c.l.b16 %v5758
      %v6147 = vunpack.c.l.b16 %v5759
      %v6148 = vunpack.c.l.b16 %v5760
      %v6149 = vunpack.c.l.b16 %v5761
      %v6150 = vunpack.c.l.b16 %v5762
      %v6151 = vunpack.c.l.b16 %v5763
      %v6152 = vunpack.c.l.b16 %v5764
      %v6153 = vunpack.c.l.b16 %v5765
      %v6154 = vpack.c.b16 %v6083, %v6082
      %v6155 = vpack.c.b16 %v6085, %v6084
      %v6156 = vpack.c.b16 %v6087, %v6086
      %v6157 = vpack.c.b16 %v6089, %v6088
      %v6158 = vpack.c.b16 %v6091, %v6090
      %v6159 = vpack.c.b16 %v6093, %v6092
      %v6160 = vpack.c.b16 %v6095, %v6094
      %v6161 = vpack.c.b16 %v6097, %v6096
      %v6162 = vpack.c.b16 %v6099, %v6098
      %v6163 = vpack.c.b16 %v6101, %v6100
      %v6164 = vpack.c.b16 %v6103, %v6102
      %v6165 = vpack.c.b16 %v6105, %v6104
      %v6166 = vpack.c.b16 %v6107, %v6106
      %v6167 = vpack.c.b16 %v6109, %v6108
      %v6168 = vpack.c.b16 %v6111, %v6110
      %v6169 = vpack.c.b16 %v6113, %v6112
      %v6170 = vpack.c.b16 %v6115, %v6114
      %v6171 = vpack.c.b16 %v6117, %v6116
      %v6172 = vpack.c.b16 %v6119, %v6118
      %v6173 = vpack.c.b16 %v6121, %v6120
      %v6174 = vpack.c.b16 %v6123, %v6122
      %v6175 = vpack.c.b16 %v6125, %v6124
      %v6176 = vpack.c.b16 %v6127, %v6126
      %v6177 = vpack.c.b16 %v6129, %v6128
      %v6178 = vpack.c.b16 %v6131, %v6130
      %v6179 = vpack.c.b16 %v6133, %v6132
      %v6180 = vpack.c.b16 %v6135, %v6134
      %v6181 = vpack.c.b16 %v6137, %v6136
      %v6182 = vpack.c.b16 %v6139, %v6138
      %v6183 = vpack.c.b16 %v6141, %v6140
      %v6184 = vpack.c.b16 %v6143, %v6142
      %v6185 = vpack.c.b16 %v6145, %v6144
      %v6186 = vpack.c.b16 %v6147, %v6146
      %v6187 = vpack.c.b16 %v6149, %v6148
      %v6188 = vpack.c.b16 %v6151, %v6150
      %v6189 = vpack.c.b16 %v6153, %v6152
      %v6227 = vsel %vm3345, %v5991, 0
      %v6230 = vsel %vm3345, %v5995, 0
      %v6233 = vsel %vm3345, %v5999, 0
      %v6236 = vsel %vm3345, %v6003, 0
      %6238 = vmatprep.subr.bf16.mxu0 0
      %6239 = vmatpush1.bf16.msra.mxu0 %v6154
      %6240 = vmatprep.subr.bf16.mxu0 0
      %6241 = vmatpush1.bf16.msra.mxu0 %v6155
      %6242 = vmatprep.subr.bf16.mxu0 0
      %6243 = vmatpush1.bf16.msra.mxu0 %v6156
      %6244 = vmatprep.subr.bf16.mxu0 0
      %6245 = vmatpush1.bf16.msra.mxu0 %v6157
      %6246 = vmatprep.subr.bf16.mxu0 0
      %6247 = vmatpush1.bf16.msra.mxu0 %v6158
      %6248 = vmatprep.subr.bf16.mxu0 0
      %6249 = vmatpush1.bf16.msra.mxu0 %v6159
      %6250 = vmatprep.subr.bf16.mxu0 0
      %6251 = vmatpush1.bf16.msra.mxu0 %v6160
      %6252 = vmatprep.subr.bf16.mxu0 0
      %6253 = vmatpush1.bf16.msra.mxu0 %v6161
      %6254 = vmatprep.subr.bf16.mxu0 0
      %6255 = vmatpush1.bf16.msra.mxu0 %v6162
      %6256 = vmatprep.subr.bf16.mxu0 0
      %6257 = vmatpush1.bf16.msra.mxu0 %v6163
      %6258 = vmatprep.subr.bf16.mxu0 0
      %6259 = vmatpush1.bf16.msra.mxu0 %v6164
      %6260 = vmatprep.subr.bf16.mxu0 0
      %6261 = vmatpush1.bf16.msra.mxu0 %v6165
      %6262 = vmatprep.subr.bf16.mxu0 0
      %6263 = vmatpush1.bf16.msra.mxu0 %v6166
      %6264 = vmatprep.subr.bf16.mxu0 0
      %6265 = vmatpush1.bf16.msra.mxu0 %v6167
      %6266 = vmatprep.subr.bf16.mxu0 0
      %6267 = vmatpush1.bf16.msra.mxu0 %v6168
      %6268 = vmatprep.subr.bf16.mxu0 0
      %6269 = vmatpush1.bf16.msra.mxu0 %v6169
      %6270 = vmatprep.mubr.bf16.mxu0 %v5988
      %6271 = vmatmul.mubr.bf16.gmra.mrb[0].mxu0 %v5987
      %v6272 = vpop.f32.mrb[0].mxu0
      %v6273 = vadd.f32 %v6008, %v6272
      %v6274 = vpop.f32.mrb[0].mxu0
      %v6275 = vpop.f32.mrb[0].mxu0
      %v6276 = vadd.f32 %v6008, %v6275
      %v6277 = vpop.f32.mrb[0].mxu0
      %6278 = vmatprep.mubr.bf16.mxu0 %v5992
      %6279 = vmatmul.mubr.bf16.gmra.mrb[0].mxu0 %v5990
      %v6280 = vpop.f32.mrb[0].mxu0
      %v6281 = vadd.f32 %v6008, %v6280
      %v6282 = vpop.f32.mrb[0].mxu0
      %v6283 = vpop.f32.mrb[0].mxu0
      %v6284 = vadd.f32 %v6008, %v6283
      %v6285 = vpop.f32.mrb[0].mxu0
      %6286 = vmatprep.mubr.bf16.mxu0 %v5996
      %6287 = vmatmul.mubr.bf16.gmra.mrb[0].mxu0 %v5994
      %v6288 = vpop.f32.mrb[0].mxu0
      %v6289 = vadd.f32 %v6008, %v6288
      %v6290 = vpop.f32.mrb[0].mxu0
      %v6291 = vpop.f32.mrb[0].mxu0
      %v6292 = vadd.f32 %v6008, %v6291
      %v6293 = vpop.f32.mrb[0].mxu0
      %6294 = vmatprep.mubr.bf16.mxu0 %v6000
      %6295 = vmatmul.mubr.bf16.gmra.mrb[0].mxu0 %v5998
      %v6296 = vpop.f32.mrb[0].mxu0
      %v6297 = vadd.f32 %v6008, %v6296
      %v6298 = vpop.f32.mrb[0].mxu0
      %v6299 = vpop.f32.mrb[0].mxu0
      %v6300 = vadd.f32 %v6008, %v6299
      %v6301 = vpop.f32.mrb[0].mxu0
      %6302 = vdwg.mxu0
      %6303 = vmatprep.subr.bf16.mxu0 0
      %6304 = vmatpush1.bf16.msra.mxu0 %v6170
      %6305 = vmatprep.subr.bf16.mxu0 0
      %6306 = vmatpush1.bf16.msra.mxu0 %v6171
      %6307 = vmatprep.subr.bf16.mxu0 0
      %6308 = vmatpush1.bf16.msra.mxu0 %v6172
      %6309 = vmatprep.subr.bf16.mxu0 0
      %6310 = vmatpush1.bf16.msra.mxu0 %v6173
      %6311 = vmatprep.subr.bf16.mxu0 0
      %6312 = vmatpush1.bf16.msra.mxu0 %v6174
      %6313 = vmatprep.subr.bf16.mxu0 0
      %6314 = vmatpush1.bf16.msra.mxu0 %v6175
      %6315 = vmatprep.subr.bf16.mxu0 0
      %6316 = vmatpush1.bf16.msra.mxu0 %v6176
      %6317 = vmatprep.subr.bf16.mxu0 0
      %6318 = vmatpush1.bf16.msra.mxu0 %v6177
      %6319 = vmatprep.subr.bf16.mxu0 0
      %6320 = vmatpush1.bf16.msra.mxu0 %v6178
      %6321 = vmatprep.subr.bf16.mxu0 0
      %6322 = vmatpush1.bf16.msra.mxu0 %v6179
      %6323 = vmatprep.subr.bf16.mxu0 0
      %6324 = vmatpush1.bf16.msra.mxu0 %v6180
      %6325 = vmatprep.subr.bf16.mxu0 0
      %6326 = vmatpush1.bf16.msra.mxu0 %v6181
      %6327 = vmatprep.subr.bf16.mxu0 0
      %6328 = vmatpush1.bf16.msra.mxu0 %v6182
      %6329 = vmatprep.subr.bf16.mxu0 0
      %6330 = vmatpush1.bf16.msra.mxu0 %v6183
      %6331 = vmatprep.subr.bf16.mxu0 0
      %6332 = vmatpush1.bf16.msra.mxu0 %v6184
      %6333 = vmatprep.subr.bf16.mxu0 0
      %6334 = vmatpush1.bf16.msra.mxu0 %v6185
      %6335 = vmatprep.mubr.bf16.mxu0 %v5990
      %6336 = vmatmul.mubr.bf16.gmra.mrb[0].mxu0 %v5989
      %v6337 = vpop.f32.mrb[0].mxu0
      %v6338 = vadd.f32 %v6273, %v6337
      %v6339 = vpop.f32.mrb[0].mxu0
      %v6340 = vpop.f32.mrb[0].mxu0
      %v6341 = vadd.f32 %v6276, %v6340
      %v6342 = vpop.f32.mrb[0].mxu0
      %6343 = vmatprep.mubr.bf16.mxu0 %v5994
      %6344 = vmatmul.mubr.bf16.gmra.mrb[0].mxu0 %v5993
      %v6345 = vpop.f32.mrb[0].mxu0
      %v6346 = vadd.f32 %v6281, %v6345
      %v6347 = vpop.f32.mrb[0].mxu0
      %v6348 = vpop.f32.mrb[0].mxu0
      %v6349 = vadd.f32 %v6284, %v6348
      %v6350 = vpop.f32.mrb[0].mxu0
      %6351 = vmatprep.mubr.bf16.mxu0 %v5998
      %6352 = vmatmul.mubr.bf16.gmra.mrb[0].mxu0 %v5997
      %v6353 = vpop.f32.mrb[0].mxu0
      %v6354 = vadd.f32 %v6289, %v6353
      %v6355 = vpop.f32.mrb[0].mxu0
      %v6356 = vpop.f32.mrb[0].mxu0
      %v6357 = vadd.f32 %v6292, %v6356
      %v6358 = vpop.f32.mrb[0].mxu0
      %6359 = vmatprep.mubr.bf16.mxu0 %v6002
      %6360 = vmatmul.mubr.bf16.gmra.mrb[0].mxu0 %v6001
      %v6361 = vpop.f32.mrb[0].mxu0
      %v6362 = vadd.f32 %v6297, %v6361
      %v6363 = vpop.f32.mrb[0].mxu0
      %v6364 = vpop.f32.mrb[0].mxu0
      %v6365 = vadd.f32 %v6300, %v6364
      %v6366 = vpop.f32.mrb[0].mxu0
      %6367 = vdwg.mxu0
      %6368 = vmatprep.subr.bf16.mxu0 0
      %6369 = vmatpush1.bf16.msra.mxu0 %v6186
      %6370 = vmatprep.subr.bf16.mxu0 0
      %6371 = vmatpush1.bf16.msra.mxu0 %v6187
      %6372 = vmatprep.subr.bf16.mxu0 0
      %6373 = vmatpush1.bf16.msra.mxu0 %v6188
      %6374 = vmatprep.subr.bf16.mxu0 0
      %6375 = vmatpush1.bf16.msra.mxu0 %v6189
      %6376 = vmatprep.subr.bf16.mxu0 0
      %6377 = vmatpush1.bf16.msra.mxu0 0
      %6378 = vmatprep.subr.bf16.mxu0 0
      %6379 = vmatpush1.bf16.msra.mxu0 0
      %6380 = vmatprep.subr.bf16.mxu0 0
      %6381 = vmatpush1.bf16.msra.mxu0 0
      %6382 = vmatprep.subr.bf16.mxu0 0
      %6383 = vmatpush1.bf16.msra.mxu0 0
      %6384 = vmatprep.subr.bf16.mxu0 0
      %6385 = vmatpush1.bf16.msra.mxu0 0
      %6386 = vmatprep.subr.bf16.mxu0 0
      %6387 = vmatpush1.bf16.msra.mxu0 0
      %6388 = vmatprep.subr.bf16.mxu0 0
      %6389 = vmatpush1.bf16.msra.mxu0 0
      %6390 = vmatprep.subr.bf16.mxu0 0
      %6391 = vmatpush1.bf16.msra.mxu0 0
      %6392 = vmatprep.subr.bf16.mxu0 0
      %6393 = vmatpush1.bf16.msra.mxu0 0
      %6394 = vmatprep.subr.bf16.mxu0 0
      %6395 = vmatpush1.bf16.msra.mxu0 0
      %6396 = vmatprep.subr.bf16.mxu0 0
      %6397 = vmatpush1.bf16.msra.mxu0 0
      %6398 = vmatprep.subr.bf16.mxu0 0
      %6399 = vmatpush1.bf16.msra.mxu0 0
      %6400 = vmatprep.mubr.bf16.mxu0 0
      %6401 = vmatmul.mubr.bf16.gmra.mrb[0].mxu0 %v6227
      %v6402 = vpop.f32.mrb[0].mxu0
      %v6403 = vadd.f32 %v6338, %v6402
      %v6404 = vpop.f32.mrb[0].mxu0
      %v6405 = vpop.f32.mrb[0].mxu0
      %v6406 = vadd.f32 %v6341, %v6405
      %v6407 = vpop.f32.mrb[0].mxu0
      %6408 = vmatprep.mubr.bf16.mxu0 0
      %6409 = vmatmul.mubr.bf16.gmra.mrb[0].mxu0 %v6230
      %v6410 = vpop.f32.mrb[0].mxu0
      %v6411 = vadd.f32 %v6346, %v6410
      %v6412 = vpop.f32.mrb[0].mxu0
      %v6413 = vpop.f32.mrb[0].mxu0
      %v6414 = vadd.f32 %v6349, %v6413
      %v6415 = vpop.f32.mrb[0].mxu0
      %6416 = vmatprep.mubr.bf16.mxu0 0
      %6417 = vmatmul.mubr.bf16.gmra.mrb[0].mxu0 %v6233
      %v6418 = vpop.f32.mrb[0].mxu0
      %v6419 = vadd.f32 %v6354, %v6418
      %v6420 = vpop.f32.mrb[0].mxu0
      %v6421 = vpop.f32.mrb[0].mxu0
      %v6422 = vadd.f32 %v6357, %v6421
      %v6423 = vpop.f32.mrb[0].mxu0
      %6424 = vmatprep.mubr.bf16.mxu0 0
      %6425 = vmatmul.mubr.bf16.gmra.mrb[0].mxu0 %v6236
      %v6426 = vpop.f32.mrb[0].mxu0
      %v6427 = vadd.f32 %v6362, %v6426
      %v6428 = vpop.f32.mrb[0].mxu0
      %v6429 = vpop.f32.mrb[0].mxu0
      %v6430 = vadd.f32 %v6365, %v6429
      %v6431 = vpop.f32.mrb[0].mxu0
      %6432 = vdwg.mxu0
      %v6433 = vmax.f32 %v6403, 0.0
      %v6434 = vmax.f32 %v6406, 0.0
      %v6435 = vmax.f32 %v6411, 0.0
      %v6436 = vmax.f32 %v6414, 0.0
      %v6437 = vmax.f32 %v6419, 0.0
      %v6438 = vmax.f32 %v6422, 0.0
      %v6439 = vmax.f32 %v6427, 0.0
      %v6440 = vmax.f32 %v6430, 0.0
      %v6441 = vld [vmem:[%s9] sm:$0xf]
      %v6442 = vld [vmem:[%s9 + $0x4] sm:$0xf]
      %v6443 = vld [vmem:[%s9 + $0x8] sm:$0xf]
      %v6444 = vld [vmem:[%s9 + $0xc] sm:$0xf]
      %v6445 = vld [vmem:[%s9 + $0x10] sm:$0xf]
      %v6446 = vld [vmem:[%s9 + $0x14] sm:$0xf]
      %v6447 = vld [vmem:[%s9 + $0x18] sm:$0xf]
      %v6448 = vld [vmem:[%s9 + $0x1c] sm:$0xf]
      %v6449 = vld [vmem:[%s10] sm:$0x1]
      %v6450 = vpack.c.bf16 %v6434, %v6433
      %v6451 = vpack.c.bf16 %v6436, %v6435
      %v6452 = vpack.c.bf16 %v6438, %v6437
      %v6453 = vpack.c.bf16 %v6440, %v6439
      %v6455 = vlaneseq
      %v6456 = vshrl.u32 %v6455, 7
      %v6457 = vsub.s32 0, %v6456
      %v6458 = vrot.slane %v6449, %v6457
      %v6468 = vunpack.c.l.b16 %v6441
      %v6469 = vunpack.c.l.b16 %v6442
      %v6470 = vunpack.c.l.b16 %v6443
      %v6471 = vunpack.c.l.b16 %v6444
      %v6472 = vunpack.c.l.b16 %v6445
      %v6473 = vunpack.c.l.b16 %v6446
      %v6474 = vunpack.c.l.b16 %v6447
      %v6475 = vunpack.c.l.b16 %v6448
      %v6476 = vpack.c.b16 %v6469, %v6468
      %v6477 = vpack.c.b16 %v6471, %v6470
      %v6478 = vpack.c.b16 %v6473, %v6472
      %v6479 = vpack.c.b16 %v6475, %v6474
      %v6485 = vsel %vm3345, %v6450, 0
      %v6488 = vsel %vm3345, %v6451, 0
      %v6491 = vsel %vm3345, %v6452, 0
      %v6494 = vsel %vm3345, %v6453, 0
      %6496 = vmatprep.subr.bf16.mxu0 0
      %6497 = vmatpush1.bf16.msra.mxu0 %v6476
      %6498 = vmatprep.subr.bf16.mxu0 0
      %6499 = vmatpush1.bf16.msra.mxu0 %v6477
      %6500 = vmatprep.subr.bf16.mxu0 0
      %6501 = vmatpush1.bf16.msra.mxu0 %v6478
      %6502 = vmatprep.subr.bf16.mxu0 0
      %6503 = vmatpush1.bf16.msra.mxu0 %v6479
      %6504 = vmatprep.subr.bf16.mxu0 0
      %6505 = vmatpush1.bf16.msra.mxu0 0
      %6506 = vmatprep.subr.bf16.mxu0 0
      %6507 = vmatpush1.bf16.msra.mxu0 0
      %6508 = vmatprep.subr.bf16.mxu0 0
      %6509 = vmatpush1.bf16.msra.mxu0 0
      %6510 = vmatprep.subr.bf16.mxu0 0
      %6511 = vmatpush1.bf16.msra.mxu0 0
      %6512 = vmatprep.subr.bf16.mxu0 0
      %6513 = vmatpush1.bf16.msra.mxu0 0
      %6514 = vmatprep.subr.bf16.mxu0 0
      %6515 = vmatpush1.bf16.msra.mxu0 0
      %6516 = vmatprep.subr.bf16.mxu0 0
      %6517 = vmatpush1.bf16.msra.mxu0 0
      %6518 = vmatprep.subr.bf16.mxu0 0
      %6519 = vmatpush1.bf16.msra.mxu0 0
      %6520 = vmatprep.subr.bf16.mxu0 0
      %6521 = vmatpush1.bf16.msra.mxu0 0
      %6522 = vmatprep.subr.bf16.mxu0 0
      %6523 = vmatpush1.bf16.msra.mxu0 0
      %6524 = vmatprep.subr.bf16.mxu0 0
      %6525 = vmatpush1.bf16.msra.mxu0 0
      %6526 = vmatprep.subr.bf16.mxu0 0
      %6527 = vmatpush1.bf16.msra.mxu0 0
      %6528 = vmatprep.mubr.bf16.mxu0 0
      %6529 = vmatmul.mubr.bf16.gmra.mrb[0].mxu0 %v6485
      %v6530 = vpop.f32.mrb[0].mxu0
      %v6531 = vadd.f32 %v6458, %v6530
      %v6532 = vpop.f32.mrb[0].mxu0
      %v6533 = vpop.f32.mrb[0].mxu0
      %v6534 = vadd.f32 %v6458, %v6533
      %v6535 = vpop.f32.mrb[0].mxu0
      %6536 = vmatprep.mubr.bf16.mxu0 0
      %6537 = vmatmul.mubr.bf16.gmra.mrb[0].mxu0 %v6488
      %v6538 = vpop.f32.mrb[0].mxu0
      %v6539 = vadd.f32 %v6458, %v6538
      %v6540 = vpop.f32.mrb[0].mxu0
      %v6541 = vpop.f32.mrb[0].mxu0
      %v6542 = vadd.f32 %v6458, %v6541
      %v6543 = vpop.f32.mrb[0].mxu0
      %6544 = vmatprep.mubr.bf16.mxu0 0
      %6545 = vmatmul.mubr.bf16.gmra.mrb[0].mxu0 %v6491
      %v6546 = vpop.f32.mrb[0].mxu0
      %v6547 = vadd.f32 %v6458, %v6546
      %v6548 = vpop.f32.mrb[0].mxu0
      %v6549 = vpop.f32.mrb[0].mxu0
      %v6550 = vadd.f32 %v6458, %v6549
      %v6551 = vpop.f32.mrb[0].mxu0
      %6552 = vmatprep.mubr.bf16.mxu0 0
      %6553 = vmatmul.mubr.bf16.gmra.mrb[0].mxu0 %v6494
      %v6554 = vpop.f32.mrb[0].mxu0
      %v6555 = vadd.f32 %v6458, %v6554
      %v6556 = vpop.f32.mrb[0].mxu0
      %v6557 = vpop.f32.mrb[0].mxu0
      %v6558 = vadd.f32 %v6458, %v6557
      %v6559 = vpop.f32.mrb[0].mxu0
      %6560 = vdwg.mxu0
      %v6561 = vpack.c.bf16 %v6534, %v6531
      %v6562 = vpack.c.bf16 %v6542, %v6539
      %v6563 = vpack.c.bf16 %v6550, %v6547
      %v6564 = vpack.c.bf16 %v6558, %v6555
      %6569 = vrot.lane.b32.xlu0 %v6561, 120
      %v6570 = vpop.permute.xlu0 %6569
      %6571 = vrot.lane.b32.xlu0 %v6562, 120
      %v6572 = vpop.permute.xlu0 %6571
      %6573 = vrot.lane.b32.xlu0 %v6563, 120
      %v6574 = vpop.permute.xlu0 %6573
      %6575 = vrot.lane.b32.xlu0 %v6564, 120
      %v6576 = vpop.permute.xlu0 %6575
      %vm6577 = vcmask 64512
      %v6579 = vsel %vm6577, %v6561, 0
      %v6582 = vsel %vm6577, %v6562, 0
      %v6585 = vsel %vm6577, %v6563, 0
      %v6588 = vsel %vm6577, %v6564, 0
      %v6591 = vsel %vm6577, %v6570, 0
      %v6594 = vsel %vm6577, %v6572, 0
      %v6597 = vsel %vm6577, %v6574, 0
      %v6600 = vsel %vm6577, %v6576, 0
      %6602 = vmatprep.subr.bf16.mxu0 0
      %6603 = vmatpush1.bf16.xpose.msra.mxu0 %v6591
      %6604 = vmatprep.subr.bf16.mxu0 0
      %6605 = vmatpush1.bf16.xpose.msra.mxu0 %v6594
      %6606 = vmatprep.subr.bf16.mxu0 0
      %6607 = vmatpush1.bf16.xpose.msra.mxu0 %v6597
      %6608 = vmatprep.subr.bf16.mxu0 0
      %6609 = vmatpush1.bf16.xpose.msra.mxu0 %v6600
      %6610 = vmatprep.subr.bf16.mxu0 0
      %6611 = vmatpush1.bf16.xpose.msra.mxu0 0
      %6612 = vmatprep.subr.bf16.mxu0 0
      %6613 = vmatpush1.bf16.xpose.msra.mxu0 0
      %6614 = vmatprep.subr.bf16.mxu0 0
      %6615 = vmatpush1.bf16.xpose.msra.mxu0 0
      %6616 = vmatprep.subr.bf16.mxu0 0
      %6617 = vmatpush1.bf16.xpose.msra.mxu0 0
      %6618 = vmatprep.subr.bf16.mxu0 0
      %6619 = vmatpush1.bf16.xpose.msra.mxu0 0
      %6620 = vmatprep.subr.bf16.mxu0 0
      %6621 = vmatpush1.bf16.xpose.msra.mxu0 0
      %6622 = vmatprep.subr.bf16.mxu0 0
      %6623 = vmatpush1.bf16.xpose.msra.mxu0 0
      %6624 = vmatprep.subr.bf16.mxu0 0
      %6625 = vmatpush1.bf16.xpose.msra.mxu0 0
      %6626 = vmatprep.subr.bf16.mxu0 0
      %6627 = vmatpush1.bf16.xpose.msra.mxu0 0
      %6628 = vmatprep.subr.bf16.mxu0 0
      %6629 = vmatpush1.bf16.xpose.msra.mxu0 0
      %6630 = vmatprep.subr.bf16.mxu0 0
      %6631 = vmatpush1.bf16.xpose.msra.mxu0 0
      %6632 = vmatprep.subr.bf16.mxu0 0
      %6633 = vmatpush1.bf16.xpose.msra.mxu0 0
      %6634 = vmatprep.mubr.bf16.mxu0 0
      %6635 = vmatmul.mubr.bf16.gmra.mrb[0].mxu0 %v6579
      %v6636 = vpop.f32.mrb[0].mxu0
      %v6637 = vadd.f32 0.0, %v6636
      %v6638 = vpop.f32.mrb[0].mxu0
      %v6639 = vpop.f32.mrb[0].mxu0
      %v6640 = vadd.f32 0.0, %v6639
      %v6641 = vpop.f32.mrb[0].mxu0
      %6642 = vmatprep.mubr.bf16.mxu0 0
      %6643 = vmatmul.mubr.bf16.gmra.mrb[0].mxu0 %v6582
      %v6644 = vpop.f32.mrb[0].mxu0
      %v6645 = vadd.f32 0.0, %v6644
      %v6646 = vpop.f32.mrb[0].mxu0
      %v6647 = vpop.f32.mrb[0].mxu0
      %v6648 = vadd.f32 0.0, %v6647
      %v6649 = vpop.f32.mrb[0].mxu0
      %6650 = vmatprep.mubr.bf16.mxu0 0
      %6651 = vmatmul.mubr.bf16.gmra.mrb[0].mxu0 %v6585
      %v6652 = vpop.f32.mrb[0].mxu0
      %v6653 = vadd.f32 0.0, %v6652
      %v6654 = vpop.f32.mrb[0].mxu0
      %v6655 = vpop.f32.mrb[0].mxu0
      %v6656 = vadd.f32 0.0, %v6655
      %v6657 = vpop.f32.mrb[0].mxu0
      %6658 = vmatprep.mubr.bf16.mxu0 0
      %6659 = vmatmul.mubr.bf16.gmra.mrb[0].mxu0 %v6588
      %v6660 = vpop.f32.mrb[0].mxu0
      %v6661 = vadd.f32 0.0, %v6660
      %v6662 = vpop.f32.mrb[0].mxu0
      %v6663 = vpop.f32.mrb[0].mxu0
      %v6664 = vadd.f32 0.0, %v6663
      %v6665 = vpop.f32.mrb[0].mxu0
      %6666 = vdwg.mxu0
      %v6667 = vsel %vm3345, %v6637, -inf
      %6668 = vmax.xlane.f32.xlu0 %v6667
      %v6669 = vpop.xlane.xlu0 %6668
      %v6670 = vsel %vm3345, %v6640, -inf
      %6671 = vmax.xlane.f32.xlu0 %v6670
      %v6672 = vpop.xlane.xlu0 %6671
      %v6673 = vsel %vm3345, %v6645, -inf
      %6674 = vmax.xlane.f32.xlu0 %v6673
      %v6675 = vpop.xlane.xlu0 %6674
      %v6676 = vsel %vm3345, %v6648, -inf
      %6677 = vmax.xlane.f32.xlu0 %v6676
      %v6678 = vpop.xlane.xlu0 %6677
      %v6679 = vsel %vm3345, %v6653, -inf
      %6680 = vmax.xlane.f32.xlu0 %v6679
      %v6681 = vpop.xlane.xlu0 %6680
      %v6682 = vsel %vm3345, %v6656, -inf
      %6683 = vmax.xlane.f32.xlu0 %v6682
      %v6684 = vpop.xlane.xlu0 %6683
      %v6685 = vsel %vm3345, %v6661, -inf
      %6686 = vmax.xlane.f32.xlu0 %v6685
      %v6687 = vpop.xlane.xlu0 %6686
      %v6688 = vsel %vm3345, %v6664, -inf
      %6689 = vmax.xlane.f32.xlu0 %v6688
      %v6690 = vpop.xlane.xlu0 %6689
      %v6691 = vsub.f32 %v6637, %v6669
      %v6692 = vsub.f32 %v6640, %v6672
      %v6693 = vsub.f32 %v6645, %v6675
      %v6694 = vsub.f32 %v6648, %v6678
      %v6695 = vsub.f32 %v6653, %v6681
      %v6696 = vsub.f32 %v6656, %v6684
      %v6697 = vsub.f32 %v6661, %v6687
      %v6698 = vsub.f32 %v6664, %v6690
      %v6699 = vmul.f32 %v6691, 1.442695
      %v6700 = vpow.pop %v6699
      %v6701 = vmul.f32 %v6692, 1.442695
      %v6702 = vpow.pop %v6701
      %v6703 = vmul.f32 %v6693, 1.442695
      %v6704 = vpow.pop %v6703
      %v6705 = vmul.f32 %v6694, 1.442695
      %v6706 = vpow.pop %v6705
      %v6707 = vmul.f32 %v6695, 1.442695
      %v6708 = vpow.pop %v6707
      %v6709 = vmul.f32 %v6696, 1.442695
      %v6710 = vpow.pop %v6709
      %v6711 = vmul.f32 %v6697, 1.442695
      %v6712 = vpow.pop %v6711
      %v6713 = vmul.f32 %v6698, 1.442695
      %v6714 = vpow.pop %v6713
      %v6715 = vsel %vm3345, %v6700, 0.0
      %6716 = vadd.xlane.f32.xlu0 %v6715
      %v6717 = vpop.xlane.xlu0 %6716
      %v6718 = vsel %vm3345, %v6702, 0.0
      %6719 = vadd.xlane.f32.xlu0 %v6718
      %v6720 = vpop.xlane.xlu0 %6719
      %v6721 = vsel %vm3345, %v6704, 0.0
      %6722 = vadd.xlane.f32.xlu0 %v6721
      %v6723 = vpop.xlane.xlu0 %6722
      %v6724 = vsel %vm3345, %v6706, 0.0
      %6725 = vadd.xlane.f32.xlu0 %v6724
      %v6726 = vpop.xlane.xlu0 %6725
      %v6727 = vsel %vm3345, %v6708, 0.0
      %6728 = vadd.xlane.f32.xlu0 %v6727
      %v6729 = vpop.xlane.xlu0 %6728
      %v6730 = vsel %vm3345, %v6710, 0.0
      %6731 = vadd.xlane.f32.xlu0 %v6730
      %v6732 = vpop.xlane.xlu0 %6731
      %v6733 = vsel %vm3345, %v6712, 0.0
      %6734 = vadd.xlane.f32.xlu0 %v6733
      %v6735 = vpop.xlane.xlu0 %6734
      %v6736 = vsel %vm3345, %v6714, 0.0
      %6737 = vadd.xlane.f32.xlu0 %v6736
      %v6738 = vpop.xlane.xlu0 %6737
      %v6739 = vrcp.pop %v6717
      %v6740 = vrcp.pop %v6720
      %v6741 = vrcp.pop %v6723
      %v6742 = vrcp.pop %v6726
      %v6743 = vrcp.pop %v6729
      %v6744 = vrcp.pop %v6732
      %v6745 = vrcp.pop %v6735
      %v6746 = vrcp.pop %v6738
      %v6747 = vmul.f32 %v6700, %v6739
      %v6748 = vmul.f32 %v6702, %v6740
      %v6749 = vmul.f32 %v6704, %v6741
      %v6750 = vmul.f32 %v6706, %v6742
      %v6751 = vmul.f32 %v6708, %v6743
      %v6752 = vmul.f32 %v6710, %v6744
      %v6753 = vmul.f32 %v6712, %v6745
      %v6754 = vmul.f32 %v6714, %v6746
      %v6755 = vpack.c.bf16 %v6748, %v6747
      %v6756 = vpack.c.bf16 %v6750, %v6749
      %v6757 = vpack.c.bf16 %v6752, %v6751
      %v6758 = vpack.c.bf16 %v6754, %v6753
      %6759 = vrot.lane.b32.xlu0 %v6561, 112
      %v6760 = vpop.permute.xlu0 %6759
      %6761 = vrot.lane.b32.xlu0 %v6562, 112
      %v6762 = vpop.permute.xlu0 %6761
      %6763 = vrot.lane.b32.xlu0 %v6563, 112
      %v6764 = vpop.permute.xlu0 %6763
      %6765 = vrot.lane.b32.xlu0 %v6564, 112
      %v6766 = vpop.permute.xlu0 %6765
      %v6772 = vsel %vm3345, %v6755, 0
      %v6775 = vsel %vm3345, %v6756, 0
      %v6778 = vsel %vm3345, %v6757, 0
      %v6781 = vsel %vm3345, %v6758, 0
      %6783 = vmatprep.subr.bf16.mxu0 0
      %6784 = vmatpush1.bf16.msra.mxu0 %v6760
      %6785 = vmatprep.subr.bf16.mxu0 0
      %6786 = vmatpush1.bf16.msra.mxu0 %v6762
      %6787 = vmatprep.subr.bf16.mxu0 0
      %6788 = vmatpush1.bf16.msra.mxu0 %v6764
      %6789 = vmatprep.subr.bf16.mxu0 0
      %6790 = vmatpush1.bf16.msra.mxu0 %v6766
      %6791 = vmatprep.subr.bf16.mxu0 0
      %6792 = vmatpush1.bf16.msra.mxu0 0
      %6793 = vmatprep.subr.bf16.mxu0 0
      %6794 = vmatpush1.bf16.msra.mxu0 0
      %6795 = vmatprep.subr.bf16.mxu0 0
      %6796 = vmatpush1.bf16.msra.mxu0 0
      %6797 = vmatprep.subr.bf16.mxu0 0
      %6798 = vmatpush1.bf16.msra.mxu0 0
      %6799 = vmatprep.subr.bf16.mxu0 0
      %6800 = vmatpush1.bf16.msra.mxu0 0
      %6801 = vmatprep.subr.bf16.mxu0 0
      %6802 = vmatpush1.bf16.msra.mxu0 0
      %6803 = vmatprep.subr.bf16.mxu0 0
      %6804 = vmatpush1.bf16.msra.mxu0 0
      %6805 = vmatprep.subr.bf16.mxu0 0
      %6806 = vmatpush1.bf16.msra.mxu0 0
      %6807 = vmatprep.subr.bf16.mxu0 0
      %6808 = vmatpush1.bf16.msra.mxu0 0
      %6809 = vmatprep.subr.bf16.mxu0 0
      %6810 = vmatpush1.bf16.msra.mxu0 0
      %6811 = vmatprep.subr.bf16.mxu0 0
      %6812 = vmatpush1.bf16.msra.mxu0 0
      %6813 = vmatprep.subr.bf16.mxu0 0
      %6814 = vmatpush1.bf16.msra.mxu0 0
      %6815 = vmatprep.mubr.bf16.mxu0 0
      %6816 = vmatmul.mubr.bf16.gmra.mrb[0].mxu0 %v6772
      %v6817 = vpop.f32.mrb[0].mxu0
      %v6818 = vadd.f32 0.0, %v6817
      %v6819 = vpop.f32.mrb[0].mxu0
      %v6820 = vpop.f32.mrb[0].mxu0
      %v6821 = vadd.f32 0.0, %v6820
      %v6822 = vpop.f32.mrb[0].mxu0
      %6823 = vmatprep.mubr.bf16.mxu0 0
      %6824 = vmatmul.mubr.bf16.gmra.mrb[0].mxu0 %v6775
      %v6825 = vpop.f32.mrb[0].mxu0
      %v6826 = vadd.f32 0.0, %v6825
      %v6827 = vpop.f32.mrb[0].mxu0
      %v6828 = vpop.f32.mrb[0].mxu0
      %v6829 = vadd.f32 0.0, %v6828
      %v6830 = vpop.f32.mrb[0].mxu0
      %6831 = vmatprep.mubr.bf16.mxu0 0
      %6832 = vmatmul.mubr.bf16.gmra.mrb[0].mxu0 %v6778
      %v6833 = vpop.f32.mrb[0].mxu0
      %v6834 = vadd.f32 0.0, %v6833
      %v6835 = vpop.f32.mrb[0].mxu0
      %v6836 = vpop.f32.mrb[0].mxu0
      %v6837 = vadd.f32 0.0, %v6836
      %v6838 = vpop.f32.mrb[0].mxu0
      %6839 = vmatprep.mubr.bf16.mxu0 0
      %6840 = vmatmul.mubr.bf16.gmra.mrb[0].mxu0 %v6781
      %v6841 = vpop.f32.mrb[0].mxu0
      %v6842 = vadd.f32 0.0, %v6841
      %v6843 = vpop.f32.mrb[0].mxu0
      %v6844 = vpop.f32.mrb[0].mxu0
      %v6845 = vadd.f32 0.0, %v6844
      %v6846 = vpop.f32.mrb[0].mxu0
      %6847 = vdwg.mxu0
      %v6848 = vld [vmem:[%s11] sm:$0xf]
      %v6849 = vld [vmem:[%s11 + $0x4] sm:$0xf]
      %v6850 = vld [vmem:[%s11 + $0x8] sm:$0xf]
      %v6851 = vld [vmem:[%s11 + $0xc] sm:$0xf]
      %v6852 = vld [vmem:[%s11 + $0x10] sm:$0xf]
      %v6853 = vld [vmem:[%s11 + $0x14] sm:$0xf]
      %v6854 = vld [vmem:[%s11 + $0x18] sm:$0xf]
      %v6855 = vld [vmem:[%s11 + $0x1c] sm:$0xf]
      %v6856 = vld [vmem:[%s12] sm:$0x1]
      %v6857 = vpack.c.bf16 %v6821, %v6818
      %v6858 = vpack.c.bf16 %v6829, %v6826
      %v6859 = vpack.c.bf16 %v6837, %v6834
      %v6860 = vpack.c.bf16 %v6845, %v6842
      %v6862 = vlaneseq
      %v6863 = vshrl.u32 %v6862, 7
      %v6864 = vsub.s32 0, %v6863
      %v6865 = vrot.slane %v6856, %v6864
      %v6875 = vunpack.c.l.b16 %v6848
      %v6876 = vunpack.c.l.b16 %v6849
      %v6877 = vunpack.c.l.b16 %v6850
      %v6878 = vunpack.c.l.b16 %v6851
      %v6879 = vunpack.c.l.b16 %v6852
      %v6880 = vunpack.c.l.b16 %v6853
      %v6881 = vunpack.c.l.b16 %v6854
      %v6882 = vunpack.c.l.b16 %v6855
      %v6883 = vpack.c.b16 %v6876, %v6875
      %v6884 = vpack.c.b16 %v6878, %v6877
      %v6885 = vpack.c.b16 %v6880, %v6879
      %v6886 = vpack.c.b16 %v6882, %v6881
      %v6892 = vsel %vm3345, %v6857, 0
      %v6895 = vsel %vm3345, %v6858, 0
      %v6898 = vsel %vm3345, %v6859, 0
      %v6901 = vsel %vm3345, %v6860, 0
      %6903 = vmatprep.subr.bf16.mxu0 0
      %6904 = vmatpush1.bf16.msra.mxu0 %v6883
      %6905 = vmatprep.subr.bf16.mxu0 0
      %6906 = vmatpush1.bf16.msra.mxu0 %v6884
      %6907 = vmatprep.subr.bf16.mxu0 0
      %6908 = vmatpush1.bf16.msra.mxu0 %v6885
      %6909 = vmatprep.subr.bf16.mxu0 0
      %6910 = vmatpush1.bf16.msra.mxu0 %v6886
      %6911 = vmatprep.subr.bf16.mxu0 0
      %6912 = vmatpush1.bf16.msra.mxu0 0
      %6913 = vmatprep.subr.bf16.mxu0 0
      %6914 = vmatpush1.bf16.msra.mxu0 0
      %6915 = vmatprep.subr.bf16.mxu0 0
      %6916 = vmatpush1.bf16.msra.mxu0 0
      %6917 = vmatprep.subr.bf16.mxu0 0
      %6918 = vmatpush1.bf16.msra.mxu0 0
      %6919 = vmatprep.subr.bf16.mxu0 0
      %6920 = vmatpush1.bf16.msra.mxu0 0
      %6921 = vmatprep.subr.bf16.mxu0 0
      %6922 = vmatpush1.bf16.msra.mxu0 0
      %6923 = vmatprep.subr.bf16.mxu0 0
      %6924 = vmatpush1.bf16.msra.mxu0 0
      %6925 = vmatprep.subr.bf16.mxu0 0
      %6926 = vmatpush1.bf16.msra.mxu0 0
      %6927 = vmatprep.subr.bf16.mxu0 0
      %6928 = vmatpush1.bf16.msra.mxu0 0
      %6929 = vmatprep.subr.bf16.mxu0 0
      %6930 = vmatpush1.bf16.msra.mxu0 0
      %6931 = vmatprep.subr.bf16.mxu0 0
      %6932 = vmatpush1.bf16.msra.mxu0 0
      %6933 = vmatprep.subr.bf16.mxu0 0
      %6934 = vmatpush1.bf16.msra.mxu0 0
      %6935 = vmatprep.mubr.bf16.mxu0 0
      %6936 = vmatmul.mubr.bf16.gmra.mrb[0].mxu0 %v6892
      %v6937 = vpop.f32.mrb[0].mxu0
      %v6938 = vadd.f32 %v6865, %v6937
      %v6939 = vpop.f32.mrb[0].mxu0
      %v6940 = vpop.f32.mrb[0].mxu0
      %v6941 = vadd.f32 %v6865, %v6940
      %v6942 = vpop.f32.mrb[0].mxu0
      %6943 = vmatprep.mubr.bf16.mxu0 0
      %6944 = vmatmul.mubr.bf16.gmra.mrb[0].mxu0 %v6895
      %v6945 = vpop.f32.mrb[0].mxu0
      %v6946 = vadd.f32 %v6865, %v6945
      %v6947 = vpop.f32.mrb[0].mxu0
      %v6948 = vpop.f32.mrb[0].mxu0
      %v6949 = vadd.f32 %v6865, %v6948
      %v6950 = vpop.f32.mrb[0].mxu0
      %6951 = vmatprep.mubr.bf16.mxu0 0
      %6952 = vmatmul.mubr.bf16.gmra.mrb[0].mxu0 %v6898
      %v6953 = vpop.f32.mrb[0].mxu0
      %v6954 = vadd.f32 %v6865, %v6953
      %v6955 = vpop.f32.mrb[0].mxu0
      %v6956 = vpop.f32.mrb[0].mxu0
      %v6957 = vadd.f32 %v6865, %v6956
      %v6958 = vpop.f32.mrb[0].mxu0
      %6959 = vmatprep.mubr.bf16.mxu0 0
      %6960 = vmatmul.mubr.bf16.gmra.mrb[0].mxu0 %v6901
      %v6961 = vpop.f32.mrb[0].mxu0
      %v6962 = vadd.f32 %v6865, %v6961
      %v6963 = vpop.f32.mrb[0].mxu0
      %v6964 = vpop.f32.mrb[0].mxu0
      %v6965 = vadd.f32 %v6865, %v6964
      %v6966 = vpop.f32.mrb[0].mxu0
      %6967 = vdwg.mxu0
      %v6976 = vcombine.high %v6938, %v6938
      %v6978 = vunpack.c.l.s4 1966171168
      %v6979 = vunpack.c.0.s8 %v6978
      %v6980 = vlaneseq
      %v6981 = vshrl.u32 %v6980, 7
      %v6982 = vsub.s32 %v6979, %v6981
      %v6983 = vrot.slane %v6938, %v6982
      %v6985 = vunpack.c.l.s4 1966171168
      %v6986 = vunpack.c.0.s8 %v6985
      %v6987 = vlaneseq
      %v6988 = vshrl.u32 %v6987, 7
      %v6989 = vsub.s32 %v6986, %v6988
      %v6990 = vrot.slane %v6976, %v6989
      %v6991 = vcombine.high %v6983, %v6983
      %v6992 = vcombine.high %v6990, %v6990
      %v6994 = vunpack.c.l.s4 1966171168
      %v6995 = vunpack.c.0.s8 %v6994
      %v6996 = vlaneseq
      %v6997 = vshrl.u32 %v6996, 7
      %v6998 = vsub.s32 %v6995, %v6997
      %v6999 = vrot.slane %v6983, %v6998
      %v7001 = vunpack.c.l.s4 1966171168
      %v7002 = vunpack.c.0.s8 %v7001
      %v7003 = vlaneseq
      %v7004 = vshrl.u32 %v7003, 7
      %v7005 = vsub.s32 %v7002, %v7004
      %v7006 = vrot.slane %v6990, %v7005
      %v7008 = vunpack.c.l.s4 1966171168
      %v7009 = vunpack.c.0.s8 %v7008
      %v7010 = vlaneseq
      %v7011 = vshrl.u32 %v7010, 7
      %v7012 = vsub.s32 %v7009, %v7011
      %v7013 = vrot.slane %v6991, %v7012
      %v7015 = vunpack.c.l.s4 1966171168
      %v7016 = vunpack.c.0.s8 %v7015
      %v7017 = vlaneseq
      %v7018 = vshrl.u32 %v7017, 7
      %v7019 = vsub.s32 %v7016, %v7018
      %v7020 = vrot.slane %v6992, %v7019
      %v7021 = vcombine.high %v6999, %v6999
      %v7022 = vcombine.high %v7006, %v7006
      %v7023 = vcombine.high %v7013, %v7013
      %v7024 = vcombine.high %v7020, %v7020
      %v7025 = vcombine.high %v6941, %v6941
      %v7027 = vunpack.c.l.s4 1966171168
      %v7028 = vunpack.c.0.s8 %v7027
      %v7029 = vlaneseq
      %v7030 = vshrl.u32 %v7029, 7
      %v7031 = vsub.s32 %v7028, %v7030
      %v7032 = vrot.slane %v6941, %v7031
      %v7034 = vunpack.c.l.s4 1966171168
      %v7035 = vunpack.c.0.s8 %v7034
      %v7036 = vlaneseq
      %v7037 = vshrl.u32 %v7036, 7
      %v7038 = vsub.s32 %v7035, %v7037
      %v7039 = vrot.slane %v7025, %v7038
      %v7040 = vcombine.high %v7032, %v7032
      %v7041 = vcombine.high %v7039, %v7039
      %v7043 = vunpack.c.l.s4 1966171168
      %v7044 = vunpack.c.0.s8 %v7043
      %v7045 = vlaneseq
      %v7046 = vshrl.u32 %v7045, 7
      %v7047 = vsub.s32 %v7044, %v7046
      %v7048 = vrot.slane %v7032, %v7047
      %v7050 = vunpack.c.l.s4 1966171168
      %v7051 = vunpack.c.0.s8 %v7050
      %v7052 = vlaneseq
      %v7053 = vshrl.u32 %v7052, 7
      %v7054 = vsub.s32 %v7051, %v7053
      %v7055 = vrot.slane %v7039, %v7054
      %v7057 = vunpack.c.l.s4 1966171168
      %v7058 = vunpack.c.0.s8 %v7057
      %v7059 = vlaneseq
      %v7060 = vshrl.u32 %v7059, 7
      %v7061 = vsub.s32 %v7058, %v7060
      %v7062 = vrot.slane %v7040, %v7061
      %v7064 = vunpack.c.l.s4 1966171168
      %v7065 = vunpack.c.0.s8 %v7064
      %v7066 = vlaneseq
      %v7067 = vshrl.u32 %v7066, 7
      %v7068 = vsub.s32 %v7065, %v7067
      %v7069 = vrot.slane %v7041, %v7068
      %v7070 = vcombine.high %v7048, %v7048
      %v7071 = vcombine.high %v7055, %v7055
      %v7072 = vcombine.high %v7062, %v7062
      %v7073 = vcombine.high %v7069, %v7069
      %v7074 = vcombine.high %v6946, %v6946
      %v7076 = vunpack.c.l.s4 1966171168
      %v7077 = vunpack.c.0.s8 %v7076
      %v7078 = vlaneseq
      %v7079 = vshrl.u32 %v7078, 7
      %v7080 = vsub.s32 %v7077, %v7079
      %v7081 = vrot.slane %v6946, %v7080
      %v7083 = vunpack.c.l.s4 1966171168
      %v7084 = vunpack.c.0.s8 %v7083
      %v7085 = vlaneseq
      %v7086 = vshrl.u32 %v7085, 7
      %v7087 = vsub.s32 %v7084, %v7086
      %v7088 = vrot.slane %v7074, %v7087
      %v7089 = vcombine.high %v7081, %v7081
      %v7090 = vcombine.high %v7088, %v7088
      %v7092 = vunpack.c.l.s4 1966171168
      %v7093 = vunpack.c.0.s8 %v7092
      %v7094 = vlaneseq
      %v7095 = vshrl.u32 %v7094, 7
      %v7096 = vsub.s32 %v7093, %v7095
      %v7097 = vrot.slane %v7081, %v7096
      %v7099 = vunpack.c.l.s4 1966171168
      %v7100 = vunpack.c.0.s8 %v7099
      %v7101 = vlaneseq
      %v7102 = vshrl.u32 %v7101, 7
      %v7103 = vsub.s32 %v7100, %v7102
      %v7104 = vrot.slane %v7088, %v7103
      %v7106 = vunpack.c.l.s4 1966171168
      %v7107 = vunpack.c.0.s8 %v7106
      %v7108 = vlaneseq
      %v7109 = vshrl.u32 %v7108, 7
      %v7110 = vsub.s32 %v7107, %v7109
      %v7111 = vrot.slane %v7089, %v7110
      %v7113 = vunpack.c.l.s4 1966171168
      %v7114 = vunpack.c.0.s8 %v7113
      %v7115 = vlaneseq
      %v7116 = vshrl.u32 %v7115, 7
      %v7117 = vsub.s32 %v7114, %v7116
      %v7118 = vrot.slane %v7090, %v7117
      %v7119 = vcombine.high %v7097, %v7097
      %v7120 = vcombine.high %v7104, %v7104
      %v7121 = vcombine.high %v7111, %v7111
      %v7122 = vcombine.high %v7118, %v7118
      %v7123 = vcombine.high %v6949, %v6949
      %v7125 = vunpack.c.l.s4 1966171168
      %v7126 = vunpack.c.0.s8 %v7125
      %v7127 = vlaneseq
      %v7128 = vshrl.u32 %v7127, 7
      %v7129 = vsub.s32 %v7126, %v7128
      %v7130 = vrot.slane %v6949, %v7129
      %v7132 = vunpack.c.l.s4 1966171168
      %v7133 = vunpack.c.0.s8 %v7132
      %v7134 = vlaneseq
      %v7135 = vshrl.u32 %v7134, 7
      %v7136 = vsub.s32 %v7133, %v7135
      %v7137 = vrot.slane %v7123, %v7136
      %v7138 = vcombine.high %v7130, %v7130
      %v7139 = vcombine.high %v7137, %v7137
      %v7141 = vunpack.c.l.s4 1966171168
      %v7142 = vunpack.c.0.s8 %v7141
      %v7143 = vlaneseq
      %v7144 = vshrl.u32 %v7143, 7
      %v7145 = vsub.s32 %v7142, %v7144
      %v7146 = vrot.slane %v7130, %v7145
      %v7148 = vunpack.c.l.s4 1966171168
      %v7149 = vunpack.c.0.s8 %v7148
      %v7150 = vlaneseq
      %v7151 = vshrl.u32 %v7150, 7
      %v7152 = vsub.s32 %v7149, %v7151
      %v7153 = vrot.slane %v7137, %v7152
      %v7155 = vunpack.c.l.s4 1966171168
      %v7156 = vunpack.c.0.s8 %v7155
      %v7157 = vlaneseq
      %v7158 = vshrl.u32 %v7157, 7
      %v7159 = vsub.s32 %v7156, %v7158
      %v7160 = vrot.slane %v7138, %v7159
      %v7162 = vunpack.c.l.s4 1966171168
      %v7163 = vunpack.c.0.s8 %v7162
      %v7164 = vlaneseq
      %v7165 = vshrl.u32 %v7164, 7
      %v7166 = vsub.s32 %v7163, %v7165
      %v7167 = vrot.slane %v7139, %v7166
      %v7168 = vcombine.high %v7146, %v7146
      %v7169 = vcombine.high %v7153, %v7153
      %v7170 = vcombine.high %v7160, %v7160
      %v7171 = vcombine.high %v7167, %v7167
      %v7172 = vcombine.high %v6954, %v6954
      %v7174 = vunpack.c.l.s4 1966171168
      %v7175 = vunpack.c.0.s8 %v7174
      %v7176 = vlaneseq
      %v7177 = vshrl.u32 %v7176, 7
      %v7178 = vsub.s32 %v7175, %v7177
      %v7179 = vrot.slane %v6954, %v7178
      %v7181 = vunpack.c.l.s4 1966171168
      %v7182 = vunpack.c.0.s8 %v7181
      %v7183 = vlaneseq
      %v7184 = vshrl.u32 %v7183, 7
      %v7185 = vsub.s32 %v7182, %v7184
      %v7186 = vrot.slane %v7172, %v7185
      %v7187 = vcombine.high %v7179, %v7179
      %v7188 = vcombine.high %v7186, %v7186
      %v7190 = vunpack.c.l.s4 1966171168
      %v7191 = vunpack.c.0.s8 %v7190
      %v7192 = vlaneseq
      %v7193 = vshrl.u32 %v7192, 7
      %v7194 = vsub.s32 %v7191, %v7193
      %v7195 = vrot.slane %v7179, %v7194
      %v7197 = vunpack.c.l.s4 1966171168
      %v7198 = vunpack.c.0.s8 %v7197
      %v7199 = vlaneseq
      %v7200 = vshrl.u32 %v7199, 7
      %v7201 = vsub.s32 %v7198, %v7200
      %v7202 = vrot.slane %v7186, %v7201
      %v7204 = vunpack.c.l.s4 1966171168
      %v7205 = vunpack.c.0.s8 %v7204
      %v7206 = vlaneseq
      %v7207 = vshrl.u32 %v7206, 7
      %v7208 = vsub.s32 %v7205, %v7207
      %v7209 = vrot.slane %v7187, %v7208
      %v7211 = vunpack.c.l.s4 1966171168
      %v7212 = vunpack.c.0.s8 %v7211
      %v7213 = vlaneseq
      %v7214 = vshrl.u32 %v7213, 7
      %v7215 = vsub.s32 %v7212, %v7214
      %v7216 = vrot.slane %v7188, %v7215
      %v7217 = vcombine.high %v7195, %v7195
      %v7218 = vcombine.high %v7202, %v7202
      %v7219 = vcombine.high %v7209, %v7209
      %v7220 = vcombine.high %v7216, %v7216
      %v7221 = vcombine.high %v6957, %v6957
      %v7223 = vunpack.c.l.s4 1966171168
      %v7224 = vunpack.c.0.s8 %v7223
      %v7225 = vlaneseq
      %v7226 = vshrl.u32 %v7225, 7
      %v7227 = vsub.s32 %v7224, %v7226
      %v7228 = vrot.slane %v6957, %v7227
      %v7230 = vunpack.c.l.s4 1966171168
      %v7231 = vunpack.c.0.s8 %v7230
      %v7232 = vlaneseq
      %v7233 = vshrl.u32 %v7232, 7
      %v7234 = vsub.s32 %v7231, %v7233
      %v7235 = vrot.slane %v7221, %v7234
      %v7236 = vcombine.high %v7228, %v7228
      %v7237 = vcombine.high %v7235, %v7235
      %v7239 = vunpack.c.l.s4 1966171168
      %v7240 = vunpack.c.0.s8 %v7239
      %v7241 = vlaneseq
      %v7242 = vshrl.u32 %v7241, 7
      %v7243 = vsub.s32 %v7240, %v7242
      %v7244 = vrot.slane %v7228, %v7243
      %v7246 = vunpack.c.l.s4 1966171168
      %v7247 = vunpack.c.0.s8 %v7246
      %v7248 = vlaneseq
      %v7249 = vshrl.u32 %v7248, 7
      %v7250 = vsub.s32 %v7247, %v7249
      %v7251 = vrot.slane %v7235, %v7250
      %v7253 = vunpack.c.l.s4 1966171168
      %v7254 = vunpack.c.0.s8 %v7253
      %v7255 = vlaneseq
      %v7256 = vshrl.u32 %v7255, 7
      %v7257 = vsub.s32 %v7254, %v7256
      %v7258 = vrot.slane %v7236, %v7257
      %v7260 = vunpack.c.l.s4 1966171168
      %v7261 = vunpack.c.0.s8 %v7260
      %v7262 = vlaneseq
      %v7263 = vshrl.u32 %v7262, 7
      %v7264 = vsub.s32 %v7261, %v7263
      %v7265 = vrot.slane %v7237, %v7264
      %v7266 = vcombine.high %v7244, %v7244
      %v7267 = vcombine.high %v7251, %v7251
      %v7268 = vcombine.high %v7258, %v7258
      %v7269 = vcombine.high %v7265, %v7265
      %v7270 = vcombine.high %v6962, %v6962
      %v7272 = vunpack.c.l.s4 1966171168
      %v7273 = vunpack.c.0.s8 %v7272
      %v7274 = vlaneseq
      %v7275 = vshrl.u32 %v7274, 7
      %v7276 = vsub.s32 %v7273, %v7275
      %v7277 = vrot.slane %v6962, %v7276
      %v7279 = vunpack.c.l.s4 1966171168
      %v7280 = vunpack.c.0.s8 %v7279
      %v7281 = vlaneseq
      %v7282 = vshrl.u32 %v7281, 7
      %v7283 = vsub.s32 %v7280, %v7282
      %v7284 = vrot.slane %v7270, %v7283
      %v7285 = vcombine.high %v7277, %v7277
      %v7286 = vcombine.high %v7284, %v7284
      %v7288 = vunpack.c.l.s4 1966171168
      %v7289 = vunpack.c.0.s8 %v7288
      %v7290 = vlaneseq
      %v7291 = vshrl.u32 %v7290, 7
      %v7292 = vsub.s32 %v7289, %v7291
      %v7293 = vrot.slane %v7277, %v7292
      %v7295 = vunpack.c.l.s4 1966171168
      %v7296 = vunpack.c.0.s8 %v7295
      %v7297 = vlaneseq
      %v7298 = vshrl.u32 %v7297, 7
      %v7299 = vsub.s32 %v7296, %v7298
      %v7300 = vrot.slane %v7284, %v7299
      %v7302 = vunpack.c.l.s4 1966171168
      %v7303 = vunpack.c.0.s8 %v7302
      %v7304 = vlaneseq
      %v7305 = vshrl.u32 %v7304, 7
      %v7306 = vsub.s32 %v7303, %v7305
      %v7307 = vrot.slane %v7285, %v7306
      %v7309 = vunpack.c.l.s4 1966171168
      %v7310 = vunpack.c.0.s8 %v7309
      %v7311 = vlaneseq
      %v7312 = vshrl.u32 %v7311, 7
      %v7313 = vsub.s32 %v7310, %v7312
      %v7314 = vrot.slane %v7286, %v7313
      %v7315 = vcombine.high %v7293, %v7293
      %v7316 = vcombine.high %v7300, %v7300
      %v7317 = vcombine.high %v7307, %v7307
      %v7318 = vcombine.high %v7314, %v7314
      %v7319 = vcombine.high %v6965, %v6965
      %v7321 = vunpack.c.l.s4 1966171168
      %v7322 = vunpack.c.0.s8 %v7321
      %v7323 = vlaneseq
      %v7324 = vshrl.u32 %v7323, 7
      %v7325 = vsub.s32 %v7322, %v7324
      %v7326 = vrot.slane %v6965, %v7325
      %v7328 = vunpack.c.l.s4 1966171168
      %v7329 = vunpack.c.0.s8 %v7328
      %v7330 = vlaneseq
      %v7331 = vshrl.u32 %v7330, 7
      %v7332 = vsub.s32 %v7329, %v7331
      %v7333 = vrot.slane %v7319, %v7332
      %v7334 = vcombine.high %v7326, %v7326
      %v7335 = vcombine.high %v7333, %v7333
      %v7337 = vunpack.c.l.s4 1966171168
      %v7338 = vunpack.c.0.s8 %v7337
      %v7339 = vlaneseq
      %v7340 = vshrl.u32 %v7339, 7
      %v7341 = vsub.s32 %v7338, %v7340
      %v7342 = vrot.slane %v7326, %v7341
      %v7344 = vunpack.c.l.s4 1966171168
      %v7345 = vunpack.c.0.s8 %v7344
      %v7346 = vlaneseq
      %v7347 = vshrl.u32 %v7346, 7
      %v7348 = vsub.s32 %v7345, %v7347
      %v7349 = vrot.slane %v7333, %v7348
      %v7351 = vunpack.c.l.s4 1966171168
      %v7352 = vunpack.c.0.s8 %v7351
      %v7353 = vlaneseq
      %v7354 = vshrl.u32 %v7353, 7
      %v7355 = vsub.s32 %v7352, %v7354
      %v7356 = vrot.slane %v7334, %v7355
      %v7358 = vunpack.c.l.s4 1966171168
      %v7359 = vunpack.c.0.s8 %v7358
      %v7360 = vlaneseq
      %v7361 = vshrl.u32 %v7360, 7
      %v7362 = vsub.s32 %v7359, %v7361
      %v7363 = vrot.slane %v7335, %v7362
      %v7364 = vcombine.high %v7342, %v7342
      %v7365 = vcombine.high %v7349, %v7349
      %v7366 = vcombine.high %v7356, %v7356
      %v7367 = vcombine.high %v7363, %v7363
      %v7432 = vlaneseq
      %v7433 = vshrl.u32 %v7432, 7
      %v7434 = vsub.s32 0, %v7433
      %v7435 = vrot.slane %v6999, %v7434
      %v7436 = vlaneseq
      %v7437 = vshrl.u32 %v7436, 7
      %v7438 = vsub.s32 0, %v7437
      %v7439 = vrot.slane %v7013, %v7438
      %v7440 = vlaneseq
      %v7441 = vshrl.u32 %v7440, 7
      %v7442 = vsub.s32 0, %v7441
      %v7443 = vrot.slane %v7021, %v7442
      %v7444 = vlaneseq
      %v7445 = vshrl.u32 %v7444, 7
      %v7446 = vsub.s32 0, %v7445
      %v7447 = vrot.slane %v7023, %v7446
      %v7448 = vlaneseq
      %v7449 = vshrl.u32 %v7448, 7
      %v7450 = vsub.s32 0, %v7449
      %v7451 = vrot.slane %v7006, %v7450
      %v7452 = vlaneseq
      %v7453 = vshrl.u32 %v7452, 7
      %v7454 = vsub.s32 0, %v7453
      %v7455 = vrot.slane %v7020, %v7454
      %v7456 = vlaneseq
      %v7457 = vshrl.u32 %v7456, 7
      %v7458 = vsub.s32 0, %v7457
      %v7459 = vrot.slane %v7022, %v7458
      %v7460 = vlaneseq
      %v7461 = vshrl.u32 %v7460, 7
      %v7462 = vsub.s32 0, %v7461
      %v7463 = vrot.slane %v7024, %v7462
      %v7464 = vlaneseq
      %v7465 = vshrl.u32 %v7464, 7
      %v7466 = vsub.s32 0, %v7465
      %v7467 = vrot.slane %v7048, %v7466
      %v7468 = vlaneseq
      %v7469 = vshrl.u32 %v7468, 7
      %v7470 = vsub.s32 0, %v7469
      %v7471 = vrot.slane %v7062, %v7470
      %v7472 = vlaneseq
      %v7473 = vshrl.u32 %v7472, 7
      %v7474 = vsub.s32 0, %v7473
      %v7475 = vrot.slane %v7070, %v7474
      %v7476 = vlaneseq
      %v7477 = vshrl.u32 %v7476, 7
      %v7478 = vsub.s32 0, %v7477
      %v7479 = vrot.slane %v7072, %v7478
      %v7480 = vlaneseq
      %v7481 = vshrl.u32 %v7480, 7
      %v7482 = vsub.s32 0, %v7481
      %v7483 = vrot.slane %v7055, %v7482
      %v7484 = vlaneseq
      %v7485 = vshrl.u32 %v7484, 7
      %v7486 = vsub.s32 0, %v7485
      %v7487 = vrot.slane %v7069, %v7486
      %v7488 = vlaneseq
      %v7489 = vshrl.u32 %v7488, 7
      %v7490 = vsub.s32 0, %v7489
      %v7491 = vrot.slane %v7071, %v7490
      %v7492 = vlaneseq
      %v7493 = vshrl.u32 %v7492, 7
      %v7494 = vsub.s32 0, %v7493
      %v7495 = vrot.slane %v7073, %v7494
      %v7496 = vlaneseq
      %v7497 = vshrl.u32 %v7496, 7
      %v7498 = vsub.s32 0, %v7497
      %v7499 = vrot.slane %v7097, %v7498
      %v7500 = vlaneseq
      %v7501 = vshrl.u32 %v7500, 7
      %v7502 = vsub.s32 0, %v7501
      %v7503 = vrot.slane %v7111, %v7502
      %v7504 = vlaneseq
      %v7505 = vshrl.u32 %v7504, 7
      %v7506 = vsub.s32 0, %v7505
      %v7507 = vrot.slane %v7119, %v7506
      %v7508 = vlaneseq
      %v7509 = vshrl.u32 %v7508, 7
      %v7510 = vsub.s32 0, %v7509
      %v7511 = vrot.slane %v7121, %v7510
      %v7512 = vlaneseq
      %v7513 = vshrl.u32 %v7512, 7
      %v7514 = vsub.s32 0, %v7513
      %v7515 = vrot.slane %v7104, %v7514
      %v7516 = vlaneseq
      %v7517 = vshrl.u32 %v7516, 7
      %v7518 = vsub.s32 0, %v7517
      %v7519 = vrot.slane %v7118, %v7518
      %v7520 = vlaneseq
      %v7521 = vshrl.u32 %v7520, 7
      %v7522 = vsub.s32 0, %v7521
      %v7523 = vrot.slane %v7120, %v7522
      %v7524 = vlaneseq
      %v7525 = vshrl.u32 %v7524, 7
      %v7526 = vsub.s32 0, %v7525
      %v7527 = vrot.slane %v7122, %v7526
      %v7528 = vlaneseq
      %v7529 = vshrl.u32 %v7528, 7
      %v7530 = vsub.s32 0, %v7529
      %v7531 = vrot.slane %v7146, %v7530
      %v7532 = vlaneseq
      %v7533 = vshrl.u32 %v7532, 7
      %v7534 = vsub.s32 0, %v7533
      %v7535 = vrot.slane %v7160, %v7534
      %v7536 = vlaneseq
      %v7537 = vshrl.u32 %v7536, 7
      %v7538 = vsub.s32 0, %v7537
      %v7539 = vrot.slane %v7168, %v7538
      %v7540 = vlaneseq
      %v7541 = vshrl.u32 %v7540, 7
      %v7542 = vsub.s32 0, %v7541
      %v7543 = vrot.slane %v7170, %v7542
      %v7544 = vlaneseq
      %v7545 = vshrl.u32 %v7544, 7
      %v7546 = vsub.s32 0, %v7545
      %v7547 = vrot.slane %v7153, %v7546
      %v7548 = vlaneseq
      %v7549 = vshrl.u32 %v7548, 7
      %v7550 = vsub.s32 0, %v7549
      %v7551 = vrot.slane %v7167, %v7550
      %v7552 = vlaneseq
      %v7553 = vshrl.u32 %v7552, 7
      %v7554 = vsub.s32 0, %v7553
      %v7555 = vrot.slane %v7169, %v7554
      %v7556 = vlaneseq
      %v7557 = vshrl.u32 %v7556, 7
      %v7558 = vsub.s32 0, %v7557
      %v7559 = vrot.slane %v7171, %v7558
      %v7560 = vlaneseq
      %v7561 = vshrl.u32 %v7560, 7
      %v7562 = vsub.s32 0, %v7561
      %v7563 = vrot.slane %v7195, %v7562
      %v7564 = vlaneseq
      %v7565 = vshrl.u32 %v7564, 7
      %v7566 = vsub.s32 0, %v7565
      %v7567 = vrot.slane %v7209, %v7566
      %v7568 = vlaneseq
      %v7569 = vshrl.u32 %v7568, 7
      %v7570 = vsub.s32 0, %v7569
      %v7571 = vrot.slane %v7217, %v7570
      %v7572 = vlaneseq
      %v7573 = vshrl.u32 %v7572, 7
      %v7574 = vsub.s32 0, %v7573
      %v7575 = vrot.slane %v7219, %v7574
      %v7576 = vlaneseq
      %v7577 = vshrl.u32 %v7576, 7
      %v7578 = vsub.s32 0, %v7577
      %v7579 = vrot.slane %v7202, %v7578
      %v7580 = vlaneseq
      %v7581 = vshrl.u32 %v7580, 7
      %v7582 = vsub.s32 0, %v7581
      %v7583 = vrot.slane %v7216, %v7582
      %v7584 = vlaneseq
      %v7585 = vshrl.u32 %v7584, 7
      %v7586 = vsub.s32 0, %v7585
      %v7587 = vrot.slane %v7218, %v7586
      %v7588 = vlaneseq
      %v7589 = vshrl.u32 %v7588, 7
      %v7590 = vsub.s32 0, %v7589
      %v7591 = vrot.slane %v7220, %v7590
      %v7592 = vlaneseq
      %v7593 = vshrl.u32 %v7592, 7
      %v7594 = vsub.s32 0, %v7593
      %v7595 = vrot.slane %v7244, %v7594
      %v7596 = vlaneseq
      %v7597 = vshrl.u32 %v7596, 7
      %v7598 = vsub.s32 0, %v7597
      %v7599 = vrot.slane %v7258, %v7598
      %v7600 = vlaneseq
      %v7601 = vshrl.u32 %v7600, 7
      %v7602 = vsub.s32 0, %v7601
      %v7603 = vrot.slane %v7266, %v7602
      %v7604 = vlaneseq
      %v7605 = vshrl.u32 %v7604, 7
      %v7606 = vsub.s32 0, %v7605
      %v7607 = vrot.slane %v7268, %v7606
      %v7608 = vlaneseq
      %v7609 = vshrl.u32 %v7608, 7
      %v7610 = vsub.s32 0, %v7609
      %v7611 = vrot.slane %v7251, %v7610
      %v7612 = vlaneseq
      %v7613 = vshrl.u32 %v7612, 7
      %v7614 = vsub.s32 0, %v7613
      %v7615 = vrot.slane %v7265, %v7614
      %v7616 = vlaneseq
      %v7617 = vshrl.u32 %v7616, 7
      %v7618 = vsub.s32 0, %v7617
      %v7619 = vrot.slane %v7267, %v7618
      %v7620 = vlaneseq
      %v7621 = vshrl.u32 %v7620, 7
      %v7622 = vsub.s32 0, %v7621
      %v7623 = vrot.slane %v7269, %v7622
      %v7624 = vlaneseq
      %v7625 = vshrl.u32 %v7624, 7
      %v7626 = vsub.s32 0, %v7625
      %v7627 = vrot.slane %v7293, %v7626
      %v7628 = vlaneseq
      %v7629 = vshrl.u32 %v7628, 7
      %v7630 = vsub.s32 0, %v7629
      %v7631 = vrot.slane %v7307, %v7630
      %v7632 = vlaneseq
      %v7633 = vshrl.u32 %v7632, 7
      %v7634 = vsub.s32 0, %v7633
      %v7635 = vrot.slane %v7315, %v7634
      %v7636 = vlaneseq
      %v7637 = vshrl.u32 %v7636, 7
      %v7638 = vsub.s32 0, %v7637
      %v7639 = vrot.slane %v7317, %v7638
      %v7640 = vlaneseq
      %v7641 = vshrl.u32 %v7640, 7
      %v7642 = vsub.s32 0, %v7641
      %v7643 = vrot.slane %v7300, %v7642
      %v7644 = vlaneseq
      %v7645 = vshrl.u32 %v7644, 7
      %v7646 = vsub.s32 0, %v7645
      %v7647 = vrot.slane %v7314, %v7646
      %v7648 = vlaneseq
      %v7649 = vshrl.u32 %v7648, 7
      %v7650 = vsub.s32 0, %v7649
      %v7651 = vrot.slane %v7316, %v7650
      %v7652 = vlaneseq
      %v7653 = vshrl.u32 %v7652, 7
      %v7654 = vsub.s32 0, %v7653
      %v7655 = vrot.slane %v7318, %v7654
      %v7656 = vlaneseq
      %v7657 = vshrl.u32 %v7656, 7
      %v7658 = vsub.s32 0, %v7657
      %v7659 = vrot.slane %v7342, %v7658
      %v7660 = vlaneseq
      %v7661 = vshrl.u32 %v7660, 7
      %v7662 = vsub.s32 0, %v7661
      %v7663 = vrot.slane %v7356, %v7662
      %v7664 = vlaneseq
      %v7665 = vshrl.u32 %v7664, 7
      %v7666 = vsub.s32 0, %v7665
      %v7667 = vrot.slane %v7364, %v7666
      %v7668 = vlaneseq
      %v7669 = vshrl.u32 %v7668, 7
      %v7670 = vsub.s32 0, %v7669
      %v7671 = vrot.slane %v7366, %v7670
      %v7672 = vlaneseq
      %v7673 = vshrl.u32 %v7672, 7
      %v7674 = vsub.s32 0, %v7673
      %v7675 = vrot.slane %v7349, %v7674
      %v7676 = vlaneseq
      %v7677 = vshrl.u32 %v7676, 7
      %v7678 = vsub.s32 0, %v7677
      %v7679 = vrot.slane %v7363, %v7678
      %v7680 = vlaneseq
      %v7681 = vshrl.u32 %v7680, 7
      %v7682 = vsub.s32 0, %v7681
      %v7683 = vrot.slane %v7365, %v7682
      %v7684 = vlaneseq
      %v7685 = vshrl.u32 %v7684, 7
      %v7686 = vsub.s32 0, %v7685
      %v7687 = vrot.slane %v7367, %v7686
      %7688 = vrot.lane.b32.xlu0 %v7435, 96
      %v7689 = vpop.permute.xlu0 %7688
      %7690 = vrot.lane.b32.xlu0 %v7439, 96
      %v7691 = vpop.permute.xlu0 %7690
      %7692 = vrot.lane.b32.xlu0 %v7443, 96
      %v7693 = vpop.permute.xlu0 %7692
      %7694 = vrot.lane.b32.xlu0 %v7447, 96
      %v7695 = vpop.permute.xlu0 %7694
      %7696 = vrot.lane.b32.xlu0 %v7451, 96
      %v7697 = vpop.permute.xlu0 %7696
      %7698 = vrot.lane.b32.xlu0 %v7455, 96
      %v7699 = vpop.permute.xlu0 %7698
      %7700 = vrot.lane.b32.xlu0 %v7459, 96
      %v7701 = vpop.permute.xlu0 %7700
      %7702 = vrot.lane.b32.xlu0 %v7463, 96
      %v7703 = vpop.permute.xlu0 %7702
      %7704 = vrot.lane.b32.xlu0 %v7467, 96
      %v7705 = vpop.permute.xlu0 %7704
      %7706 = vrot.lane.b32.xlu0 %v7471, 96
      %v7707 = vpop.permute.xlu0 %7706
      %7708 = vrot.lane.b32.xlu0 %v7475, 96
      %v7709 = vpop.permute.xlu0 %7708
      %7710 = vrot.lane.b32.xlu0 %v7479, 96
      %v7711 = vpop.permute.xlu0 %7710
      %7712 = vrot.lane.b32.xlu0 %v7483, 96
      %v7713 = vpop.permute.xlu0 %7712
      %7714 = vrot.lane.b32.xlu0 %v7487, 96
      %v7715 = vpop.permute.xlu0 %7714
      %7716 = vrot.lane.b32.xlu0 %v7491, 96
      %v7717 = vpop.permute.xlu0 %7716
      %7718 = vrot.lane.b32.xlu0 %v7495, 96
      %v7719 = vpop.permute.xlu0 %7718
      %7720 = vrot.lane.b32.xlu0 %v7499, 96
      %v7721 = vpop.permute.xlu0 %7720
      %7722 = vrot.lane.b32.xlu0 %v7503, 96
      %v7723 = vpop.permute.xlu0 %7722
      %7724 = vrot.lane.b32.xlu0 %v7507, 96
      %v7725 = vpop.permute.xlu0 %7724
      %7726 = vrot.lane.b32.xlu0 %v7511, 96
      %v7727 = vpop.permute.xlu0 %7726
      %7728 = vrot.lane.b32.xlu0 %v7515, 96
      %v7729 = vpop.permute.xlu0 %7728
      %7730 = vrot.lane.b32.xlu0 %v7519, 96
      %v7731 = vpop.permute.xlu0 %7730
      %7732 = vrot.lane.b32.xlu0 %v7523, 96
      %v7733 = vpop.permute.xlu0 %7732
      %7734 = vrot.lane.b32.xlu0 %v7527, 96
      %v7735 = vpop.permute.xlu0 %7734
      %7736 = vrot.lane.b32.xlu0 %v7531, 96
      %v7737 = vpop.permute.xlu0 %7736
      %7738 = vrot.lane.b32.xlu0 %v7535, 96
      %v7739 = vpop.permute.xlu0 %7738
      %7740 = vrot.lane.b32.xlu0 %v7539, 96
      %v7741 = vpop.permute.xlu0 %7740
      %7742 = vrot.lane.b32.xlu0 %v7543, 96
      %v7743 = vpop.permute.xlu0 %7742
      %7744 = vrot.lane.b32.xlu0 %v7547, 96
      %v7745 = vpop.permute.xlu0 %7744
      %7746 = vrot.lane.b32.xlu0 %v7551, 96
      %v7747 = vpop.permute.xlu0 %7746
      %7748 = vrot.lane.b32.xlu0 %v7555, 96
      %v7749 = vpop.permute.xlu0 %7748
      %7750 = vrot.lane.b32.xlu0 %v7559, 96
      %v7751 = vpop.permute.xlu0 %7750
      %7752 = vrot.lane.b32.xlu0 %v7563, 96
      %v7753 = vpop.permute.xlu0 %7752
      %7754 = vrot.lane.b32.xlu0 %v7567, 96
      %v7755 = vpop.permute.xlu0 %7754
      %7756 = vrot.lane.b32.xlu0 %v7571, 96
      %v7757 = vpop.permute.xlu0 %7756
      %7758 = vrot.lane.b32.xlu0 %v7575, 96
      %v7759 = vpop.permute.xlu0 %7758
      %7760 = vrot.lane.b32.xlu0 %v7579, 96
      %v7761 = vpop.permute.xlu0 %7760
      %7762 = vrot.lane.b32.xlu0 %v7583, 96
      %v7763 = vpop.permute.xlu0 %7762
      %7764 = vrot.lane.b32.xlu0 %v7587, 96
      %v7765 = vpop.permute.xlu0 %7764
      %7766 = vrot.lane.b32.xlu0 %v7591, 96
      %v7767 = vpop.permute.xlu0 %7766
      %7768 = vrot.lane.b32.xlu0 %v7595, 96
      %v7769 = vpop.permute.xlu0 %7768
      %7770 = vrot.lane.b32.xlu0 %v7599, 96
      %v7771 = vpop.permute.xlu0 %7770
      %7772 = vrot.lane.b32.xlu0 %v7603, 96
      %v7773 = vpop.permute.xlu0 %7772
      %7774 = vrot.lane.b32.xlu0 %v7607, 96
      %v7775 = vpop.permute.xlu0 %7774
      %7776 = vrot.lane.b32.xlu0 %v7611, 96
      %v7777 = vpop.permute.xlu0 %7776
      %7778 = vrot.lane.b32.xlu0 %v7615, 96
      %v7779 = vpop.permute.xlu0 %7778
      %7780 = vrot.lane.b32.xlu0 %v7619, 96
      %v7781 = vpop.permute.xlu0 %7780
      %7782 = vrot.lane.b32.xlu0 %v7623, 96
      %v7783 = vpop.permute.xlu0 %7782
      %7784 = vrot.lane.b32.xlu0 %v7627, 96
      %v7785 = vpop.permute.xlu0 %7784
      %7786 = vrot.lane.b32.xlu0 %v7631, 96
      %v7787 = vpop.permute.xlu0 %7786
      %7788 = vrot.lane.b32.xlu0 %v7635, 96
      %v7789 = vpop.permute.xlu0 %7788
      %7790 = vrot.lane.b32.xlu0 %v7639, 96
      %v7791 = vpop.permute.xlu0 %7790
      %7792 = vrot.lane.b32.xlu0 %v7643, 96
      %v7793 = vpop.permute.xlu0 %7792
      %7794 = vrot.lane.b32.xlu0 %v7647, 96
      %v7795 = vpop.permute.xlu0 %7794
      %7796 = vrot.lane.b32.xlu0 %v7651, 96
      %v7797 = vpop.permute.xlu0 %7796
      %7798 = vrot.lane.b32.xlu0 %v7655, 96
      %v7799 = vpop.permute.xlu0 %7798
      %7800 = vrot.lane.b32.xlu0 %v7659, 96
      %v7801 = vpop.permute.xlu0 %7800
      %7802 = vrot.lane.b32.xlu0 %v7663, 96
      %v7803 = vpop.permute.xlu0 %7802
      %7804 = vrot.lane.b32.xlu0 %v7667, 96
      %v7805 = vpop.permute.xlu0 %7804
      %7806 = vrot.lane.b32.xlu0 %v7671, 96
      %v7807 = vpop.permute.xlu0 %7806
      %7808 = vrot.lane.b32.xlu0 %v7675, 96
      %v7809 = vpop.permute.xlu0 %7808
      %7810 = vrot.lane.b32.xlu0 %v7679, 96
      %v7811 = vpop.permute.xlu0 %7810
      %7812 = vrot.lane.b32.xlu0 %v7683, 96
      %v7813 = vpop.permute.xlu0 %7812
      %7814 = vrot.lane.b32.xlu0 %v7687, 96
      %v7815 = vpop.permute.xlu0 %7814
      %v7880 = vsel %vm623, %v6999, %v7689
      %v7881 = vsel %vm623, %v7013, %v7691
      %v7882 = vsel %vm623, %v7021, %v7693
      %v7883 = vsel %vm623, %v7023, %v7695
      %v7884 = vsel %vm623, %v7006, %v7697
      %v7885 = vsel %vm623, %v7020, %v7699
      %v7886 = vsel %vm623, %v7022, %v7701
      %v7887 = vsel %vm623, %v7024, %v7703
      %v7888 = vsel %vm623, %v7048, %v7705
      %v7889 = vsel %vm623, %v7062, %v7707
      %v7890 = vsel %vm623, %v7070, %v7709
      %v7891 = vsel %vm623, %v7072, %v7711
      %v7892 = vsel %vm623, %v7055, %v7713
      %v7893 = vsel %vm623, %v7069, %v7715
      %v7894 = vsel %vm623, %v7071, %v7717
      %v7895 = vsel %vm623, %v7073, %v7719
      %v7896 = vsel %vm623, %v7097, %v7721
      %v7897 = vsel %vm623, %v7111, %v7723
      %v7898 = vsel %vm623, %v7119, %v7725
      %v7899 = vsel %vm623, %v7121, %v7727
      %v7900 = vsel %vm623, %v7104, %v7729
      %v7901 = vsel %vm623, %v7118, %v7731
      %v7902 = vsel %vm623, %v7120, %v7733
      %v7903 = vsel %vm623, %v7122, %v7735
      %v7904 = vsel %vm623, %v7146, %v7737
      %v7905 = vsel %vm623, %v7160, %v7739
      %v7906 = vsel %vm623, %v7168, %v7741
      %v7907 = vsel %vm623, %v7170, %v7743
      %v7908 = vsel %vm623, %v7153, %v7745
      %v7909 = vsel %vm623, %v7167, %v7747
      %v7910 = vsel %vm623, %v7169, %v7749
      %v7911 = vsel %vm623, %v7171, %v7751
      %v7912 = vsel %vm623, %v7195, %v7753
      %v7913 = vsel %vm623, %v7209, %v7755
      %v7914 = vsel %vm623, %v7217, %v7757
      %v7915 = vsel %vm623, %v7219, %v7759
      %v7916 = vsel %vm623, %v7202, %v7761
      %v7917 = vsel %vm623, %v7216, %v7763
      %v7918 = vsel %vm623, %v7218, %v7765
      %v7919 = vsel %vm623, %v7220, %v7767
      %v7920 = vsel %vm623, %v7244, %v7769
      %v7921 = vsel %vm623, %v7258, %v7771
      %v7922 = vsel %vm623, %v7266, %v7773
      %v7923 = vsel %vm623, %v7268, %v7775
      %v7924 = vsel %vm623, %v7251, %v7777
      %v7925 = vsel %vm623, %v7265, %v7779
      %v7926 = vsel %vm623, %v7267, %v7781
      %v7927 = vsel %vm623, %v7269, %v7783
      %v7928 = vsel %vm623, %v7293, %v7785
      %v7929 = vsel %vm623, %v7307, %v7787
      %v7930 = vsel %vm623, %v7315, %v7789
      %v7931 = vsel %vm623, %v7317, %v7791
      %v7932 = vsel %vm623, %v7300, %v7793
      %v7933 = vsel %vm623, %v7314, %v7795
      %v7934 = vsel %vm623, %v7316, %v7797
      %v7935 = vsel %vm623, %v7318, %v7799
      %v7936 = vsel %vm623, %v7342, %v7801
      %v7937 = vsel %vm623, %v7356, %v7803
      %v7938 = vsel %vm623, %v7364, %v7805
      %v7939 = vsel %vm623, %v7366, %v7807
      %v7940 = vsel %vm623, %v7349, %v7809
      %v7941 = vsel %vm623, %v7363, %v7811
      %v7942 = vsel %vm623, %v7365, %v7813
      %v7943 = vsel %vm623, %v7367, %v7815
      %8008 = vrot.lane.b32.xlu0 %v7880, 64
      %v8009 = vpop.permute.xlu0 %8008
      %8010 = vrot.lane.b32.xlu0 %v7881, 64
      %v8011 = vpop.permute.xlu0 %8010
      %8012 = vrot.lane.b32.xlu0 %v7882, 64
      %v8013 = vpop.permute.xlu0 %8012
      %8014 = vrot.lane.b32.xlu0 %v7883, 64
      %v8015 = vpop.permute.xlu0 %8014
      %8016 = vrot.lane.b32.xlu0 %v7884, 64
      %v8017 = vpop.permute.xlu0 %8016
      %8018 = vrot.lane.b32.xlu0 %v7885, 64
      %v8019 = vpop.permute.xlu0 %8018
      %8020 = vrot.lane.b32.xlu0 %v7886, 64
      %v8021 = vpop.permute.xlu0 %8020
      %8022 = vrot.lane.b32.xlu0 %v7887, 64
      %v8023 = vpop.permute.xlu0 %8022
      %8024 = vrot.lane.b32.xlu0 %v7888, 64
      %v8025 = vpop.permute.xlu0 %8024
      %8026 = vrot.lane.b32.xlu0 %v7889, 64
      %v8027 = vpop.permute.xlu0 %8026
      %8028 = vrot.lane.b32.xlu0 %v7890, 64
      %v8029 = vpop.permute.xlu0 %8028
      %8030 = vrot.lane.b32.xlu0 %v7891, 64
      %v8031 = vpop.permute.xlu0 %8030
      %8032 = vrot.lane.b32.xlu0 %v7892, 64
      %v8033 = vpop.permute.xlu0 %8032
      %8034 = vrot.lane.b32.xlu0 %v7893, 64
      %v8035 = vpop.permute.xlu0 %8034
      %8036 = vrot.lane.b32.xlu0 %v7894, 64
      %v8037 = vpop.permute.xlu0 %8036
      %8038 = vrot.lane.b32.xlu0 %v7895, 64
      %v8039 = vpop.permute.xlu0 %8038
      %8040 = vrot.lane.b32.xlu0 %v7896, 64
      %v8041 = vpop.permute.xlu0 %8040
      %8042 = vrot.lane.b32.xlu0 %v7897, 64
      %v8043 = vpop.permute.xlu0 %8042
      %8044 = vrot.lane.b32.xlu0 %v7898, 64
      %v8045 = vpop.permute.xlu0 %8044
      %8046 = vrot.lane.b32.xlu0 %v7899, 64
      %v8047 = vpop.permute.xlu0 %8046
      %8048 = vrot.lane.b32.xlu0 %v7900, 64
      %v8049 = vpop.permute.xlu0 %8048
      %8050 = vrot.lane.b32.xlu0 %v7901, 64
      %v8051 = vpop.permute.xlu0 %8050
      %8052 = vrot.lane.b32.xlu0 %v7902, 64
      %v8053 = vpop.permute.xlu0 %8052
      %8054 = vrot.lane.b32.xlu0 %v7903, 64
      %v8055 = vpop.permute.xlu0 %8054
      %8056 = vrot.lane.b32.xlu0 %v7904, 64
      %v8057 = vpop.permute.xlu0 %8056
      %8058 = vrot.lane.b32.xlu0 %v7905, 64
      %v8059 = vpop.permute.xlu0 %8058
      %8060 = vrot.lane.b32.xlu0 %v7906, 64
      %v8061 = vpop.permute.xlu0 %8060
      %8062 = vrot.lane.b32.xlu0 %v7907, 64
      %v8063 = vpop.permute.xlu0 %8062
      %8064 = vrot.lane.b32.xlu0 %v7908, 64
      %v8065 = vpop.permute.xlu0 %8064
      %8066 = vrot.lane.b32.xlu0 %v7909, 64
      %v8067 = vpop.permute.xlu0 %8066
      %8068 = vrot.lane.b32.xlu0 %v7910, 64
      %v8069 = vpop.permute.xlu0 %8068
      %8070 = vrot.lane.b32.xlu0 %v7911, 64
      %v8071 = vpop.permute.xlu0 %8070
      %8072 = vrot.lane.b32.xlu0 %v7912, 64
      %v8073 = vpop.permute.xlu0 %8072
      %8074 = vrot.lane.b32.xlu0 %v7913, 64
      %v8075 = vpop.permute.xlu0 %8074
      %8076 = vrot.lane.b32.xlu0 %v7914, 64
      %v8077 = vpop.permute.xlu0 %8076
      %8078 = vrot.lane.b32.xlu0 %v7915, 64
      %v8079 = vpop.permute.xlu0 %8078
      %8080 = vrot.lane.b32.xlu0 %v7916, 64
      %v8081 = vpop.permute.xlu0 %8080
      %8082 = vrot.lane.b32.xlu0 %v7917, 64
      %v8083 = vpop.permute.xlu0 %8082
      %8084 = vrot.lane.b32.xlu0 %v7918, 64
      %v8085 = vpop.permute.xlu0 %8084
      %8086 = vrot.lane.b32.xlu0 %v7919, 64
      %v8087 = vpop.permute.xlu0 %8086
      %8088 = vrot.lane.b32.xlu0 %v7920, 64
      %v8089 = vpop.permute.xlu0 %8088
      %8090 = vrot.lane.b32.xlu0 %v7921, 64
      %v8091 = vpop.permute.xlu0 %8090
      %8092 = vrot.lane.b32.xlu0 %v7922, 64
      %v8093 = vpop.permute.xlu0 %8092
      %8094 = vrot.lane.b32.xlu0 %v7923, 64
      %v8095 = vpop.permute.xlu0 %8094
      %8096 = vrot.lane.b32.xlu0 %v7924, 64
      %v8097 = vpop.permute.xlu0 %8096
      %8098 = vrot.lane.b32.xlu0 %v7925, 64
      %v8099 = vpop.permute.xlu0 %8098
      %8100 = vrot.lane.b32.xlu0 %v7926, 64
      %v8101 = vpop.permute.xlu0 %8100
      %8102 = vrot.lane.b32.xlu0 %v7927, 64
      %v8103 = vpop.permute.xlu0 %8102
      %8104 = vrot.lane.b32.xlu0 %v7928, 64
      %v8105 = vpop.permute.xlu0 %8104
      %8106 = vrot.lane.b32.xlu0 %v7929, 64
      %v8107 = vpop.permute.xlu0 %8106
      %8108 = vrot.lane.b32.xlu0 %v7930, 64
      %v8109 = vpop.permute.xlu0 %8108
      %8110 = vrot.lane.b32.xlu0 %v7931, 64
      %v8111 = vpop.permute.xlu0 %8110
      %8112 = vrot.lane.b32.xlu0 %v7932, 64
      %v8113 = vpop.permute.xlu0 %8112
      %8114 = vrot.lane.b32.xlu0 %v7933, 64
      %v8115 = vpop.permute.xlu0 %8114
      %8116 = vrot.lane.b32.xlu0 %v7934, 64
      %v8117 = vpop.permute.xlu0 %8116
      %8118 = vrot.lane.b32.xlu0 %v7935, 64
      %v8119 = vpop.permute.xlu0 %8118
      %8120 = vrot.lane.b32.xlu0 %v7936, 64
      %v8121 = vpop.permute.xlu0 %8120
      %8122 = vrot.lane.b32.xlu0 %v7937, 64
      %v8123 = vpop.permute.xlu0 %8122
      %8124 = vrot.lane.b32.xlu0 %v7938, 64
      %v8125 = vpop.permute.xlu0 %8124
      %8126 = vrot.lane.b32.xlu0 %v7939, 64
      %v8127 = vpop.permute.xlu0 %8126
      %8128 = vrot.lane.b32.xlu0 %v7940, 64
      %v8129 = vpop.permute.xlu0 %8128
      %8130 = vrot.lane.b32.xlu0 %v7941, 64
      %v8131 = vpop.permute.xlu0 %8130
      %8132 = vrot.lane.b32.xlu0 %v7942, 64
      %v8133 = vpop.permute.xlu0 %8132
      %8134 = vrot.lane.b32.xlu0 %v7943, 64
      %v8135 = vpop.permute.xlu0 %8134
      %v8136 = vld [vmem:[%s13] sm:$0xf]
      %v8137 = vld [vmem:[%s13 + $0x4] sm:$0xf]
      %v8138 = vld [vmem:[%s13 + $0x8] sm:$0xf]
      %v8139 = vld [vmem:[%s13 + $0xc] sm:$0xf]
      %v8140 = vld [vmem:[%s13 + $0x10] sm:$0xf]
      %v8141 = vld [vmem:[%s13 + $0x14] sm:$0xf]
      %v8142 = vld [vmem:[%s13 + $0x18] sm:$0xf]
      %v8143 = vld [vmem:[%s13 + $0x1c] sm:$0xf]
      %v8144 = vld [vmem:[%s13 + $0x20] sm:$0xf]
      %v8145 = vld [vmem:[%s13 + $0x24] sm:$0xf]
      %v8146 = vld [vmem:[%s13 + $0x28] sm:$0xf]
      %v8147 = vld [vmem:[%s13 + $0x2c] sm:$0xf]
      %v8148 = vld [vmem:[%s13 + $0x30] sm:$0xf]
      %v8149 = vld [vmem:[%s13 + $0x34] sm:$0xf]
      %v8150 = vld [vmem:[%s13 + $0x38] sm:$0xf]
      %v8151 = vld [vmem:[%s13 + $0x3c] sm:$0xf]
      %v8152 = vld [vmem:[%s13 + $0x40] sm:$0xf]
      %v8153 = vld [vmem:[%s13 + $0x44] sm:$0xf]
      %v8154 = vld [vmem:[%s13 + $0x48] sm:$0xf]
      %v8155 = vld [vmem:[%s13 + $0x4c] sm:$0xf]
      %v8156 = vld [vmem:[%s13 + $0x50] sm:$0xf]
      %v8157 = vld [vmem:[%s13 + $0x54] sm:$0xf]
      %v8158 = vld [vmem:[%s13 + $0x58] sm:$0xf]
      %v8159 = vld [vmem:[%s13 + $0x5c] sm:$0xf]
      %v8160 = vld [vmem:[%s13 + $0x60] sm:$0xf]
      %v8161 = vld [vmem:[%s13 + $0x64] sm:$0xf]
      %v8162 = vld [vmem:[%s13 + $0x68] sm:$0xf]
      %v8163 = vld [vmem:[%s13 + $0x6c] sm:$0xf]
      %v8164 = vld [vmem:[%s13 + $0x70] sm:$0xf]
      %v8165 = vld [vmem:[%s13 + $0x74] sm:$0xf]
      %v8166 = vld [vmem:[%s13 + $0x78] sm:$0xf]
      %v8167 = vld [vmem:[%s13 + $0x7c] sm:$0xf]
      %v8168 = vld [vmem:[%s13 + $0x80] sm:$0xf]
      %v8169 = vld [vmem:[%s13 + $0x84] sm:$0xf]
      %v8170 = vld [vmem:[%s13 + $0x88] sm:$0xf]
      %v8171 = vld [vmem:[%s13 + $0x8c] sm:$0xf]
      %v8172 = vld [vmem:[%s14] sm:$0x1]
      %v8173 = vcombine.low %v7880, %v7881
      %v8174 = vcombine.low %v7882, %v7883
      %v8176 = vunpack.c.l.s4 1983009808
      %v8177 = vunpack.c.0.s8 %v8176
      %v8178 = vlaneseq
      %v8179 = vshrl.u32 %v8178, 7
      %v8180 = vsub.s32 %v8177, %v8179
      %v8181 = vrot.slane %v8173, %v8180
      %v8183 = vunpack.c.l.s4 1983009808
      %v8184 = vunpack.c.0.s8 %v8183
      %v8185 = vlaneseq
      %v8186 = vshrl.u32 %v8185, 7
      %v8187 = vsub.s32 %v8184, %v8186
      %v8188 = vrot.slane %v8174, %v8187
      %v8189 = vcombine.low %v8181, %v8188
      %v8190 = vcombine.low %v7884, %v7885
      %v8191 = vcombine.low %v7886, %v7887
      %v8193 = vunpack.c.l.s4 1983009808
      %v8194 = vunpack.c.0.s8 %v8193
      %v8195 = vlaneseq
      %v8196 = vshrl.u32 %v8195, 7
      %v8197 = vsub.s32 %v8194, %v8196
      %v8198 = vrot.slane %v8190, %v8197
      %v8200 = vunpack.c.l.s4 1983009808
      %v8201 = vunpack.c.0.s8 %v8200
      %v8202 = vlaneseq
      %v8203 = vshrl.u32 %v8202, 7
      %v8204 = vsub.s32 %v8201, %v8203
      %v8205 = vrot.slane %v8191, %v8204
      %v8206 = vcombine.low %v8198, %v8205
      %v8207 = vcombine.low %v8009, %v8011
      %v8208 = vcombine.low %v8013, %v8015
      %v8210 = vunpack.c.l.s4 1983009808
      %v8211 = vunpack.c.0.s8 %v8210
      %v8212 = vlaneseq
      %v8213 = vshrl.u32 %v8212, 7
      %v8214 = vsub.s32 %v8211, %v8213
      %v8215 = vrot.slane %v8207, %v8214
      %v8217 = vunpack.c.l.s4 1983009808
      %v8218 = vunpack.c.0.s8 %v8217
      %v8219 = vlaneseq
      %v8220 = vshrl.u32 %v8219, 7
      %v8221 = vsub.s32 %v8218, %v8220
      %v8222 = vrot.slane %v8208, %v8221
      %v8223 = vcombine.low %v8215, %v8222
      %v8224 = vcombine.low %v8017, %v8019
      %v8225 = vcombine.low %v8021, %v8023
      %v8227 = vunpack.c.l.s4 1983009808
      %v8228 = vunpack.c.0.s8 %v8227
      %v8229 = vlaneseq
      %v8230 = vshrl.u32 %v8229, 7
      %v8231 = vsub.s32 %v8228, %v8230
      %v8232 = vrot.slane %v8224, %v8231
      %v8234 = vunpack.c.l.s4 1983009808
      %v8235 = vunpack.c.0.s8 %v8234
      %v8236 = vlaneseq
      %v8237 = vshrl.u32 %v8236, 7
      %v8238 = vsub.s32 %v8235, %v8237
      %v8239 = vrot.slane %v8225, %v8238
      %v8240 = vcombine.low %v8232, %v8239
      %v8241 = vcombine.low %v7888, %v7889
      %v8242 = vcombine.low %v7890, %v7891
      %v8244 = vunpack.c.l.s4 1983009808
      %v8245 = vunpack.c.0.s8 %v8244
      %v8246 = vlaneseq
      %v8247 = vshrl.u32 %v8246, 7
      %v8248 = vsub.s32 %v8245, %v8247
      %v8249 = vrot.slane %v8241, %v8248
      %v8251 = vunpack.c.l.s4 1983009808
      %v8252 = vunpack.c.0.s8 %v8251
      %v8253 = vlaneseq
      %v8254 = vshrl.u32 %v8253, 7
      %v8255 = vsub.s32 %v8252, %v8254
      %v8256 = vrot.slane %v8242, %v8255
      %v8257 = vcombine.low %v8249, %v8256
      %v8258 = vcombine.low %v7892, %v7893
      %v8259 = vcombine.low %v7894, %v7895
      %v8261 = vunpack.c.l.s4 1983009808
      %v8262 = vunpack.c.0.s8 %v8261
      %v8263 = vlaneseq
      %v8264 = vshrl.u32 %v8263, 7
      %v8265 = vsub.s32 %v8262, %v8264
      %v8266 = vrot.slane %v8258, %v8265
      %v8268 = vunpack.c.l.s4 1983009808
      %v8269 = vunpack.c.0.s8 %v8268
      %v8270 = vlaneseq
      %v8271 = vshrl.u32 %v8270, 7
      %v8272 = vsub.s32 %v8269, %v8271
      %v8273 = vrot.slane %v8259, %v8272
      %v8274 = vcombine.low %v8266, %v8273
      %v8275 = vcombine.low %v8025, %v8027
      %v8276 = vcombine.low %v8029, %v8031
      %v8278 = vunpack.c.l.s4 1983009808
      %v8279 = vunpack.c.0.s8 %v8278
      %v8280 = vlaneseq
      %v8281 = vshrl.u32 %v8280, 7
      %v8282 = vsub.s32 %v8279, %v8281
      %v8283 = vrot.slane %v8275, %v8282
      %v8285 = vunpack.c.l.s4 1983009808
      %v8286 = vunpack.c.0.s8 %v8285
      %v8287 = vlaneseq
      %v8288 = vshrl.u32 %v8287, 7
      %v8289 = vsub.s32 %v8286, %v8288
      %v8290 = vrot.slane %v8276, %v8289
      %v8291 = vcombine.low %v8283, %v8290
      %v8292 = vcombine.low %v8033, %v8035
      %v8293 = vcombine.low %v8037, %v8039
      %v8295 = vunpack.c.l.s4 1983009808
      %v8296 = vunpack.c.0.s8 %v8295
      %v8297 = vlaneseq
      %v8298 = vshrl.u32 %v8297, 7
      %v8299 = vsub.s32 %v8296, %v8298
      %v8300 = vrot.slane %v8292, %v8299
      %v8302 = vunpack.c.l.s4 1983009808
      %v8303 = vunpack.c.0.s8 %v8302
      %v8304 = vlaneseq
      %v8305 = vshrl.u32 %v8304, 7
      %v8306 = vsub.s32 %v8303, %v8305
      %v8307 = vrot.slane %v8293, %v8306
      %v8308 = vcombine.low %v8300, %v8307
      %v8309 = vcombine.low %v7896, %v7897
      %v8310 = vcombine.low %v7898, %v7899
      %v8312 = vunpack.c.l.s4 1983009808
      %v8313 = vunpack.c.0.s8 %v8312
      %v8314 = vlaneseq
      %v8315 = vshrl.u32 %v8314, 7
      %v8316 = vsub.s32 %v8313, %v8315
      %v8317 = vrot.slane %v8309, %v8316
      %v8319 = vunpack.c.l.s4 1983009808
      %v8320 = vunpack.c.0.s8 %v8319
      %v8321 = vlaneseq
      %v8322 = vshrl.u32 %v8321, 7
      %v8323 = vsub.s32 %v8320, %v8322
      %v8324 = vrot.slane %v8310, %v8323
      %v8325 = vcombine.low %v8317, %v8324
      %v8326 = vcombine.low %v7900, %v7901
      %v8327 = vcombine.low %v7902, %v7903
      %v8329 = vunpack.c.l.s4 1983009808
      %v8330 = vunpack.c.0.s8 %v8329
      %v8331 = vlaneseq
      %v8332 = vshrl.u32 %v8331, 7
      %v8333 = vsub.s32 %v8330, %v8332
      %v8334 = vrot.slane %v8326, %v8333
      %v8336 = vunpack.c.l.s4 1983009808
      %v8337 = vunpack.c.0.s8 %v8336
      %v8338 = vlaneseq
      %v8339 = vshrl.u32 %v8338, 7
      %v8340 = vsub.s32 %v8337, %v8339
      %v8341 = vrot.slane %v8327, %v8340
      %v8342 = vcombine.low %v8334, %v8341
      %v8343 = vcombine.low %v8041, %v8043
      %v8344 = vcombine.low %v8045, %v8047
      %v8346 = vunpack.c.l.s4 1983009808
      %v8347 = vunpack.c.0.s8 %v8346
      %v8348 = vlaneseq
      %v8349 = vshrl.u32 %v8348, 7
      %v8350 = vsub.s32 %v8347, %v8349
      %v8351 = vrot.slane %v8343, %v8350
      %v8353 = vunpack.c.l.s4 1983009808
      %v8354 = vunpack.c.0.s8 %v8353
      %v8355 = vlaneseq
      %v8356 = vshrl.u32 %v8355, 7
      %v8357 = vsub.s32 %v8354, %v8356
      %v8358 = vrot.slane %v8344, %v8357
      %v8359 = vcombine.low %v8351, %v8358
      %v8360 = vcombine.low %v8049, %v8051
      %v8361 = vcombine.low %v8053, %v8055
      %v8363 = vunpack.c.l.s4 1983009808
      %v8364 = vunpack.c.0.s8 %v8363
      %v8365 = vlaneseq
      %v8366 = vshrl.u32 %v8365, 7
      %v8367 = vsub.s32 %v8364, %v8366
      %v8368 = vrot.slane %v8360, %v8367
      %v8370 = vunpack.c.l.s4 1983009808
      %v8371 = vunpack.c.0.s8 %v8370
      %v8372 = vlaneseq
      %v8373 = vshrl.u32 %v8372, 7
      %v8374 = vsub.s32 %v8371, %v8373
      %v8375 = vrot.slane %v8361, %v8374
      %v8376 = vcombine.low %v8368, %v8375
      %v8377 = vcombine.low %v7904, %v7905
      %v8378 = vcombine.low %v7906, %v7907
      %v8380 = vunpack.c.l.s4 1983009808
      %v8381 = vunpack.c.0.s8 %v8380
      %v8382 = vlaneseq
      %v8383 = vshrl.u32 %v8382, 7
      %v8384 = vsub.s32 %v8381, %v8383
      %v8385 = vrot.slane %v8377, %v8384
      %v8387 = vunpack.c.l.s4 1983009808
      %v8388 = vunpack.c.0.s8 %v8387
      %v8389 = vlaneseq
      %v8390 = vshrl.u32 %v8389, 7
      %v8391 = vsub.s32 %v8388, %v8390
      %v8392 = vrot.slane %v8378, %v8391
      %v8393 = vcombine.low %v8385, %v8392
      %v8394 = vcombine.low %v7908, %v7909
      %v8395 = vcombine.low %v7910, %v7911
      %v8397 = vunpack.c.l.s4 1983009808
      %v8398 = vunpack.c.0.s8 %v8397
      %v8399 = vlaneseq
      %v8400 = vshrl.u32 %v8399, 7
      %v8401 = vsub.s32 %v8398, %v8400
      %v8402 = vrot.slane %v8394, %v8401
      %v8404 = vunpack.c.l.s4 1983009808
      %v8405 = vunpack.c.0.s8 %v8404
      %v8406 = vlaneseq
      %v8407 = vshrl.u32 %v8406, 7
      %v8408 = vsub.s32 %v8405, %v8407
      %v8409 = vrot.slane %v8395, %v8408
      %v8410 = vcombine.low %v8402, %v8409
      %v8411 = vcombine.low %v8057, %v8059
      %v8412 = vcombine.low %v8061, %v8063
      %v8414 = vunpack.c.l.s4 1983009808
      %v8415 = vunpack.c.0.s8 %v8414
      %v8416 = vlaneseq
      %v8417 = vshrl.u32 %v8416, 7
      %v8418 = vsub.s32 %v8415, %v8417
      %v8419 = vrot.slane %v8411, %v8418
      %v8421 = vunpack.c.l.s4 1983009808
      %v8422 = vunpack.c.0.s8 %v8421
      %v8423 = vlaneseq
      %v8424 = vshrl.u32 %v8423, 7
      %v8425 = vsub.s32 %v8422, %v8424
      %v8426 = vrot.slane %v8412, %v8425
      %v8427 = vcombine.low %v8419, %v8426
      %v8428 = vcombine.low %v8065, %v8067
      %v8429 = vcombine.low %v8069, %v8071
      %v8431 = vunpack.c.l.s4 1983009808
      %v8432 = vunpack.c.0.s8 %v8431
      %v8433 = vlaneseq
      %v8434 = vshrl.u32 %v8433, 7
      %v8435 = vsub.s32 %v8432, %v8434
      %v8436 = vrot.slane %v8428, %v8435
      %v8438 = vunpack.c.l.s4 1983009808
      %v8439 = vunpack.c.0.s8 %v8438
      %v8440 = vlaneseq
      %v8441 = vshrl.u32 %v8440, 7
      %v8442 = vsub.s32 %v8439, %v8441
      %v8443 = vrot.slane %v8429, %v8442
      %v8444 = vcombine.low %v8436, %v8443
      %v8445 = vcombine.low %v7912, %v7913
      %v8446 = vcombine.low %v7914, %v7915
      %v8448 = vunpack.c.l.s4 1983009808
      %v8449 = vunpack.c.0.s8 %v8448
      %v8450 = vlaneseq
      %v8451 = vshrl.u32 %v8450, 7
      %v8452 = vsub.s32 %v8449, %v8451
      %v8453 = vrot.slane %v8445, %v8452
      %v8455 = vunpack.c.l.s4 1983009808
      %v8456 = vunpack.c.0.s8 %v8455
      %v8457 = vlaneseq
      %v8458 = vshrl.u32 %v8457, 7
      %v8459 = vsub.s32 %v8456, %v8458
      %v8460 = vrot.slane %v8446, %v8459
      %v8461 = vcombine.low %v8453, %v8460
      %v8462 = vcombine.low %v7916, %v7917
      %v8463 = vcombine.low %v7918, %v7919
      %v8465 = vunpack.c.l.s4 1983009808
      %v8466 = vunpack.c.0.s8 %v8465
      %v8467 = vlaneseq
      %v8468 = vshrl.u32 %v8467, 7
      %v8469 = vsub.s32 %v8466, %v8468
      %v8470 = vrot.slane %v8462, %v8469
      %v8472 = vunpack.c.l.s4 1983009808
      %v8473 = vunpack.c.0.s8 %v8472
      %v8474 = vlaneseq
      %v8475 = vshrl.u32 %v8474, 7
      %v8476 = vsub.s32 %v8473, %v8475
      %v8477 = vrot.slane %v8463, %v8476
      %v8478 = vcombine.low %v8470, %v8477
      %v8479 = vcombine.low %v8073, %v8075
      %v8480 = vcombine.low %v8077, %v8079
      %v8482 = vunpack.c.l.s4 1983009808
      %v8483 = vunpack.c.0.s8 %v8482
      %v8484 = vlaneseq
      %v8485 = vshrl.u32 %v8484, 7
      %v8486 = vsub.s32 %v8483, %v8485
      %v8487 = vrot.slane %v8479, %v8486
      %v8489 = vunpack.c.l.s4 1983009808
      %v8490 = vunpack.c.0.s8 %v8489
      %v8491 = vlaneseq
      %v8492 = vshrl.u32 %v8491, 7
      %v8493 = vsub.s32 %v8490, %v8492
      %v8494 = vrot.slane %v8480, %v8493
      %v8495 = vcombine.low %v8487, %v8494
      %v8496 = vcombine.low %v8081, %v8083
      %v8497 = vcombine.low %v8085, %v8087
      %v8499 = vunpack.c.l.s4 1983009808
      %v8500 = vunpack.c.0.s8 %v8499
      %v8501 = vlaneseq
      %v8502 = vshrl.u32 %v8501, 7
      %v8503 = vsub.s32 %v8500, %v8502
      %v8504 = vrot.slane %v8496, %v8503
      %v8506 = vunpack.c.l.s4 1983009808
      %v8507 = vunpack.c.0.s8 %v8506
      %v8508 = vlaneseq
      %v8509 = vshrl.u32 %v8508, 7
      %v8510 = vsub.s32 %v8507, %v8509
      %v8511 = vrot.slane %v8497, %v8510
      %v8512 = vcombine.low %v8504, %v8511
      %v8513 = vcombine.low %v7920, %v7921
      %v8514 = vcombine.low %v7922, %v7923
      %v8516 = vunpack.c.l.s4 1983009808
      %v8517 = vunpack.c.0.s8 %v8516
      %v8518 = vlaneseq
      %v8519 = vshrl.u32 %v8518, 7
      %v8520 = vsub.s32 %v8517, %v8519
      %v8521 = vrot.slane %v8513, %v8520
      %v8523 = vunpack.c.l.s4 1983009808
      %v8524 = vunpack.c.0.s8 %v8523
      %v8525 = vlaneseq
      %v8526 = vshrl.u32 %v8525, 7
      %v8527 = vsub.s32 %v8524, %v8526
      %v8528 = vrot.slane %v8514, %v8527
      %v8529 = vcombine.low %v8521, %v8528
      %v8530 = vcombine.low %v7924, %v7925
      %v8531 = vcombine.low %v7926, %v7927
      %v8533 = vunpack.c.l.s4 1983009808
      %v8534 = vunpack.c.0.s8 %v8533
      %v8535 = vlaneseq
      %v8536 = vshrl.u32 %v8535, 7
      %v8537 = vsub.s32 %v8534, %v8536
      %v8538 = vrot.slane %v8530, %v8537
      %v8540 = vunpack.c.l.s4 1983009808
      %v8541 = vunpack.c.0.s8 %v8540
      %v8542 = vlaneseq
      %v8543 = vshrl.u32 %v8542, 7
      %v8544 = vsub.s32 %v8541, %v8543
      %v8545 = vrot.slane %v8531, %v8544
      %v8546 = vcombine.low %v8538, %v8545
      %v8547 = vcombine.low %v8089, %v8091
      %v8548 = vcombine.low %v8093, %v8095
      %v8550 = vunpack.c.l.s4 1983009808
      %v8551 = vunpack.c.0.s8 %v8550
      %v8552 = vlaneseq
      %v8553 = vshrl.u32 %v8552, 7
      %v8554 = vsub.s32 %v8551, %v8553
      %v8555 = vrot.slane %v8547, %v8554
      %v8557 = vunpack.c.l.s4 1983009808
      %v8558 = vunpack.c.0.s8 %v8557
      %v8559 = vlaneseq
      %v8560 = vshrl.u32 %v8559, 7
      %v8561 = vsub.s32 %v8558, %v8560
      %v8562 = vrot.slane %v8548, %v8561
      %v8563 = vcombine.low %v8555, %v8562
      %v8564 = vcombine.low %v8097, %v8099
      %v8565 = vcombine.low %v8101, %v8103
      %v8567 = vunpack.c.l.s4 1983009808
      %v8568 = vunpack.c.0.s8 %v8567
      %v8569 = vlaneseq
      %v8570 = vshrl.u32 %v8569, 7
      %v8571 = vsub.s32 %v8568, %v8570
      %v8572 = vrot.slane %v8564, %v8571
      %v8574 = vunpack.c.l.s4 1983009808
      %v8575 = vunpack.c.0.s8 %v8574
      %v8576 = vlaneseq
      %v8577 = vshrl.u32 %v8576, 7
      %v8578 = vsub.s32 %v8575, %v8577
      %v8579 = vrot.slane %v8565, %v8578
      %v8580 = vcombine.low %v8572, %v8579
      %v8581 = vcombine.low %v7928, %v7929
      %v8582 = vcombine.low %v7930, %v7931
      %v8584 = vunpack.c.l.s4 1983009808
      %v8585 = vunpack.c.0.s8 %v8584
      %v8586 = vlaneseq
      %v8587 = vshrl.u32 %v8586, 7
      %v8588 = vsub.s32 %v8585, %v8587
      %v8589 = vrot.slane %v8581, %v8588
      %v8591 = vunpack.c.l.s4 1983009808
      %v8592 = vunpack.c.0.s8 %v8591
      %v8593 = vlaneseq
      %v8594 = vshrl.u32 %v8593, 7
      %v8595 = vsub.s32 %v8592, %v8594
      %v8596 = vrot.slane %v8582, %v8595
      %v8597 = vcombine.low %v8589, %v8596
      %v8598 = vcombine.low %v7932, %v7933
      %v8599 = vcombine.low %v7934, %v7935
      %v8601 = vunpack.c.l.s4 1983009808
      %v8602 = vunpack.c.0.s8 %v8601
      %v8603 = vlaneseq
      %v8604 = vshrl.u32 %v8603, 7
      %v8605 = vsub.s32 %v8602, %v8604
      %v8606 = vrot.slane %v8598, %v8605
      %v8608 = vunpack.c.l.s4 1983009808
      %v8609 = vunpack.c.0.s8 %v8608
      %v8610 = vlaneseq
      %v8611 = vshrl.u32 %v8610, 7
      %v8612 = vsub.s32 %v8609, %v8611
      %v8613 = vrot.slane %v8599, %v8612
      %v8614 = vcombine.low %v8606, %v8613
      %v8615 = vcombine.low %v8105, %v8107
      %v8616 = vcombine.low %v8109, %v8111
      %v8618 = vunpack.c.l.s4 1983009808
      %v8619 = vunpack.c.0.s8 %v8618
      %v8620 = vlaneseq
      %v8621 = vshrl.u32 %v8620, 7
      %v8622 = vsub.s32 %v8619, %v8621
      %v8623 = vrot.slane %v8615, %v8622
      %v8625 = vunpack.c.l.s4 1983009808
      %v8626 = vunpack.c.0.s8 %v8625
      %v8627 = vlaneseq
      %v8628 = vshrl.u32 %v8627, 7
      %v8629 = vsub.s32 %v8626, %v8628
      %v8630 = vrot.slane %v8616, %v8629
      %v8631 = vcombine.low %v8623, %v8630
      %v8632 = vcombine.low %v8113, %v8115
      %v8633 = vcombine.low %v8117, %v8119
      %v8635 = vunpack.c.l.s4 1983009808
      %v8636 = vunpack.c.0.s8 %v8635
      %v8637 = vlaneseq
      %v8638 = vshrl.u32 %v8637, 7
      %v8639 = vsub.s32 %v8636, %v8638
      %v8640 = vrot.slane %v8632, %v8639
      %v8642 = vunpack.c.l.s4 1983009808
      %v8643 = vunpack.c.0.s8 %v8642
      %v8644 = vlaneseq
      %v8645 = vshrl.u32 %v8644, 7
      %v8646 = vsub.s32 %v8643, %v8645
      %v8647 = vrot.slane %v8633, %v8646
      %v8648 = vcombine.low %v8640, %v8647
      %v8649 = vcombine.low %v7936, %v7937
      %v8650 = vcombine.low %v7938, %v7939
      %v8652 = vunpack.c.l.s4 1983009808
      %v8653 = vunpack.c.0.s8 %v8652
      %v8654 = vlaneseq
      %v8655 = vshrl.u32 %v8654, 7
      %v8656 = vsub.s32 %v8653, %v8655
      %v8657 = vrot.slane %v8649, %v8656
      %v8659 = vunpack.c.l.s4 1983009808
      %v8660 = vunpack.c.0.s8 %v8659
      %v8661 = vlaneseq
      %v8662 = vshrl.u32 %v8661, 7
      %v8663 = vsub.s32 %v8660, %v8662
      %v8664 = vrot.slane %v8650, %v8663
      %v8665 = vcombine.low %v8657, %v8664
      %v8666 = vcombine.low %v7940, %v7941
      %v8667 = vcombine.low %v7942, %v7943
      %v8669 = vunpack.c.l.s4 1983009808
      %v8670 = vunpack.c.0.s8 %v8669
      %v8671 = vlaneseq
      %v8672 = vshrl.u32 %v8671, 7
      %v8673 = vsub.s32 %v8670, %v8672
      %v8674 = vrot.slane %v8666, %v8673
      %v8676 = vunpack.c.l.s4 1983009808
      %v8677 = vunpack.c.0.s8 %v8676
      %v8678 = vlaneseq
      %v8679 = vshrl.u32 %v8678, 7
      %v8680 = vsub.s32 %v8677, %v8679
      %v8681 = vrot.slane %v8667, %v8680
      %v8682 = vcombine.low %v8674, %v8681
      %v8683 = vcombine.low %v8121, %v8123
      %v8684 = vcombine.low %v8125, %v8127
      %v8686 = vunpack.c.l.s4 1983009808
      %v8687 = vunpack.c.0.s8 %v8686
      %v8688 = vlaneseq
      %v8689 = vshrl.u32 %v8688, 7
      %v8690 = vsub.s32 %v8687, %v8689
      %v8691 = vrot.slane %v8683, %v8690
      %v8693 = vunpack.c.l.s4 1983009808
      %v8694 = vunpack.c.0.s8 %v8693
      %v8695 = vlaneseq
      %v8696 = vshrl.u32 %v8695, 7
      %v8697 = vsub.s32 %v8694, %v8696
      %v8698 = vrot.slane %v8684, %v8697
      %v8699 = vcombine.low %v8691, %v8698
      %v8700 = vcombine.low %v8129, %v8131
      %v8701 = vcombine.low %v8133, %v8135
      %v8703 = vunpack.c.l.s4 1983009808
      %v8704 = vunpack.c.0.s8 %v8703
      %v8705 = vlaneseq
      %v8706 = vshrl.u32 %v8705, 7
      %v8707 = vsub.s32 %v8704, %v8706
      %v8708 = vrot.slane %v8700, %v8707
      %v8710 = vunpack.c.l.s4 1983009808
      %v8711 = vunpack.c.0.s8 %v8710
      %v8712 = vlaneseq
      %v8713 = vshrl.u32 %v8712, 7
      %v8714 = vsub.s32 %v8711, %v8713
      %v8715 = vrot.slane %v8701, %v8714
      %v8716 = vcombine.low %v8708, %v8715
      %v8717 = vrot.slane %v8189, 7
      %v8718 = vrot.slane %v8206, 7
      %v8719 = vsel %vm623, %v8717, %v8718
      %v8720 = vrot.slane %v8223, 7
      %v8721 = vrot.slane %v8240, 7
      %v8722 = vsel %vm623, %v8720, %v8721
      %v8723 = vrot.slane %v8257, 7
      %v8724 = vrot.slane %v8274, 7
      %v8725 = vsel %vm623, %v8723, %v8724
      %v8726 = vrot.slane %v8291, 7
      %v8727 = vrot.slane %v8308, 7
      %v8728 = vsel %vm623, %v8726, %v8727
      %v8729 = vrot.slane %v8325, 7
      %v8730 = vrot.slane %v8342, 7
      %v8731 = vsel %vm623, %v8729, %v8730
      %v8732 = vrot.slane %v8359, 7
      %v8733 = vrot.slane %v8376, 7
      %v8734 = vsel %vm623, %v8732, %v8733
      %v8735 = vrot.slane %v8393, 7
      %v8736 = vrot.slane %v8410, 7
      %v8737 = vsel %vm623, %v8735, %v8736
      %v8738 = vrot.slane %v8427, 7
      %v8739 = vrot.slane %v8444, 7
      %v8740 = vsel %vm623, %v8738, %v8739
      %v8741 = vrot.slane %v8461, 7
      %v8742 = vrot.slane %v8478, 7
      %v8743 = vsel %vm623, %v8741, %v8742
      %v8744 = vrot.slane %v8495, 7
      %v8745 = vrot.slane %v8512, 7
      %v8746 = vsel %vm623, %v8744, %v8745
      %v8747 = vrot.slane %v8529, 7
      %v8748 = vrot.slane %v8546, 7
      %v8749 = vsel %vm623, %v8747, %v8748
      %v8750 = vrot.slane %v8563, 7
      %v8751 = vrot.slane %v8580, 7
      %v8752 = vsel %vm623, %v8750, %v8751
      %v8753 = vrot.slane %v8597, 7
      %v8754 = vrot.slane %v8614, 7
      %v8755 = vsel %vm623, %v8753, %v8754
      %v8756 = vrot.slane %v8631, 7
      %v8757 = vrot.slane %v8648, 7
      %v8758 = vsel %vm623, %v8756, %v8757
      %v8759 = vrot.slane %v8665, 7
      %v8760 = vrot.slane %v8682, 7
      %v8761 = vsel %vm623, %v8759, %v8760
      %v8762 = vrot.slane %v8699, 7
      %v8763 = vrot.slane %v8716, 7
      %v8764 = vsel %vm623, %v8762, %v8763
      %v8812 = vsel %vm623, 0.0, %v8717
      %v8813 = vsel %vm623, 0.0, %v8720
      %v8814 = vsel %vm623, 0.0, %v8723
      %v8815 = vsel %vm623, 0.0, %v8726
      %v8816 = vsel %vm623, 0.0, %v8729
      %v8817 = vsel %vm623, 0.0, %v8732
      %v8818 = vsel %vm623, 0.0, %v8735
      %v8819 = vsel %vm623, 0.0, %v8738
      %v8820 = vsel %vm623, 0.0, %v8741
      %v8821 = vsel %vm623, 0.0, %v8744
      %v8822 = vsel %vm623, 0.0, %v8747
      %v8823 = vsel %vm623, 0.0, %v8750
      %v8824 = vsel %vm623, 0.0, %v8753
      %v8825 = vsel %vm623, 0.0, %v8756
      %v8826 = vsel %vm623, 0.0, %v8759
      %v8827 = vsel %vm623, 0.0, %v8762
      %v8828 = vsel %vm623, %v8718, 0.0
      %v8829 = vsel %vm623, %v8721, 0.0
      %v8830 = vsel %vm623, %v8724, 0.0
      %v8831 = vsel %vm623, %v8727, 0.0
      %v8832 = vsel %vm623, %v8730, 0.0
      %v8833 = vsel %vm623, %v8733, 0.0
      %v8834 = vsel %vm623, %v8736, 0.0
      %v8835 = vsel %vm623, %v8739, 0.0
      %v8836 = vsel %vm623, %v8742, 0.0
      %v8837 = vsel %vm623, %v8745, 0.0
      %v8838 = vsel %vm623, %v8748, 0.0
      %v8839 = vsel %vm623, %v8751, 0.0
      %v8840 = vsel %vm623, %v8754, 0.0
      %v8841 = vsel %vm623, %v8757, 0.0
      %v8842 = vsel %vm623, %v8760, 0.0
      %v8843 = vsel %vm623, %v8763, 0.0
      %v8874 = vrot.slane %v8812, 1
      %v8875 = vrot.slane %v8719, 1
      %v8876 = vsel %vm789, %v8874, %v8875
      %v8877 = vrot.slane %v8828, 1
      %v8878 = vsel %vm789, %v8875, %v8877
      %v8879 = vrot.slane %v8813, 1
      %v8880 = vrot.slane %v8722, 1
      %v8881 = vsel %vm789, %v8879, %v8880
      %v8882 = vrot.slane %v8829, 1
      %v8883 = vsel %vm789, %v8880, %v8882
      %v8884 = vrot.slane %v8814, 1
      %v8885 = vrot.slane %v8725, 1
      %v8886 = vsel %vm789, %v8884, %v8885
      %v8887 = vrot.slane %v8830, 1
      %v8888 = vsel %vm789, %v8885, %v8887
      %v8889 = vrot.slane %v8815, 1
      %v8890 = vrot.slane %v8728, 1
      %v8891 = vsel %vm789, %v8889, %v8890
      %v8892 = vrot.slane %v8831, 1
      %v8893 = vsel %vm789, %v8890, %v8892
      %v8894 = vrot.slane %v8816, 1
      %v8895 = vrot.slane %v8731, 1
      %v8896 = vsel %vm789, %v8894, %v8895
      %v8897 = vrot.slane %v8832, 1
      %v8898 = vsel %vm789, %v8895, %v8897
      %v8899 = vrot.slane %v8817, 1
      %v8900 = vrot.slane %v8734, 1
      %v8901 = vsel %vm789, %v8899, %v8900
      %v8902 = vrot.slane %v8833, 1
      %v8903 = vsel %vm789, %v8900, %v8902
      %v8904 = vrot.slane %v8818, 1
      %v8905 = vrot.slane %v8737, 1
      %v8906 = vsel %vm789, %v8904, %v8905
      %v8907 = vrot.slane %v8834, 1
      %v8908 = vsel %vm789, %v8905, %v8907
      %v8909 = vrot.slane %v8819, 1
      %v8910 = vrot.slane %v8740, 1
      %v8911 = vsel %vm789, %v8909, %v8910
      %v8912 = vrot.slane %v8835, 1
      %v8913 = vsel %vm789, %v8910, %v8912
      %v8914 = vrot.slane %v8820, 1
      %v8915 = vrot.slane %v8743, 1
      %v8916 = vsel %vm789, %v8914, %v8915
      %v8917 = vrot.slane %v8836, 1
      %v8918 = vsel %vm789, %v8915, %v8917
      %v8919 = vrot.slane %v8821, 1
      %v8920 = vrot.slane %v8746, 1
      %v8921 = vsel %vm789, %v8919, %v8920
      %v8922 = vrot.slane %v8837, 1
      %v8923 = vsel %vm789, %v8920, %v8922
      %v8924 = vrot.slane %v8822, 1
      %v8925 = vrot.slane %v8749, 1
      %v8926 = vsel %vm789, %v8924, %v8925
      %v8927 = vrot.slane %v8838, 1
      %v8928 = vsel %vm789, %v8925, %v8927
      %v8929 = vrot.slane %v8823, 1
      %v8930 = vrot.slane %v8752, 1
      %v8931 = vsel %vm789, %v8929, %v8930
      %v8932 = vrot.slane %v8839, 1
      %v8933 = vsel %vm789, %v8930, %v8932
      %v8934 = vrot.slane %v8824, 1
      %v8935 = vrot.slane %v8755, 1
      %v8936 = vsel %vm789, %v8934, %v8935
      %v8937 = vrot.slane %v8840, 1
      %v8938 = vsel %vm789, %v8935, %v8937
      %v8939 = vrot.slane %v8825, 1
      %v8940 = vrot.slane %v8758, 1
      %v8941 = vsel %vm789, %v8939, %v8940
      %v8942 = vrot.slane %v8841, 1
      %v8943 = vsel %vm789, %v8940, %v8942
      %v8944 = vrot.slane %v8826, 1
      %v8945 = vrot.slane %v8761, 1
      %v8946 = vsel %vm789, %v8944, %v8945
      %v8947 = vrot.slane %v8842, 1
      %v8948 = vsel %vm789, %v8945, %v8947
      %v8949 = vrot.slane %v8812, 2
      %v8950 = vrot.slane %v8719, 2
      %v8951 = vsel %vm870, %v8949, %v8950
      %v8952 = vrot.slane %v8828, 2
      %v8953 = vsel %vm870, %v8950, %v8952
      %v8954 = vrot.slane %v8813, 2
      %v8955 = vrot.slane %v8722, 2
      %v8956 = vsel %vm870, %v8954, %v8955
      %v8957 = vrot.slane %v8829, 2
      %v8958 = vsel %vm870, %v8955, %v8957
      %v8959 = vrot.slane %v8814, 2
      %v8960 = vrot.slane %v8725, 2
      %v8961 = vsel %vm870, %v8959, %v8960
      %v8962 = vrot.slane %v8830, 2
      %v8963 = vsel %vm870, %v8960, %v8962
      %v8964 = vrot.slane %v8815, 2
      %v8965 = vrot.slane %v8728, 2
      %v8966 = vsel %vm870, %v8964, %v8965
      %v8967 = vrot.slane %v8831, 2
      %v8968 = vsel %vm870, %v8965, %v8967
      %v8969 = vrot.slane %v8816, 2
      %v8970 = vrot.slane %v8731, 2
      %v8971 = vsel %vm870, %v8969, %v8970
      %v8972 = vrot.slane %v8832, 2
      %v8973 = vsel %vm870, %v8970, %v8972
      %v8974 = vrot.slane %v8817, 2
      %v8975 = vrot.slane %v8734, 2
      %v8976 = vsel %vm870, %v8974, %v8975
      %v8977 = vrot.slane %v8833, 2
      %v8978 = vsel %vm870, %v8975, %v8977
      %v8979 = vrot.slane %v8818, 2
      %v8980 = vrot.slane %v8737, 2
      %v8981 = vsel %vm870, %v8979, %v8980
      %v8982 = vrot.slane %v8834, 2
      %v8983 = vsel %vm870, %v8980, %v8982
      %v8984 = vrot.slane %v8819, 2
      %v8985 = vrot.slane %v8740, 2
      %v8986 = vsel %vm870, %v8984, %v8985
      %v8987 = vrot.slane %v8835, 2
      %v8988 = vsel %vm870, %v8985, %v8987
      %v8989 = vrot.slane %v8820, 2
      %v8990 = vrot.slane %v8743, 2
      %v8991 = vsel %vm870, %v8989, %v8990
      %v8992 = vrot.slane %v8836, 2
      %v8993 = vsel %vm870, %v8990, %v8992
      %v8994 = vrot.slane %v8821, 2
      %v8995 = vrot.slane %v8746, 2
      %v8996 = vsel %vm870, %v8994, %v8995
      %v8997 = vrot.slane %v8837, 2
      %v8998 = vsel %vm870, %v8995, %v8997
      %v8999 = vrot.slane %v8822, 2
      %v9000 = vrot.slane %v8749, 2
      %v9001 = vsel %vm870, %v8999, %v9000
      %v9002 = vrot.slane %v8838, 2
      %v9003 = vsel %vm870, %v9000, %v9002
      %v9004 = vrot.slane %v8823, 2
      %v9005 = vrot.slane %v8752, 2
      %v9006 = vsel %vm870, %v9004, %v9005
      %v9007 = vrot.slane %v8839, 2
      %v9008 = vsel %vm870, %v9005, %v9007
      %v9009 = vrot.slane %v8824, 2
      %v9010 = vrot.slane %v8755, 2
      %v9011 = vsel %vm870, %v9009, %v9010
      %v9012 = vrot.slane %v8840, 2
      %v9013 = vsel %vm870, %v9010, %v9012
      %v9014 = vrot.slane %v8825, 2
      %v9015 = vrot.slane %v8758, 2
      %v9016 = vsel %vm870, %v9014, %v9015
      %v9017 = vrot.slane %v8841, 2
      %v9018 = vsel %vm870, %v9015, %v9017
      %v9019 = vrot.slane %v8826, 2
      %v9020 = vrot.slane %v8761, 2
      %v9021 = vsel %vm870, %v9019, %v9020
      %v9022 = vrot.slane %v8842, 2
      %v9023 = vsel %vm870, %v9020, %v9022
      %v9026 = vrot.slane %v8827, 1
      %v9027 = vrot.slane %v8764, 1
      %v9028 = vsel %vm789, %v9026, %v9027
      %v9029 = vrot.slane %v8843, 1
      %v9030 = vsel %vm789, %v9027, %v9029
      %v9063 = vrot.slane %v8827, 2
      %v9064 = vrot.slane %v8764, 2
      %v9065 = vsel %vm870, %v9063, %v9064
      %v9066 = vrot.slane %v8843, 2
      %v9067 = vsel %vm870, %v9064, %v9066
      %9098 = vrot.lane.b32.xlu0 %v8876, 32
      %v9099 = vpop.permute.xlu0 %9098
      %9100 = vrot.lane.b32.xlu0 %v8878, 32
      %v9101 = vpop.permute.xlu0 %9100
      %9102 = vrot.lane.b32.xlu0 %v8881, 32
      %v9103 = vpop.permute.xlu0 %9102
      %9104 = vrot.lane.b32.xlu0 %v8883, 32
      %v9105 = vpop.permute.xlu0 %9104
      %9106 = vrot.lane.b32.xlu0 %v8886, 32
      %v9107 = vpop.permute.xlu0 %9106
      %9108 = vrot.lane.b32.xlu0 %v8888, 32
      %v9109 = vpop.permute.xlu0 %9108
      %9110 = vrot.lane.b32.xlu0 %v8891, 32
      %v9111 = vpop.permute.xlu0 %9110
      %9112 = vrot.lane.b32.xlu0 %v8893, 32
      %v9113 = vpop.permute.xlu0 %9112
      %9114 = vrot.lane.b32.xlu0 %v8896, 32
      %v9115 = vpop.permute.xlu0 %9114
      %9116 = vrot.lane.b32.xlu0 %v8898, 32
      %v9117 = vpop.permute.xlu0 %9116
      %9118 = vrot.lane.b32.xlu0 %v8901, 32
      %v9119 = vpop.permute.xlu0 %9118
      %9120 = vrot.lane.b32.xlu0 %v8903, 32
      %v9121 = vpop.permute.xlu0 %9120
      %9122 = vrot.lane.b32.xlu0 %v8906, 32
      %v9123 = vpop.permute.xlu0 %9122
      %9124 = vrot.lane.b32.xlu0 %v8908, 32
      %v9125 = vpop.permute.xlu0 %9124
      %9126 = vrot.lane.b32.xlu0 %v8911, 32
      %v9127 = vpop.permute.xlu0 %9126
      %9128 = vrot.lane.b32.xlu0 %v8913, 32
      %v9129 = vpop.permute.xlu0 %9128
      %9130 = vrot.lane.b32.xlu0 %v8916, 32
      %v9131 = vpop.permute.xlu0 %9130
      %9132 = vrot.lane.b32.xlu0 %v8918, 32
      %v9133 = vpop.permute.xlu0 %9132
      %9134 = vrot.lane.b32.xlu0 %v8921, 32
      %v9135 = vpop.permute.xlu0 %9134
      %9136 = vrot.lane.b32.xlu0 %v8923, 32
      %v9137 = vpop.permute.xlu0 %9136
      %9138 = vrot.lane.b32.xlu0 %v8926, 32
      %v9139 = vpop.permute.xlu0 %9138
      %9140 = vrot.lane.b32.xlu0 %v8928, 32
      %v9141 = vpop.permute.xlu0 %9140
      %9142 = vrot.lane.b32.xlu0 %v8931, 32
      %v9143 = vpop.permute.xlu0 %9142
      %9144 = vrot.lane.b32.xlu0 %v8933, 32
      %v9145 = vpop.permute.xlu0 %9144
      %9146 = vrot.lane.b32.xlu0 %v8936, 32
      %v9147 = vpop.permute.xlu0 %9146
      %9148 = vrot.lane.b32.xlu0 %v8938, 32
      %v9149 = vpop.permute.xlu0 %9148
      %9150 = vrot.lane.b32.xlu0 %v8941, 32
      %v9151 = vpop.permute.xlu0 %9150
      %9152 = vrot.lane.b32.xlu0 %v8943, 32
      %v9153 = vpop.permute.xlu0 %9152
      %9154 = vrot.lane.b32.xlu0 %v8946, 32
      %v9155 = vpop.permute.xlu0 %9154
      %9156 = vrot.lane.b32.xlu0 %v8948, 32
      %v9157 = vpop.permute.xlu0 %9156
      %9188 = vrot.lane.b32.xlu0 %v8951, 64
      %v9189 = vpop.permute.xlu0 %9188
      %9190 = vrot.lane.b32.xlu0 %v8953, 64
      %v9191 = vpop.permute.xlu0 %9190
      %9192 = vrot.lane.b32.xlu0 %v8956, 64
      %v9193 = vpop.permute.xlu0 %9192
      %9194 = vrot.lane.b32.xlu0 %v8958, 64
      %v9195 = vpop.permute.xlu0 %9194
      %9196 = vrot.lane.b32.xlu0 %v8961, 64
      %v9197 = vpop.permute.xlu0 %9196
      %9198 = vrot.lane.b32.xlu0 %v8963, 64
      %v9199 = vpop.permute.xlu0 %9198
      %9200 = vrot.lane.b32.xlu0 %v8966, 64
      %v9201 = vpop.permute.xlu0 %9200
      %9202 = vrot.lane.b32.xlu0 %v8968, 64
      %v9203 = vpop.permute.xlu0 %9202
      %9204 = vrot.lane.b32.xlu0 %v8971, 64
      %v9205 = vpop.permute.xlu0 %9204
      %9206 = vrot.lane.b32.xlu0 %v8973, 64
      %v9207 = vpop.permute.xlu0 %9206
      %9208 = vrot.lane.b32.xlu0 %v8976, 64
      %v9209 = vpop.permute.xlu0 %9208
      %9210 = vrot.lane.b32.xlu0 %v8978, 64
      %v9211 = vpop.permute.xlu0 %9210
      %9212 = vrot.lane.b32.xlu0 %v8981, 64
      %v9213 = vpop.permute.xlu0 %9212
      %9214 = vrot.lane.b32.xlu0 %v8983, 64
      %v9215 = vpop.permute.xlu0 %9214
      %9216 = vrot.lane.b32.xlu0 %v8986, 64
      %v9217 = vpop.permute.xlu0 %9216
      %9218 = vrot.lane.b32.xlu0 %v8988, 64
      %v9219 = vpop.permute.xlu0 %9218
      %9220 = vrot.lane.b32.xlu0 %v8991, 64
      %v9221 = vpop.permute.xlu0 %9220
      %9222 = vrot.lane.b32.xlu0 %v8993, 64
      %v9223 = vpop.permute.xlu0 %9222
      %9224 = vrot.lane.b32.xlu0 %v8996, 64
      %v9225 = vpop.permute.xlu0 %9224
      %9226 = vrot.lane.b32.xlu0 %v8998, 64
      %v9227 = vpop.permute.xlu0 %9226
      %9228 = vrot.lane.b32.xlu0 %v9001, 64
      %v9229 = vpop.permute.xlu0 %9228
      %9230 = vrot.lane.b32.xlu0 %v9003, 64
      %v9231 = vpop.permute.xlu0 %9230
      %9232 = vrot.lane.b32.xlu0 %v9006, 64
      %v9233 = vpop.permute.xlu0 %9232
      %9234 = vrot.lane.b32.xlu0 %v9008, 64
      %v9235 = vpop.permute.xlu0 %9234
      %9236 = vrot.lane.b32.xlu0 %v9011, 64
      %v9237 = vpop.permute.xlu0 %9236
      %9238 = vrot.lane.b32.xlu0 %v9013, 64
      %v9239 = vpop.permute.xlu0 %9238
      %9240 = vrot.lane.b32.xlu0 %v9016, 64
      %v9241 = vpop.permute.xlu0 %9240
      %9242 = vrot.lane.b32.xlu0 %v9018, 64
      %v9243 = vpop.permute.xlu0 %9242
      %9244 = vrot.lane.b32.xlu0 %v9021, 64
      %v9245 = vpop.permute.xlu0 %9244
      %9246 = vrot.lane.b32.xlu0 %v9023, 64
      %v9247 = vpop.permute.xlu0 %9246
      %9278 = vrot.lane.b32.xlu0 %v8812, 96
      %v9279 = vpop.permute.xlu0 %9278
      %9280 = vrot.lane.b32.xlu0 %v8719, 96
      %v9281 = vpop.permute.xlu0 %9280
      %9282 = vrot.lane.b32.xlu0 %v8813, 96
      %v9283 = vpop.permute.xlu0 %9282
      %9284 = vrot.lane.b32.xlu0 %v8722, 96
      %v9285 = vpop.permute.xlu0 %9284
      %9286 = vrot.lane.b32.xlu0 %v8814, 96
      %v9287 = vpop.permute.xlu0 %9286
      %9288 = vrot.lane.b32.xlu0 %v8725, 96
      %v9289 = vpop.permute.xlu0 %9288
      %9290 = vrot.lane.b32.xlu0 %v8815, 96
      %v9291 = vpop.permute.xlu0 %9290
      %9292 = vrot.lane.b32.xlu0 %v8728, 96
      %v9293 = vpop.permute.xlu0 %9292
      %9294 = vrot.lane.b32.xlu0 %v8816, 96
      %v9295 = vpop.permute.xlu0 %9294
      %9296 = vrot.lane.b32.xlu0 %v8731, 96
      %v9297 = vpop.permute.xlu0 %9296
      %9298 = vrot.lane.b32.xlu0 %v8817, 96
      %v9299 = vpop.permute.xlu0 %9298
      %9300 = vrot.lane.b32.xlu0 %v8734, 96
      %v9301 = vpop.permute.xlu0 %9300
      %9302 = vrot.lane.b32.xlu0 %v8818, 96
      %v9303 = vpop.permute.xlu0 %9302
      %9304 = vrot.lane.b32.xlu0 %v8737, 96
      %v9305 = vpop.permute.xlu0 %9304
      %9306 = vrot.lane.b32.xlu0 %v8819, 96
      %v9307 = vpop.permute.xlu0 %9306
      %9308 = vrot.lane.b32.xlu0 %v8740, 96
      %v9309 = vpop.permute.xlu0 %9308
      %9310 = vrot.lane.b32.xlu0 %v8820, 96
      %v9311 = vpop.permute.xlu0 %9310
      %9312 = vrot.lane.b32.xlu0 %v8743, 96
      %v9313 = vpop.permute.xlu0 %9312
      %9314 = vrot.lane.b32.xlu0 %v8821, 96
      %v9315 = vpop.permute.xlu0 %9314
      %9316 = vrot.lane.b32.xlu0 %v8746, 96
      %v9317 = vpop.permute.xlu0 %9316
      %9318 = vrot.lane.b32.xlu0 %v8822, 96
      %v9319 = vpop.permute.xlu0 %9318
      %9320 = vrot.lane.b32.xlu0 %v8749, 96
      %v9321 = vpop.permute.xlu0 %9320
      %9322 = vrot.lane.b32.xlu0 %v8823, 96
      %v9323 = vpop.permute.xlu0 %9322
      %9324 = vrot.lane.b32.xlu0 %v8752, 96
      %v9325 = vpop.permute.xlu0 %9324
      %9326 = vrot.lane.b32.xlu0 %v8824, 96
      %v9327 = vpop.permute.xlu0 %9326
      %9328 = vrot.lane.b32.xlu0 %v8755, 96
      %v9329 = vpop.permute.xlu0 %9328
      %9330 = vrot.lane.b32.xlu0 %v8825, 96
      %v9331 = vpop.permute.xlu0 %9330
      %9332 = vrot.lane.b32.xlu0 %v8758, 96
      %v9333 = vpop.permute.xlu0 %9332
      %9334 = vrot.lane.b32.xlu0 %v8826, 96
      %v9335 = vpop.permute.xlu0 %9334
      %9336 = vrot.lane.b32.xlu0 %v8761, 96
      %v9337 = vpop.permute.xlu0 %9336
      %9338 = vrot.lane.b32.xlu0 %v8827, 96
      %v9339 = vpop.permute.xlu0 %9338
      %9340 = vrot.lane.b32.xlu0 %v8764, 96
      %v9341 = vpop.permute.xlu0 %9340
      %9374 = vrot.lane.b32.xlu0 %v8951, 32
      %v9375 = vpop.permute.xlu0 %9374
      %9376 = vrot.lane.b32.xlu0 %v8953, 32
      %v9377 = vpop.permute.xlu0 %9376
      %9378 = vrot.lane.b32.xlu0 %v8956, 32
      %v9379 = vpop.permute.xlu0 %9378
      %9380 = vrot.lane.b32.xlu0 %v8958, 32
      %v9381 = vpop.permute.xlu0 %9380
      %9382 = vrot.lane.b32.xlu0 %v8961, 32
      %v9383 = vpop.permute.xlu0 %9382
      %9384 = vrot.lane.b32.xlu0 %v8963, 32
      %v9385 = vpop.permute.xlu0 %9384
      %9386 = vrot.lane.b32.xlu0 %v8966, 32
      %v9387 = vpop.permute.xlu0 %9386
      %9388 = vrot.lane.b32.xlu0 %v8968, 32
      %v9389 = vpop.permute.xlu0 %9388
      %9390 = vrot.lane.b32.xlu0 %v8971, 32
      %v9391 = vpop.permute.xlu0 %9390
      %9392 = vrot.lane.b32.xlu0 %v8973, 32
      %v9393 = vpop.permute.xlu0 %9392
      %9394 = vrot.lane.b32.xlu0 %v8976, 32
      %v9395 = vpop.permute.xlu0 %9394
      %9396 = vrot.lane.b32.xlu0 %v8978, 32
      %v9397 = vpop.permute.xlu0 %9396
      %9398 = vrot.lane.b32.xlu0 %v8981, 32
      %v9399 = vpop.permute.xlu0 %9398
      %9400 = vrot.lane.b32.xlu0 %v8983, 32
      %v9401 = vpop.permute.xlu0 %9400
      %9402 = vrot.lane.b32.xlu0 %v8986, 32
      %v9403 = vpop.permute.xlu0 %9402
      %9404 = vrot.lane.b32.xlu0 %v8988, 32
      %v9405 = vpop.permute.xlu0 %9404
      %9406 = vrot.lane.b32.xlu0 %v8991, 32
      %v9407 = vpop.permute.xlu0 %9406
      %9408 = vrot.lane.b32.xlu0 %v8993, 32
      %v9409 = vpop.permute.xlu0 %9408
      %9410 = vrot.lane.b32.xlu0 %v8996, 32
      %v9411 = vpop.permute.xlu0 %9410
      %9412 = vrot.lane.b32.xlu0 %v8998, 32
      %v9413 = vpop.permute.xlu0 %9412
      %9414 = vrot.lane.b32.xlu0 %v9001, 32
      %v9415 = vpop.permute.xlu0 %9414
      %9416 = vrot.lane.b32.xlu0 %v9003, 32
      %v9417 = vpop.permute.xlu0 %9416
      %9418 = vrot.lane.b32.xlu0 %v9006, 32
      %v9419 = vpop.permute.xlu0 %9418
      %9420 = vrot.lane.b32.xlu0 %v9008, 32
      %v9421 = vpop.permute.xlu0 %9420
      %9422 = vrot.lane.b32.xlu0 %v9011, 32
      %v9423 = vpop.permute.xlu0 %9422
      %9424 = vrot.lane.b32.xlu0 %v9013, 32
      %v9425 = vpop.permute.xlu0 %9424
      %9426 = vrot.lane.b32.xlu0 %v9016, 32
      %v9427 = vpop.permute.xlu0 %9426
      %9428 = vrot.lane.b32.xlu0 %v9018, 32
      %v9429 = vpop.permute.xlu0 %9428
      %9430 = vrot.lane.b32.xlu0 %v9021, 32
      %v9431 = vpop.permute.xlu0 %9430
      %9432 = vrot.lane.b32.xlu0 %v9023, 32
      %v9433 = vpop.permute.xlu0 %9432
      %9434 = vrot.lane.b32.xlu0 %v9065, 32
      %v9435 = vpop.permute.xlu0 %9434
      %9436 = vrot.lane.b32.xlu0 %v9067, 32
      %v9437 = vpop.permute.xlu0 %9436
      %9470 = vrot.lane.b32.xlu0 %v8813, 64
      %v9471 = vpop.permute.xlu0 %9470
      %9472 = vrot.lane.b32.xlu0 %v8722, 64
      %v9473 = vpop.permute.xlu0 %9472
      %9474 = vrot.lane.b32.xlu0 %v8814, 64
      %v9475 = vpop.permute.xlu0 %9474
      %9476 = vrot.lane.b32.xlu0 %v8725, 64
      %v9477 = vpop.permute.xlu0 %9476
      %9478 = vrot.lane.b32.xlu0 %v8815, 64
      %v9479 = vpop.permute.xlu0 %9478
      %9480 = vrot.lane.b32.xlu0 %v8728, 64
      %v9481 = vpop.permute.xlu0 %9480
      %9482 = vrot.lane.b32.xlu0 %v8816, 64
      %v9483 = vpop.permute.xlu0 %9482
      %9484 = vrot.lane.b32.xlu0 %v8731, 64
      %v9485 = vpop.permute.xlu0 %9484
      %9486 = vrot.lane.b32.xlu0 %v8817, 64
      %v9487 = vpop.permute.xlu0 %9486
      %9488 = vrot.lane.b32.xlu0 %v8734, 64
      %v9489 = vpop.permute.xlu0 %9488
      %9490 = vrot.lane.b32.xlu0 %v8818, 64
      %v9491 = vpop.permute.xlu0 %9490
      %9492 = vrot.lane.b32.xlu0 %v8737, 64
      %v9493 = vpop.permute.xlu0 %9492
      %9494 = vrot.lane.b32.xlu0 %v8819, 64
      %v9495 = vpop.permute.xlu0 %9494
      %9496 = vrot.lane.b32.xlu0 %v8740, 64
      %v9497 = vpop.permute.xlu0 %9496
      %9498 = vrot.lane.b32.xlu0 %v8820, 64
      %v9499 = vpop.permute.xlu0 %9498
      %9500 = vrot.lane.b32.xlu0 %v8743, 64
      %v9501 = vpop.permute.xlu0 %9500
      %9502 = vrot.lane.b32.xlu0 %v8821, 64
      %v9503 = vpop.permute.xlu0 %9502
      %9504 = vrot.lane.b32.xlu0 %v8746, 64
      %v9505 = vpop.permute.xlu0 %9504
      %9506 = vrot.lane.b32.xlu0 %v8822, 64
      %v9507 = vpop.permute.xlu0 %9506
      %9508 = vrot.lane.b32.xlu0 %v8749, 64
      %v9509 = vpop.permute.xlu0 %9508
      %9510 = vrot.lane.b32.xlu0 %v8823, 64
      %v9511 = vpop.permute.xlu0 %9510
      %9512 = vrot.lane.b32.xlu0 %v8752, 64
      %v9513 = vpop.permute.xlu0 %9512
      %9514 = vrot.lane.b32.xlu0 %v8824, 64
      %v9515 = vpop.permute.xlu0 %9514
      %9516 = vrot.lane.b32.xlu0 %v8755, 64
      %v9517 = vpop.permute.xlu0 %9516
      %9518 = vrot.lane.b32.xlu0 %v8825, 64
      %v9519 = vpop.permute.xlu0 %9518
      %9520 = vrot.lane.b32.xlu0 %v8758, 64
      %v9521 = vpop.permute.xlu0 %9520
      %9522 = vrot.lane.b32.xlu0 %v8826, 64
      %v9523 = vpop.permute.xlu0 %9522
      %9524 = vrot.lane.b32.xlu0 %v8761, 64
      %v9525 = vpop.permute.xlu0 %9524
      %9526 = vrot.lane.b32.xlu0 %v8827, 64
      %v9527 = vpop.permute.xlu0 %9526
      %9528 = vrot.lane.b32.xlu0 %v8764, 64
      %v9529 = vpop.permute.xlu0 %9528
      %9560 = vrot.lane.b32.xlu0 %v8881, 96
      %v9561 = vpop.permute.xlu0 %9560
      %9562 = vrot.lane.b32.xlu0 %v8883, 96
      %v9563 = vpop.permute.xlu0 %9562
      %9564 = vrot.lane.b32.xlu0 %v8886, 96
      %v9565 = vpop.permute.xlu0 %9564
      %9566 = vrot.lane.b32.xlu0 %v8888, 96
      %v9567 = vpop.permute.xlu0 %9566
      %9568 = vrot.lane.b32.xlu0 %v8891, 96
      %v9569 = vpop.permute.xlu0 %9568
      %9570 = vrot.lane.b32.xlu0 %v8893, 96
      %v9571 = vpop.permute.xlu0 %9570
      %9572 = vrot.lane.b32.xlu0 %v8896, 96
      %v9573 = vpop.permute.xlu0 %9572
      %9574 = vrot.lane.b32.xlu0 %v8898, 96
      %v9575 = vpop.permute.xlu0 %9574
      %9576 = vrot.lane.b32.xlu0 %v8901, 96
      %v9577 = vpop.permute.xlu0 %9576
      %9578 = vrot.lane.b32.xlu0 %v8903, 96
      %v9579 = vpop.permute.xlu0 %9578
      %9580 = vrot.lane.b32.xlu0 %v8906, 96
      %v9581 = vpop.permute.xlu0 %9580
      %9582 = vrot.lane.b32.xlu0 %v8908, 96
      %v9583 = vpop.permute.xlu0 %9582
      %9584 = vrot.lane.b32.xlu0 %v8911, 96
      %v9585 = vpop.permute.xlu0 %9584
      %9586 = vrot.lane.b32.xlu0 %v8913, 96
      %v9587 = vpop.permute.xlu0 %9586
      %9588 = vrot.lane.b32.xlu0 %v8916, 96
      %v9589 = vpop.permute.xlu0 %9588
      %9590 = vrot.lane.b32.xlu0 %v8918, 96
      %v9591 = vpop.permute.xlu0 %9590
      %9592 = vrot.lane.b32.xlu0 %v8921, 96
      %v9593 = vpop.permute.xlu0 %9592
      %9594 = vrot.lane.b32.xlu0 %v8923, 96
      %v9595 = vpop.permute.xlu0 %9594
      %9596 = vrot.lane.b32.xlu0 %v8926, 96
      %v9597 = vpop.permute.xlu0 %9596
      %9598 = vrot.lane.b32.xlu0 %v8928, 96
      %v9599 = vpop.permute.xlu0 %9598
      %9600 = vrot.lane.b32.xlu0 %v8931, 96
      %v9601 = vpop.permute.xlu0 %9600
      %9602 = vrot.lane.b32.xlu0 %v8933, 96
      %v9603 = vpop.permute.xlu0 %9602
      %9604 = vrot.lane.b32.xlu0 %v8936, 96
      %v9605 = vpop.permute.xlu0 %9604
      %9606 = vrot.lane.b32.xlu0 %v8938, 96
      %v9607 = vpop.permute.xlu0 %9606
      %9608 = vrot.lane.b32.xlu0 %v8941, 96
      %v9609 = vpop.permute.xlu0 %9608
      %9610 = vrot.lane.b32.xlu0 %v8943, 96
      %v9611 = vpop.permute.xlu0 %9610
      %9612 = vrot.lane.b32.xlu0 %v8946, 96
      %v9613 = vpop.permute.xlu0 %9612
      %9614 = vrot.lane.b32.xlu0 %v8948, 96
      %v9615 = vpop.permute.xlu0 %9614
      %9616 = vrot.lane.b32.xlu0 %v9028, 96
      %v9617 = vpop.permute.xlu0 %9616
      %9618 = vrot.lane.b32.xlu0 %v9030, 96
      %v9619 = vpop.permute.xlu0 %9618
      %v9650 = vsel %vm3312, %v8812, %v9099
      %v9651 = vsel %vm3312, %v8719, %v9101
      %v9652 = vsel %vm3312, %v8813, %v9103
      %v9653 = vsel %vm3312, %v8722, %v9105
      %v9654 = vsel %vm3312, %v8814, %v9107
      %v9655 = vsel %vm3312, %v8725, %v9109
      %v9656 = vsel %vm3312, %v8815, %v9111
      %v9657 = vsel %vm3312, %v8728, %v9113
      %v9658 = vsel %vm3312, %v8816, %v9115
      %v9659 = vsel %vm3312, %v8731, %v9117
      %v9660 = vsel %vm3312, %v8817, %v9119
      %v9661 = vsel %vm3312, %v8734, %v9121
      %v9662 = vsel %vm3312, %v8818, %v9123
      %v9663 = vsel %vm3312, %v8737, %v9125
      %v9664 = vsel %vm3312, %v8819, %v9127
      %v9665 = vsel %vm3312, %v8740, %v9129
      %v9666 = vsel %vm3312, %v8820, %v9131
      %v9667 = vsel %vm3312, %v8743, %v9133
      %v9668 = vsel %vm3312, %v8821, %v9135
      %v9669 = vsel %vm3312, %v8746, %v9137
      %v9670 = vsel %vm3312, %v8822, %v9139
      %v9671 = vsel %vm3312, %v8749, %v9141
      %v9672 = vsel %vm3312, %v8823, %v9143
      %v9673 = vsel %vm3312, %v8752, %v9145
      %v9674 = vsel %vm3312, %v8824, %v9147
      %v9675 = vsel %vm3312, %v8755, %v9149
      %v9676 = vsel %vm3312, %v8825, %v9151
      %v9677 = vsel %vm3312, %v8758, %v9153
      %v9678 = vsel %vm3312, %v8826, %v9155
      %v9679 = vsel %vm3312, %v8761, %v9157
      %v9680 = vsel %vm3345, %v9650, %v9189
      %v9681 = vsel %vm3345, %v9651, %v9191
      %v9682 = vsel %vm3345, %v9652, %v9193
      %v9683 = vsel %vm3345, %v9653, %v9195
      %v9684 = vsel %vm3345, %v9654, %v9197
      %v9685 = vsel %vm3345, %v9655, %v9199
      %v9686 = vsel %vm3345, %v9656, %v9201
      %v9687 = vsel %vm3345, %v9657, %v9203
      %v9688 = vsel %vm3345, %v9658, %v9205
      %v9689 = vsel %vm3345, %v9659, %v9207
      %v9690 = vsel %vm3345, %v9660, %v9209
      %v9691 = vsel %vm3345, %v9661, %v9211
      %v9692 = vsel %vm3345, %v9662, %v9213
      %v9693 = vsel %vm3345, %v9663, %v9215
      %v9694 = vsel %vm3345, %v9664, %v9217
      %v9695 = vsel %vm3345, %v9665, %v9219
      %v9696 = vsel %vm3345, %v9666, %v9221
      %v9697 = vsel %vm3345, %v9667, %v9223
      %v9698 = vsel %vm3345, %v9668, %v9225
      %v9699 = vsel %vm3345, %v9669, %v9227
      %v9700 = vsel %vm3345, %v9670, %v9229
      %v9701 = vsel %vm3345, %v9671, %v9231
      %v9702 = vsel %vm3345, %v9672, %v9233
      %v9703 = vsel %vm3345, %v9673, %v9235
      %v9704 = vsel %vm3345, %v9674, %v9237
      %v9705 = vsel %vm3345, %v9675, %v9239
      %v9706 = vsel %vm3345, %v9676, %v9241
      %v9707 = vsel %vm3345, %v9677, %v9243
      %v9708 = vsel %vm3345, %v9678, %v9245
      %v9709 = vsel %vm3345, %v9679, %v9247
      %v9710 = vsel %vm3378, %v3346, %v9279
      %v9711 = vsel %vm3378, %v3347, %v9281
      %v9712 = vsel %vm3378, %v9680, %v9283
      %v9713 = vsel %vm3378, %v9681, %v9285
      %v9714 = vsel %vm3378, %v9682, %v9287
      %v9715 = vsel %vm3378, %v9683, %v9289
      %v9716 = vsel %vm3378, %v9684, %v9291
      %v9717 = vsel %vm3378, %v9685, %v9293
      %v9718 = vsel %vm3378, %v9686, %v9295
      %v9719 = vsel %vm3378, %v9687, %v9297
      %v9720 = vsel %vm3378, %v9688, %v9299
      %v9721 = vsel %vm3378, %v9689, %v9301
      %v9722 = vsel %vm3378, %v9690, %v9303
      %v9723 = vsel %vm3378, %v9691, %v9305
      %v9724 = vsel %vm3378, %v9692, %v9307
      %v9725 = vsel %vm3378, %v9693, %v9309
      %v9726 = vsel %vm3378, %v9694, %v9311
      %v9727 = vsel %vm3378, %v9695, %v9313
      %v9728 = vsel %vm3378, %v9696, %v9315
      %v9729 = vsel %vm3378, %v9697, %v9317
      %v9730 = vsel %vm3378, %v9698, %v9319
      %v9731 = vsel %vm3378, %v9699, %v9321
      %v9732 = vsel %vm3378, %v9700, %v9323
      %v9733 = vsel %vm3378, %v9701, %v9325
      %v9734 = vsel %vm3378, %v9702, %v9327
      %v9735 = vsel %vm3378, %v9703, %v9329
      %v9736 = vsel %vm3378, %v9704, %v9331
      %v9737 = vsel %vm3378, %v9705, %v9333
      %v9738 = vsel %vm3378, %v9706, %v9335
      %v9739 = vsel %vm3378, %v9707, %v9337
      %v9740 = vsel %vm3378, %v9708, %v9339
      %v9741 = vsel %vm3378, %v9709, %v9341
      %v9742 = vsel %vm3312, %v8876, %v9375
      %v9743 = vsel %vm3312, %v8878, %v9377
      %v9744 = vsel %vm3312, %v8881, %v9379
      %v9745 = vsel %vm3312, %v8883, %v9381
      %v9746 = vsel %vm3312, %v8886, %v9383
      %v9747 = vsel %vm3312, %v8888, %v9385
      %v9748 = vsel %vm3312, %v8891, %v9387
      %v9749 = vsel %vm3312, %v8893, %v9389
      %v9750 = vsel %vm3312, %v8896, %v9391
      %v9751 = vsel %vm3312, %v8898, %v9393
      %v9752 = vsel %vm3312, %v8901, %v9395
      %v9753 = vsel %vm3312, %v8903, %v9397
      %v9754 = vsel %vm3312, %v8906, %v9399
      %v9755 = vsel %vm3312, %v8908, %v9401
      %v9756 = vsel %vm3312, %v8911, %v9403
      %v9757 = vsel %vm3312, %v8913, %v9405
      %v9758 = vsel %vm3312, %v8916, %v9407
      %v9759 = vsel %vm3312, %v8918, %v9409
      %v9760 = vsel %vm3312, %v8921, %v9411
      %v9761 = vsel %vm3312, %v8923, %v9413
      %v9762 = vsel %vm3312, %v8926, %v9415
      %v9763 = vsel %vm3312, %v8928, %v9417
      %v9764 = vsel %vm3312, %v8931, %v9419
      %v9765 = vsel %vm3312, %v8933, %v9421
      %v9766 = vsel %vm3312, %v8936, %v9423
      %v9767 = vsel %vm3312, %v8938, %v9425
      %v9768 = vsel %vm3312, %v8941, %v9427
      %v9769 = vsel %vm3312, %v8943, %v9429
      %v9770 = vsel %vm3312, %v8946, %v9431
      %v9771 = vsel %vm3312, %v8948, %v9433
      %v9772 = vsel %vm3312, %v9028, %v9435
      %v9773 = vsel %vm3312, %v9030, %v9437
      %v9774 = vsel %vm3345, %v9742, %v9471
      %v9775 = vsel %vm3345, %v9743, %v9473
      %v9776 = vsel %vm3345, %v9744, %v9475
      %v9777 = vsel %vm3345, %v9745, %v9477
      %v9778 = vsel %vm3345, %v9746, %v9479
      %v9779 = vsel %vm3345, %v9747, %v9481
      %v9780 = vsel %vm3345, %v9748, %v9483
      %v9781 = vsel %vm3345, %v9749, %v9485
      %v9782 = vsel %vm3345, %v9750, %v9487
      %v9783 = vsel %vm3345, %v9751, %v9489
      %v9784 = vsel %vm3345, %v9752, %v9491
      %v9785 = vsel %vm3345, %v9753, %v9493
      %v9786 = vsel %vm3345, %v9754, %v9495
      %v9787 = vsel %vm3345, %v9755, %v9497
      %v9788 = vsel %vm3345, %v9756, %v9499
      %v9789 = vsel %vm3345, %v9757, %v9501
      %v9790 = vsel %vm3345, %v9758, %v9503
      %v9791 = vsel %vm3345, %v9759, %v9505
      %v9792 = vsel %vm3345, %v9760, %v9507
      %v9793 = vsel %vm3345, %v9761, %v9509
      %v9794 = vsel %vm3345, %v9762, %v9511
      %v9795 = vsel %vm3345, %v9763, %v9513
      %v9796 = vsel %vm3345, %v9764, %v9515
      %v9797 = vsel %vm3345, %v9765, %v9517
      %v9798 = vsel %vm3345, %v9766, %v9519
      %v9799 = vsel %vm3345, %v9767, %v9521
      %v9800 = vsel %vm3345, %v9768, %v9523
      %v9801 = vsel %vm3345, %v9769, %v9525
      %v9802 = vsel %vm3345, %v9770, %v9527
      %v9803 = vsel %vm3345, %v9771, %v9529
      %v9804 = vsel %vm3345, %v9772, %v3181
      %v9805 = vsel %vm3345, %v9773, %v3183
      %v9806 = vsel %vm3378, %v9774, %v9561
      %v9807 = vsel %vm3378, %v9775, %v9563
      %v9808 = vsel %vm3378, %v9776, %v9565
      %v9809 = vsel %vm3378, %v9777, %v9567
      %v9810 = vsel %vm3378, %v9778, %v9569
      %v9811 = vsel %vm3378, %v9779, %v9571
      %v9812 = vsel %vm3378, %v9780, %v9573
      %v9813 = vsel %vm3378, %v9781, %v9575
      %v9814 = vsel %vm3378, %v9782, %v9577
      %v9815 = vsel %vm3378, %v9783, %v9579
      %v9816 = vsel %vm3378, %v9784, %v9581
      %v9817 = vsel %vm3378, %v9785, %v9583
      %v9818 = vsel %vm3378, %v9786, %v9585
      %v9819 = vsel %vm3378, %v9787, %v9587
      %v9820 = vsel %vm3378, %v9788, %v9589
      %v9821 = vsel %vm3378, %v9789, %v9591
      %v9822 = vsel %vm3378, %v9790, %v9593
      %v9823 = vsel %vm3378, %v9791, %v9595
      %v9824 = vsel %vm3378, %v9792, %v9597
      %v9825 = vsel %vm3378, %v9793, %v9599
      %v9826 = vsel %vm3378, %v9794, %v9601
      %v9827 = vsel %vm3378, %v9795, %v9603
      %v9828 = vsel %vm3378, %v9796, %v9605
      %v9829 = vsel %vm3378, %v9797, %v9607
      %v9830 = vsel %vm3378, %v9798, %v9609
      %v9831 = vsel %vm3378, %v9799, %v9611
      %v9832 = vsel %vm3378, %v9800, %v9613
      %v9833 = vsel %vm3378, %v9801, %v9615
      %v9834 = vsel %vm3378, %v9802, %v9617
      %v9835 = vsel %vm3378, %v9803, %v9619
      %v9836 = vsel %vm3378, %v9804, %v3277
      %v9837 = vsel %vm3378, %v9805, %v3279
      %v9838 = vpack.c.bf16 %v9711, %v9710
      %v9839 = vpack.c.bf16 %v9807, %v9806
      %v9840 = vpack.c.bf16 %v8958, %v8956
      %v9841 = vpack.c.bf16 %v9713, %v9712
      %v9842 = vpack.c.bf16 %v9809, %v9808
      %v9843 = vpack.c.bf16 %v8963, %v8961
      %v9844 = vpack.c.bf16 %v9715, %v9714
      %v9845 = vpack.c.bf16 %v9811, %v9810
      %v9846 = vpack.c.bf16 %v8968, %v8966
      %v9847 = vpack.c.bf16 %v9717, %v9716
      %v9848 = vpack.c.bf16 %v9813, %v9812
      %v9849 = vpack.c.bf16 %v8973, %v8971
      %v9850 = vpack.c.bf16 %v9719, %v9718
      %v9851 = vpack.c.bf16 %v9815, %v9814
      %v9852 = vpack.c.bf16 %v8978, %v8976
      %v9853 = vpack.c.bf16 %v9721, %v9720
      %v9854 = vpack.c.bf16 %v9817, %v9816
      %v9855 = vpack.c.bf16 %v8983, %v8981
      %v9856 = vpack.c.bf16 %v9723, %v9722
      %v9857 = vpack.c.bf16 %v9819, %v9818
      %v9858 = vpack.c.bf16 %v8988, %v8986
      %v9859 = vpack.c.bf16 %v9725, %v9724
      %v9860 = vpack.c.bf16 %v9821, %v9820
      %v9861 = vpack.c.bf16 %v8993, %v8991
      %v9862 = vpack.c.bf16 %v9727, %v9726
      %v9863 = vpack.c.bf16 %v9823, %v9822
      %v9864 = vpack.c.bf16 %v8998, %v8996
      %v9865 = vpack.c.bf16 %v9729, %v9728
      %v9866 = vpack.c.bf16 %v9825, %v9824
      %v9867 = vpack.c.bf16 %v9003, %v9001
      %v9868 = vpack.c.bf16 %v9731, %v9730
      %v9869 = vpack.c.bf16 %v9827, %v9826
      %v9870 = vpack.c.bf16 %v9008, %v9006
      %v9871 = vpack.c.bf16 %v9733, %v9732
      %v9872 = vpack.c.bf16 %v9829, %v9828
      %v9873 = vpack.c.bf16 %v9013, %v9011
      %v9874 = vpack.c.bf16 %v9735, %v9734
      %v9875 = vpack.c.bf16 %v9831, %v9830
      %v9876 = vpack.c.bf16 %v9018, %v9016
      %v9877 = vpack.c.bf16 %v9737, %v9736
      %v9878 = vpack.c.bf16 %v9833, %v9832
      %v9879 = vpack.c.bf16 %v9023, %v9021
      %v9880 = vpack.c.bf16 %v9739, %v9738
      %v9881 = vpack.c.bf16 %v9835, %v9834
      %v9882 = vpack.c.bf16 %v9067, %v9065
      %v9883 = vpack.c.bf16 %v9741, %v9740
      %v9884 = vpack.c.bf16 %v9837, %v9836
      %v9886 = vlaneseq
      %v9887 = vshrl.u32 %v9886, 7
      %v9888 = vsub.s32 0, %v9887
      %v9889 = vrot.slane %v8172, %v9888
      %v9927 = vunpack.c.l.b16 %v8136
      %v9928 = vunpack.c.l.b16 %v8137
      %v9929 = vunpack.c.l.b16 %v8138
      %v9930 = vunpack.c.l.b16 %v8139
      %v9931 = vunpack.c.l.b16 %v8140
      %v9932 = vunpack.c.l.b16 %v8141
      %v9933 = vunpack.c.l.b16 %v8142
      %v9934 = vunpack.c.l.b16 %v8143
      %v9935 = vunpack.c.l.b16 %v8144
      %v9936 = vunpack.c.l.b16 %v8145
      %v9937 = vunpack.c.l.b16 %v8146
      %v9938 = vunpack.c.l.b16 %v8147
      %v9939 = vunpack.c.l.b16 %v8148
      %v9940 = vunpack.c.l.b16 %v8149
      %v9941 = vunpack.c.l.b16 %v8150
      %v9942 = vunpack.c.l.b16 %v8151
      %v9943 = vunpack.c.l.b16 %v8152
      %v9944 = vunpack.c.l.b16 %v8153
      %v9945 = vunpack.c.l.b16 %v8154
      %v9946 = vunpack.c.l.b16 %v8155
      %v9947 = vunpack.c.l.b16 %v8156
      %v9948 = vunpack.c.l.b16 %v8157
      %v9949 = vunpack.c.l.b16 %v8158
      %v9950 = vunpack.c.l.b16 %v8159
      %v9951 = vunpack.c.l.b16 %v8160
      %v9952 = vunpack.c.l.b16 %v8161
      %v9953 = vunpack.c.l.b16 %v8162
      %v9954 = vunpack.c.l.b16 %v8163
      %v9955 = vunpack.c.l.b16 %v8164
      %v9956 = vunpack.c.l.b16 %v8165
      %v9957 = vunpack.c.l.b16 %v8166
      %v9958 = vunpack.c.l.b16 %v8167
      %v9959 = vunpack.c.l.b16 %v8168
      %v9960 = vunpack.c.l.b16 %v8169
      %v9961 = vunpack.c.l.b16 %v8170
      %v9962 = vunpack.c.l.b16 %v8171
      %v9963 = vpack.c.b16 %v9928, %v9927
      %v9964 = vpack.c.b16 %v9930, %v9929
      %v9965 = vpack.c.b16 %v9932, %v9931
      %v9966 = vpack.c.b16 %v9934, %v9933
      %v9967 = vpack.c.b16 %v9936, %v9935
      %v9968 = vpack.c.b16 %v9938, %v9937
      %v9969 = vpack.c.b16 %v9940, %v9939
      %v9970 = vpack.c.b16 %v9942, %v9941
      %v9971 = vpack.c.b16 %v9944, %v9943
      %v9972 = vpack.c.b16 %v9946, %v9945
      %v9973 = vpack.c.b16 %v9948, %v9947
      %v9974 = vpack.c.b16 %v9950, %v9949
      %v9975 = vpack.c.b16 %v9952, %v9951
      %v9976 = vpack.c.b16 %v9954, %v9953
      %v9977 = vpack.c.b16 %v9956, %v9955
      %v9978 = vpack.c.b16 %v9958, %v9957
      %v9979 = vpack.c.b16 %v9960, %v9959
      %v9980 = vpack.c.b16 %v9962, %v9961
      %v10000 = vsel %vm3312, %v9840, 0
      %v10003 = vsel %vm3312, %v9843, 0
      %v10006 = vsel %vm3312, %v9846, 0
      %v10009 = vsel %vm3312, %v9849, 0
      %v10012 = vsel %vm3312, %v9852, 0
      %v10015 = vsel %vm3312, %v9855, 0
      %v10018 = vsel %vm3312, %v9858, 0
      %v10021 = vsel %vm3312, %v9861, 0
      %v10024 = vsel %vm3312, %v9864, 0
      %v10027 = vsel %vm3312, %v9867, 0
      %v10030 = vsel %vm3312, %v9870, 0
      %v10033 = vsel %vm3312, %v9873, 0
      %v10036 = vsel %vm3312, %v9876, 0
      %v10039 = vsel %vm3312, %v9879, 0
      %v10042 = vsel %vm3312, %v9882, 0
      %10044 = vmatprep.subr.bf16.mxu0 0
      %10045 = vmatpush1.bf16.msra.mxu0 %v9963
      %10046 = vmatprep.subr.bf16.mxu0 0
      %10047 = vmatpush1.bf16.msra.mxu0 %v9964
      %10048 = vmatprep.subr.bf16.mxu0 0
      %10049 = vmatpush1.bf16.msra.mxu0 %v9965
      %10050 = vmatprep.subr.bf16.mxu0 0
      %10051 = vmatpush1.bf16.msra.mxu0 %v9966
      %10052 = vmatprep.subr.bf16.mxu0 0
      %10053 = vmatpush1.bf16.msra.mxu0 %v9967
      %10054 = vmatprep.subr.bf16.mxu0 0
      %10055 = vmatpush1.bf16.msra.mxu0 %v9968
      %10056 = vmatprep.subr.bf16.mxu0 0
      %10057 = vmatpush1.bf16.msra.mxu0 %v9969
      %10058 = vmatprep.subr.bf16.mxu0 0
      %10059 = vmatpush1.bf16.msra.mxu0 %v9970
      %10060 = vmatprep.subr.bf16.mxu0 0
      %10061 = vmatpush1.bf16.msra.mxu0 %v9971
      %10062 = vmatprep.subr.bf16.mxu0 0
      %10063 = vmatpush1.bf16.msra.mxu0 %v9972
      %10064 = vmatprep.subr.bf16.mxu0 0
      %10065 = vmatpush1.bf16.msra.mxu0 %v9973
      %10066 = vmatprep.subr.bf16.mxu0 0
      %10067 = vmatpush1.bf16.msra.mxu0 %v9974
      %10068 = vmatprep.subr.bf16.mxu0 0
      %10069 = vmatpush1.bf16.msra.mxu0 %v9975
      %10070 = vmatprep.subr.bf16.mxu0 0
      %10071 = vmatpush1.bf16.msra.mxu0 %v9976
      %10072 = vmatprep.subr.bf16.mxu0 0
      %10073 = vmatpush1.bf16.msra.mxu0 %v9977
      %10074 = vmatprep.subr.bf16.mxu0 0
      %10075 = vmatpush1.bf16.msra.mxu0 %v9978
      %10076 = vmatprep.mubr.bf16.mxu0 %v9839
      %10077 = vmatmul.mubr.bf16.gmra.mrb[0].mxu0 %v9838
      %v10078 = vpop.f32.mrb[0].mxu0
      %v10079 = vadd.f32 %v9889, %v10078
      %v10080 = vpop.f32.mrb[0].mxu0
      %v10081 = vpop.f32.mrb[0].mxu0
      %v10082 = vadd.f32 %v9889, %v10081
      %v10083 = vpop.f32.mrb[0].mxu0
      %10084 = vmatprep.mubr.bf16.mxu0 %v9842
      %10085 = vmatmul.mubr.bf16.gmra.mrb[0].mxu0 %v9841
      %v10086 = vpop.f32.mrb[0].mxu0
      %v10087 = vadd.f32 %v9889, %v10086
      %v10088 = vpop.f32.mrb[0].mxu0
      %v10089 = vpop.f32.mrb[0].mxu0
      %v10090 = vadd.f32 %v9889, %v10089
      %v10091 = vpop.f32.mrb[0].mxu0
      %10092 = vmatprep.mubr.bf16.mxu0 %v9845
      %10093 = vmatmul.mubr.bf16.gmra.mrb[0].mxu0 %v9844
      %v10094 = vpop.f32.mrb[0].mxu0
      %v10095 = vadd.f32 %v9889, %v10094
      %v10096 = vpop.f32.mrb[0].mxu0
      %v10097 = vpop.f32.mrb[0].mxu0
      %v10098 = vadd.f32 %v9889, %v10097
      %v10099 = vpop.f32.mrb[0].mxu0
      %10100 = vmatprep.mubr.bf16.mxu0 %v9848
      %10101 = vmatmul.mubr.bf16.gmra.mrb[0].mxu0 %v9847
      %v10102 = vpop.f32.mrb[0].mxu0
      %v10103 = vadd.f32 %v9889, %v10102
      %v10104 = vpop.f32.mrb[0].mxu0
      %v10105 = vpop.f32.mrb[0].mxu0
      %v10106 = vadd.f32 %v9889, %v10105
      %v10107 = vpop.f32.mrb[0].mxu0
      %10108 = vmatprep.mubr.bf16.mxu0 %v9851
      %10109 = vmatmul.mubr.bf16.gmra.mrb[0].mxu0 %v9850
      %v10110 = vpop.f32.mrb[0].mxu0
      %v10111 = vadd.f32 %v9889, %v10110
      %v10112 = vpop.f32.mrb[0].mxu0
      %v10113 = vpop.f32.mrb[0].mxu0
      %v10114 = vadd.f32 %v9889, %v10113
      %v10115 = vpop.f32.mrb[0].mxu0
      %10116 = vmatprep.mubr.bf16.mxu0 %v9854
      %10117 = vmatmul.mubr.bf16.gmra.mrb[0].mxu0 %v9853
      %v10118 = vpop.f32.mrb[0].mxu0
      %v10119 = vadd.f32 %v9889, %v10118
      %v10120 = vpop.f32.mrb[0].mxu0
      %v10121 = vpop.f32.mrb[0].mxu0
      %v10122 = vadd.f32 %v9889, %v10121
      %v10123 = vpop.f32.mrb[0].mxu0
      %10124 = vmatprep.mubr.bf16.mxu0 %v9857
      %10125 = vmatmul.mubr.bf16.gmra.mrb[0].mxu0 %v9856
      %v10126 = vpop.f32.mrb[0].mxu0
      %v10127 = vadd.f32 %v9889, %v10126
      %v10128 = vpop.f32.mrb[0].mxu0
      %v10129 = vpop.f32.mrb[0].mxu0
      %v10130 = vadd.f32 %v9889, %v10129
      %v10131 = vpop.f32.mrb[0].mxu0
      %10132 = vmatprep.mubr.bf16.mxu0 %v9860
      %10133 = vmatmul.mubr.bf16.gmra.mrb[0].mxu0 %v9859
      %v10134 = vpop.f32.mrb[0].mxu0
      %v10135 = vadd.f32 %v9889, %v10134
      %v10136 = vpop.f32.mrb[0].mxu0
      %v10137 = vpop.f32.mrb[0].mxu0
      %v10138 = vadd.f32 %v9889, %v10137
      %v10139 = vpop.f32.mrb[0].mxu0
      %10140 = vmatprep.mubr.bf16.mxu0 %v9863
      %10141 = vmatmul.mubr.bf16.gmra.mrb[0].mxu0 %v9862
      %v10142 = vpop.f32.mrb[0].mxu0
      %v10143 = vadd.f32 %v9889, %v10142
      %v10144 = vpop.f32.mrb[0].mxu0
      %v10145 = vpop.f32.mrb[0].mxu0
      %v10146 = vadd.f32 %v9889, %v10145
      %v10147 = vpop.f32.mrb[0].mxu0
      %10148 = vmatprep.mubr.bf16.mxu0 %v9866
      %10149 = vmatmul.mubr.bf16.gmra.mrb[0].mxu0 %v9865
      %v10150 = vpop.f32.mrb[0].mxu0
      %v10151 = vadd.f32 %v9889, %v10150
      %v10152 = vpop.f32.mrb[0].mxu0
      %v10153 = vpop.f32.mrb[0].mxu0
      %v10154 = vadd.f32 %v9889, %v10153
      %v10155 = vpop.f32.mrb[0].mxu0
      %10156 = vmatprep.mubr.bf16.mxu0 %v9869
      %10157 = vmatmul.mubr.bf16.gmra.mrb[0].mxu0 %v9868
      %v10158 = vpop.f32.mrb[0].mxu0
      %v10159 = vadd.f32 %v9889, %v10158
      %v10160 = vpop.f32.mrb[0].mxu0
      %v10161 = vpop.f32.mrb[0].mxu0
      %v10162 = vadd.f32 %v9889, %v10161
      %v10163 = vpop.f32.mrb[0].mxu0
      %10164 = vmatprep.mubr.bf16.mxu0 %v9872
      %10165 = vmatmul.mubr.bf16.gmra.mrb[0].mxu0 %v9871
      %v10166 = vpop.f32.mrb[0].mxu0
      %v10167 = vadd.f32 %v9889, %v10166
      %v10168 = vpop.f32.mrb[0].mxu0
      %v10169 = vpop.f32.mrb[0].mxu0
      %v10170 = vadd.f32 %v9889, %v10169
      %v10171 = vpop.f32.mrb[0].mxu0
      %10172 = vmatprep.mubr.bf16.mxu0 %v9875
      %10173 = vmatmul.mubr.bf16.gmra.mrb[0].mxu0 %v9874
      %v10174 = vpop.f32.mrb[0].mxu0
      %v10175 = vadd.f32 %v9889, %v10174
      %v10176 = vpop.f32.mrb[0].mxu0
      %v10177 = vpop.f32.mrb[0].mxu0
      %v10178 = vadd.f32 %v9889, %v10177
      %v10179 = vpop.f32.mrb[0].mxu0
      %10180 = vmatprep.mubr.bf16.mxu0 %v9878
      %10181 = vmatmul.mubr.bf16.gmra.mrb[0].mxu0 %v9877
      %v10182 = vpop.f32.mrb[0].mxu0
      %v10183 = vadd.f32 %v9889, %v10182
      %v10184 = vpop.f32.mrb[0].mxu0
      %v10185 = vpop.f32.mrb[0].mxu0
      %v10186 = vadd.f32 %v9889, %v10185
      %v10187 = vpop.f32.mrb[0].mxu0
      %10188 = vmatprep.mubr.bf16.mxu0 %v9881
      %10189 = vmatmul.mubr.bf16.gmra.mrb[0].mxu0 %v9880
      %v10190 = vpop.f32.mrb[0].mxu0
      %v10191 = vadd.f32 %v9889, %v10190
      %v10192 = vpop.f32.mrb[0].mxu0
      %v10193 = vpop.f32.mrb[0].mxu0
      %v10194 = vadd.f32 %v9889, %v10193
      %v10195 = vpop.f32.mrb[0].mxu0
      %10196 = vmatprep.mubr.bf16.mxu0 %v9884
      %10197 = vmatmul.mubr.bf16.gmra.mrb[0].mxu0 %v9883
      %v10198 = vpop.f32.mrb[0].mxu0
      %v10199 = vadd.f32 %v9889, %v10198
      %v10200 = vpop.f32.mrb[0].mxu0
      %v10201 = vpop.f32.mrb[0].mxu0
      %v10202 = vadd.f32 %v9889, %v10201
      %v10203 = vpop.f32.mrb[0].mxu0
      %10204 = vdwg.mxu0
      %10205 = vmatprep.subr.bf16.mxu0 0
      %10206 = vmatpush1.bf16.msra.mxu0 %v9979
      %10207 = vmatprep.subr.bf16.mxu0 0
      %10208 = vmatpush1.bf16.msra.mxu0 %v9980
      %10209 = vmatprep.subr.bf16.mxu0 0
      %10210 = vmatpush1.bf16.msra.mxu0 0
      %10211 = vmatprep.subr.bf16.mxu0 0
      %10212 = vmatpush1.bf16.msra.mxu0 0
      %10213 = vmatprep.subr.bf16.mxu0 0
      %10214 = vmatpush1.bf16.msra.mxu0 0
      %10215 = vmatprep.subr.bf16.mxu0 0
      %10216 = vmatpush1.bf16.msra.mxu0 0
      %10217 = vmatprep.subr.bf16.mxu0 0
      %10218 = vmatpush1.bf16.msra.mxu0 0
      %10219 = vmatprep.subr.bf16.mxu0 0
      %10220 = vmatpush1.bf16.msra.mxu0 0
      %10221 = vmatprep.subr.bf16.mxu0 0
      %10222 = vmatpush1.bf16.msra.mxu0 0
      %10223 = vmatprep.subr.bf16.mxu0 0
      %10224 = vmatpush1.bf16.msra.mxu0 0
      %10225 = vmatprep.subr.bf16.mxu0 0
      %10226 = vmatpush1.bf16.msra.mxu0 0
      %10227 = vmatprep.subr.bf16.mxu0 0
      %10228 = vmatpush1.bf16.msra.mxu0 0
      %10229 = vmatprep.subr.bf16.mxu0 0
      %10230 = vmatpush1.bf16.msra.mxu0 0
      %10231 = vmatprep.subr.bf16.mxu0 0
      %10232 = vmatpush1.bf16.msra.mxu0 0
      %10233 = vmatprep.subr.bf16.mxu0 0
      %10234 = vmatpush1.bf16.msra.mxu0 0
      %10235 = vmatprep.subr.bf16.mxu0 0
      %10236 = vmatpush1.bf16.msra.mxu0 0
      %10237 = vmatprep.mubr.bf16.mxu0 0
      %10238 = vmatmul.mubr.bf16.gmra.mrb[0].mxu0 %v10000
      %v10239 = vpop.f32.mrb[0].mxu0
      %v10240 = vadd.f32 %v10079, %v10239
      %v10241 = vpop.f32.mrb[0].mxu0
      %v10242 = vpop.f32.mrb[0].mxu0
      %v10243 = vadd.f32 %v10082, %v10242
      %v10244 = vpop.f32.mrb[0].mxu0
      %10245 = vmatprep.mubr.bf16.mxu0 0
      %10246 = vmatmul.mubr.bf16.gmra.mrb[0].mxu0 %v10003
      %v10247 = vpop.f32.mrb[0].mxu0
      %v10248 = vadd.f32 %v10087, %v10247
      %v10249 = vpop.f32.mrb[0].mxu0
      %v10250 = vpop.f32.mrb[0].mxu0
      %v10251 = vadd.f32 %v10090, %v10250
      %v10252 = vpop.f32.mrb[0].mxu0
      %10253 = vmatprep.mubr.bf16.mxu0 0
      %10254 = vmatmul.mubr.bf16.gmra.mrb[0].mxu0 %v10006
      %v10255 = vpop.f32.mrb[0].mxu0
      %v10256 = vadd.f32 %v10095, %v10255
      %v10257 = vpop.f32.mrb[0].mxu0
      %v10258 = vpop.f32.mrb[0].mxu0
      %v10259 = vadd.f32 %v10098, %v10258
      %v10260 = vpop.f32.mrb[0].mxu0
      %10261 = vmatprep.mubr.bf16.mxu0 0
      %10262 = vmatmul.mubr.bf16.gmra.mrb[0].mxu0 %v10009
      %v10263 = vpop.f32.mrb[0].mxu0
      %v10264 = vadd.f32 %v10103, %v10263
      %v10265 = vpop.f32.mrb[0].mxu0
      %v10266 = vpop.f32.mrb[0].mxu0
      %v10267 = vadd.f32 %v10106, %v10266
      %v10268 = vpop.f32.mrb[0].mxu0
      %10269 = vmatprep.mubr.bf16.mxu0 0
      %10270 = vmatmul.mubr.bf16.gmra.mrb[0].mxu0 %v10012
      %v10271 = vpop.f32.mrb[0].mxu0
      %v10272 = vadd.f32 %v10111, %v10271
      %v10273 = vpop.f32.mrb[0].mxu0
      %v10274 = vpop.f32.mrb[0].mxu0
      %v10275 = vadd.f32 %v10114, %v10274
      %v10276 = vpop.f32.mrb[0].mxu0
      %10277 = vmatprep.mubr.bf16.mxu0 0
      %10278 = vmatmul.mubr.bf16.gmra.mrb[0].mxu0 %v10015
      %v10279 = vpop.f32.mrb[0].mxu0
      %v10280 = vadd.f32 %v10119, %v10279
      %v10281 = vpop.f32.mrb[0].mxu0
      %v10282 = vpop.f32.mrb[0].mxu0
      %v10283 = vadd.f32 %v10122, %v10282
      %v10284 = vpop.f32.mrb[0].mxu0
      %10285 = vmatprep.mubr.bf16.mxu0 0
      %10286 = vmatmul.mubr.bf16.gmra.mrb[0].mxu0 %v10018
      %v10287 = vpop.f32.mrb[0].mxu0
      %v10288 = vadd.f32 %v10127, %v10287
      %v10289 = vpop.f32.mrb[0].mxu0
      %v10290 = vpop.f32.mrb[0].mxu0
      %v10291 = vadd.f32 %v10130, %v10290
      %v10292 = vpop.f32.mrb[0].mxu0
      %10293 = vmatprep.mubr.bf16.mxu0 0
      %10294 = vmatmul.mubr.bf16.gmra.mrb[0].mxu0 %v10021
      %v10295 = vpop.f32.mrb[0].mxu0
      %v10296 = vadd.f32 %v10135, %v10295
      %v10297 = vpop.f32.mrb[0].mxu0
      %v10298 = vpop.f32.mrb[0].mxu0
      %v10299 = vadd.f32 %v10138, %v10298
      %v10300 = vpop.f32.mrb[0].mxu0
      %10301 = vmatprep.mubr.bf16.mxu0 0
      %10302 = vmatmul.mubr.bf16.gmra.mrb[0].mxu0 %v10024
      %v10303 = vpop.f32.mrb[0].mxu0
      %v10304 = vadd.f32 %v10143, %v10303
      %v10305 = vpop.f32.mrb[0].mxu0
      %v10306 = vpop.f32.mrb[0].mxu0
      %v10307 = vadd.f32 %v10146, %v10306
      %v10308 = vpop.f32.mrb[0].mxu0
      %10309 = vmatprep.mubr.bf16.mxu0 0
      %10310 = vmatmul.mubr.bf16.gmra.mrb[0].mxu0 %v10027
      %v10311 = vpop.f32.mrb[0].mxu0
      %v10312 = vadd.f32 %v10151, %v10311
      %v10313 = vpop.f32.mrb[0].mxu0
      %v10314 = vpop.f32.mrb[0].mxu0
      %v10315 = vadd.f32 %v10154, %v10314
      %v10316 = vpop.f32.mrb[0].mxu0
      %10317 = vmatprep.mubr.bf16.mxu0 0
      %10318 = vmatmul.mubr.bf16.gmra.mrb[0].mxu0 %v10030
      %v10319 = vpop.f32.mrb[0].mxu0
      %v10320 = vadd.f32 %v10159, %v10319
      %v10321 = vpop.f32.mrb[0].mxu0
      %v10322 = vpop.f32.mrb[0].mxu0
      %v10323 = vadd.f32 %v10162, %v10322
      %v10324 = vpop.f32.mrb[0].mxu0
      %10325 = vmatprep.mubr.bf16.mxu0 0
      %10326 = vmatmul.mubr.bf16.gmra.mrb[0].mxu0 %v10033
      %v10327 = vpop.f32.mrb[0].mxu0
      %v10328 = vadd.f32 %v10167, %v10327
      %v10329 = vpop.f32.mrb[0].mxu0
      %v10330 = vpop.f32.mrb[0].mxu0
      %v10331 = vadd.f32 %v10170, %v10330
      %v10332 = vpop.f32.mrb[0].mxu0
      %10333 = vmatprep.mubr.bf16.mxu0 0
      %10334 = vmatmul.mubr.bf16.gmra.mrb[0].mxu0 %v10036
      %v10335 = vpop.f32.mrb[0].mxu0
      %v10336 = vadd.f32 %v10175, %v10335
      %v10337 = vpop.f32.mrb[0].mxu0
      %v10338 = vpop.f32.mrb[0].mxu0
      %v10339 = vadd.f32 %v10178, %v10338
      %v10340 = vpop.f32.mrb[0].mxu0
      %10341 = vmatprep.mubr.bf16.mxu0 0
      %10342 = vmatmul.mubr.bf16.gmra.mrb[0].mxu0 %v10039
      %v10343 = vpop.f32.mrb[0].mxu0
      %v10344 = vadd.f32 %v10183, %v10343
      %v10345 = vpop.f32.mrb[0].mxu0
      %v10346 = vpop.f32.mrb[0].mxu0
      %v10347 = vadd.f32 %v10186, %v10346
      %v10348 = vpop.f32.mrb[0].mxu0
      %10349 = vmatprep.mubr.bf16.mxu0 0
      %10350 = vmatmul.mubr.bf16.gmra.mrb[0].mxu0 %v10042
      %v10351 = vpop.f32.mrb[0].mxu0
      %v10352 = vadd.f32 %v10191, %v10351
      %v10353 = vpop.f32.mrb[0].mxu0
      %v10354 = vpop.f32.mrb[0].mxu0
      %v10355 = vadd.f32 %v10194, %v10354
      %v10356 = vpop.f32.mrb[0].mxu0
      %10357 = vmatprep.mubr.bf16.mxu0 0
      %10358 = vmatmul.mubr.bf16.gmra.mrb[0].mxu0 %v3715
      %v10359 = vpop.f32.mrb[0].mxu0
      %v10360 = vadd.f32 %v10199, %v10359
      %v10361 = vpop.f32.mrb[0].mxu0
      %v10362 = vpop.f32.mrb[0].mxu0
      %v10363 = vadd.f32 %v10202, %v10362
      %v10364 = vpop.f32.mrb[0].mxu0
      %10365 = vdwg.mxu0
      %v10366 = vmax.f32 %v10240, 0.0
      %v10367 = vmax.f32 %v10243, 0.0
      %v10368 = vmax.f32 %v10248, 0.0
      %v10369 = vmax.f32 %v10251, 0.0
      %v10370 = vmax.f32 %v10256, 0.0
      %v10371 = vmax.f32 %v10259, 0.0
      %v10372 = vmax.f32 %v10264, 0.0
      %v10373 = vmax.f32 %v10267, 0.0
      %v10374 = vmax.f32 %v10272, 0.0
      %v10375 = vmax.f32 %v10275, 0.0
      %v10376 = vmax.f32 %v10280, 0.0
      %v10377 = vmax.f32 %v10283, 0.0
      %v10378 = vmax.f32 %v10288, 0.0
      %v10379 = vmax.f32 %v10291, 0.0
      %v10380 = vmax.f32 %v10296, 0.0
      %v10381 = vmax.f32 %v10299, 0.0
      %v10382 = vmax.f32 %v10304, 0.0
      %v10383 = vmax.f32 %v10307, 0.0
      %v10384 = vmax.f32 %v10312, 0.0
      %v10385 = vmax.f32 %v10315, 0.0
      %v10386 = vmax.f32 %v10320, 0.0
      %v10387 = vmax.f32 %v10323, 0.0
      %v10388 = vmax.f32 %v10328, 0.0
      %v10389 = vmax.f32 %v10331, 0.0
      %v10390 = vmax.f32 %v10336, 0.0
      %v10391 = vmax.f32 %v10339, 0.0
      %v10392 = vmax.f32 %v10344, 0.0
      %v10393 = vmax.f32 %v10347, 0.0
      %v10394 = vmax.f32 %v10352, 0.0
      %v10395 = vmax.f32 %v10355, 0.0
      %v10396 = vmax.f32 %v10360, 0.0
      %v10397 = vmax.f32 %v10363, 0.0
      %v10398 = vld [vmem:[%s15] sm:$0x3f]
      %v10399 = vld [vmem:[%s16] sm:$0x7]
      %v10432 = vrot.slane %v10366, 7
      %v10433 = vrot.slane %v10367, 7
      %v10434 = vsel %vm623, %v10432, %v10433
      %v10435 = vrot.slane %v10368, 7
      %v10436 = vrot.slane %v10369, 7
      %v10437 = vsel %vm623, %v10435, %v10436
      %v10438 = vrot.slane %v10370, 7
      %v10439 = vrot.slane %v10371, 7
      %v10440 = vsel %vm623, %v10438, %v10439
      %v10441 = vrot.slane %v10372, 7
      %v10442 = vrot.slane %v10373, 7
      %v10443 = vsel %vm623, %v10441, %v10442
      %v10444 = vrot.slane %v10374, 7
      %v10445 = vrot.slane %v10375, 7
      %v10446 = vsel %vm623, %v10444, %v10445
      %v10447 = vrot.slane %v10376, 7
      %v10448 = vrot.slane %v10377, 7
      %v10449 = vsel %vm623, %v10447, %v10448
      %v10450 = vrot.slane %v10378, 7
      %v10451 = vrot.slane %v10379, 7
      %v10452 = vsel %vm623, %v10450, %v10451
      %v10453 = vrot.slane %v10380, 7
      %v10454 = vrot.slane %v10381, 7
      %v10455 = vsel %vm623, %v10453, %v10454
      %v10456 = vrot.slane %v10382, 7
      %v10457 = vrot.slane %v10383, 7
      %v10458 = vsel %vm623, %v10456, %v10457
      %v10459 = vrot.slane %v10384, 7
      %v10460 = vrot.slane %v10385, 7
      %v10461 = vsel %vm623, %v10459, %v10460
      %v10462 = vrot.slane %v10386, 7
      %v10463 = vrot.slane %v10387, 7
      %v10464 = vsel %vm623, %v10462, %v10463
      %v10465 = vrot.slane %v10388, 7
      %v10466 = vrot.slane %v10389, 7
      %v10467 = vsel %vm623, %v10465, %v10466
      %v10468 = vrot.slane %v10390, 7
      %v10469 = vrot.slane %v10391, 7
      %v10470 = vsel %vm623, %v10468, %v10469
      %v10471 = vrot.slane %v10392, 7
      %v10472 = vrot.slane %v10393, 7
      %v10473 = vsel %vm623, %v10471, %v10472
      %v10474 = vrot.slane %v10394, 7
      %v10475 = vrot.slane %v10395, 7
      %v10476 = vsel %vm623, %v10474, %v10475
      %v10477 = vrot.slane %v10396, 7
      %v10478 = vrot.slane %v10397, 7
      %v10479 = vsel %vm623, %v10477, %v10478
      %v10527 = vsel %vm623, 0.0, %v10432
      %v10528 = vsel %vm623, 0.0, %v10435
      %v10529 = vsel %vm623, 0.0, %v10438
      %v10530 = vsel %vm623, 0.0, %v10441
      %v10531 = vsel %vm623, 0.0, %v10444
      %v10532 = vsel %vm623, 0.0, %v10447
      %v10533 = vsel %vm623, 0.0, %v10450
      %v10534 = vsel %vm623, 0.0, %v10453
      %v10535 = vsel %vm623, 0.0, %v10456
      %v10536 = vsel %vm623, 0.0, %v10459
      %v10537 = vsel %vm623, 0.0, %v10462
      %v10538 = vsel %vm623, 0.0, %v10465
      %v10539 = vsel %vm623, 0.0, %v10468
      %v10540 = vsel %vm623, 0.0, %v10471
      %v10541 = vsel %vm623, 0.0, %v10474
      %v10542 = vsel %vm623, 0.0, %v10477
      %v10543 = vsel %vm623, %v10433, 0.0
      %v10544 = vsel %vm623, %v10436, 0.0
      %v10545 = vsel %vm623, %v10439, 0.0
      %v10546 = vsel %vm623, %v10442, 0.0
      %v10547 = vsel %vm623, %v10445, 0.0
      %v10548 = vsel %vm623, %v10448, 0.0
      %v10549 = vsel %vm623, %v10451, 0.0
      %v10550 = vsel %vm623, %v10454, 0.0
      %v10551 = vsel %vm623, %v10457, 0.0
      %v10552 = vsel %vm623, %v10460, 0.0
      %v10553 = vsel %vm623, %v10463, 0.0
      %v10554 = vsel %vm623, %v10466, 0.0
      %v10555 = vsel %vm623, %v10469, 0.0
      %v10556 = vsel %vm623, %v10472, 0.0
      %v10557 = vsel %vm623, %v10475, 0.0
      %v10558 = vsel %vm623, %v10478, 0.0
      %v10589 = vrot.slane %v10527, 1
      %v10590 = vrot.slane %v10434, 1
      %v10591 = vsel %vm789, %v10589, %v10590
      %v10592 = vrot.slane %v10543, 1
      %v10593 = vsel %vm789, %v10590, %v10592
      %v10594 = vrot.slane %v10528, 1
      %v10595 = vrot.slane %v10437, 1
      %v10596 = vsel %vm789, %v10594, %v10595
      %v10597 = vrot.slane %v10544, 1
      %v10598 = vsel %vm789, %v10595, %v10597
      %v10599 = vrot.slane %v10529, 1
      %v10600 = vrot.slane %v10440, 1
      %v10601 = vsel %vm789, %v10599, %v10600
      %v10602 = vrot.slane %v10545, 1
      %v10603 = vsel %vm789, %v10600, %v10602
      %v10604 = vrot.slane %v10530, 1
      %v10605 = vrot.slane %v10443, 1
      %v10606 = vsel %vm789, %v10604, %v10605
      %v10607 = vrot.slane %v10546, 1
      %v10608 = vsel %vm789, %v10605, %v10607
      %v10609 = vrot.slane %v10531, 1
      %v10610 = vrot.slane %v10446, 1
      %v10611 = vsel %vm789, %v10609, %v10610
      %v10612 = vrot.slane %v10547, 1
      %v10613 = vsel %vm789, %v10610, %v10612
      %v10614 = vrot.slane %v10532, 1
      %v10615 = vrot.slane %v10449, 1
      %v10616 = vsel %vm789, %v10614, %v10615
      %v10617 = vrot.slane %v10548, 1
      %v10618 = vsel %vm789, %v10615, %v10617
      %v10619 = vrot.slane %v10533, 1
      %v10620 = vrot.slane %v10452, 1
      %v10621 = vsel %vm789, %v10619, %v10620
      %v10622 = vrot.slane %v10549, 1
      %v10623 = vsel %vm789, %v10620, %v10622
      %v10624 = vrot.slane %v10534, 1
      %v10625 = vrot.slane %v10455, 1
      %v10626 = vsel %vm789, %v10624, %v10625
      %v10627 = vrot.slane %v10550, 1
      %v10628 = vsel %vm789, %v10625, %v10627
      %v10629 = vrot.slane %v10535, 1
      %v10630 = vrot.slane %v10458, 1
      %v10631 = vsel %vm789, %v10629, %v10630
      %v10632 = vrot.slane %v10551, 1
      %v10633 = vsel %vm789, %v10630, %v10632
      %v10634 = vrot.slane %v10536, 1
      %v10635 = vrot.slane %v10461, 1
      %v10636 = vsel %vm789, %v10634, %v10635
      %v10637 = vrot.slane %v10552, 1
      %v10638 = vsel %vm789, %v10635, %v10637
      %v10639 = vrot.slane %v10537, 1
      %v10640 = vrot.slane %v10464, 1
      %v10641 = vsel %vm789, %v10639, %v10640
      %v10642 = vrot.slane %v10553, 1
      %v10643 = vsel %vm789, %v10640, %v10642
      %v10644 = vrot.slane %v10538, 1
      %v10645 = vrot.slane %v10467, 1
      %v10646 = vsel %vm789, %v10644, %v10645
      %v10647 = vrot.slane %v10554, 1
      %v10648 = vsel %vm789, %v10645, %v10647
      %v10649 = vrot.slane %v10539, 1
      %v10650 = vrot.slane %v10470, 1
      %v10651 = vsel %vm789, %v10649, %v10650
      %v10652 = vrot.slane %v10555, 1
      %v10653 = vsel %vm789, %v10650, %v10652
      %v10654 = vrot.slane %v10540, 1
      %v10655 = vrot.slane %v10473, 1
      %v10656 = vsel %vm789, %v10654, %v10655
      %v10657 = vrot.slane %v10556, 1
      %v10658 = vsel %vm789, %v10655, %v10657
      %v10659 = vrot.slane %v10541, 1
      %v10660 = vrot.slane %v10476, 1
      %v10661 = vsel %vm789, %v10659, %v10660
      %v10662 = vrot.slane %v10557, 1
      %v10663 = vsel %vm789, %v10660, %v10662
      %v10664 = vrot.slane %v10527, 2
      %v10665 = vrot.slane %v10434, 2
      %v10666 = vsel %vm870, %v10664, %v10665
      %v10667 = vrot.slane %v10543, 2
      %v10668 = vsel %vm870, %v10665, %v10667
      %v10669 = vrot.slane %v10528, 2
      %v10670 = vrot.slane %v10437, 2
      %v10671 = vsel %vm870, %v10669, %v10670
      %v10672 = vrot.slane %v10544, 2
      %v10673 = vsel %vm870, %v10670, %v10672
      %v10674 = vrot.slane %v10529, 2
      %v10675 = vrot.slane %v10440, 2
      %v10676 = vsel %vm870, %v10674, %v10675
      %v10677 = vrot.slane %v10545, 2
      %v10678 = vsel %vm870, %v10675, %v10677
      %v10679 = vrot.slane %v10530, 2
      %v10680 = vrot.slane %v10443, 2
      %v10681 = vsel %vm870, %v10679, %v10680
      %v10682 = vrot.slane %v10546, 2
      %v10683 = vsel %vm870, %v10680, %v10682
      %v10684 = vrot.slane %v10531, 2
      %v10685 = vrot.slane %v10446, 2
      %v10686 = vsel %vm870, %v10684, %v10685
      %v10687 = vrot.slane %v10547, 2
      %v10688 = vsel %vm870, %v10685, %v10687
      %v10689 = vrot.slane %v10532, 2
      %v10690 = vrot.slane %v10449, 2
      %v10691 = vsel %vm870, %v10689, %v10690
      %v10692 = vrot.slane %v10548, 2
      %v10693 = vsel %vm870, %v10690, %v10692
      %v10694 = vrot.slane %v10533, 2
      %v10695 = vrot.slane %v10452, 2
      %v10696 = vsel %vm870, %v10694, %v10695
      %v10697 = vrot.slane %v10549, 2
      %v10698 = vsel %vm870, %v10695, %v10697
      %v10699 = vrot.slane %v10534, 2
      %v10700 = vrot.slane %v10455, 2
      %v10701 = vsel %vm870, %v10699, %v10700
      %v10702 = vrot.slane %v10550, 2
      %v10703 = vsel %vm870, %v10700, %v10702
      %v10704 = vrot.slane %v10535, 2
      %v10705 = vrot.slane %v10458, 2
      %v10706 = vsel %vm870, %v10704, %v10705
      %v10707 = vrot.slane %v10551, 2
      %v10708 = vsel %vm870, %v10705, %v10707
      %v10709 = vrot.slane %v10536, 2
      %v10710 = vrot.slane %v10461, 2
      %v10711 = vsel %vm870, %v10709, %v10710
      %v10712 = vrot.slane %v10552, 2
      %v10713 = vsel %vm870, %v10710, %v10712
      %v10714 = vrot.slane %v10537, 2
      %v10715 = vrot.slane %v10464, 2
      %v10716 = vsel %vm870, %v10714, %v10715
      %v10717 = vrot.slane %v10553, 2
      %v10718 = vsel %vm870, %v10715, %v10717
      %v10719 = vrot.slane %v10538, 2
      %v10720 = vrot.slane %v10467, 2
      %v10721 = vsel %vm870, %v10719, %v10720
      %v10722 = vrot.slane %v10554, 2
      %v10723 = vsel %vm870, %v10720, %v10722
      %v10724 = vrot.slane %v10539, 2
      %v10725 = vrot.slane %v10470, 2
      %v10726 = vsel %vm870, %v10724, %v10725
      %v10727 = vrot.slane %v10555, 2
      %v10728 = vsel %vm870, %v10725, %v10727
      %v10729 = vrot.slane %v10540, 2
      %v10730 = vrot.slane %v10473, 2
      %v10731 = vsel %vm870, %v10729, %v10730
      %v10732 = vrot.slane %v10556, 2
      %v10733 = vsel %vm870, %v10730, %v10732
      %v10734 = vrot.slane %v10541, 2
      %v10735 = vrot.slane %v10476, 2
      %v10736 = vsel %vm870, %v10734, %v10735
      %v10737 = vrot.slane %v10557, 2
      %v10738 = vsel %vm870, %v10735, %v10737
      %v10741 = vrot.slane %v10542, 1
      %v10742 = vrot.slane %v10479, 1
      %v10743 = vsel %vm789, %v10741, %v10742
      %v10744 = vrot.slane %v10558, 1
      %v10745 = vsel %vm789, %v10742, %v10744
      %v10778 = vrot.slane %v10542, 2
      %v10779 = vrot.slane %v10479, 2
      %v10780 = vsel %vm870, %v10778, %v10779
      %v10781 = vrot.slane %v10558, 2
      %v10782 = vsel %vm870, %v10779, %v10781
      %10813 = vrot.lane.b32.xlu0 %v10591, 32
      %v10814 = vpop.permute.xlu0 %10813
      %10815 = vrot.lane.b32.xlu0 %v10593, 32
      %v10816 = vpop.permute.xlu0 %10815
      %10817 = vrot.lane.b32.xlu0 %v10596, 32
      %v10818 = vpop.permute.xlu0 %10817
      %10819 = vrot.lane.b32.xlu0 %v10598, 32
      %v10820 = vpop.permute.xlu0 %10819
      %10821 = vrot.lane.b32.xlu0 %v10601, 32
      %v10822 = vpop.permute.xlu0 %10821
      %10823 = vrot.lane.b32.xlu0 %v10603, 32
      %v10824 = vpop.permute.xlu0 %10823
      %10825 = vrot.lane.b32.xlu0 %v10606, 32
      %v10826 = vpop.permute.xlu0 %10825
      %10827 = vrot.lane.b32.xlu0 %v10608, 32
      %v10828 = vpop.permute.xlu0 %10827
      %10829 = vrot.lane.b32.xlu0 %v10611, 32
      %v10830 = vpop.permute.xlu0 %10829
      %10831 = vrot.lane.b32.xlu0 %v10613, 32
      %v10832 = vpop.permute.xlu0 %10831
      %10833 = vrot.lane.b32.xlu0 %v10616, 32
      %v10834 = vpop.permute.xlu0 %10833
      %10835 = vrot.lane.b32.xlu0 %v10618, 32
      %v10836 = vpop.permute.xlu0 %10835
      %10837 = vrot.lane.b32.xlu0 %v10621, 32
      %v10838 = vpop.permute.xlu0 %10837
      %10839 = vrot.lane.b32.xlu0 %v10623, 32
      %v10840 = vpop.permute.xlu0 %10839
      %10841 = vrot.lane.b32.xlu0 %v10626, 32
      %v10842 = vpop.permute.xlu0 %10841
      %10843 = vrot.lane.b32.xlu0 %v10628, 32
      %v10844 = vpop.permute.xlu0 %10843
      %10845 = vrot.lane.b32.xlu0 %v10631, 32
      %v10846 = vpop.permute.xlu0 %10845
      %10847 = vrot.lane.b32.xlu0 %v10633, 32
      %v10848 = vpop.permute.xlu0 %10847
      %10849 = vrot.lane.b32.xlu0 %v10636, 32
      %v10850 = vpop.permute.xlu0 %10849
      %10851 = vrot.lane.b32.xlu0 %v10638, 32
      %v10852 = vpop.permute.xlu0 %10851
      %10853 = vrot.lane.b32.xlu0 %v10641, 32
      %v10854 = vpop.permute.xlu0 %10853
      %10855 = vrot.lane.b32.xlu0 %v10643, 32
      %v10856 = vpop.permute.xlu0 %10855
      %10857 = vrot.lane.b32.xlu0 %v10646, 32
      %v10858 = vpop.permute.xlu0 %10857
      %10859 = vrot.lane.b32.xlu0 %v10648, 32
      %v10860 = vpop.permute.xlu0 %10859
      %10861 = vrot.lane.b32.xlu0 %v10651, 32
      %v10862 = vpop.permute.xlu0 %10861
      %10863 = vrot.lane.b32.xlu0 %v10653, 32
      %v10864 = vpop.permute.xlu0 %10863
      %10865 = vrot.lane.b32.xlu0 %v10656, 32
      %v10866 = vpop.permute.xlu0 %10865
      %10867 = vrot.lane.b32.xlu0 %v10658, 32
      %v10868 = vpop.permute.xlu0 %10867
      %10869 = vrot.lane.b32.xlu0 %v10661, 32
      %v10870 = vpop.permute.xlu0 %10869
      %10871 = vrot.lane.b32.xlu0 %v10663, 32
      %v10872 = vpop.permute.xlu0 %10871
      %10903 = vrot.lane.b32.xlu0 %v10666, 64
      %v10904 = vpop.permute.xlu0 %10903
      %10905 = vrot.lane.b32.xlu0 %v10668, 64
      %v10906 = vpop.permute.xlu0 %10905
      %10907 = vrot.lane.b32.xlu0 %v10671, 64
      %v10908 = vpop.permute.xlu0 %10907
      %10909 = vrot.lane.b32.xlu0 %v10673, 64
      %v10910 = vpop.permute.xlu0 %10909
      %10911 = vrot.lane.b32.xlu0 %v10676, 64
      %v10912 = vpop.permute.xlu0 %10911
      %10913 = vrot.lane.b32.xlu0 %v10678, 64
      %v10914 = vpop.permute.xlu0 %10913
      %10915 = vrot.lane.b32.xlu0 %v10681, 64
      %v10916 = vpop.permute.xlu0 %10915
      %10917 = vrot.lane.b32.xlu0 %v10683, 64
      %v10918 = vpop.permute.xlu0 %10917
      %10919 = vrot.lane.b32.xlu0 %v10686, 64
      %v10920 = vpop.permute.xlu0 %10919
      %10921 = vrot.lane.b32.xlu0 %v10688, 64
      %v10922 = vpop.permute.xlu0 %10921
      %10923 = vrot.lane.b32.xlu0 %v10691, 64
      %v10924 = vpop.permute.xlu0 %10923
      %10925 = vrot.lane.b32.xlu0 %v10693, 64
      %v10926 = vpop.permute.xlu0 %10925
      %10927 = vrot.lane.b32.xlu0 %v10696, 64
      %v10928 = vpop.permute.xlu0 %10927
      %10929 = vrot.lane.b32.xlu0 %v10698, 64
      %v10930 = vpop.permute.xlu0 %10929
      %10931 = vrot.lane.b32.xlu0 %v10701, 64
      %v10932 = vpop.permute.xlu0 %10931
      %10933 = vrot.lane.b32.xlu0 %v10703, 64
      %v10934 = vpop.permute.xlu0 %10933
      %10935 = vrot.lane.b32.xlu0 %v10706, 64
      %v10936 = vpop.permute.xlu0 %10935
      %10937 = vrot.lane.b32.xlu0 %v10708, 64
      %v10938 = vpop.permute.xlu0 %10937
      %10939 = vrot.lane.b32.xlu0 %v10711, 64
      %v10940 = vpop.permute.xlu0 %10939
      %10941 = vrot.lane.b32.xlu0 %v10713, 64
      %v10942 = vpop.permute.xlu0 %10941
      %10943 = vrot.lane.b32.xlu0 %v10716, 64
      %v10944 = vpop.permute.xlu0 %10943
      %10945 = vrot.lane.b32.xlu0 %v10718, 64
      %v10946 = vpop.permute.xlu0 %10945
      %10947 = vrot.lane.b32.xlu0 %v10721, 64
      %v10948 = vpop.permute.xlu0 %10947
      %10949 = vrot.lane.b32.xlu0 %v10723, 64
      %v10950 = vpop.permute.xlu0 %10949
      %10951 = vrot.lane.b32.xlu0 %v10726, 64
      %v10952 = vpop.permute.xlu0 %10951
      %10953 = vrot.lane.b32.xlu0 %v10728, 64
      %v10954 = vpop.permute.xlu0 %10953
      %10955 = vrot.lane.b32.xlu0 %v10731, 64
      %v10956 = vpop.permute.xlu0 %10955
      %10957 = vrot.lane.b32.xlu0 %v10733, 64
      %v10958 = vpop.permute.xlu0 %10957
      %10959 = vrot.lane.b32.xlu0 %v10736, 64
      %v10960 = vpop.permute.xlu0 %10959
      %10961 = vrot.lane.b32.xlu0 %v10738, 64
      %v10962 = vpop.permute.xlu0 %10961
      %10993 = vrot.lane.b32.xlu0 %v10527, 96
      %v10994 = vpop.permute.xlu0 %10993
      %10995 = vrot.lane.b32.xlu0 %v10434, 96
      %v10996 = vpop.permute.xlu0 %10995
      %10997 = vrot.lane.b32.xlu0 %v10528, 96
      %v10998 = vpop.permute.xlu0 %10997
      %10999 = vrot.lane.b32.xlu0 %v10437, 96
      %v11000 = vpop.permute.xlu0 %10999
      %11001 = vrot.lane.b32.xlu0 %v10529, 96
      %v11002 = vpop.permute.xlu0 %11001
      %11003 = vrot.lane.b32.xlu0 %v10440, 96
      %v11004 = vpop.permute.xlu0 %11003
      %11005 = vrot.lane.b32.xlu0 %v10530, 96
      %v11006 = vpop.permute.xlu0 %11005
      %11007 = vrot.lane.b32.xlu0 %v10443, 96
      %v11008 = vpop.permute.xlu0 %11007
      %11009 = vrot.lane.b32.xlu0 %v10531, 96
      %v11010 = vpop.permute.xlu0 %11009
      %11011 = vrot.lane.b32.xlu0 %v10446, 96
      %v11012 = vpop.permute.xlu0 %11011
      %11013 = vrot.lane.b32.xlu0 %v10532, 96
      %v11014 = vpop.permute.xlu0 %11013
      %11015 = vrot.lane.b32.xlu0 %v10449, 96
      %v11016 = vpop.permute.xlu0 %11015
      %11017 = vrot.lane.b32.xlu0 %v10533, 96
      %v11018 = vpop.permute.xlu0 %11017
      %11019 = vrot.lane.b32.xlu0 %v10452, 96
      %v11020 = vpop.permute.xlu0 %11019
      %11021 = vrot.lane.b32.xlu0 %v10534, 96
      %v11022 = vpop.permute.xlu0 %11021
      %11023 = vrot.lane.b32.xlu0 %v10455, 96
      %v11024 = vpop.permute.xlu0 %11023
      %11025 = vrot.lane.b32.xlu0 %v10535, 96
      %v11026 = vpop.permute.xlu0 %11025
      %11027 = vrot.lane.b32.xlu0 %v10458, 96
      %v11028 = vpop.permute.xlu0 %11027
      %11029 = vrot.lane.b32.xlu0 %v10536, 96
      %v11030 = vpop.permute.xlu0 %11029
      %11031 = vrot.lane.b32.xlu0 %v10461, 96
      %v11032 = vpop.permute.xlu0 %11031
      %11033 = vrot.lane.b32.xlu0 %v10537, 96
      %v11034 = vpop.permute.xlu0 %11033
      %11035 = vrot.lane.b32.xlu0 %v10464, 96
      %v11036 = vpop.permute.xlu0 %11035
      %11037 = vrot.lane.b32.xlu0 %v10538, 96
      %v11038 = vpop.permute.xlu0 %11037
      %11039 = vrot.lane.b32.xlu0 %v10467, 96
      %v11040 = vpop.permute.xlu0 %11039
      %11041 = vrot.lane.b32.xlu0 %v10539, 96
      %v11042 = vpop.permute.xlu0 %11041
      %11043 = vrot.lane.b32.xlu0 %v10470, 96
      %v11044 = vpop.permute.xlu0 %11043
      %11045 = vrot.lane.b32.xlu0 %v10540, 96
      %v11046 = vpop.permute.xlu0 %11045
      %11047 = vrot.lane.b32.xlu0 %v10473, 96
      %v11048 = vpop.permute.xlu0 %11047
      %11049 = vrot.lane.b32.xlu0 %v10541, 96
      %v11050 = vpop.permute.xlu0 %11049
      %11051 = vrot.lane.b32.xlu0 %v10476, 96
      %v11052 = vpop.permute.xlu0 %11051
      %11053 = vrot.lane.b32.xlu0 %v10542, 96
      %v11054 = vpop.permute.xlu0 %11053
      %11055 = vrot.lane.b32.xlu0 %v10479, 96
      %v11056 = vpop.permute.xlu0 %11055
      %11089 = vrot.lane.b32.xlu0 %v10666, 32
      %v11090 = vpop.permute.xlu0 %11089
      %11091 = vrot.lane.b32.xlu0 %v10668, 32
      %v11092 = vpop.permute.xlu0 %11091
      %11093 = vrot.lane.b32.xlu0 %v10671, 32
      %v11094 = vpop.permute.xlu0 %11093
      %11095 = vrot.lane.b32.xlu0 %v10673, 32
      %v11096 = vpop.permute.xlu0 %11095
      %11097 = vrot.lane.b32.xlu0 %v10676, 32
      %v11098 = vpop.permute.xlu0 %11097
      %11099 = vrot.lane.b32.xlu0 %v10678, 32
      %v11100 = vpop.permute.xlu0 %11099
      %11101 = vrot.lane.b32.xlu0 %v10681, 32
      %v11102 = vpop.permute.xlu0 %11101
      %11103 = vrot.lane.b32.xlu0 %v10683, 32
      %v11104 = vpop.permute.xlu0 %11103
      %11105 = vrot.lane.b32.xlu0 %v10686, 32
      %v11106 = vpop.permute.xlu0 %11105
      %11107 = vrot.lane.b32.xlu0 %v10688, 32
      %v11108 = vpop.permute.xlu0 %11107
      %11109 = vrot.lane.b32.xlu0 %v10691, 32
      %v11110 = vpop.permute.xlu0 %11109
      %11111 = vrot.lane.b32.xlu0 %v10693, 32
      %v11112 = vpop.permute.xlu0 %11111
      %11113 = vrot.lane.b32.xlu0 %v10696, 32
      %v11114 = vpop.permute.xlu0 %11113
      %11115 = vrot.lane.b32.xlu0 %v10698, 32
      %v11116 = vpop.permute.xlu0 %11115
      %11117 = vrot.lane.b32.xlu0 %v10701, 32
      %v11118 = vpop.permute.xlu0 %11117
      %11119 = vrot.lane.b32.xlu0 %v10703, 32
      %v11120 = vpop.permute.xlu0 %11119
      %11121 = vrot.lane.b32.xlu0 %v10706, 32
      %v11122 = vpop.permute.xlu0 %11121
      %11123 = vrot.lane.b32.xlu0 %v10708, 32
      %v11124 = vpop.permute.xlu0 %11123
      %11125 = vrot.lane.b32.xlu0 %v10711, 32
      %v11126 = vpop.permute.xlu0 %11125
      %11127 = vrot.lane.b32.xlu0 %v10713, 32
      %v11128 = vpop.permute.xlu0 %11127
      %11129 = vrot.lane.b32.xlu0 %v10716, 32
      %v11130 = vpop.permute.xlu0 %11129
      %11131 = vrot.lane.b32.xlu0 %v10718, 32
      %v11132 = vpop.permute.xlu0 %11131
      %11133 = vrot.lane.b32.xlu0 %v10721, 32
      %v11134 = vpop.permute.xlu0 %11133
      %11135 = vrot.lane.b32.xlu0 %v10723, 32
      %v11136 = vpop.permute.xlu0 %11135
      %11137 = vrot.lane.b32.xlu0 %v10726, 32
      %v11138 = vpop.permute.xlu0 %11137
      %11139 = vrot.lane.b32.xlu0 %v10728, 32
      %v11140 = vpop.permute.xlu0 %11139
      %11141 = vrot.lane.b32.xlu0 %v10731, 32
      %v11142 = vpop.permute.xlu0 %11141
      %11143 = vrot.lane.b32.xlu0 %v10733, 32
      %v11144 = vpop.permute.xlu0 %11143
      %11145 = vrot.lane.b32.xlu0 %v10736, 32
      %v11146 = vpop.permute.xlu0 %11145
      %11147 = vrot.lane.b32.xlu0 %v10738, 32
      %v11148 = vpop.permute.xlu0 %11147
      %11149 = vrot.lane.b32.xlu0 %v10780, 32
      %v11150 = vpop.permute.xlu0 %11149
      %11151 = vrot.lane.b32.xlu0 %v10782, 32
      %v11152 = vpop.permute.xlu0 %11151
      %11185 = vrot.lane.b32.xlu0 %v10528, 64
      %v11186 = vpop.permute.xlu0 %11185
      %11187 = vrot.lane.b32.xlu0 %v10437, 64
      %v11188 = vpop.permute.xlu0 %11187
      %11189 = vrot.lane.b32.xlu0 %v10529, 64
      %v11190 = vpop.permute.xlu0 %11189
      %11191 = vrot.lane.b32.xlu0 %v10440, 64
      %v11192 = vpop.permute.xlu0 %11191
      %11193 = vrot.lane.b32.xlu0 %v10530, 64
      %v11194 = vpop.permute.xlu0 %11193
      %11195 = vrot.lane.b32.xlu0 %v10443, 64
      %v11196 = vpop.permute.xlu0 %11195
      %11197 = vrot.lane.b32.xlu0 %v10531, 64
      %v11198 = vpop.permute.xlu0 %11197
      %11199 = vrot.lane.b32.xlu0 %v10446, 64
      %v11200 = vpop.permute.xlu0 %11199
      %11201 = vrot.lane.b32.xlu0 %v10532, 64
      %v11202 = vpop.permute.xlu0 %11201
      %11203 = vrot.lane.b32.xlu0 %v10449, 64
      %v11204 = vpop.permute.xlu0 %11203
      %11205 = vrot.lane.b32.xlu0 %v10533, 64
      %v11206 = vpop.permute.xlu0 %11205
      %11207 = vrot.lane.b32.xlu0 %v10452, 64
      %v11208 = vpop.permute.xlu0 %11207
      %11209 = vrot.lane.b32.xlu0 %v10534, 64
      %v11210 = vpop.permute.xlu0 %11209
      %11211 = vrot.lane.b32.xlu0 %v10455, 64
      %v11212 = vpop.permute.xlu0 %11211
      %11213 = vrot.lane.b32.xlu0 %v10535, 64
      %v11214 = vpop.permute.xlu0 %11213
      %11215 = vrot.lane.b32.xlu0 %v10458, 64
      %v11216 = vpop.permute.xlu0 %11215
      %11217 = vrot.lane.b32.xlu0 %v10536, 64
      %v11218 = vpop.permute.xlu0 %11217
      %11219 = vrot.lane.b32.xlu0 %v10461, 64
      %v11220 = vpop.permute.xlu0 %11219
      %11221 = vrot.lane.b32.xlu0 %v10537, 64
      %v11222 = vpop.permute.xlu0 %11221
      %11223 = vrot.lane.b32.xlu0 %v10464, 64
      %v11224 = vpop.permute.xlu0 %11223
      %11225 = vrot.lane.b32.xlu0 %v10538, 64
      %v11226 = vpop.permute.xlu0 %11225
      %11227 = vrot.lane.b32.xlu0 %v10467, 64
      %v11228 = vpop.permute.xlu0 %11227
      %11229 = vrot.lane.b32.xlu0 %v10539, 64
      %v11230 = vpop.permute.xlu0 %11229
      %11231 = vrot.lane.b32.xlu0 %v10470, 64
      %v11232 = vpop.permute.xlu0 %11231
      %11233 = vrot.lane.b32.xlu0 %v10540, 64
      %v11234 = vpop.permute.xlu0 %11233
      %11235 = vrot.lane.b32.xlu0 %v10473, 64
      %v11236 = vpop.permute.xlu0 %11235
      %11237 = vrot.lane.b32.xlu0 %v10541, 64
      %v11238 = vpop.permute.xlu0 %11237
      %11239 = vrot.lane.b32.xlu0 %v10476, 64
      %v11240 = vpop.permute.xlu0 %11239
      %11241 = vrot.lane.b32.xlu0 %v10542, 64
      %v11242 = vpop.permute.xlu0 %11241
      %11243 = vrot.lane.b32.xlu0 %v10479, 64
      %v11244 = vpop.permute.xlu0 %11243
      %11275 = vrot.lane.b32.xlu0 %v10596, 96
      %v11276 = vpop.permute.xlu0 %11275
      %11277 = vrot.lane.b32.xlu0 %v10598, 96
      %v11278 = vpop.permute.xlu0 %11277
      %11279 = vrot.lane.b32.xlu0 %v10601, 96
      %v11280 = vpop.permute.xlu0 %11279
      %11281 = vrot.lane.b32.xlu0 %v10603, 96
      %v11282 = vpop.permute.xlu0 %11281
      %11283 = vrot.lane.b32.xlu0 %v10606, 96
      %v11284 = vpop.permute.xlu0 %11283
      %11285 = vrot.lane.b32.xlu0 %v10608, 96
      %v11286 = vpop.permute.xlu0 %11285
      %11287 = vrot.lane.b32.xlu0 %v10611, 96
      %v11288 = vpop.permute.xlu0 %11287
      %11289 = vrot.lane.b32.xlu0 %v10613, 96
      %v11290 = vpop.permute.xlu0 %11289
      %11291 = vrot.lane.b32.xlu0 %v10616, 96
      %v11292 = vpop.permute.xlu0 %11291
      %11293 = vrot.lane.b32.xlu0 %v10618, 96
      %v11294 = vpop.permute.xlu0 %11293
      %11295 = vrot.lane.b32.xlu0 %v10621, 96
      %v11296 = vpop.permute.xlu0 %11295
      %11297 = vrot.lane.b32.xlu0 %v10623, 96
      %v11298 = vpop.permute.xlu0 %11297
      %11299 = vrot.lane.b32.xlu0 %v10626, 96
      %v11300 = vpop.permute.xlu0 %11299
      %11301 = vrot.lane.b32.xlu0 %v10628, 96
      %v11302 = vpop.permute.xlu0 %11301
      %11303 = vrot.lane.b32.xlu0 %v10631, 96
      %v11304 = vpop.permute.xlu0 %11303
      %11305 = vrot.lane.b32.xlu0 %v10633, 96
      %v11306 = vpop.permute.xlu0 %11305
      %11307 = vrot.lane.b32.xlu0 %v10636, 96
      %v11308 = vpop.permute.xlu0 %11307
      %11309 = vrot.lane.b32.xlu0 %v10638, 96
      %v11310 = vpop.permute.xlu0 %11309
      %11311 = vrot.lane.b32.xlu0 %v10641, 96
      %v11312 = vpop.permute.xlu0 %11311
      %11313 = vrot.lane.b32.xlu0 %v10643, 96
      %v11314 = vpop.permute.xlu0 %11313
      %11315 = vrot.lane.b32.xlu0 %v10646, 96
      %v11316 = vpop.permute.xlu0 %11315
      %11317 = vrot.lane.b32.xlu0 %v10648, 96
      %v11318 = vpop.permute.xlu0 %11317
      %11319 = vrot.lane.b32.xlu0 %v10651, 96
      %v11320 = vpop.permute.xlu0 %11319
      %11321 = vrot.lane.b32.xlu0 %v10653, 96
      %v11322 = vpop.permute.xlu0 %11321
      %11323 = vrot.lane.b32.xlu0 %v10656, 96
      %v11324 = vpop.permute.xlu0 %11323
      %11325 = vrot.lane.b32.xlu0 %v10658, 96
      %v11326 = vpop.permute.xlu0 %11325
      %11327 = vrot.lane.b32.xlu0 %v10661, 96
      %v11328 = vpop.permute.xlu0 %11327
      %11329 = vrot.lane.b32.xlu0 %v10663, 96
      %v11330 = vpop.permute.xlu0 %11329
      %11331 = vrot.lane.b32.xlu0 %v10743, 96
      %v11332 = vpop.permute.xlu0 %11331
      %11333 = vrot.lane.b32.xlu0 %v10745, 96
      %v11334 = vpop.permute.xlu0 %11333
      %v11365 = vsel %vm3312, %v10527, %v10814
      %v11366 = vsel %vm3312, %v10434, %v10816
      %v11367 = vsel %vm3312, %v10528, %v10818
      %v11368 = vsel %vm3312, %v10437, %v10820
      %v11369 = vsel %vm3312, %v10529, %v10822
      %v11370 = vsel %vm3312, %v10440, %v10824
      %v11371 = vsel %vm3312, %v10530, %v10826
      %v11372 = vsel %vm3312, %v10443, %v10828
      %v11373 = vsel %vm3312, %v10531, %v10830
      %v11374 = vsel %vm3312, %v10446, %v10832
      %v11375 = vsel %vm3312, %v10532, %v10834
      %v11376 = vsel %vm3312, %v10449, %v10836
      %v11377 = vsel %vm3312, %v10533, %v10838
      %v11378 = vsel %vm3312, %v10452, %v10840
      %v11379 = vsel %vm3312, %v10534, %v10842
      %v11380 = vsel %vm3312, %v10455, %v10844
      %v11381 = vsel %vm3312, %v10535, %v10846
      %v11382 = vsel %vm3312, %v10458, %v10848
      %v11383 = vsel %vm3312, %v10536, %v10850
      %v11384 = vsel %vm3312, %v10461, %v10852
      %v11385 = vsel %vm3312, %v10537, %v10854
      %v11386 = vsel %vm3312, %v10464, %v10856
      %v11387 = vsel %vm3312, %v10538, %v10858
      %v11388 = vsel %vm3312, %v10467, %v10860
      %v11389 = vsel %vm3312, %v10539, %v10862
      %v11390 = vsel %vm3312, %v10470, %v10864
      %v11391 = vsel %vm3312, %v10540, %v10866
      %v11392 = vsel %vm3312, %v10473, %v10868
      %v11393 = vsel %vm3312, %v10541, %v10870
      %v11394 = vsel %vm3312, %v10476, %v10872
      %v11395 = vsel %vm3345, %v11365, %v10904
      %v11396 = vsel %vm3345, %v11366, %v10906
      %v11397 = vsel %vm3345, %v11367, %v10908
      %v11398 = vsel %vm3345, %v11368, %v10910
      %v11399 = vsel %vm3345, %v11369, %v10912
      %v11400 = vsel %vm3345, %v11370, %v10914
      %v11401 = vsel %vm3345, %v11371, %v10916
      %v11402 = vsel %vm3345, %v11372, %v10918
      %v11403 = vsel %vm3345, %v11373, %v10920
      %v11404 = vsel %vm3345, %v11374, %v10922
      %v11405 = vsel %vm3345, %v11375, %v10924
      %v11406 = vsel %vm3345, %v11376, %v10926
      %v11407 = vsel %vm3345, %v11377, %v10928
      %v11408 = vsel %vm3345, %v11378, %v10930
      %v11409 = vsel %vm3345, %v11379, %v10932
      %v11410 = vsel %vm3345, %v11380, %v10934
      %v11411 = vsel %vm3345, %v11381, %v10936
      %v11412 = vsel %vm3345, %v11382, %v10938
      %v11413 = vsel %vm3345, %v11383, %v10940
      %v11414 = vsel %vm3345, %v11384, %v10942
      %v11415 = vsel %vm3345, %v11385, %v10944
      %v11416 = vsel %vm3345, %v11386, %v10946
      %v11417 = vsel %vm3345, %v11387, %v10948
      %v11418 = vsel %vm3345, %v11388, %v10950
      %v11419 = vsel %vm3345, %v11389, %v10952
      %v11420 = vsel %vm3345, %v11390, %v10954
      %v11421 = vsel %vm3345, %v11391, %v10956
      %v11422 = vsel %vm3345, %v11392, %v10958
      %v11423 = vsel %vm3345, %v11393, %v10960
      %v11424 = vsel %vm3345, %v11394, %v10962
      %v11425 = vsel %vm3378, %v3346, %v10994
      %v11426 = vsel %vm3378, %v3347, %v10996
      %v11427 = vsel %vm3378, %v11395, %v10998
      %v11428 = vsel %vm3378, %v11396, %v11000
      %v11429 = vsel %vm3378, %v11397, %v11002
      %v11430 = vsel %vm3378, %v11398, %v11004
      %v11431 = vsel %vm3378, %v11399, %v11006
      %v11432 = vsel %vm3378, %v11400, %v11008
      %v11433 = vsel %vm3378, %v11401, %v11010
      %v11434 = vsel %vm3378, %v11402, %v11012
      %v11435 = vsel %vm3378, %v11403, %v11014
      %v11436 = vsel %vm3378, %v11404, %v11016
      %v11437 = vsel %vm3378, %v11405, %v11018
      %v11438 = vsel %vm3378, %v11406, %v11020
      %v11439 = vsel %vm3378, %v11407, %v11022
      %v11440 = vsel %vm3378, %v11408, %v11024
      %v11441 = vsel %vm3378, %v11409, %v11026
      %v11442 = vsel %vm3378, %v11410, %v11028
      %v11443 = vsel %vm3378, %v11411, %v11030
      %v11444 = vsel %vm3378, %v11412, %v11032
      %v11445 = vsel %vm3378, %v11413, %v11034
      %v11446 = vsel %vm3378, %v11414, %v11036
      %v11447 = vsel %vm3378, %v11415, %v11038
      %v11448 = vsel %vm3378, %v11416, %v11040
      %v11449 = vsel %vm3378, %v11417, %v11042
      %v11450 = vsel %vm3378, %v11418, %v11044
      %v11451 = vsel %vm3378, %v11419, %v11046
      %v11452 = vsel %vm3378, %v11420, %v11048
      %v11453 = vsel %vm3378, %v11421, %v11050
      %v11454 = vsel %vm3378, %v11422, %v11052
      %v11455 = vsel %vm3378, %v11423, %v11054
      %v11456 = vsel %vm3378, %v11424, %v11056
      %v11457 = vsel %vm3312, %v10591, %v11090
      %v11458 = vsel %vm3312, %v10593, %v11092
      %v11459 = vsel %vm3312, %v10596, %v11094
      %v11460 = vsel %vm3312, %v10598, %v11096
      %v11461 = vsel %vm3312, %v10601, %v11098
      %v11462 = vsel %vm3312, %v10603, %v11100
      %v11463 = vsel %vm3312, %v10606, %v11102
      %v11464 = vsel %vm3312, %v10608, %v11104
      %v11465 = vsel %vm3312, %v10611, %v11106
      %v11466 = vsel %vm3312, %v10613, %v11108
      %v11467 = vsel %vm3312, %v10616, %v11110
      %v11468 = vsel %vm3312, %v10618, %v11112
      %v11469 = vsel %vm3312, %v10621, %v11114
      %v11470 = vsel %vm3312, %v10623, %v11116
      %v11471 = vsel %vm3312, %v10626, %v11118
      %v11472 = vsel %vm3312, %v10628, %v11120
      %v11473 = vsel %vm3312, %v10631, %v11122
      %v11474 = vsel %vm3312, %v10633, %v11124
      %v11475 = vsel %vm3312, %v10636, %v11126
      %v11476 = vsel %vm3312, %v10638, %v11128
      %v11477 = vsel %vm3312, %v10641, %v11130
      %v11478 = vsel %vm3312, %v10643, %v11132
      %v11479 = vsel %vm3312, %v10646, %v11134
      %v11480 = vsel %vm3312, %v10648, %v11136
      %v11481 = vsel %vm3312, %v10651, %v11138
      %v11482 = vsel %vm3312, %v10653, %v11140
      %v11483 = vsel %vm3312, %v10656, %v11142
      %v11484 = vsel %vm3312, %v10658, %v11144
      %v11485 = vsel %vm3312, %v10661, %v11146
      %v11486 = vsel %vm3312, %v10663, %v11148
      %v11487 = vsel %vm3312, %v10743, %v11150
      %v11488 = vsel %vm3312, %v10745, %v11152
      %v11489 = vsel %vm3345, %v11457, %v11186
      %v11490 = vsel %vm3345, %v11458, %v11188
      %v11491 = vsel %vm3345, %v11459, %v11190
      %v11492 = vsel %vm3345, %v11460, %v11192
      %v11493 = vsel %vm3345, %v11461, %v11194
      %v11494 = vsel %vm3345, %v11462, %v11196
      %v11495 = vsel %vm3345, %v11463, %v11198
      %v11496 = vsel %vm3345, %v11464, %v11200
      %v11497 = vsel %vm3345, %v11465, %v11202
      %v11498 = vsel %vm3345, %v11466, %v11204
      %v11499 = vsel %vm3345, %v11467, %v11206
      %v11500 = vsel %vm3345, %v11468, %v11208
      %v11501 = vsel %vm3345, %v11469, %v11210
      %v11502 = vsel %vm3345, %v11470, %v11212
      %v11503 = vsel %vm3345, %v11471, %v11214
      %v11504 = vsel %vm3345, %v11472, %v11216
      %v11505 = vsel %vm3345, %v11473, %v11218
      %v11506 = vsel %vm3345, %v11474, %v11220
      %v11507 = vsel %vm3345, %v11475, %v11222
      %v11508 = vsel %vm3345, %v11476, %v11224
      %v11509 = vsel %vm3345, %v11477, %v11226
      %v11510 = vsel %vm3345, %v11478, %v11228
      %v11511 = vsel %vm3345, %v11479, %v11230
      %v11512 = vsel %vm3345, %v11480, %v11232
      %v11513 = vsel %vm3345, %v11481, %v11234
      %v11514 = vsel %vm3345, %v11482, %v11236
      %v11515 = vsel %vm3345, %v11483, %v11238
      %v11516 = vsel %vm3345, %v11484, %v11240
      %v11517 = vsel %vm3345, %v11485, %v11242
      %v11518 = vsel %vm3345, %v11486, %v11244
      %v11519 = vsel %vm3345, %v11487, %v3181
      %v11520 = vsel %vm3345, %v11488, %v3183
      %v11521 = vsel %vm3378, %v11489, %v11276
      %v11522 = vsel %vm3378, %v11490, %v11278
      %v11523 = vsel %vm3378, %v11491, %v11280
      %v11524 = vsel %vm3378, %v11492, %v11282
      %v11525 = vsel %vm3378, %v11493, %v11284
      %v11526 = vsel %vm3378, %v11494, %v11286
      %v11527 = vsel %vm3378, %v11495, %v11288
      %v11528 = vsel %vm3378, %v11496, %v11290
      %v11529 = vsel %vm3378, %v11497, %v11292
      %v11530 = vsel %vm3378, %v11498, %v11294
      %v11531 = vsel %vm3378, %v11499, %v11296
      %v11532 = vsel %vm3378, %v11500, %v11298
      %v11533 = vsel %vm3378, %v11501, %v11300
      %v11534 = vsel %vm3378, %v11502, %v11302
      %v11535 = vsel %vm3378, %v11503, %v11304
      %v11536 = vsel %vm3378, %v11504, %v11306
      %v11537 = vsel %vm3378, %v11505, %v11308
      %v11538 = vsel %vm3378, %v11506, %v11310
      %v11539 = vsel %vm3378, %v11507, %v11312
      %v11540 = vsel %vm3378, %v11508, %v11314
      %v11541 = vsel %vm3378, %v11509, %v11316
      %v11542 = vsel %vm3378, %v11510, %v11318
      %v11543 = vsel %vm3378, %v11511, %v11320
      %v11544 = vsel %vm3378, %v11512, %v11322
      %v11545 = vsel %vm3378, %v11513, %v11324
      %v11546 = vsel %vm3378, %v11514, %v11326
      %v11547 = vsel %vm3378, %v11515, %v11328
      %v11548 = vsel %vm3378, %v11516, %v11330
      %v11549 = vsel %vm3378, %v11517, %v11332
      %v11550 = vsel %vm3378, %v11518, %v11334
      %v11551 = vsel %vm3378, %v11519, %v3277
      %v11552 = vsel %vm3378, %v11520, %v3279
      %v11553 = vpack.c.bf16 %v11426, %v11425
      %v11554 = vpack.c.bf16 %v11522, %v11521
      %v11555 = vpack.c.bf16 %v10673, %v10671
      %v11556 = vpack.c.bf16 %v11428, %v11427
      %v11557 = vpack.c.bf16 %v11524, %v11523
      %v11558 = vpack.c.bf16 %v10678, %v10676
      %v11559 = vpack.c.bf16 %v11430, %v11429
      %v11560 = vpack.c.bf16 %v11526, %v11525
      %v11561 = vpack.c.bf16 %v10683, %v10681
      %v11562 = vpack.c.bf16 %v11432, %v11431
      %v11563 = vpack.c.bf16 %v11528, %v11527
      %v11564 = vpack.c.bf16 %v10688, %v10686
      %v11565 = vpack.c.bf16 %v11434, %v11433
      %v11566 = vpack.c.bf16 %v11530, %v11529
      %v11567 = vpack.c.bf16 %v10693, %v10691
      %v11568 = vpack.c.bf16 %v11436, %v11435
      %v11569 = vpack.c.bf16 %v11532, %v11531
      %v11570 = vpack.c.bf16 %v10698, %v10696
      %v11571 = vpack.c.bf16 %v11438, %v11437
      %v11572 = vpack.c.bf16 %v11534, %v11533
      %v11573 = vpack.c.bf16 %v10703, %v10701
      %v11574 = vpack.c.bf16 %v11440, %v11439
      %v11575 = vpack.c.bf16 %v11536, %v11535
      %v11576 = vpack.c.bf16 %v10708, %v10706
      %v11577 = vpack.c.bf16 %v11442, %v11441
      %v11578 = vpack.c.bf16 %v11538, %v11537
      %v11579 = vpack.c.bf16 %v10713, %v10711
      %v11580 = vpack.c.bf16 %v11444, %v11443
      %v11581 = vpack.c.bf16 %v11540, %v11539
      %v11582 = vpack.c.bf16 %v10718, %v10716
      %v11583 = vpack.c.bf16 %v11446, %v11445
      %v11584 = vpack.c.bf16 %v11542, %v11541
      %v11585 = vpack.c.bf16 %v10723, %v10721
      %v11586 = vpack.c.bf16 %v11448, %v11447
      %v11587 = vpack.c.bf16 %v11544, %v11543
      %v11588 = vpack.c.bf16 %v10728, %v10726
      %v11589 = vpack.c.bf16 %v11450, %v11449
      %v11590 = vpack.c.bf16 %v11546, %v11545
      %v11591 = vpack.c.bf16 %v10733, %v10731
      %v11592 = vpack.c.bf16 %v11452, %v11451
      %v11593 = vpack.c.bf16 %v11548, %v11547
      %v11594 = vpack.c.bf16 %v10738, %v10736
      %v11595 = vpack.c.bf16 %v11454, %v11453
      %v11596 = vpack.c.bf16 %v11550, %v11549
      %v11597 = vpack.c.bf16 %v10782, %v10780
      %v11598 = vpack.c.bf16 %v11456, %v11455
      %v11599 = vpack.c.bf16 %v11552, %v11551
      %11601 = vset.pattern.permute.xlu0 0
      %11602 = vperm.xlu0 %11601, %v10399
      %v11603 = vpop.permute.xlu0 %11602
      %v11606 = vcombine.high %v10398, %v10398
      %v11608 = vunpack.c.l.s4 1983009808
      %v11609 = vunpack.c.0.s8 %v11608
      %v11610 = vlaneseq
      %v11611 = vshrl.u32 %v11610, 7
      %v11612 = vsub.s32 %v11609, %v11611
      %v11613 = vrot.slane %v10398, %v11612
      %v11615 = vunpack.c.l.s4 1983009808
      %v11616 = vunpack.c.0.s8 %v11615
      %v11617 = vlaneseq
      %v11618 = vshrl.u32 %v11617, 7
      %v11619 = vsub.s32 %v11616, %v11618
      %v11620 = vrot.slane %v11606, %v11619
      %v11621 = vcombine.high %v11613, %v11613
      %v11625 = vsel %vm3312, %v11620, 0
      %v11628 = vsel %vm3312, %v11555, 0
      %v11631 = vsel %vm3312, %v11558, 0
      %v11634 = vsel %vm3312, %v11561, 0
      %v11637 = vsel %vm3312, %v11564, 0
      %v11640 = vsel %vm3312, %v11567, 0
      %v11643 = vsel %vm3312, %v11570, 0
      %v11646 = vsel %vm3312, %v11573, 0
      %v11649 = vsel %vm3312, %v11576, 0
      %v11652 = vsel %vm3312, %v11579, 0
      %v11655 = vsel %vm3312, %v11582, 0
      %v11658 = vsel %vm3312, %v11585, 0
      %v11661 = vsel %vm3312, %v11588, 0
      %v11664 = vsel %vm3312, %v11591, 0
      %v11667 = vsel %vm3312, %v11594, 0
      %v11670 = vsel %vm3312, %v11597, 0
      %11672 = vmatprep.subr.bf16.mxu0 %v11554
      %11673 = vmatpush1.bf16.xpose.msra.mxu0 %v11553
      %11674 = vmatprep.subr.bf16.mxu0 %v11557
      %11675 = vmatpush1.bf16.xpose.msra.mxu0 %v11556
      %11676 = vmatprep.subr.bf16.mxu0 %v11560
      %11677 = vmatpush1.bf16.xpose.msra.mxu0 %v11559
      %11678 = vmatprep.subr.bf16.mxu0 %v11563
      %11679 = vmatpush1.bf16.xpose.msra.mxu0 %v11562
      %11680 = vmatprep.subr.bf16.mxu0 %v11566
      %11681 = vmatpush1.bf16.xpose.msra.mxu0 %v11565
      %11682 = vmatprep.subr.bf16.mxu0 %v11569
      %11683 = vmatpush1.bf16.xpose.msra.mxu0 %v11568
      %11684 = vmatprep.subr.bf16.mxu0 %v11572
      %11685 = vmatpush1.bf16.xpose.msra.mxu0 %v11571
      %11686 = vmatprep.subr.bf16.mxu0 %v11575
      %11687 = vmatpush1.bf16.xpose.msra.mxu0 %v11574
      %11688 = vmatprep.subr.bf16.mxu0 %v11578
      %11689 = vmatpush1.bf16.xpose.msra.mxu0 %v11577
      %11690 = vmatprep.subr.bf16.mxu0 %v11581
      %11691 = vmatpush1.bf16.xpose.msra.mxu0 %v11580
      %11692 = vmatprep.subr.bf16.mxu0 %v11584
      %11693 = vmatpush1.bf16.xpose.msra.mxu0 %v11583
      %11694 = vmatprep.subr.bf16.mxu0 %v11587
      %11695 = vmatpush1.bf16.xpose.msra.mxu0 %v11586
      %11696 = vmatprep.subr.bf16.mxu0 %v11590
      %11697 = vmatpush1.bf16.xpose.msra.mxu0 %v11589
      %11698 = vmatprep.subr.bf16.mxu0 %v11593
      %11699 = vmatpush1.bf16.xpose.msra.mxu0 %v11592
      %11700 = vmatprep.subr.bf16.mxu0 %v11596
      %11701 = vmatpush1.bf16.xpose.msra.mxu0 %v11595
      %11702 = vmatprep.subr.bf16.mxu0 %v11599
      %11703 = vmatpush1.bf16.xpose.msra.mxu0 %v11598
      %11704 = vmatprep.mubr.bf16.mxu0 %v11621
      %11705 = vmatmul.mubr.bf16.gmra.mrb[0].mxu0 %v11613
      %v11706 = vpop.f32.mrb[0].mxu0
      %v11707 = vadd.f32 %v11603, %v11706
      %v11708 = vpop.f32.mrb[0].mxu0
      %v11709 = vadd.f32 %v11603, %v11708
      %v11710 = vpop.f32.mrb[0].mxu0
      %v11711 = vpop.f32.mrb[0].mxu0
      %11712 = vdwg.mxu0
      %11713 = vmatprep.subr.bf16.mxu0 0
      %11714 = vmatpush1.bf16.xpose.msra.mxu0 %v11628
      %11715 = vmatprep.subr.bf16.mxu0 0
      %11716 = vmatpush1.bf16.xpose.msra.mxu0 %v11631
      %11717 = vmatprep.subr.bf16.mxu0 0
      %11718 = vmatpush1.bf16.xpose.msra.mxu0 %v11634
      %11719 = vmatprep.subr.bf16.mxu0 0
      %11720 = vmatpush1.bf16.xpose.msra.mxu0 %v11637
      %11721 = vmatprep.subr.bf16.mxu0 0
      %11722 = vmatpush1.bf16.xpose.msra.mxu0 %v11640
      %11723 = vmatprep.subr.bf16.mxu0 0
      %11724 = vmatpush1.bf16.xpose.msra.mxu0 %v11643
      %11725 = vmatprep.subr.bf16.mxu0 0
      %11726 = vmatpush1.bf16.xpose.msra.mxu0 %v11646
      %11727 = vmatprep.subr.bf16.mxu0 0
      %11728 = vmatpush1.bf16.xpose.msra.mxu0 %v11649
      %11729 = vmatprep.subr.bf16.mxu0 0
      %11730 = vmatpush1.bf16.xpose.msra.mxu0 %v11652
      %11731 = vmatprep.subr.bf16.mxu0 0
      %11732 = vmatpush1.bf16.xpose.msra.mxu0 %v11655
      %11733 = vmatprep.subr.bf16.mxu0 0
      %11734 = vmatpush1.bf16.xpose.msra.mxu0 %v11658
      %11735 = vmatprep.subr.bf16.mxu0 0
      %11736 = vmatpush1.bf16.xpose.msra.mxu0 %v11661
      %11737 = vmatprep.subr.bf16.mxu0 0
      %11738 = vmatpush1.bf16.xpose.msra.mxu0 %v11664
      %11739 = vmatprep.subr.bf16.mxu0 0
      %11740 = vmatpush1.bf16.xpose.msra.mxu0 %v11667
      %11741 = vmatprep.subr.bf16.mxu0 0
      %11742 = vmatpush1.bf16.xpose.msra.mxu0 %v11670
      %11743 = vmatprep.subr.bf16.mxu0 0
      %11744 = vmatpush1.bf16.xpose.msra.mxu0 %v3715
      %11745 = vmatprep.mubr.bf16.mxu0 0
      %11746 = vmatmul.mubr.bf16.gmra.mrb[0].mxu0 %v11625
      %v11747 = vpop.f32.mrb[0].mxu0
      %v11748 = vadd.f32 %v11707, %v11747
      %v11749 = vpop.f32.mrb[0].mxu0
      %v11750 = vadd.f32 %v11709, %v11749
      %v11751 = vpop.f32.mrb[0].mxu0
      %v11752 = vpop.f32.mrb[0].mxu0
      %11753 = vdwg.mxu0
      %v11754 = vtanh.pop %v11748
      %v11755 = vtanh.pop %v11750
      %v11758 = vcombine.low %v11754, %v11755
      %11760 = vst [vmem:[%s548] sm:$0x77] %v11758
      %p11761 = scmp.lt.s32.totalorder %s28, 1
      %s11762 = scalar_select %p11761, %s28, 1
      %s11763 = smul.addr %s11762, 2
      %s11764 = smul.addr %s11763, 4
      %s11765 = scalar_lea.vmem %s17, %s11764
      // Predicated region
      $region89: #{st_generator_forward.1} parent=87 // pred_check
        %p11766 = pneg %p408
      $region90: #{st_generator_forward.1} parent=87 // pred_check_branch
        %11768 = sbr.rel (%p11766) target = $region92
      $region91: #{st_generator_forward.1} parent=87 // pred_region
        _
      $region92: #{st_generator_forward.1} parent=87 // pred_fallthru
        _
    $region88: #{st_generator_forward.1} parent=5 // pred_fallthru
      _
    %p11769 = scmp.le.s32.totalorder 2, %s23
    // Predicated region
    $region93: #{st_generator_forward.1} parent=5 // pred_check
      %p11770 = pneg %p11769
    $region94: #{st_generator_forward.1} parent=5 // pred_check_branch
      %11772 = sbr.rel (%p11770) target = $region96
    $region95: #{st_generator_forward.1} parent=5 // pred_region
      %s11773 = ssub.s32 %s23, 2
      // Predicated region
      $region97: #{st_generator_forward.1} parent=95 // pred_check
        %p11774 = pneg %p414
      $region98: #{st_generator_forward.1} parent=95 // pred_check_branch
        %11776 = sbr.rel (%p11774) target = $region100
      $region99: #{st_generator_forward.1} parent=95 // pred_region
        %p11777 = scmp.lt.s32.totalorder %s29, 1
        %s11778 = scalar_select %p11777, %s29, 1
        %s11779 = smul.addr %s11778, 2
        %s11780 = smul.addr %s11779, 4
        %s11781 = scalar_lea.vmem %s17, %s11780
      $region100: #{st_generator_forward.1} parent=95 // pred_fallthru
        _
    $region96: #{st_generator_forward.1} parent=5 // pred_fallthru
      _
  $region6: #{st_generator_forward.1} parent=0 // loop_footer
    %s27 = sadd.s32 1, %s23
  $region7: #{st_generator_forward.1} parent=0 // loop_footer_branch
    %22 = sbr.rel target = $region3
  $region8: #{st_generator_forward.1} parent=0 // loop_exit
    _

</llo_original>
